<compile_context>
chip_gen: v7x
topology: tpu7x:2x2x1
jax: 0.10.0
libtpu: 0.0.40
codegen_flags: <defaults>
</compile_context>

<pallas_src>
import math

import jax
import jax.numpy as jnp
from jax.experimental import pallas as pl
from jax.experimental.pallas import tpu as pltpu

# ---------------- configuration (from ASTModel(input_tdim=100, label_dim=2)) ---------
INPUT_TDIM = 100
INPUT_FDIM = 128
PATCH = 16
STRIDE = 10
F_DIM = (INPUT_FDIM - PATCH) // STRIDE + 1          # 12
T_DIM = (INPUT_TDIM - PATCH) // STRIDE + 1          # 9
NUM_PATCHES = F_DIM * T_DIM                         # 108
SEQ = NUM_PATCHES + 2                               # + cls + dist = 110
SEQ_PAD = 128                                       # (8,128)-aligned sequence padding
EMBED_DIM = 192                                     # real AST base: 768
NUM_HEADS = 3                                       # real AST base: 12
HEAD_DIM = EMBED_DIM // NUM_HEADS                   # 64
DEPTH = 2                                           # real AST base: 12
MLP_DIM = 4 * EMBED_DIM
LABEL_DIM = 2


# -------------------------------- in-kernel helpers -----------------------------------
def _ln_rows(x, g, b, eps):
    """Row-wise LayerNorm over the last axis (x: (M, D) f32; g,b: (1, D))."""
    mu = jnp.mean(x, axis=-1, keepdims=True)
    xc = x - mu
    var = jnp.mean(xc * xc, axis=-1, keepdims=True)
    return xc * jax.lax.rsqrt(var + eps) * g + b


# ---------------------------------- fused Pallas kernel --------------------------------
def _ast_kernel(patches_ref, wpatch_ref, pos_ref, kbias_ref,
                ln1g_ref, ln1b_ref, qkvw_ref, qkvb_ref, projw_ref, projb_ref,
                ln2g_ref, ln2b_ref, fc1w_ref, fc1b_ref, fc2w_ref, fc2b_ref,
                normg_ref, normb_ref, hlng_ref, hlnb_ref, headw_ref, headb_ref,
                logits_ref, h_sc):
    """grid=(B, DEPTH).  One batch element per b; one transformer block per d.

    d == 0        : patch-embed matmul + token/pos assembly into the resident f32 scratch.
    every d       : one full pre-LN block (LN1 -> QKV -> masked softmax attention ->
                    fused proj+residual -> LN2 -> FC1+GELU -> FC2+residual).
    d == DEPTH-1  : final LN on cls/dist, (cls+dist)/2 pooling, head LN + Linear -> logits.
    """
    f32 = jnp.float32
    bf16 = jnp.bfloat16
    d = pl.program_id(1)

    # ---- patch embedding (only at the first depth step for this batch element) ----
    @pl.when(d == 0)
    def _():
        tok = jnp.dot(patches_ref[0], wpatch_ref[...], preferred_element_type=f32)
        h_sc[...] = tok + pos_ref[...]            # pos_eff already folds cls/dist/conv-bias

    h = h_sc[...]                                 # (SEQ_PAD, D) f32 residual stream

    # ---- attention sub-block (pre-LN), residual + proj fused ----
    hn = _ln_rows(h, ln1g_ref[0], ln1b_ref[0], 1e-6)
    qkv = (jnp.dot(hn.astype(bf16), qkvw_ref[0], preferred_element_type=f32)
           + qkvb_ref[0]).astype(bf16)            # (SEQ_PAD, 3D), kept bf16 to shrink live range

    scale = 1.0 / math.sqrt(HEAD_DIM)
    kbias = kbias_ref[...]                        # (1, SEQ_PAD): 0 valid keys, -1e30 padded

    o_heads = []
    for hd in range(NUM_HEADS):                   # static unroll (3 heads)
        q = qkv[:, hd * HEAD_DIM:(hd + 1) * HEAD_DIM]
        k = qkv[:, EMBED_DIM + hd * HEAD_DIM:EMBED_DIM + (hd + 1) * HEAD_DIM]
        v = qkv[:, 2 * EMBED_DIM + hd * HEAD_DIM:2 * EMBED_DIM + (hd + 1) * HEAD_DIM]
        s = jax.lax.dot_general(q, k, (((1,), (1,)), ((), ())),
                                preferred_element_type=f32) * scale + kbias
        s = s - jnp.max(s, axis=-1, keepdims=True)
        p = jnp.exp(s)
        p = p * pl.reciprocal(jnp.sum(p, axis=-1, keepdims=True), approx=True)
        o_heads.append(jnp.dot(p.astype(bf16), v,
                               preferred_element_type=f32).astype(bf16))
    o_all = jnp.concatenate(o_heads, axis=-1)     # (SEQ_PAD, D) bf16
    h = h + jnp.dot(o_all, projw_ref[0], preferred_element_type=f32) + projb_ref[0]

    # ---- MLP sub-block (pre-LN), residual fused ----
    hn2 = _ln_rows(h, ln2g_ref[0], ln2b_ref[0], 1e-6)
    m = jnp.dot(hn2.astype(bf16), fc1w_ref[0], preferred_element_type=f32) + fc1b_ref[0]
    # TODO(synk): tanh-approx GELU (EUP op) instead of timm's exact erf -> tiny numeric delta.
    m = jax.nn.gelu(m, approximate=True)
    h = h + jnp.dot(m.astype(bf16), fc2w_ref[0], preferred_element_type=f32) + fc2b_ref[0]

    h_sc[...] = h                                 # carry residual stream to next depth step

    # ---- tail: final LN on cls/dist rows, pooling, head LN + Linear ----
    @pl.when(d == DEPTH - 1)
    def _():
        x2 = h[0:2, :]                                            # cls/dist rows only
        xn = _ln_rows(x2, normg_ref[...], normb_ref[...], 1e-6)
        pooled = 0.5 * (xn[0:1, :] + xn[1:2, :])                  # (1, D)
        zn = _ln_rows(pooled, hlng_ref[...], hlnb_ref[...], 1e-5)  # mlp_head LayerNorm
        logits_ref[0] = (jnp.dot(zn, headw_ref[...], preferred_element_type=jnp.float32)
                         + headb_ref[...])


# --------------------------------- pallas_call wrapper ---------------------------------
def ast_stack(patches_pad, fp):
    B = patches_pad.shape[0]
    D = EMBED_DIM

    per_b = lambda b, d: (b, 0, 0)        # per-batch-element block, constant over depth
    per_d = lambda b, d: (d, 0, 0)        # per-depth weight block (prefetches under compute)
    const2 = lambda b, d: (0, 0)          # shared 2-D parameter

    in_specs = [
        pl.BlockSpec((1, SEQ_PAD, PATCH * PATCH), per_b),   # patches (bf16)
        pl.BlockSpec((PATCH * PATCH, D), const2),           # patch-embed weight (bf16)
        pl.BlockSpec((SEQ_PAD, D), const2),                 # pos_eff (f32)
        pl.BlockSpec((1, SEQ_PAD), const2),                 # additive key mask (f32)
        pl.BlockSpec((1, 1, D), per_d),                     # ln1_g
        pl.BlockSpec((1, 1, D), per_d),                     # ln1_b
        pl.BlockSpec((1, D, 3 * D), per_d),                 # qkv_w (bf16)
        pl.BlockSpec((1, 1, 3 * D), per_d),                 # qkv_b
        pl.BlockSpec((1, D, D), per_d),                     # proj_w (bf16)
        pl.BlockSpec((1, 1, D), per_d),                     # proj_b
        pl.BlockSpec((1, 1, D), per_d),                     # ln2_g
        pl.BlockSpec((1, 1, D), per_d),                     # ln2_b
        pl.BlockSpec((1, D, MLP_DIM), per_d),               # fc1_w (bf16)
        pl.BlockSpec((1, 1, MLP_DIM), per_d),               # fc1_b
        pl.BlockSpec((1, MLP_DIM, D), per_d),               # fc2_w (bf16)
        pl.BlockSpec((1, 1, D), per_d),                     # fc2_b
        pl.BlockSpec((1, D), const2),                       # norm_g
        pl.BlockSpec((1, D), const2),                       # norm_b
        pl.BlockSpec((1, D), const2),                       # head_ln_g
        pl.BlockSpec((1, D), const2),                       # head_ln_b
        pl.BlockSpec((D, LABEL_DIM), const2),               # head_w
        pl.BlockSpec((1, LABEL_DIM), const2),               # head_b
    ]
    out = pl.pallas_call(
        _ast_kernel,
        out_shape=jax.ShapeDtypeStruct((B, 1, LABEL_DIM), jnp.float32),
        grid=(B, DEPTH),
        in_specs=in_specs,
        out_specs=pl.BlockSpec((1, 1, LABEL_DIM), lambda b, d: (b, 0, 0)),
        scratch_shapes=[pltpu.VMEM((SEQ_PAD, EMBED_DIM), jnp.float32)],
        compiler_params=pltpu.CompilerParams(
            dimension_semantics=("parallel", "arbitrary")),
    )(patches_pad, fp["wpatch"], fp["pos_eff"], fp["key_bias"],
      fp["ln1_g"], fp["ln1_b"], fp["qkv_w"], fp["qkv_b"],
      fp["proj_w"], fp["proj_b"], fp["ln2_g"], fp["ln2_b"],
      fp["fc1_w"], fp["fc1_b"], fp["fc2_w"], fp["fc2_b"],
      fp["norm_g"], fp["norm_b"], fp["head_ln_g"], fp["head_ln_b"],
      fp["head_w"], fp["head_b"])
    return out.reshape(B, LABEL_DIM)


# ------------------------------- parameters (synthetic) --------------------------------
def init_params(key):
    ks = jax.random.split(key, 8)

    def nrm(k, shape):
        return 0.02 * jax.random.normal(k, shape, jnp.float32)

    p = {
        "patch_w": nrm(ks[0], (EMBED_DIM, 1, PATCH, PATCH)),   # conv weight (D, 1, 16, 16)
        "patch_b": jnp.zeros((EMBED_DIM,), jnp.float32),
        "cls": nrm(ks[1], (1, 1, EMBED_DIM)),
        "dist": nrm(ks[2], (1, 1, EMBED_DIM)),
        "pos": nrm(ks[3], (1, SEQ, EMBED_DIM)),
        "norm_g": jnp.ones((EMBED_DIM,), jnp.float32),
        "norm_b": jnp.zeros((EMBED_DIM,), jnp.float32),
        "head_ln_g": jnp.ones((EMBED_DIM,), jnp.float32),
        "head_ln_b": jnp.zeros((EMBED_DIM,), jnp.float32),
        "head_w": nrm(ks[4], (EMBED_DIM, LABEL_DIM)),
        "head_b": jnp.zeros((LABEL_DIM,), jnp.float32),
    }
    blocks = []
    bkeys = jax.random.split(ks[5], DEPTH)
    for d in range(DEPTH):
        bk = jax.random.split(bkeys[d], 4)
        blocks.append(dict(
            ln1_g=jnp.ones((EMBED_DIM,), jnp.float32),
            ln1_b=jnp.zeros((EMBED_DIM,), jnp.float32),
            qkv_w=nrm(bk[0], (EMBED_DIM, 3 * EMBED_DIM)),
            qkv_b=jnp.zeros((3 * EMBED_DIM,), jnp.float32),
            proj_w=nrm(bk[1], (EMBED_DIM, EMBED_DIM)),
            proj_b=jnp.zeros((EMBED_DIM,), jnp.float32),
            ln2_g=jnp.ones((EMBED_DIM,), jnp.float32),
            ln2_b=jnp.zeros((EMBED_DIM,), jnp.float32),
            fc1_w=nrm(bk[2], (EMBED_DIM, MLP_DIM)),
            fc1_b=jnp.zeros((MLP_DIM,), jnp.float32),
            fc2_w=nrm(bk[3], (MLP_DIM, EMBED_DIM)),
            fc2_b=jnp.zeros((EMBED_DIM,), jnp.float32),
        ))
    p["blocks"] = blocks
    return p


def prepare_params(p):
    """One-time prep: stack per-depth weights, cast matmul weights to bf16, fold
    cls/dist/pos/conv-bias into pos_eff, build the additive key-mask row."""
    bf16, f32 = jnp.bfloat16, jnp.float32
    pos = p["pos"][0]
    pos_eff = jnp.concatenate(
        [p["cls"][0] + pos[0:1],                                      # row 0
         p["dist"][0] + pos[1:2],                                     # row 1
         pos[2:] + p["patch_b"][None, :],                             # rows 2..109
         jnp.zeros((SEQ_PAD - SEQ, EMBED_DIM), f32)], axis=0)         # rows 110..127
    key_bias = jnp.where(jnp.arange(SEQ_PAD) < SEQ, 0.0, -1e30)
    key_bias = key_bias.astype(f32).reshape(1, SEQ_PAD)

    stack = lambda name: jnp.stack([b[name] for b in p["blocks"]], axis=0)
    return dict(
        wpatch=p["patch_w"].reshape(EMBED_DIM, PATCH * PATCH).T.astype(bf16),
        pos_eff=pos_eff,
        key_bias=key_bias,
        ln1_g=stack("ln1_g").reshape(DEPTH, 1, EMBED_DIM),
        ln1_b=stack("ln1_b").reshape(DEPTH, 1, EMBED_DIM),
        qkv_w=stack("qkv_w").astype(bf16),
        qkv_b=stack("qkv_b").reshape(DEPTH, 1, 3 * EMBED_DIM),
        proj_w=stack("proj_w").astype(bf16),
        proj_b=stack("proj_b").reshape(DEPTH, 1, EMBED_DIM),
        ln2_g=stack("ln2_g").reshape(DEPTH, 1, EMBED_DIM),
        ln2_b=stack("ln2_b").reshape(DEPTH, 1, EMBED_DIM),
        fc1_w=stack("fc1_w").astype(bf16),
        fc1_b=stack("fc1_b").reshape(DEPTH, 1, MLP_DIM),
        fc2_w=stack("fc2_w").astype(bf16),
        fc2_b=stack("fc2_b").reshape(DEPTH, 1, EMBED_DIM),
        norm_g=p["norm_g"].reshape(1, EMBED_DIM),
        norm_b=p["norm_b"].reshape(1, EMBED_DIM),
        head_ln_g=p["head_ln_g"].reshape(1, EMBED_DIM),
        head_ln_b=p["head_ln_b"].reshape(1, EMBED_DIM),
        head_w=p["head_w"],
        head_b=p["head_b"].reshape(1, LABEL_DIM),
    )


# ---------------------------------------- forward --------------------------------------
def ast_forward(fparams, x):
    """x: (B, 100, 128) -> logits (B, 2). Mirrors ASTModel.forward (eval mode, dropout=0)."""
    B = x.shape[0]
    # x.unsqueeze(1).transpose(2, 3): (B, 1, 128, 100)
    img = jnp.transpose(x, (0, 2, 1))[:, None, :, :].astype(jnp.bfloat16)

    # im2col for Conv2d(1, D, kernel=16, stride=10) via strided patch extraction.
    # TODO(synk): overlapping-window extraction stays as XLA glue (strided identity conv);
    # the patch-embed matmul + token/pos assembly run inside the fused Pallas kernel.
    pat = jax.lax.conv_general_dilated_patches(
        img, (PATCH, PATCH), (STRIDE, STRIDE), "VALID")          # (B, 256, 12, 9)
    patches = jnp.transpose(pat, (0, 2, 3, 1)).reshape(B, NUM_PATCHES, PATCH * PATCH)
    patches_pad = jnp.concatenate(
        [jnp.zeros((B, 2, PATCH * PATCH), jnp.bfloat16),          # cls/dist rows
         patches,
         jnp.zeros((B, SEQ_PAD - SEQ, PATCH * PATCH), jnp.bfloat16)], axis=1)

    return ast_stack(patches_pad, fparams)                        # (B, 2)


# ------------------------------------------ main ----------------------------------------
if __name__ == "__main__":
    key = jax.random.PRNGKey(0)
    pkey, xkey = jax.random.split(key)
    params = init_params(pkey)
    fparams = prepare_params(params)          # one-time parameter prep (hoisted off fwd path)

    B = 2
    x = jax.random.normal(xkey, (B, INPUT_TDIM, INPUT_FDIM), jnp.float32)

    fwd = jax.jit(ast_forward)
    out = jax.block_until_ready(fwd(fparams, x))
    assert out.shape == (B, LABEL_DIM), out.shape
    assert bool(jnp.all(jnp.isfinite(out)))
    print("KERNEL_OK")
</pallas_src>

<mosaic_0001>
module attributes {stable_mosaic.version = 11 : i64} {
  func.func @_ast_kernel(%arg0: i32, %arg1: i32, %arg2: memref<1x128x256xbf16, #tpu.memory_space<vmem>>, %arg3: memref<256x192xbf16, #tpu.memory_space<vmem>>, %arg4: memref<128x192xf32, #tpu.memory_space<vmem>>, %arg5: memref<1x128xf32, #tpu.memory_space<vmem>>, %arg6: memref<1x1x192xf32, #tpu.memory_space<vmem>>, %arg7: memref<1x1x192xf32, #tpu.memory_space<vmem>>, %arg8: memref<1x192x576xbf16, #tpu.memory_space<vmem>>, %arg9: memref<1x1x576xf32, #tpu.memory_space<vmem>>, %arg10: memref<1x192x192xbf16, #tpu.memory_space<vmem>>, %arg11: memref<1x1x192xf32, #tpu.memory_space<vmem>>, %arg12: memref<1x1x192xf32, #tpu.memory_space<vmem>>, %arg13: memref<1x1x192xf32, #tpu.memory_space<vmem>>, %arg14: memref<1x192x768xbf16, #tpu.memory_space<vmem>>, %arg15: memref<1x1x768xf32, #tpu.memory_space<vmem>>, %arg16: memref<1x768x192xbf16, #tpu.memory_space<vmem>>, %arg17: memref<1x1x192xf32, #tpu.memory_space<vmem>>, %arg18: memref<1x192xf32, #tpu.memory_space<vmem>>, %arg19: memref<1x192xf32, #tpu.memory_space<vmem>>, %arg20: memref<1x192xf32, #tpu.memory_space<vmem>>, %arg21: memref<1x192xf32, #tpu.memory_space<vmem>>, %arg22: memref<192x2xf32, #tpu.memory_space<vmem>>, %arg23: memref<1x2xf32, #tpu.memory_space<vmem>>, %arg24: memref<1x1x2xf32, #tpu.memory_space<vmem>>, %arg25: memref<128x192xf32, #tpu.memory_space<vmem>>) attributes {dimension_semantics = [#tpu.dimension_semantics<parallel>, #tpu.dimension_semantics<arbitrary>], iteration_bounds = array<i64: 2, 2>, scalar_prefetch = 0 : i64, scratch_operands = 1 : i64, tpu.core_type = #tpu.core_type<tc>, window_params = [{transform_indices = @transform_0, window_bounds = array<i64: 1, 128, 256>}, {pipeline_mode = #tpu.pipeline_mode<synchronous>, transform_indices = @transform_1, window_bounds = array<i64: 256, 192>}, {pipeline_mode = #tpu.pipeline_mode<synchronous>, transform_indices = @transform_2, window_bounds = array<i64: 128, 192>}, {pipeline_mode = #tpu.pipeline_mode<synchronous>, transform_indices = @transform_3, window_bounds = array<i64: 1, 128>}, {transform_indices = @transform_4, window_bounds = array<i64: 1, 1, 192>}, {transform_indices = @transform_5, window_bounds = array<i64: 1, 1, 192>}, {transform_indices = @transform_6, window_bounds = array<i64: 1, 192, 576>}, {transform_indices = @transform_7, window_bounds = array<i64: 1, 1, 576>}, {transform_indices = @transform_8, window_bounds = array<i64: 1, 192, 192>}, {transform_indices = @transform_9, window_bounds = array<i64: 1, 1, 192>}, {transform_indices = @transform_10, window_bounds = array<i64: 1, 1, 192>}, {transform_indices = @transform_11, window_bounds = array<i64: 1, 1, 192>}, {transform_indices = @transform_12, window_bounds = array<i64: 1, 192, 768>}, {transform_indices = @transform_13, window_bounds = array<i64: 1, 1, 768>}, {transform_indices = @transform_14, window_bounds = array<i64: 1, 768, 192>}, {transform_indices = @transform_15, window_bounds = array<i64: 1, 1, 192>}, {pipeline_mode = #tpu.pipeline_mode<synchronous>, transform_indices = @transform_16, window_bounds = array<i64: 1, 192>}, {pipeline_mode = #tpu.pipeline_mode<synchronous>, transform_indices = @transform_17, window_bounds = array<i64: 1, 192>}, {pipeline_mode = #tpu.pipeline_mode<synchronous>, transform_indices = @transform_18, window_bounds = array<i64: 1, 192>}, {pipeline_mode = #tpu.pipeline_mode<synchronous>, transform_indices = @transform_19, window_bounds = array<i64: 1, 192>}, {pipeline_mode = #tpu.pipeline_mode<synchronous>, transform_indices = @transform_20, window_bounds = array<i64: 192, 2>}, {pipeline_mode = #tpu.pipeline_mode<synchronous>, transform_indices = @transform_21, window_bounds = array<i64: 1, 2>}, {transform_indices = @transform_22, window_bounds = array<i64: 1, 1, 2>}]} {
    %c0_i32 = arith.constant 0 : i32
    %0 = arith.cmpi eq, %arg1, %c0_i32 : i32
    %1 = arith.extui %0 : i1 to i32
    %c0_i32_0 = arith.constant 0 : i32
    %2 = arith.cmpi ne, %1, %c0_i32_0 : i32
    scf.if %2 {
      %c0_75 = arith.constant 0 : index
      %c0_76 = arith.constant 0 : index
      %c0_77 = arith.constant 0 : index
      %168 = vector.load %arg2[%c0_75, %c0_76, %c0_77] : memref<1x128x256xbf16, #tpu.memory_space<vmem>>, vector<1x128x256xbf16>
      %169 = vector.shape_cast %168 : vector<1x128x256xbf16> to vector<128x256xbf16>
      %c0_78 = arith.constant 0 : index
      %c0_79 = arith.constant 0 : index
      %170 = vector.load %arg3[%c0_78, %c0_79] : memref<256x192xbf16, #tpu.memory_space<vmem>>, vector<256x192xbf16>
      %cst_80 = arith.constant dense<0.000000e+00> : vector<128x192xf32>
      %171 = tpu.matmul %169, %170, %cst_80 {dimension_numbers = #tpu.dot_dimension_numbers<[1], [0], [0], [1], [0, 0, 1, 1], [], []>} : vector<128x256xbf16>, vector<256x192xbf16>, vector<128x192xf32> -> vector<128x192xf32>
      %c0_81 = arith.constant 0 : index
      %c0_82 = arith.constant 0 : index
      %172 = vector.load %arg4[%c0_81, %c0_82] : memref<128x192xf32, #tpu.memory_space<vmem>>, vector<128x192xf32>
      %173 = arith.addf %171, %172 : vector<128x192xf32>
      %c0_83 = arith.constant 0 : index
      %c0_84 = arith.constant 0 : index
      %174 = vector.load %arg25[%c0_83, %c0_84] : memref<128x192xf32, #tpu.memory_space<vmem>>, vector<128x192xf32>
      tpu.vector_store %arg25[%c0_83, %c0_84], %173 {strides = array<i32>} : memref<128x192xf32, #tpu.memory_space<vmem>>, vector<128x192xf32>,
    } else {
    }
    %c0 = arith.constant 0 : index
    %c0_1 = arith.constant 0 : index
    %3 = vector.load %arg25[%c0, %c0_1] : memref<128x192xf32, #tpu.memory_space<vmem>>, vector<128x192xf32>
    %c0_2 = arith.constant 0 : index
    %c0_3 = arith.constant 0 : index
    %c0_4 = arith.constant 0 : index
    %4 = vector.load %arg6[%c0_2, %c0_3, %c0_4] : memref<1x1x192xf32, #tpu.memory_space<vmem>>, vector<1x1x192xf32>
    %5 = vector.shape_cast %4 : vector<1x1x192xf32> to vector<1x192xf32>
    %c0_5 = arith.constant 0 : index
    %c0_6 = arith.constant 0 : index
    %c0_7 = arith.constant 0 : index
    %6 = vector.load %arg7[%c0_5, %c0_6, %c0_7] : memref<1x1x192xf32, #tpu.memory_space<vmem>>, vector<1x1x192xf32>
    %7 = vector.shape_cast %6 : vector<1x1x192xf32> to vector<1x192xf32>
    %cst = arith.constant dense<0.000000e+00> : vector<128xf32>
    %8 = vector.multi_reduction <add>, %3, %cst [1] : vector<128x192xf32> to vector<128xf32>
    %9 = vector.shape_cast %8 : vector<128xf32> to vector<128x1xf32>
    %cst_8 = arith.constant 1.920000e+02 : f32
    %10 = vector.broadcast %cst_8 : f32 to vector<128x1xf32>
    %11 = arith.divf %9, %10 : vector<128x1xf32>
    %12 = vector.broadcast %11 : vector<128x1xf32> to vector<128x192xf32>
    %13 = arith.subf %3, %12 : vector<128x192xf32>
    %14 = arith.mulf %13, %13 : vector<128x192xf32>
    %cst_9 = arith.constant dense<0.000000e+00> : vector<128xf32>
    %15 = vector.multi_reduction <add>, %14, %cst_9 [1] : vector<128x192xf32> to vector<128xf32>
    %16 = vector.shape_cast %15 : vector<128xf32> to vector<128x1xf32>
    %cst_10 = arith.constant 1.920000e+02 : f32
    %17 = vector.broadcast %cst_10 : f32 to vector<128x1xf32>
    %18 = arith.divf %16, %17 : vector<128x1xf32>
    %cst_11 = arith.constant 9.99999997E-7 : f32
    %19 = vector.broadcast %cst_11 : f32 to vector<128x1xf32>
    %20 = arith.addf %18, %19 : vector<128x1xf32>
    %21 = math.rsqrt %20 : vector<128x1xf32>
    %22 = vector.broadcast %21 : vector<128x1xf32> to vector<128x192xf32>
    %23 = arith.mulf %13, %22 : vector<128x192xf32>
    %24 = vector.broadcast %5 : vector<1x192xf32> to vector<128x192xf32>
    %25 = arith.mulf %23, %24 : vector<128x192xf32>
    %26 = vector.broadcast %7 : vector<1x192xf32> to vector<128x192xf32>
    %27 = arith.addf %25, %26 : vector<128x192xf32>
    %28 = arith.truncf %27 : vector<128x192xf32> to vector<128x192xbf16>
    %c0_12 = arith.constant 0 : index
    %c0_13 = arith.constant 0 : index
    %c0_14 = arith.constant 0 : index
    %29 = vector.load %arg8[%c0_12, %c0_13, %c0_14] : memref<1x192x576xbf16, #tpu.memory_space<vmem>>, vector<1x192x576xbf16>
    %30 = vector.shape_cast %29 : vector<1x192x576xbf16> to vector<192x576xbf16>
    %cst_15 = arith.constant dense<0.000000e+00> : vector<128x576xf32>
    %31 = tpu.matmul %28, %30, %cst_15 {dimension_numbers = #tpu.dot_dimension_numbers<[1], [0], [0], [1], [0, 0, 1, 1], [], []>} : vector<128x192xbf16>, vector<192x576xbf16>, vector<128x576xf32> -> vector<128x576xf32>
    %c0_16 = arith.constant 0 : index
    %c0_17 = arith.constant 0 : index
    %c0_18 = arith.constant 0 : index
    %32 = vector.load %arg9[%c0_16, %c0_17, %c0_18] : memref<1x1x576xf32, #tpu.memory_space<vmem>>, vector<1x1x576xf32>
    %33 = vector.shape_cast %32 : vector<1x1x576xf32> to vector<1x576xf32>
    %34 = vector.broadcast %33 : vector<1x576xf32> to vector<128x576xf32>
    %35 = arith.addf %31, %34 : vector<128x576xf32>
    %36 = arith.truncf %35 : vector<128x576xf32> to vector<128x576xbf16>
    %c0_19 = arith.constant 0 : index
    %c0_20 = arith.constant 0 : index
    %37 = vector.load %arg5[%c0_19, %c0_20] : memref<1x128xf32, #tpu.memory_space<vmem>>, vector<1x128xf32>
    %38 = vector.extract_strided_slice %36 {offsets = [0, 0], sizes = [128, 64], strides = [1, 1]} : vector<128x576xbf16> to vector<128x64xbf16>
    %39 = vector.extract_strided_slice %36 {offsets = [0, 192], sizes = [128, 64], strides = [1, 1]} : vector<128x576xbf16> to vector<128x64xbf16>
    %40 = vector.extract_strided_slice %36 {offsets = [0, 384], sizes = [128, 64], strides = [1, 1]} : vector<128x576xbf16> to vector<128x64xbf16>
    %cst_21 = arith.constant dense<0.000000e+00> : vector<128x128xf32>
    %41 = tpu.matmul %38, %39, %cst_21 {dimension_numbers = #tpu.dot_dimension_numbers<[1], [1], [0], [0], [0, 0, 1, 0], [], []>} : vector<128x64xbf16>, vector<128x64xbf16>, vector<128x128xf32> -> vector<128x128xf32>
    %cst_22 = arith.constant 1.250000e-01 : f32
    %42 = vector.broadcast %cst_22 : f32 to vector<128x128xf32>
    %43 = arith.mulf %41, %42 : vector<128x128xf32>
    %44 = vector.broadcast %37 : vector<1x128xf32> to vector<128x128xf32>
    %45 = arith.addf %43, %44 : vector<128x128xf32>
    %cst_23 = arith.constant dense<0xFF800000> : vector<128xf32>
    %46 = vector.multi_reduction <maximumf>, %45, %cst_23 [1] : vector<128x128xf32> to vector<128xf32>
    %47 = vector.shape_cast %46 : vector<128xf32> to vector<128x1xf32>
    %48 = vector.broadcast %47 : vector<128x1xf32> to vector<128x128xf32>
    %49 = arith.subf %45, %48 : vector<128x128xf32>
    %50 = math.exp %49 : vector<128x128xf32>
    %cst_24 = arith.constant dense<0.000000e+00> : vector<128xf32>
    %51 = vector.multi_reduction <add>, %50, %cst_24 [1] : vector<128x128xf32> to vector<128xf32>
    %52 = vector.shape_cast %51 : vector<128xf32> to vector<128x1xf32>
    %53 = tpu.reciprocal %52 {approx = true} : vector<128x1xf32> -> vector<128x1xf32>
    %54 = vector.broadcast %53 : vector<128x1xf32> to vector<128x128xf32>
    %55 = arith.mulf %50, %54 : vector<128x128xf32>
    %56 = arith.truncf %55 : vector<128x128xf32> to vector<128x128xbf16>
    %cst_25 = arith.constant dense<0.000000e+00> : vector<128x64xf32>
    %57 = tpu.matmul %56, %40, %cst_25 {dimension_numbers = #tpu.dot_dimension_numbers<[1], [0], [0], [1], [0, 0, 1, 1], [], []>} : vector<128x128xbf16>, vector<128x64xbf16>, vector<128x64xf32> -> vector<128x64xf32>
    %58 = arith.truncf %57 : vector<128x64xf32> to vector<128x64xbf16>
    %59 = vector.extract_strided_slice %36 {offsets = [0, 64], sizes = [128, 64], strides = [1, 1]} : vector<128x576xbf16> to vector<128x64xbf16>
    %60 = vector.extract_strided_slice %36 {offsets = [0, 256], sizes = [128, 64], strides = [1, 1]} : vector<128x576xbf16> to vector<128x64xbf16>
    %61 = vector.extract_strided_slice %36 {offsets = [0, 448], sizes = [128, 64], strides = [1, 1]} : vector<128x576xbf16> to vector<128x64xbf16>
    %cst_26 = arith.constant dense<0.000000e+00> : vector<128x128xf32>
    %62 = tpu.matmul %59, %60, %cst_26 {dimension_numbers = #tpu.dot_dimension_numbers<[1], [1], [0], [0], [0, 0, 1, 0], [], []>} : vector<128x64xbf16>, vector<128x64xbf16>, vector<128x128xf32> -> vector<128x128xf32>
    %cst_27 = arith.constant 1.250000e-01 : f32
    %63 = vector.broadcast %cst_27 : f32 to vector<128x128xf32>
    %64 = arith.mulf %62, %63 : vector<128x128xf32>
    %65 = vector.broadcast %37 : vector<1x128xf32> to vector<128x128xf32>
    %66 = arith.addf %64, %65 : vector<128x128xf32>
    %cst_28 = arith.constant dense<0xFF800000> : vector<128xf32>
    %67 = vector.multi_reduction <maximumf>, %66, %cst_28 [1] : vector<128x128xf32> to vector<128xf32>
    %68 = vector.shape_cast %67 : vector<128xf32> to vector<128x1xf32>
    %69 = vector.broadcast %68 : vector<128x1xf32> to vector<128x128xf32>
    %70 = arith.subf %66, %69 : vector<128x128xf32>
    %71 = math.exp %70 : vector<128x128xf32>
    %cst_29 = arith.constant dense<0.000000e+00> : vector<128xf32>
    %72 = vector.multi_reduction <add>, %71, %cst_29 [1] : vector<128x128xf32> to vector<128xf32>
    %73 = vector.shape_cast %72 : vector<128xf32> to vector<128x1xf32>
    %74 = tpu.reciprocal %73 {approx = true} : vector<128x1xf32> -> vector<128x1xf32>
    %75 = vector.broadcast %74 : vector<128x1xf32> to vector<128x128xf32>
    %76 = arith.mulf %71, %75 : vector<128x128xf32>
    %77 = arith.truncf %76 : vector<128x128xf32> to vector<128x128xbf16>
    %cst_30 = arith.constant dense<0.000000e+00> : vector<128x64xf32>
    %78 = tpu.matmul %77, %61, %cst_30 {dimension_numbers = #tpu.dot_dimension_numbers<[1], [0], [0], [1], [0, 0, 1, 1], [], []>} : vector<128x128xbf16>, vector<128x64xbf16>, vector<128x64xf32> -> vector<128x64xf32>
    %79 = arith.truncf %78 : vector<128x64xf32> to vector<128x64xbf16>
    %80 = vector.extract_strided_slice %36 {offsets = [0, 128], sizes = [128, 64], strides = [1, 1]} : vector<128x576xbf16> to vector<128x64xbf16>
    %81 = vector.extract_strided_slice %36 {offsets = [0, 320], sizes = [128, 64], strides = [1, 1]} : vector<128x576xbf16> to vector<128x64xbf16>
    %82 = vector.extract_strided_slice %36 {offsets = [0, 512], sizes = [128, 64], strides = [1, 1]} : vector<128x576xbf16> to vector<128x64xbf16>
    %cst_31 = arith.constant dense<0.000000e+00> : vector<128x128xf32>
    %83 = tpu.matmul %80, %81, %cst_31 {dimension_numbers = #tpu.dot_dimension_numbers<[1], [1], [0], [0], [0, 0, 1, 0], [], []>} : vector<128x64xbf16>, vector<128x64xbf16>, vector<128x128xf32> -> vector<128x128xf32>
    %cst_32 = arith.constant 1.250000e-01 : f32
    %84 = vector.broadcast %cst_32 : f32 to vector<128x128xf32>
    %85 = arith.mulf %83, %84 : vector<128x128xf32>
    %86 = vector.broadcast %37 : vector<1x128xf32> to vector<128x128xf32>
    %87 = arith.addf %85, %86 : vector<128x128xf32>
    %cst_33 = arith.constant dense<0xFF800000> : vector<128xf32>
    %88 = vector.multi_reduction <maximumf>, %87, %cst_33 [1] : vector<128x128xf32> to vector<128xf32>
    %89 = vector.shape_cast %88 : vector<128xf32> to vector<128x1xf32>
    %90 = vector.broadcast %89 : vector<128x1xf32> to vector<128x128xf32>
    %91 = arith.subf %87, %90 : vector<128x128xf32>
    %92 = math.exp %91 : vector<128x128xf32>
    %cst_34 = arith.constant dense<0.000000e+00> : vector<128xf32>
    %93 = vector.multi_reduction <add>, %92, %cst_34 [1] : vector<128x128xf32> to vector<128xf32>
    %94 = vector.shape_cast %93 : vector<128xf32> to vector<128x1xf32>
    %95 = tpu.reciprocal %94 {approx = true} : vector<128x1xf32> -> vector<128x1xf32>
    %96 = vector.broadcast %95 : vector<128x1xf32> to vector<128x128xf32>
    %97 = arith.mulf %92, %96 : vector<128x128xf32>
    %98 = arith.truncf %97 : vector<128x128xf32> to vector<128x128xbf16>
    %cst_35 = arith.constant dense<0.000000e+00> : vector<128x64xf32>
    %99 = tpu.matmul %98, %82, %cst_35 {dimension_numbers = #tpu.dot_dimension_numbers<[1], [0], [0], [1], [0, 0, 1, 1], [], []>} : vector<128x128xbf16>, vector<128x64xbf16>, vector<128x64xf32> -> vector<128x64xf32>
    %100 = arith.truncf %99 : vector<128x64xf32> to vector<128x64xbf16>
    %101 = tpu.concatenate %58, %79, %100 in 1 : vector<128x64xbf16>, vector<128x64xbf16>, vector<128x64xbf16> -> vector<128x192xbf16>
    %c0_36 = arith.constant 0 : index
    %c0_37 = arith.constant 0 : index
    %c0_38 = arith.constant 0 : index
    %102 = vector.load %arg10[%c0_36, %c0_37, %c0_38] : memref<1x192x192xbf16, #tpu.memory_space<vmem>>, vector<1x192x192xbf16>
    %103 = vector.shape_cast %102 : vector<1x192x192xbf16> to vector<192x192xbf16>
    %cst_39 = arith.constant dense<0.000000e+00> : vector<128x192xf32>
    %104 = tpu.matmul %101, %103, %cst_39 {dimension_numbers = #tpu.dot_dimension_numbers<[1], [0], [0], [1], [0, 0, 1, 1], [], []>} : vector<128x192xbf16>, vector<192x192xbf16>, vector<128x192xf32> -> vector<128x192xf32>
    %105 = arith.addf %3, %104 : vector<128x192xf32>
    %c0_40 = arith.constant 0 : index
    %c0_41 = arith.constant 0 : index
    %c0_42 = arith.constant 0 : index
    %106 = vector.load %arg11[%c0_40, %c0_41, %c0_42] : memref<1x1x192xf32, #tpu.memory_space<vmem>>, vector<1x1x192xf32>
    %107 = vector.shape_cast %106 : vector<1x1x192xf32> to vector<1x192xf32>
    %108 = vector.broadcast %107 : vector<1x192xf32> to vector<128x192xf32>
    %109 = arith.addf %105, %108 : vector<128x192xf32>
    %c0_43 = arith.constant 0 : index
    %c0_44 = arith.constant 0 : index
    %c0_45 = arith.constant 0 : index
    %110 = vector.load %arg12[%c0_43, %c0_44, %c0_45] : memref<1x1x192xf32, #tpu.memory_space<vmem>>, vector<1x1x192xf32>
    %111 = vector.shape_cast %110 : vector<1x1x192xf32> to vector<1x192xf32>
    %c0_46 = arith.constant 0 : index
    %c0_47 = arith.constant 0 : index
    %c0_48 = arith.constant 0 : index
    %112 = vector.load %arg13[%c0_46, %c0_47, %c0_48] : memref<1x1x192xf32, #tpu.memory_space<vmem>>, vector<1x1x192xf32>
    %113 = vector.shape_cast %112 : vector<1x1x192xf32> to vector<1x192xf32>
    %cst_49 = arith.constant dense<0.000000e+00> : vector<128xf32>
    %114 = vector.multi_reduction <add>, %109, %cst_49 [1] : vector<128x192xf32> to vector<128xf32>
    %115 = vector.shape_cast %114 : vector<128xf32> to vector<128x1xf32>
    %cst_50 = arith.constant 1.920000e+02 : f32
    %116 = vector.broadcast %cst_50 : f32 to vector<128x1xf32>
    %117 = arith.divf %115, %116 : vector<128x1xf32>
    %118 = vector.broadcast %117 : vector<128x1xf32> to vector<128x192xf32>
    %119 = arith.subf %109, %118 : vector<128x192xf32>
    %120 = arith.mulf %119, %119 : vector<128x192xf32>
    %cst_51 = arith.constant dense<0.000000e+00> : vector<128xf32>
    %121 = vector.multi_reduction <add>, %120, %cst_51 [1] : vector<128x192xf32> to vector<128xf32>
    %122 = vector.shape_cast %121 : vector<128xf32> to vector<128x1xf32>
    %cst_52 = arith.constant 1.920000e+02 : f32
    %123 = vector.broadcast %cst_52 : f32 to vector<128x1xf32>
    %124 = arith.divf %122, %123 : vector<128x1xf32>
    %cst_53 = arith.constant 9.99999997E-7 : f32
    %125 = vector.broadcast %cst_53 : f32 to vector<128x1xf32>
    %126 = arith.addf %124, %125 : vector<128x1xf32>
    %127 = math.rsqrt %126 : vector<128x1xf32>
    %128 = vector.broadcast %127 : vector<128x1xf32> to vector<128x192xf32>
    %129 = arith.mulf %119, %128 : vector<128x192xf32>
    %130 = vector.broadcast %111 : vector<1x192xf32> to vector<128x192xf32>
    %131 = arith.mulf %129, %130 : vector<128x192xf32>
    %132 = vector.broadcast %113 : vector<1x192xf32> to vector<128x192xf32>
    %133 = arith.addf %131, %132 : vector<128x192xf32>
    %134 = arith.truncf %133 : vector<128x192xf32> to vector<128x192xbf16>
    %c0_54 = arith.constant 0 : index
    %c0_55 = arith.constant 0 : index
    %c0_56 = arith.constant 0 : index
    %135 = vector.load %arg14[%c0_54, %c0_55, %c0_56] : memref<1x192x768xbf16, #tpu.memory_space<vmem>>, vector<1x192x768xbf16>
    %136 = vector.shape_cast %135 : vector<1x192x768xbf16> to vector<192x768xbf16>
    %cst_57 = arith.constant dense<0.000000e+00> : vector<128x768xf32>
    %137 = tpu.matmul %134, %136, %cst_57 {dimension_numbers = #tpu.dot_dimension_numbers<[1], [0], [0], [1], [0, 0, 1, 1], [], []>} : vector<128x192xbf16>, vector<192x768xbf16>, vector<128x768xf32> -> vector<128x768xf32>
    %c0_58 = arith.constant 0 : index
    %c0_59 = arith.constant 0 : index
    %c0_60 = arith.constant 0 : index
    %138 = vector.load %arg15[%c0_58, %c0_59, %c0_60] : memref<1x1x768xf32, #tpu.memory_space<vmem>>, vector<1x1x768xf32>
    %139 = vector.shape_cast %138 : vector<1x1x768xf32> to vector<1x768xf32>
    %140 = vector.broadcast %139 : vector<1x768xf32> to vector<128x768xf32>
    %141 = arith.addf %137, %140 : vector<128x768xf32>
    %142 = arith.mulf %141, %141 : vector<128x768xf32>
    %143 = arith.mulf %141, %142 : vector<128x768xf32>
    %cst_61 = arith.constant 4.471500e-02 : f32
    %144 = vector.broadcast %cst_61 : f32 to vector<128x768xf32>
    %145 = arith.mulf %144, %143 : vector<128x768xf32>
    %146 = arith.addf %141, %145 : vector<128x768xf32>
    %cst_62 = arith.constant 0.797884583 : f32
    %147 = vector.broadcast %cst_62 : f32 to vector<128x768xf32>
    %148 = arith.mulf %147, %146 : vector<128x768xf32>
    %149 = math.tanh %148 : vector<128x768xf32>
    %cst_63 = arith.constant 1.000000e+00 : f32
    %150 = vector.broadcast %cst_63 : f32 to vector<128x768xf32>
    %151 = arith.addf %150, %149 : vector<128x768xf32>
    %cst_64 = arith.constant 5.000000e-01 : f32
    %152 = vector.broadcast %cst_64 : f32 to vector<128x768xf32>
    %153 = arith.mulf %152, %151 : vector<128x768xf32>
    %154 = arith.mulf %141, %153 : vector<128x768xf32>
    %155 = arith.truncf %154 : vector<128x768xf32> to vector<128x768xbf16>
    %c0_65 = arith.constant 0 : index
    %c0_66 = arith.constant 0 : index
    %c0_67 = arith.constant 0 : index
    %156 = vector.load %arg16[%c0_65, %c0_66, %c0_67] : memref<1x768x192xbf16, #tpu.memory_space<vmem>>, vector<1x768x192xbf16>
    %157 = vector.shape_cast %156 : vector<1x768x192xbf16> to vector<768x192xbf16>
    %cst_68 = arith.constant dense<0.000000e+00> : vector<128x192xf32>
    %158 = tpu.matmul %155, %157, %cst_68 {dimension_numbers = #tpu.dot_dimension_numbers<[1], [0], [0], [1], [0, 0, 1, 1], [], []>} : vector<128x768xbf16>, vector<768x192xbf16>, vector<128x192xf32> -> vector<128x192xf32>
    %159 = arith.addf %109, %158 : vector<128x192xf32>
    %c0_69 = arith.constant 0 : index
    %c0_70 = arith.constant 0 : index
    %c0_71 = arith.constant 0 : index
    %160 = vector.load %arg17[%c0_69, %c0_70, %c0_71] : memref<1x1x192xf32, #tpu.memory_space<vmem>>, vector<1x1x192xf32>
    %161 = vector.shape_cast %160 : vector<1x1x192xf32> to vector<1x192xf32>
    %162 = vector.broadcast %161 : vector<1x192xf32> to vector<128x192xf32>
    %163 = arith.addf %159, %162 : vector<128x192xf32>
    %c0_72 = arith.constant 0 : index
    %c0_73 = arith.constant 0 : index
    %164 = vector.load %arg25[%c0_72, %c0_73] : memref<128x192xf32, #tpu.memory_space<vmem>>, vector<128x192xf32>
    tpu.vector_store %arg25[%c0_72, %c0_73], %163 {strides = array<i32>} : memref<128x192xf32, #tpu.memory_space<vmem>>, vector<128x192xf32>,
    %c1_i32 = arith.constant 1 : i32
    %165 = arith.cmpi eq, %arg1, %c1_i32 : i32
    %166 = arith.extui %165 : i1 to i32
    %c0_i32_74 = arith.constant 0 : i32
    %167 = arith.cmpi ne, %166, %c0_i32_74 : i32
    scf.if %167 {
      %168 = vector.extract_strided_slice %163 {offsets = [0, 0], sizes = [2, 192], strides = [1, 1]} : vector<128x192xf32> to vector<2x192xf32>
      %c0_75 = arith.constant 0 : index
      %c0_76 = arith.constant 0 : index
      %169 = vector.load %arg18[%c0_75, %c0_76] : memref<1x192xf32, #tpu.memory_space<vmem>>, vector<1x192xf32>
      %c0_77 = arith.constant 0 : index
      %c0_78 = arith.constant 0 : index
      %170 = vector.load %arg19[%c0_77, %c0_78] : memref<1x192xf32, #tpu.memory_space<vmem>>, vector<1x192xf32>
      %cst_79 = arith.constant dense<0.000000e+00> : vector<2xf32>
      %171 = vector.multi_reduction <add>, %168, %cst_79 [1] : vector<2x192xf32> to vector<2xf32>
      %172 = vector.shape_cast %171 : vector<2xf32> to vector<2x1xf32>
      %cst_80 = arith.constant 1.920000e+02 : f32
      %173 = vector.broadcast %cst_80 : f32 to vector<2x1xf32>
      %174 = arith.divf %172, %173 : vector<2x1xf32>
      %175 = vector.broadcast %174 : vector<2x1xf32> to vector<2x192xf32>
      %176 = arith.subf %168, %175 : vector<2x192xf32>
      %177 = arith.mulf %176, %176 : vector<2x192xf32>
      %cst_81 = arith.constant dense<0.000000e+00> : vector<2xf32>
      %178 = vector.multi_reduction <add>, %177, %cst_81 [1] : vector<2x192xf32> to vector<2xf32>
      %179 = vector.shape_cast %178 : vector<2xf32> to vector<2x1xf32>
      %cst_82 = arith.constant 1.920000e+02 : f32
      %180 = vector.broadcast %cst_82 : f32 to vector<2x1xf32>
      %181 = arith.divf %179, %180 : vector<2x1xf32>
      %cst_83 = arith.constant 9.99999997E-7 : f32
      %182 = vector.broadcast %cst_83 : f32 to vector<2x1xf32>
      %183 = arith.addf %181, %182 : vector<2x1xf32>
      %184 = math.rsqrt %183 : vector<2x1xf32>
      %185 = vector.broadcast %184 : vector<2x1xf32> to vector<2x192xf32>
      %186 = arith.mulf %176, %185 : vector<2x192xf32>
      %187 = vector.broadcast %169 : vector<1x192xf32> to vector<2x192xf32>
      %188 = arith.mulf %186, %187 : vector<2x192xf32>
      %189 = vector.broadcast %170 : vector<1x192xf32> to vector<2x192xf32>
      %190 = arith.addf %188, %189 : vector<2x192xf32>
      %191 = vector.extract_strided_slice %190 {offsets = [0, 0], sizes = [1, 192], strides = [1, 1]} : vector<2x192xf32> to vector<1x192xf32>
      %192 = vector.extract_strided_slice %190 {offsets = [1, 0], sizes = [1, 192], strides = [1, 1]} : vector<2x192xf32> to vector<1x192xf32>
      %193 = arith.addf %191, %192 : vector<1x192xf32>
      %cst_84 = arith.constant 5.000000e-01 : f32
      %194 = vector.broadcast %cst_84 : f32 to vector<1x192xf32>
      %195 = arith.mulf %194, %193 : vector<1x192xf32>
      %c0_85 = arith.constant 0 : index
      %c0_86 = arith.constant 0 : index
      %196 = vector.load %arg20[%c0_85, %c0_86] : memref<1x192xf32, #tpu.memory_space<vmem>>, vector<1x192xf32>
      %c0_87 = arith.constant 0 : index
      %c0_88 = arith.constant 0 : index
      %197 = vector.load %arg21[%c0_87, %c0_88] : memref<1x192xf32, #tpu.memory_space<vmem>>, vector<1x192xf32>
      %cst_89 = arith.constant dense<0.000000e+00> : vector<1xf32>
      %198 = vector.multi_reduction <add>, %195, %cst_89 [1] : vector<1x192xf32> to vector<1xf32>
      %199 = vector.shape_cast %198 : vector<1xf32> to vector<1x1xf32>
      %cst_90 = arith.constant 1.920000e+02 : f32
      %200 = vector.broadcast %cst_90 : f32 to vector<1x1xf32>
      %201 = arith.divf %199, %200 : vector<1x1xf32>
      %202 = vector.broadcast %201 : vector<1x1xf32> to vector<1x192xf32>
      %203 = arith.subf %195, %202 : vector<1x192xf32>
      %204 = arith.mulf %203, %203 : vector<1x192xf32>
      %cst_91 = arith.constant dense<0.000000e+00> : vector<1xf32>
      %205 = vector.multi_reduction <add>, %204, %cst_91 [1] : vector<1x192xf32> to vector<1xf32>
      %206 = vector.shape_cast %205 : vector<1xf32> to vector<1x1xf32>
      %cst_92 = arith.constant 1.920000e+02 : f32
      %207 = vector.broadcast %cst_92 : f32 to vector<1x1xf32>
      %208 = arith.divf %206, %207 : vector<1x1xf32>
      %cst_93 = arith.constant 9.99999974E-6 : f32
      %209 = vector.broadcast %cst_93 : f32 to vector<1x1xf32>
      %210 = arith.addf %208, %209 : vector<1x1xf32>
      %211 = math.rsqrt %210 : vector<1x1xf32>
      %212 = vector.broadcast %211 : vector<1x1xf32> to vector<1x192xf32>
      %213 = arith.mulf %203, %212 : vector<1x192xf32>
      %214 = arith.mulf %213, %196 : vector<1x192xf32>
      %215 = arith.addf %214, %197 : vector<1x192xf32>
      %c0_94 = arith.constant 0 : index
      %c0_95 = arith.constant 0 : index
      %216 = vector.load %arg22[%c0_94, %c0_95] : memref<192x2xf32, #tpu.memory_space<vmem>>, vector<192x2xf32>
      %cst_96 = arith.constant dense<0.000000e+00> : vector<1x2xf32>
      %217 = tpu.matmul %215, %216, %cst_96 {dimension_numbers = #tpu.dot_dimension_numbers<[1], [0], [0], [1], [0, 0, 1, 1], [], []>} : vector<1x192xf32>, vector<192x2xf32>, vector<1x2xf32> -> vector<1x2xf32>
      %c0_97 = arith.constant 0 : index
      %c0_98 = arith.constant 0 : index
      %218 = vector.load %arg23[%c0_97, %c0_98] : memref<1x2xf32, #tpu.memory_space<vmem>>, vector<1x2xf32>
      %219 = arith.addf %217, %218 : vector<1x2xf32>
      %c0_99 = arith.constant 0 : index
      %c0_100 = arith.constant 0 : index
      %c0_101 = arith.constant 0 : index
      %220 = vector.load %arg24[%c0_99, %c0_100, %c0_101] : memref<1x1x2xf32, #tpu.memory_space<vmem>>, vector<1x1x2xf32>
      %221 = vector.shape_cast %220 : vector<1x1x2xf32> to vector<1x2xf32>
      %222 = vector.shape_cast %219 : vector<1x2xf32> to vector<1x1x2xf32>
      tpu.vector_store %arg24[%c0_99, %c0_100, %c0_101], %222 {strides = array<i32>} : memref<1x1x2xf32, #tpu.memory_space<vmem>>, vector<1x1x2xf32>,
    } else {
    }
    return
  }
  func.func @transform_0(%arg0: i32, %arg1: i32) -> (i32, i32, i32) {
    %c0_i32 = arith.constant 0 : i32
    %c0_i32_0 = arith.constant 0 : i32
    %c0_i32_1 = arith.constant 0 : i32
    return %arg0, %c0_i32, %c0_i32_0 : i32, i32, i32
  }
  func.func @transform_1(%arg0: i32, %arg1: i32) -> (i32, i32) {
    %c0_i32 = arith.constant 0 : i32
    %c0_i32_0 = arith.constant 0 : i32
    %c0_i32_1 = arith.constant 0 : i32
    return %c0_i32, %c0_i32_0 : i32, i32
  }
  func.func @transform_2(%arg0: i32, %arg1: i32) -> (i32, i32) {
    %c0_i32 = arith.constant 0 : i32
    %c0_i32_0 = arith.constant 0 : i32
    %c0_i32_1 = arith.constant 0 : i32
    return %c0_i32, %c0_i32_0 : i32, i32
  }
  func.func @transform_3(%arg0: i32, %arg1: i32) -> (i32, i32) {
    %c0_i32 = arith.constant 0 : i32
    %c0_i32_0 = arith.constant 0 : i32
    %c0_i32_1 = arith.constant 0 : i32
    return %c0_i32, %c0_i32_0 : i32, i32
  }
  func.func @transform_4(%arg0: i32, %arg1: i32) -> (i32, i32, i32) {
    %c0_i32 = arith.constant 0 : i32
    %c0_i32_0 = arith.constant 0 : i32
    %c0_i32_1 = arith.constant 0 : i32
    return %arg1, %c0_i32, %c0_i32_0 : i32, i32, i32
  }
  func.func @transform_5(%arg0: i32, %arg1: i32) -> (i32, i32, i32) {
    %c0_i32 = arith.constant 0 : i32
    %c0_i32_0 = arith.constant 0 : i32
    %c0_i32_1 = arith.constant 0 : i32
    return %arg1, %c0_i32, %c0_i32_0 : i32, i32, i32
  }
  func.func @transform_6(%arg0: i32, %arg1: i32) -> (i32, i32, i32) {
    %c0_i32 = arith.constant 0 : i32
    %c0_i32_0 = arith.constant 0 : i32
    %c0_i32_1 = arith.constant 0 : i32
    return %arg1, %c0_i32, %c0_i32_0 : i32, i32, i32
  }
  func.func @transform_7(%arg0: i32, %arg1: i32) -> (i32, i32, i32) {
    %c0_i32 = arith.constant 0 : i32
    %c0_i32_0 = arith.constant 0 : i32
    %c0_i32_1 = arith.constant 0 : i32
    return %arg1, %c0_i32, %c0_i32_0 : i32, i32, i32
  }
  func.func @transform_8(%arg0: i32, %arg1: i32) -> (i32, i32, i32) {
    %c0_i32 = arith.constant 0 : i32
    %c0_i32_0 = arith.constant 0 : i32
    %c0_i32_1 = arith.constant 0 : i32
    return %arg1, %c0_i32, %c0_i32_0 : i32, i32, i32
  }
  func.func @transform_9(%arg0: i32, %arg1: i32) -> (i32, i32, i32) {
    %c0_i32 = arith.constant 0 : i32
    %c0_i32_0 = arith.constant 0 : i32
    %c0_i32_1 = arith.constant 0 : i32
    return %arg1, %c0_i32, %c0_i32_0 : i32, i32, i32
  }
  func.func @transform_10(%arg0: i32, %arg1: i32) -> (i32, i32, i32) {
    %c0_i32 = arith.constant 0 : i32
    %c0_i32_0 = arith.constant 0 : i32
    %c0_i32_1 = arith.constant 0 : i32
    return %arg1, %c0_i32, %c0_i32_0 : i32, i32, i32
  }
  func.func @transform_11(%arg0: i32, %arg1: i32) -> (i32, i32, i32) {
    %c0_i32 = arith.constant 0 : i32
    %c0_i32_0 = arith.constant 0 : i32
    %c0_i32_1 = arith.constant 0 : i32
    return %arg1, %c0_i32, %c0_i32_0 : i32, i32, i32
  }
  func.func @transform_12(%arg0: i32, %arg1: i32) -> (i32, i32, i32) {
    %c0_i32 = arith.constant 0 : i32
    %c0_i32_0 = arith.constant 0 : i32
    %c0_i32_1 = arith.constant 0 : i32
    return %arg1, %c0_i32, %c0_i32_0 : i32, i32, i32
  }
  func.func @transform_13(%arg0: i32, %arg1: i32) -> (i32, i32, i32) {
    %c0_i32 = arith.constant 0 : i32
    %c0_i32_0 = arith.constant 0 : i32
    %c0_i32_1 = arith.constant 0 : i32
    return %arg1, %c0_i32, %c0_i32_0 : i32, i32, i32
  }
  func.func @transform_14(%arg0: i32, %arg1: i32) -> (i32, i32, i32) {
    %c0_i32 = arith.constant 0 : i32
    %c0_i32_0 = arith.constant 0 : i32
    %c0_i32_1 = arith.constant 0 : i32
    return %arg1, %c0_i32, %c0_i32_0 : i32, i32, i32
  }
  func.func @transform_15(%arg0: i32, %arg1: i32) -> (i32, i32, i32) {
    %c0_i32 = arith.constant 0 : i32
    %c0_i32_0 = arith.constant 0 : i32
    %c0_i32_1 = arith.constant 0 : i32
    return %arg1, %c0_i32, %c0_i32_0 : i32, i32, i32
  }
  func.func @transform_16(%arg0: i32, %arg1: i32) -> (i32, i32) {
    %c0_i32 = arith.constant 0 : i32
    %c0_i32_0 = arith.constant 0 : i32
    %c0_i32_1 = arith.constant 0 : i32
    return %c0_i32, %c0_i32_0 : i32, i32
  }
  func.func @transform_17(%arg0: i32, %arg1: i32) -> (i32, i32) {
    %c0_i32 = arith.constant 0 : i32
    %c0_i32_0 = arith.constant 0 : i32
    %c0_i32_1 = arith.constant 0 : i32
    return %c0_i32, %c0_i32_0 : i32, i32
  }
  func.func @transform_18(%arg0: i32, %arg1: i32) -> (i32, i32) {
    %c0_i32 = arith.constant 0 : i32
    %c0_i32_0 = arith.constant 0 : i32
    %c0_i32_1 = arith.constant 0 : i32
    return %c0_i32, %c0_i32_0 : i32, i32
  }
  func.func @transform_19(%arg0: i32, %arg1: i32) -> (i32, i32) {
    %c0_i32 = arith.constant 0 : i32
    %c0_i32_0 = arith.constant 0 : i32
    %c0_i32_1 = arith.constant 0 : i32
    return %c0_i32, %c0_i32_0 : i32, i32
  }
  func.func @transform_20(%arg0: i32, %arg1: i32) -> (i32, i32) {
    %c0_i32 = arith.constant 0 : i32
    %c0_i32_0 = arith.constant 0 : i32
    %c0_i32_1 = arith.constant 0 : i32
    return %c0_i32, %c0_i32_0 : i32, i32
  }
  func.func @transform_21(%arg0: i32, %arg1: i32) -> (i32, i32) {
    %c0_i32 = arith.constant 0 : i32
    %c0_i32_0 = arith.constant 0 : i32
    %c0_i32_1 = arith.constant 0 : i32
    return %c0_i32, %c0_i32_0 : i32, i32
  }
  func.func @transform_22(%arg0: i32, %arg1: i32) -> (i32, i32, i32) {
    %c0_i32 = arith.constant 0 : i32
    %c0_i32_0 = arith.constant 0 : i32
    %c0_i32_1 = arith.constant 0 : i32
    return %arg0, %c0_i32, %c0_i32_0 : i32, i32, i32
  }
}

</mosaic_0001>

<llo_original>
// kernel: ast_forward.1
$region0: #{ast_forward.1}
  #allocation0 [shape = 'u32[]', space=smem, size = 0x4, offset = 0x4, fixed_abs, tag = 'smem constant byte address 0x4 - core index']
  #allocation1 [shape = 'u32[144,128]{1,0:T(1,128)}', space=vmem, size = 0x12000, scoped, tag = 'internal scratch']
  #allocation2 [shape = 'f32[128,192]{1,0:T(8,128)}', space=vmem, size = 0x20000, scoped, tag = 'scratch operand']
  %s0 = inlined_call_operand.vmem [shape: bf16[2,128,256], index: 0, kind: input, shape index: {}]
  %s1 = inlined_call_operand.vmem [shape: bf16[256,192], index: 1, kind: input, shape index: {}]
  %s2 = inlined_call_operand.vmem [shape: f32[128,192], index: 2, kind: input, shape index: {}]
  %s3 = inlined_call_operand.vmem [shape: f32[1,128], index: 3, kind: input, shape index: {}]
  %s4 = inlined_call_operand.vmem [shape: f32[2,1,192], index: 4, kind: input, shape index: {}]
  %s5 = inlined_call_operand.vmem [shape: f32[2,1,192], index: 5, kind: input, shape index: {}]
  %s6 = inlined_call_operand.vmem [shape: bf16[2,192,576], index: 6, kind: input, shape index: {}]
  %s7 = inlined_call_operand.vmem [shape: f32[2,1,576], index: 7, kind: input, shape index: {}]
  %s8 = inlined_call_operand.vmem [shape: bf16[2,192,192], index: 8, kind: input, shape index: {}]
  %s9 = inlined_call_operand.vmem [shape: f32[2,1,192], index: 9, kind: input, shape index: {}]
  %s10 = inlined_call_operand.vmem [shape: f32[2,1,192], index: 10, kind: input, shape index: {}]
  %s11 = inlined_call_operand.vmem [shape: f32[2,1,192], index: 11, kind: input, shape index: {}]
  %s12 = inlined_call_operand.vmem [shape: bf16[2,192,768], index: 12, kind: input, shape index: {}]
  %s13 = inlined_call_operand.vmem [shape: f32[2,1,768], index: 13, kind: input, shape index: {}]
  %s14 = inlined_call_operand.vmem [shape: bf16[2,768,192], index: 14, kind: input, shape index: {}]
  %s15 = inlined_call_operand.vmem [shape: f32[2,1,192], index: 15, kind: input, shape index: {}]
  %s16 = inlined_call_operand.vmem [shape: f32[1,192], index: 16, kind: input, shape index: {}]
  %s17 = inlined_call_operand.vmem [shape: f32[1,192], index: 17, kind: input, shape index: {}]
  %s18 = inlined_call_operand.vmem [shape: f32[1,192], index: 18, kind: input, shape index: {}]
  %s19 = inlined_call_operand.vmem [shape: f32[1,192], index: 19, kind: input, shape index: {}]
  %s20 = inlined_call_operand.vmem [shape: f32[192,2], index: 20, kind: input, shape index: {}]
  %s21 = inlined_call_operand.vmem [shape: f32[1,2], index: 21, kind: input, shape index: {}]
  %s22 = inlined_call_operand.hbm [shape: f32[2,1,2], index: 22, kind: output, shape index: {}]
  %s23 = sld [smem:[#allocation0]]
  $region129: #{ast_forward.1} parent=0
    _
  %s25 = ssub.s32 1, %s23
  %s26 = scalar_select 0, %s25, %s23
  $region1: #{ast_forward.1} parent=0
    #allocation3 [shape = 'u8[1024]{0}', space=vmem, size = 0x400, scoped, tag = 'output window, operand 0']
    #allocation4 [shape = 's32[2]{0}', space=sflag, size = 0x8, scoped, tag = 'scoped memory for ast_forward.1']
    %27 = vsyncpa [#allocation4], 0
    %s28 = scalar_lea.sflag [#allocation4], 1
    %29 = vsyncpa %s28, 0
    loop: start=0, step=1, limit=6
    $region2: #{ast_forward.1} parent=1 // loop_pre_header
      _
    $region3: #{ast_forward.1} parent=1 // loop_header
      %s31 = sphi 0, %s35
      %p32 = scmp.ge.s32.totalorder %s31, 6
      %s38 = sphi 0, %s50
      %s39 = sphi 0, %s46
      %s40 = sphi 0, %s38
      %s41 = sphi 0, %s39
      %s42 = sphi 0, %s40
      %s43 = sphi 0, %s41
      %s53 = sphi 0, %s55
      %s56 = sphi 0, %s53
      %s57 = sphi 0, %s56
      %s73 = sphi 0, %s57
      %s77 = sphi 0, %s77
      %s79 = sphi 0, %s77
      %s80 = sphi 0, %s79
      %s94 = sphi 0, %s80
      %s98 = sphi 0, %s98
      %s100 = sphi 0, %s98
      %s101 = sphi 0, %s100
      %s115 = sphi 0, %s101
      %s119 = sphi 0, %s119
      %s121 = sphi 0, %s119
      %s122 = sphi 0, %s121
      %s136 = sphi 0, %s122
      %s142 = sphi 0, %s144
      %s145 = sphi 0, %s142
      %s146 = sphi 0, %s145
      %s162 = sphi 0, %s146
      %s168 = sphi 0, %s170
      %s171 = sphi 0, %s168
      %s172 = sphi 0, %s171
      %s188 = sphi 0, %s172
      %s194 = sphi 0, %s196
      %s197 = sphi 0, %s194
      %s198 = sphi 0, %s197
      %s214 = sphi 0, %s198
      %s220 = sphi 0, %s222
      %s223 = sphi 0, %s220
      %s224 = sphi 0, %s223
      %s240 = sphi 0, %s224
      %s246 = sphi 0, %s248
      %s249 = sphi 0, %s246
      %s250 = sphi 0, %s249
      %s266 = sphi 0, %s250
      %s272 = sphi 0, %s274
      %s275 = sphi 0, %s272
      %s276 = sphi 0, %s275
      %s292 = sphi 0, %s276
      %s298 = sphi 0, %s300
      %s301 = sphi 0, %s298
      %s302 = sphi 0, %s301
      %s318 = sphi 0, %s302
      %s324 = sphi 0, %s326
      %s327 = sphi 0, %s324
      %s328 = sphi 0, %s327
      %s344 = sphi 0, %s328
      %s350 = sphi 0, %s352
      %s353 = sphi 0, %s350
      %s354 = sphi 0, %s353
      %s370 = sphi 0, %s354
      %s376 = sphi 0, %s378
      %s379 = sphi 0, %s376
      %s380 = sphi 0, %s379
      %s396 = sphi 0, %s380
      %s402 = sphi 0, %s404
      %s405 = sphi 0, %s402
      %s406 = sphi 0, %s405
      %s422 = sphi 0, %s406
      %s428 = sphi 0, %s430
      %s431 = sphi 0, %s428
      %s432 = sphi 0, %s431
      %s448 = sphi 0, %s432
      %s452 = sphi 0, %s452
      %s454 = sphi 0, %s452
      %s455 = sphi 0, %s454
      %s469 = sphi 0, %s455
      %s473 = sphi 0, %s473
      %s475 = sphi 0, %s473
      %s476 = sphi 0, %s475
      %s490 = sphi 0, %s476
      %s494 = sphi 0, %s494
      %s496 = sphi 0, %s494
      %s497 = sphi 0, %s496
      %s511 = sphi 0, %s497
      %s515 = sphi 0, %s515
      %s517 = sphi 0, %s515
      %s518 = sphi 0, %s517
      %s532 = sphi 0, %s518
      %s536 = sphi 0, %s536
      %s538 = sphi 0, %s536
      %s539 = sphi 0, %s538
      %s553 = sphi 0, %s539
      %s557 = sphi 0, %s557
      %s559 = sphi 0, %s557
      %s560 = sphi 0, %s559
      %s574 = sphi 0, %s560
      %s580 = sphi 0, %s582
      %s583 = sphi 0, %s580
      %s584 = sphi 0, %s583
      %s600 = sphi 0, %s584
    $region4: #{ast_forward.1} parent=1 // loop_header_branch
      %34 = sbr.rel (%p32) target = $region8
    $region5: #{ast_forward.1} parent=1 // loop_body
      %s36 = ssub.s32 %s31, 1
      %s37 = ssub.s32 %s31, 2
      %s44 = sadd.s32 1, %s39
      %p45 = scmp.ge.s32.totalorder %s44, 2
      %s46 = scalar_select %p45, 0, %s44
      %s47 = sadd.s32 1, %s38
      %s48 = scalar_select %p45, %s47, %s38
      %p49 = scmp.ge.s32.totalorder %s48, 2
      %s50 = scalar_select %p49, 0, %s48
      %s51 = ssub.s32 %s38, %s50
      %p52 = scmp.eq.s32.totalorder %s51, 0
      %s54 = sadd.s32 %s53, 1
      %s55 = scalar_select %p52, %s53, %s54
      %p58 = pneg %p52
      %p59 = scmp.eq.s32.totalorder %s31, 3
      %p60 = por %p58, %p59
      %p61 = scmp.ne.s32.totalorder %s53, %s56
      %p62 = scmp.eq.s32.totalorder %s31, 0
      %p63 = por %p61, %p62
      %p64 = scmp.ne.s32.totalorder %s53, %s56
      %p65 = scmp.eq.s32.totalorder %s36, 3
      %p66 = por %p64, %p65
      %p67 = scmp.ne.s32.totalorder %s56, %s57
      %p68 = scmp.eq.s32.totalorder %s36, 0
      %p69 = por %p67, %p68
      %p70 = scmp.ne.s32.totalorder %s56, %s57
      %p71 = scmp.eq.s32.totalorder %s37, 3
      %p72 = por %p70, %p71
      %p74 = scmp.ne.s32.totalorder %s57, %s73
      %p75 = scmp.eq.s32.totalorder %s37, 0
      %p76 = por %p74, %p75
      %s78 = sadd.s32 %s77, 1
      %p81 = scmp.eq.s32.totalorder %s31, 3
      %p82 = scmp.ne.s32.totalorder %s77, %s79
      %p83 = scmp.eq.s32.totalorder %s31, 0
      %p84 = por %p82, %p83
      %p85 = scmp.ne.s32.totalorder %s77, %s79
      %p86 = scmp.eq.s32.totalorder %s36, 3
      %p87 = por %p85, %p86
      %p88 = scmp.ne.s32.totalorder %s79, %s80
      %p89 = scmp.eq.s32.totalorder %s36, 0
      %p90 = por %p88, %p89
      %p91 = scmp.ne.s32.totalorder %s79, %s80
      %p92 = scmp.eq.s32.totalorder %s37, 3
      %p93 = por %p91, %p92
      %p95 = scmp.ne.s32.totalorder %s80, %s94
      %p96 = scmp.eq.s32.totalorder %s37, 0
      %p97 = por %p95, %p96
      %s99 = sadd.s32 %s98, 1
      %p102 = scmp.eq.s32.totalorder %s31, 3
      %p103 = scmp.ne.s32.totalorder %s98, %s100
      %p104 = scmp.eq.s32.totalorder %s31, 0
      %p105 = por %p103, %p104
      %p106 = scmp.ne.s32.totalorder %s98, %s100
      %p107 = scmp.eq.s32.totalorder %s36, 3
      %p108 = por %p106, %p107
      %p109 = scmp.ne.s32.totalorder %s100, %s101
      %p110 = scmp.eq.s32.totalorder %s36, 0
      %p111 = por %p109, %p110
      %p112 = scmp.ne.s32.totalorder %s100, %s101
      %p113 = scmp.eq.s32.totalorder %s37, 3
      %p114 = por %p112, %p113
      %p116 = scmp.ne.s32.totalorder %s101, %s115
      %p117 = scmp.eq.s32.totalorder %s37, 0
      %p118 = por %p116, %p117
      %s120 = sadd.s32 %s119, 1
      %p123 = scmp.eq.s32.totalorder %s31, 3
      %p124 = scmp.ne.s32.totalorder %s119, %s121
      %p125 = scmp.eq.s32.totalorder %s31, 0
      %p126 = por %p124, %p125
      %p127 = scmp.ne.s32.totalorder %s119, %s121
      %p128 = scmp.eq.s32.totalorder %s36, 3
      %p129 = por %p127, %p128
      %p130 = scmp.ne.s32.totalorder %s121, %s122
      %p131 = scmp.eq.s32.totalorder %s36, 0
      %p132 = por %p130, %p131
      %p133 = scmp.ne.s32.totalorder %s121, %s122
      %p134 = scmp.eq.s32.totalorder %s37, 3
      %p135 = por %p133, %p134
      %p137 = scmp.ne.s32.totalorder %s122, %s136
      %p138 = scmp.eq.s32.totalorder %s37, 0
      %p139 = por %p137, %p138
      %s140 = ssub.s32 %s39, %s46
      %p141 = scmp.eq.s32.totalorder %s140, 0
      %s143 = sadd.s32 %s142, 1
      %s144 = scalar_select %p141, %s142, %s143
      %p147 = pneg %p141
      %p148 = scmp.eq.s32.totalorder %s31, 3
      %p149 = por %p147, %p148
      %p150 = scmp.ne.s32.totalorder %s142, %s145
      %p151 = scmp.eq.s32.totalorder %s31, 0
      %p152 = por %p150, %p151
      %p153 = scmp.ne.s32.totalorder %s142, %s145
      %p154 = scmp.eq.s32.totalorder %s36, 3
      %p155 = por %p153, %p154
      %p156 = scmp.ne.s32.totalorder %s145, %s146
      %p157 = scmp.eq.s32.totalorder %s36, 0
      %p158 = por %p156, %p157
      %p159 = scmp.ne.s32.totalorder %s145, %s146
      %p160 = scmp.eq.s32.totalorder %s37, 3
      %p161 = por %p159, %p160
      %p163 = scmp.ne.s32.totalorder %s146, %s162
      %p164 = scmp.eq.s32.totalorder %s37, 0
      %p165 = por %p163, %p164
      %s166 = ssub.s32 %s39, %s46
      %p167 = scmp.eq.s32.totalorder %s166, 0
      %s169 = sadd.s32 %s168, 1
      %s170 = scalar_select %p167, %s168, %s169
      %p173 = pneg %p167
      %p174 = scmp.eq.s32.totalorder %s31, 3
      %p175 = por %p173, %p174
      %p176 = scmp.ne.s32.totalorder %s168, %s171
      %p177 = scmp.eq.s32.totalorder %s31, 0
      %p178 = por %p176, %p177
      %p179 = scmp.ne.s32.totalorder %s168, %s171
      %p180 = scmp.eq.s32.totalorder %s36, 3
      %p181 = por %p179, %p180
      %p182 = scmp.ne.s32.totalorder %s171, %s172
      %p183 = scmp.eq.s32.totalorder %s36, 0
      %p184 = por %p182, %p183
      %p185 = scmp.ne.s32.totalorder %s171, %s172
      %p186 = scmp.eq.s32.totalorder %s37, 3
      %p187 = por %p185, %p186
      %p189 = scmp.ne.s32.totalorder %s172, %s188
      %p190 = scmp.eq.s32.totalorder %s37, 0
      %p191 = por %p189, %p190
      %s192 = ssub.s32 %s39, %s46
      %p193 = scmp.eq.s32.totalorder %s192, 0
      %s195 = sadd.s32 %s194, 1
      %s196 = scalar_select %p193, %s194, %s195
      %p199 = pneg %p193
      %p200 = scmp.eq.s32.totalorder %s31, 3
      %p201 = por %p199, %p200
      %p202 = scmp.ne.s32.totalorder %s194, %s197
      %p203 = scmp.eq.s32.totalorder %s31, 0
      %p204 = por %p202, %p203
      %p205 = scmp.ne.s32.totalorder %s194, %s197
      %p206 = scmp.eq.s32.totalorder %s36, 3
      %p207 = por %p205, %p206
      %p208 = scmp.ne.s32.totalorder %s197, %s198
      %p209 = scmp.eq.s32.totalorder %s36, 0
      %p210 = por %p208, %p209
      %p211 = scmp.ne.s32.totalorder %s197, %s198
      %p212 = scmp.eq.s32.totalorder %s37, 3
      %p213 = por %p211, %p212
      %p215 = scmp.ne.s32.totalorder %s198, %s214
      %p216 = scmp.eq.s32.totalorder %s37, 0
      %p217 = por %p215, %p216
      %s218 = ssub.s32 %s39, %s46
      %p219 = scmp.eq.s32.totalorder %s218, 0
      %s221 = sadd.s32 %s220, 1
      %s222 = scalar_select %p219, %s220, %s221
      %p225 = pneg %p219
      %p226 = scmp.eq.s32.totalorder %s31, 3
      %p227 = por %p225, %p226
      %p228 = scmp.ne.s32.totalorder %s220, %s223
      %p229 = scmp.eq.s32.totalorder %s31, 0
      %p230 = por %p228, %p229
      %p231 = scmp.ne.s32.totalorder %s220, %s223
      %p232 = scmp.eq.s32.totalorder %s36, 3
      %p233 = por %p231, %p232
      %p234 = scmp.ne.s32.totalorder %s223, %s224
      %p235 = scmp.eq.s32.totalorder %s36, 0
      %p236 = por %p234, %p235
      %p237 = scmp.ne.s32.totalorder %s223, %s224
      %p238 = scmp.eq.s32.totalorder %s37, 3
      %p239 = por %p237, %p238
      %p241 = scmp.ne.s32.totalorder %s224, %s240
      %p242 = scmp.eq.s32.totalorder %s37, 0
      %p243 = por %p241, %p242
      %s244 = ssub.s32 %s39, %s46
      %p245 = scmp.eq.s32.totalorder %s244, 0
      %s247 = sadd.s32 %s246, 1
      %s248 = scalar_select %p245, %s246, %s247
      %p251 = pneg %p245
      %p252 = scmp.eq.s32.totalorder %s31, 3
      %p253 = por %p251, %p252
      %p254 = scmp.ne.s32.totalorder %s246, %s249
      %p255 = scmp.eq.s32.totalorder %s31, 0
      %p256 = por %p254, %p255
      %p257 = scmp.ne.s32.totalorder %s246, %s249
      %p258 = scmp.eq.s32.totalorder %s36, 3
      %p259 = por %p257, %p258
      %p260 = scmp.ne.s32.totalorder %s249, %s250
      %p261 = scmp.eq.s32.totalorder %s36, 0
      %p262 = por %p260, %p261
      %p263 = scmp.ne.s32.totalorder %s249, %s250
      %p264 = scmp.eq.s32.totalorder %s37, 3
      %p265 = por %p263, %p264
      %p267 = scmp.ne.s32.totalorder %s250, %s266
      %p268 = scmp.eq.s32.totalorder %s37, 0
      %p269 = por %p267, %p268
      %s270 = ssub.s32 %s39, %s46
      %p271 = scmp.eq.s32.totalorder %s270, 0
      %s273 = sadd.s32 %s272, 1
      %s274 = scalar_select %p271, %s272, %s273
      %p277 = pneg %p271
      %p278 = scmp.eq.s32.totalorder %s31, 3
      %p279 = por %p277, %p278
      %p280 = scmp.ne.s32.totalorder %s272, %s275
      %p281 = scmp.eq.s32.totalorder %s31, 0
      %p282 = por %p280, %p281
      %p283 = scmp.ne.s32.totalorder %s272, %s275
      %p284 = scmp.eq.s32.totalorder %s36, 3
      %p285 = por %p283, %p284
      %p286 = scmp.ne.s32.totalorder %s275, %s276
      %p287 = scmp.eq.s32.totalorder %s36, 0
      %p288 = por %p286, %p287
      %p289 = scmp.ne.s32.totalorder %s275, %s276
      %p290 = scmp.eq.s32.totalorder %s37, 3
      %p291 = por %p289, %p290
      %p293 = scmp.ne.s32.totalorder %s276, %s292
      %p294 = scmp.eq.s32.totalorder %s37, 0
      %p295 = por %p293, %p294
      %s296 = ssub.s32 %s39, %s46
      %p297 = scmp.eq.s32.totalorder %s296, 0
      %s299 = sadd.s32 %s298, 1
      %s300 = scalar_select %p297, %s298, %s299
      %p303 = pneg %p297
      %p304 = scmp.eq.s32.totalorder %s31, 3
      %p305 = por %p303, %p304
      %p306 = scmp.ne.s32.totalorder %s298, %s301
      %p307 = scmp.eq.s32.totalorder %s31, 0
      %p308 = por %p306, %p307
      %p309 = scmp.ne.s32.totalorder %s298, %s301
      %p310 = scmp.eq.s32.totalorder %s36, 3
      %p311 = por %p309, %p310
      %p312 = scmp.ne.s32.totalorder %s301, %s302
      %p313 = scmp.eq.s32.totalorder %s36, 0
      %p314 = por %p312, %p313
      %p315 = scmp.ne.s32.totalorder %s301, %s302
      %p316 = scmp.eq.s32.totalorder %s37, 3
      %p317 = por %p315, %p316
      %p319 = scmp.ne.s32.totalorder %s302, %s318
      %p320 = scmp.eq.s32.totalorder %s37, 0
      %p321 = por %p319, %p320
      %s322 = ssub.s32 %s39, %s46
      %p323 = scmp.eq.s32.totalorder %s322, 0
      %s325 = sadd.s32 %s324, 1
      %s326 = scalar_select %p323, %s324, %s325
      %p329 = pneg %p323
      %p330 = scmp.eq.s32.totalorder %s31, 3
      %p331 = por %p329, %p330
      %p332 = scmp.ne.s32.totalorder %s324, %s327
      %p333 = scmp.eq.s32.totalorder %s31, 0
      %p334 = por %p332, %p333
      %p335 = scmp.ne.s32.totalorder %s324, %s327
      %p336 = scmp.eq.s32.totalorder %s36, 3
      %p337 = por %p335, %p336
      %p338 = scmp.ne.s32.totalorder %s327, %s328
      %p339 = scmp.eq.s32.totalorder %s36, 0
      %p340 = por %p338, %p339
      %p341 = scmp.ne.s32.totalorder %s327, %s328
      %p342 = scmp.eq.s32.totalorder %s37, 3
      %p343 = por %p341, %p342
      %p345 = scmp.ne.s32.totalorder %s328, %s344
      %p346 = scmp.eq.s32.totalorder %s37, 0
      %p347 = por %p345, %p346
      %s348 = ssub.s32 %s39, %s46
      %p349 = scmp.eq.s32.totalorder %s348, 0
      %s351 = sadd.s32 %s350, 1
      %s352 = scalar_select %p349, %s350, %s351
      %p355 = pneg %p349
      %p356 = scmp.eq.s32.totalorder %s31, 3
      %p357 = por %p355, %p356
      %p358 = scmp.ne.s32.totalorder %s350, %s353
      %p359 = scmp.eq.s32.totalorder %s31, 0
      %p360 = por %p358, %p359
      %p361 = scmp.ne.s32.totalorder %s350, %s353
      %p362 = scmp.eq.s32.totalorder %s36, 3
      %p363 = por %p361, %p362
      %p364 = scmp.ne.s32.totalorder %s353, %s354
      %p365 = scmp.eq.s32.totalorder %s36, 0
      %p366 = por %p364, %p365
      %p367 = scmp.ne.s32.totalorder %s353, %s354
      %p368 = scmp.eq.s32.totalorder %s37, 3
      %p369 = por %p367, %p368
      %p371 = scmp.ne.s32.totalorder %s354, %s370
      %p372 = scmp.eq.s32.totalorder %s37, 0
      %p373 = por %p371, %p372
      %s374 = ssub.s32 %s39, %s46
      %p375 = scmp.eq.s32.totalorder %s374, 0
      %s377 = sadd.s32 %s376, 1
      %s378 = scalar_select %p375, %s376, %s377
      %p381 = pneg %p375
      %p382 = scmp.eq.s32.totalorder %s31, 3
      %p383 = por %p381, %p382
      %p384 = scmp.ne.s32.totalorder %s376, %s379
      %p385 = scmp.eq.s32.totalorder %s31, 0
      %p386 = por %p384, %p385
      %p387 = scmp.ne.s32.totalorder %s376, %s379
      %p388 = scmp.eq.s32.totalorder %s36, 3
      %p389 = por %p387, %p388
      %p390 = scmp.ne.s32.totalorder %s379, %s380
      %p391 = scmp.eq.s32.totalorder %s36, 0
      %p392 = por %p390, %p391
      %p393 = scmp.ne.s32.totalorder %s379, %s380
      %p394 = scmp.eq.s32.totalorder %s37, 3
      %p395 = por %p393, %p394
      %p397 = scmp.ne.s32.totalorder %s380, %s396
      %p398 = scmp.eq.s32.totalorder %s37, 0
      %p399 = por %p397, %p398
      %s400 = ssub.s32 %s39, %s46
      %p401 = scmp.eq.s32.totalorder %s400, 0
      %s403 = sadd.s32 %s402, 1
      %s404 = scalar_select %p401, %s402, %s403
      %p407 = pneg %p401
      %p408 = scmp.eq.s32.totalorder %s31, 3
      %p409 = por %p407, %p408
      %p410 = scmp.ne.s32.totalorder %s402, %s405
      %p411 = scmp.eq.s32.totalorder %s31, 0
      %p412 = por %p410, %p411
      %p413 = scmp.ne.s32.totalorder %s402, %s405
      %p414 = scmp.eq.s32.totalorder %s36, 3
      %p415 = por %p413, %p414
      %p416 = scmp.ne.s32.totalorder %s405, %s406
      %p417 = scmp.eq.s32.totalorder %s36, 0
      %p418 = por %p416, %p417
      %p419 = scmp.ne.s32.totalorder %s405, %s406
      %p420 = scmp.eq.s32.totalorder %s37, 3
      %p421 = por %p419, %p420
      %p423 = scmp.ne.s32.totalorder %s406, %s422
      %p424 = scmp.eq.s32.totalorder %s37, 0
      %p425 = por %p423, %p424
      %s426 = ssub.s32 %s39, %s46
      %p427 = scmp.eq.s32.totalorder %s426, 0
      %s429 = sadd.s32 %s428, 1
      %s430 = scalar_select %p427, %s428, %s429
      %p433 = pneg %p427
      %p434 = scmp.eq.s32.totalorder %s31, 3
      %p435 = por %p433, %p434
      %p436 = scmp.ne.s32.totalorder %s428, %s431
      %p437 = scmp.eq.s32.totalorder %s31, 0
      %p438 = por %p436, %p437
      %p439 = scmp.ne.s32.totalorder %s428, %s431
      %p440 = scmp.eq.s32.totalorder %s36, 3
      %p441 = por %p439, %p440
      %p442 = scmp.ne.s32.totalorder %s431, %s432
      %p443 = scmp.eq.s32.totalorder %s36, 0
      %p444 = por %p442, %p443
      %p445 = scmp.ne.s32.totalorder %s431, %s432
      %p446 = scmp.eq.s32.totalorder %s37, 3
      %p447 = por %p445, %p446
      %p449 = scmp.ne.s32.totalorder %s432, %s448
      %p450 = scmp.eq.s32.totalorder %s37, 0
      %p451 = por %p449, %p450
      %s453 = sadd.s32 %s452, 1
      %p456 = scmp.eq.s32.totalorder %s31, 3
      %p457 = scmp.ne.s32.totalorder %s452, %s454
      %p458 = scmp.eq.s32.totalorder %s31, 0
      %p459 = por %p457, %p458
      %p460 = scmp.ne.s32.totalorder %s452, %s454
      %p461 = scmp.eq.s32.totalorder %s36, 3
      %p462 = por %p460, %p461
      %p463 = scmp.ne.s32.totalorder %s454, %s455
      %p464 = scmp.eq.s32.totalorder %s36, 0
      %p465 = por %p463, %p464
      %p466 = scmp.ne.s32.totalorder %s454, %s455
      %p467 = scmp.eq.s32.totalorder %s37, 3
      %p468 = por %p466, %p467
      %p470 = scmp.ne.s32.totalorder %s455, %s469
      %p471 = scmp.eq.s32.totalorder %s37, 0
      %p472 = por %p470, %p471
      %s474 = sadd.s32 %s473, 1
      %p477 = scmp.eq.s32.totalorder %s31, 3
      %p478 = scmp.ne.s32.totalorder %s473, %s475
      %p479 = scmp.eq.s32.totalorder %s31, 0
      %p480 = por %p478, %p479
      %p481 = scmp.ne.s32.totalorder %s473, %s475
      %p482 = scmp.eq.s32.totalorder %s36, 3
      %p483 = por %p481, %p482
      %p484 = scmp.ne.s32.totalorder %s475, %s476
      %p485 = scmp.eq.s32.totalorder %s36, 0
      %p486 = por %p484, %p485
      %p487 = scmp.ne.s32.totalorder %s475, %s476
      %p488 = scmp.eq.s32.totalorder %s37, 3
      %p489 = por %p487, %p488
      %p491 = scmp.ne.s32.totalorder %s476, %s490
      %p492 = scmp.eq.s32.totalorder %s37, 0
      %p493 = por %p491, %p492
      %s495 = sadd.s32 %s494, 1
      %p498 = scmp.eq.s32.totalorder %s31, 3
      %p499 = scmp.ne.s32.totalorder %s494, %s496
      %p500 = scmp.eq.s32.totalorder %s31, 0
      %p501 = por %p499, %p500
      %p502 = scmp.ne.s32.totalorder %s494, %s496
      %p503 = scmp.eq.s32.totalorder %s36, 3
      %p504 = por %p502, %p503
      %p505 = scmp.ne.s32.totalorder %s496, %s497
      %p506 = scmp.eq.s32.totalorder %s36, 0
      %p507 = por %p505, %p506
      %p508 = scmp.ne.s32.totalorder %s496, %s497
      %p509 = scmp.eq.s32.totalorder %s37, 3
      %p510 = por %p508, %p509
      %p512 = scmp.ne.s32.totalorder %s497, %s511
      %p513 = scmp.eq.s32.totalorder %s37, 0
      %p514 = por %p512, %p513
      %s516 = sadd.s32 %s515, 1
      %p519 = scmp.eq.s32.totalorder %s31, 3
      %p520 = scmp.ne.s32.totalorder %s515, %s517
      %p521 = scmp.eq.s32.totalorder %s31, 0
      %p522 = por %p520, %p521
      %p523 = scmp.ne.s32.totalorder %s515, %s517
      %p524 = scmp.eq.s32.totalorder %s36, 3
      %p525 = por %p523, %p524
      %p526 = scmp.ne.s32.totalorder %s517, %s518
      %p527 = scmp.eq.s32.totalorder %s36, 0
      %p528 = por %p526, %p527
      %p529 = scmp.ne.s32.totalorder %s517, %s518
      %p530 = scmp.eq.s32.totalorder %s37, 3
      %p531 = por %p529, %p530
      %p533 = scmp.ne.s32.totalorder %s518, %s532
      %p534 = scmp.eq.s32.totalorder %s37, 0
      %p535 = por %p533, %p534
      %s537 = sadd.s32 %s536, 1
      %p540 = scmp.eq.s32.totalorder %s31, 3
      %p541 = scmp.ne.s32.totalorder %s536, %s538
      %p542 = scmp.eq.s32.totalorder %s31, 0
      %p543 = por %p541, %p542
      %p544 = scmp.ne.s32.totalorder %s536, %s538
      %p545 = scmp.eq.s32.totalorder %s36, 3
      %p546 = por %p544, %p545
      %p547 = scmp.ne.s32.totalorder %s538, %s539
      %p548 = scmp.eq.s32.totalorder %s36, 0
      %p549 = por %p547, %p548
      %p550 = scmp.ne.s32.totalorder %s538, %s539
      %p551 = scmp.eq.s32.totalorder %s37, 3
      %p552 = por %p550, %p551
      %p554 = scmp.ne.s32.totalorder %s539, %s553
      %p555 = scmp.eq.s32.totalorder %s37, 0
      %p556 = por %p554, %p555
      %s558 = sadd.s32 %s557, 1
      %p561 = scmp.eq.s32.totalorder %s31, 3
      %p562 = scmp.ne.s32.totalorder %s557, %s559
      %p563 = scmp.eq.s32.totalorder %s31, 0
      %p564 = por %p562, %p563
      %p565 = scmp.ne.s32.totalorder %s557, %s559
      %p566 = scmp.eq.s32.totalorder %s36, 3
      %p567 = por %p565, %p566
      %p568 = scmp.ne.s32.totalorder %s559, %s560
      %p569 = scmp.eq.s32.totalorder %s36, 0
      %p570 = por %p568, %p569
      %p571 = scmp.ne.s32.totalorder %s559, %s560
      %p572 = scmp.eq.s32.totalorder %s37, 3
      %p573 = por %p571, %p572
      %p575 = scmp.ne.s32.totalorder %s560, %s574
      %p576 = scmp.eq.s32.totalorder %s37, 0
      %p577 = por %p575, %p576
      %s578 = ssub.s32 %s38, %s50
      %p579 = scmp.eq.s32.totalorder %s578, 0
      %s581 = sadd.s32 %s580, 1
      %s582 = scalar_select %p579, %s580, %s581
      %p585 = pneg %p579
      %p586 = scmp.eq.s32.totalorder %s31, 3
      %p587 = por %p585, %p586
      %p588 = scmp.ne.s32.totalorder %s580, %s583
      %p589 = scmp.eq.s32.totalorder %s31, 0
      %p590 = por %p588, %p589
      %p591 = scmp.ne.s32.totalorder %s580, %s583
      %p592 = scmp.eq.s32.totalorder %s36, 3
      %p593 = por %p591, %p592
      %p594 = scmp.ne.s32.totalorder %s583, %s584
      %p595 = scmp.eq.s32.totalorder %s36, 0
      %p596 = por %p594, %p595
      %p597 = scmp.ne.s32.totalorder %s583, %s584
      %p598 = scmp.eq.s32.totalorder %s37, 3
      %p599 = por %p597, %p598
      %p601 = scmp.ne.s32.totalorder %s584, %s600
      %p602 = scmp.eq.s32.totalorder %s37, 0
      %p603 = por %p601, %p602
      %p604 = scmp.le.s32.totalorder 1, %s31
      %p605 = scmp.lt.s32.totalorder %s31, 5
      %p606 = pnand %p604, %p605
      %p607 = pneg %p606
      // Predicated region
      $region9: #{ast_forward.1} parent=5 // pred_check
        _
      $region10: #{ast_forward.1} parent=5 // pred_check_branch
        %609 = sbr.rel (%p606) target = $region12
      $region11: #{ast_forward.1} parent=5 // pred_region
        %s610 = ssub.s32 %s31, 1
        // Predicated region
        $region13: #{ast_forward.1} parent=11 // pred_check
          %p611 = pneg %p90
        $region14: #{ast_forward.1} parent=11 // pred_check_branch
          %613 = sbr.rel (%p611) target = $region16
        $region15: #{ast_forward.1} parent=11 // pred_region
          _
        $region16: #{ast_forward.1} parent=11 // pred_fallthru
          _
        // Predicated region
        $region17: #{ast_forward.1} parent=11 // pred_check
          %p614 = pneg %p111
        $region18: #{ast_forward.1} parent=11 // pred_check_branch
          %616 = sbr.rel (%p614) target = $region20
        $region19: #{ast_forward.1} parent=11 // pred_region
          _
        $region20: #{ast_forward.1} parent=11 // pred_fallthru
          _
        // Predicated region
        $region21: #{ast_forward.1} parent=11 // pred_check
          %p617 = pneg %p132
        $region22: #{ast_forward.1} parent=11 // pred_check_branch
          %619 = sbr.rel (%p617) target = $region24
        $region23: #{ast_forward.1} parent=11 // pred_region
          _
        $region24: #{ast_forward.1} parent=11 // pred_fallthru
          _
        // Predicated region
        $region25: #{ast_forward.1} parent=11 // pred_check
          %p620 = pneg %p465
        $region26: #{ast_forward.1} parent=11 // pred_check_branch
          %622 = sbr.rel (%p620) target = $region28
        $region27: #{ast_forward.1} parent=11 // pred_region
          _
        $region28: #{ast_forward.1} parent=11 // pred_fallthru
          _
        // Predicated region
        $region29: #{ast_forward.1} parent=11 // pred_check
          %p623 = pneg %p486
        $region30: #{ast_forward.1} parent=11 // pred_check_branch
          %625 = sbr.rel (%p623) target = $region32
        $region31: #{ast_forward.1} parent=11 // pred_region
          _
        $region32: #{ast_forward.1} parent=11 // pred_fallthru
          _
        // Predicated region
        $region33: #{ast_forward.1} parent=11 // pred_check
          %p626 = pneg %p507
        $region34: #{ast_forward.1} parent=11 // pred_check_branch
          %628 = sbr.rel (%p626) target = $region36
        $region35: #{ast_forward.1} parent=11 // pred_region
          _
        $region36: #{ast_forward.1} parent=11 // pred_fallthru
          _
        // Predicated region
        $region37: #{ast_forward.1} parent=11 // pred_check
          %p629 = pneg %p528
        $region38: #{ast_forward.1} parent=11 // pred_check_branch
          %631 = sbr.rel (%p629) target = $region40
        $region39: #{ast_forward.1} parent=11 // pred_region
          _
        $region40: #{ast_forward.1} parent=11 // pred_fallthru
          _
        // Predicated region
        $region41: #{ast_forward.1} parent=11 // pred_check
          %p632 = pneg %p549
        $region42: #{ast_forward.1} parent=11 // pred_check_branch
          %634 = sbr.rel (%p632) target = $region44
        $region43: #{ast_forward.1} parent=11 // pred_region
          _
        $region44: #{ast_forward.1} parent=11 // pred_fallthru
          _
        // Predicated region
        $region45: #{ast_forward.1} parent=11 // pred_check
          %p635 = pneg %p570
        $region46: #{ast_forward.1} parent=11 // pred_check_branch
          %637 = sbr.rel (%p635) target = $region48
        $region47: #{ast_forward.1} parent=11 // pred_region
          _
        $region48: #{ast_forward.1} parent=11 // pred_fallthru
          _
      $region12: #{ast_forward.1} parent=5 // pred_fallthru
        _
      %p638 = scmp.lt.s32.totalorder %s31, 4
      // Predicated region
      $region49: #{ast_forward.1} parent=5 // pred_check
        %p639 = pneg %p638
      $region50: #{ast_forward.1} parent=5 // pred_check_branch
        %641 = sbr.rel (%p639) target = $region52
      $region51: #{ast_forward.1} parent=5 // pred_region
        // Predicated region
        $region53: #{ast_forward.1} parent=51 // pred_check
          %p642 = pneg %p63
        $region54: #{ast_forward.1} parent=51 // pred_check_branch
          %644 = sbr.rel (%p642) target = $region56
        $region55: #{ast_forward.1} parent=51 // pred_region
          %p645 = scmp.lt.s32.totalorder %s38, 1
          %s646 = scalar_select %p645, %s38, 1
          %s647 = smul.addr %s646, 32
          %s648 = smul.addr %s647, 4
          %s649 = scalar_lea.vmem %s0, %s648
        $region56: #{ast_forward.1} parent=51 // pred_fallthru
          _
        // Predicated region
        $region57: #{ast_forward.1} parent=51 // pred_check
          %p650 = pneg %p152
        $region58: #{ast_forward.1} parent=51 // pred_check_branch
          %652 = sbr.rel (%p650) target = $region60
        $region59: #{ast_forward.1} parent=51 // pred_region
          %p653 = scmp.lt.s32.totalorder %s39, 1
          %s654 = scalar_select %p653, %s39, 1
          %s655 = smul.addr %s654, 2
          %s656 = scalar_lea.vmem %s4, %s655
        $region60: #{ast_forward.1} parent=51 // pred_fallthru
          _
        // Predicated region
        $region61: #{ast_forward.1} parent=51 // pred_check
          %p657 = pneg %p178
        $region62: #{ast_forward.1} parent=51 // pred_check_branch
          %659 = sbr.rel (%p657) target = $region64
        $region63: #{ast_forward.1} parent=51 // pred_region
          %p660 = scmp.lt.s32.totalorder %s39, 1
          %s661 = scalar_select %p660, %s39, 1
          %s662 = smul.addr %s661, 2
          %s663 = scalar_lea.vmem %s5, %s662
        $region64: #{ast_forward.1} parent=51 // pred_fallthru
          _
        // Predicated region
        $region65: #{ast_forward.1} parent=51 // pred_check
          %p664 = pneg %p204
        $region66: #{ast_forward.1} parent=51 // pred_check_branch
          %666 = sbr.rel (%p664) target = $region68
        $region67: #{ast_forward.1} parent=51 // pred_region
          %p667 = scmp.lt.s32.totalorder %s39, 1
          %s668 = scalar_select %p667, %s39, 1
          %s669 = smul.addr %s668, 120
          %s670 = smul.addr %s669, 4
          %s671 = scalar_lea.vmem %s6, %s670
        $region68: #{ast_forward.1} parent=51 // pred_fallthru
          _
        // Predicated region
        $region69: #{ast_forward.1} parent=51 // pred_check
          %p672 = pneg %p230
        $region70: #{ast_forward.1} parent=51 // pred_check_branch
          %674 = sbr.rel (%p672) target = $region72
        $region71: #{ast_forward.1} parent=51 // pred_region
          %p675 = scmp.lt.s32.totalorder %s39, 1
          %s676 = scalar_select %p675, %s39, 1
          %s677 = smul.addr %s676, 5
          %s678 = scalar_lea.vmem %s7, %s677
        $region72: #{ast_forward.1} parent=51 // pred_fallthru
          _
        // Predicated region
        $region73: #{ast_forward.1} parent=51 // pred_check
          %p679 = pneg %p256
        $region74: #{ast_forward.1} parent=51 // pred_check_branch
          %681 = sbr.rel (%p679) target = $region76
        $region75: #{ast_forward.1} parent=51 // pred_region
          %p682 = scmp.lt.s32.totalorder %s39, 1
          %s683 = scalar_select %p682, %s39, 1
          %s684 = smul.addr %s683, 48
          %s685 = smul.addr %s684, 4
          %s686 = scalar_lea.vmem %s8, %s685
        $region76: #{ast_forward.1} parent=51 // pred_fallthru
          _
        // Predicated region
        $region77: #{ast_forward.1} parent=51 // pred_check
          %p687 = pneg %p282
        $region78: #{ast_forward.1} parent=51 // pred_check_branch
          %689 = sbr.rel (%p687) target = $region80
        $region79: #{ast_forward.1} parent=51 // pred_region
          %p690 = scmp.lt.s32.totalorder %s39, 1
          %s691 = scalar_select %p690, %s39, 1
          %s692 = smul.addr %s691, 2
          %s693 = scalar_lea.vmem %s9, %s692
        $region80: #{ast_forward.1} parent=51 // pred_fallthru
          _
        // Predicated region
        $region81: #{ast_forward.1} parent=51 // pred_check
          %p694 = pneg %p308
        $region82: #{ast_forward.1} parent=51 // pred_check_branch
          %696 = sbr.rel (%p694) target = $region84
        $region83: #{ast_forward.1} parent=51 // pred_region
          %p697 = scmp.lt.s32.totalorder %s39, 1
          %s698 = scalar_select %p697, %s39, 1
          %s699 = smul.addr %s698, 2
          %s700 = scalar_lea.vmem %s10, %s699
        $region84: #{ast_forward.1} parent=51 // pred_fallthru
          _
        // Predicated region
        $region85: #{ast_forward.1} parent=51 // pred_check
          %p701 = pneg %p334
        $region86: #{ast_forward.1} parent=51 // pred_check_branch
          %703 = sbr.rel (%p701) target = $region88
        $region87: #{ast_forward.1} parent=51 // pred_region
          %p704 = scmp.lt.s32.totalorder %s39, 1
          %s705 = scalar_select %p704, %s39, 1
          %s706 = smul.addr %s705, 2
          %s707 = scalar_lea.vmem %s11, %s706
        $region88: #{ast_forward.1} parent=51 // pred_fallthru
          _
        // Predicated region
        $region89: #{ast_forward.1} parent=51 // pred_check
          %p708 = pneg %p360
        $region90: #{ast_forward.1} parent=51 // pred_check_branch
          %710 = sbr.rel (%p708) target = $region92
        $region91: #{ast_forward.1} parent=51 // pred_region
          %p711 = scmp.lt.s32.totalorder %s39, 1
          %s712 = scalar_select %p711, %s39, 1
          %s713 = smul.addr %s712, 144
          %s714 = smul.addr %s713, 4
          %s715 = scalar_lea.vmem %s12, %s714
        $region92: #{ast_forward.1} parent=51 // pred_fallthru
          _
        // Predicated region
        $region93: #{ast_forward.1} parent=51 // pred_check
          %p716 = pneg %p386
        $region94: #{ast_forward.1} parent=51 // pred_check_branch
          %718 = sbr.rel (%p716) target = $region96
        $region95: #{ast_forward.1} parent=51 // pred_region
          %p719 = scmp.lt.s32.totalorder %s39, 1
          %s720 = scalar_select %p719, %s39, 1
          %s721 = smul.addr %s720, 6
          %s722 = scalar_lea.vmem %s13, %s721
        $region96: #{ast_forward.1} parent=51 // pred_fallthru
          _
        // Predicated region
        $region97: #{ast_forward.1} parent=51 // pred_check
          %p723 = pneg %p412
        $region98: #{ast_forward.1} parent=51 // pred_check_branch
          %725 = sbr.rel (%p723) target = $region100
        $region99: #{ast_forward.1} parent=51 // pred_region
          %p726 = scmp.lt.s32.totalorder %s39, 1
          %s727 = scalar_select %p726, %s39, 1
          %s728 = smul.addr %s727, 192
          %s729 = smul.addr %s728, 4
          %s730 = scalar_lea.vmem %s14, %s729
        $region100: #{ast_forward.1} parent=51 // pred_fallthru
          _
        // Predicated region
        $region101: #{ast_forward.1} parent=51 // pred_check
          %p731 = pneg %p438
        $region102: #{ast_forward.1} parent=51 // pred_check_branch
          %733 = sbr.rel (%p731) target = $region104
        $region103: #{ast_forward.1} parent=51 // pred_region
          %p734 = scmp.lt.s32.totalorder %s39, 1
          %s735 = scalar_select %p734, %s39, 1
          %s736 = smul.addr %s735, 2
          %s737 = scalar_lea.vmem %s15, %s736
        $region104: #{ast_forward.1} parent=51 // pred_fallthru
          _
      $region52: #{ast_forward.1} parent=5 // pred_fallthru
        _
      %p738 = scmp.le.s32.totalorder 1, %s31
      %p739 = scmp.lt.s32.totalorder %s31, 5
      %p740 = pnand %p738, %p739
      %p741 = pneg %p740
      // Predicated region
      $region105: #{ast_forward.1} parent=5 // pred_check
        _
      $region106: #{ast_forward.1} parent=5 // pred_check_branch
        %743 = sbr.rel (%p740) target = $region108
      $region107: #{ast_forward.1} parent=5 // pred_region
        %s744 = ssub.s32 %s31, 1
        %p745 = scmp.lt.s32.totalorder %s40, 1
        %s746 = scalar_select %p745, %s40, 1
        %s747 = smul.addr %s746, 32
        %s748 = smul.addr %s747, 4
        %s749 = scalar_lea.vmem %s0, %s748
        %p750 = pneg %p69
        %p751 = pneg %p66
        %p752 = pneg %p90
        %p753 = pneg %p87
        %p754 = pneg %p111
        %p755 = pneg %p108
        %p756 = pneg %p132
        %p757 = pneg %p129
        %p758 = scmp.lt.s32.totalorder %s41, 1
        %s759 = scalar_select %p758, %s41, 1
        %s760 = smul.addr %s759, 2
        %s761 = scalar_lea.vmem %s4, %s760
        %p762 = pneg %p158
        %p763 = pneg %p155
        %p764 = scmp.lt.s32.totalorder %s41, 1
        %s765 = scalar_select %p764, %s41, 1
        %s766 = smul.addr %s765, 2
        %s767 = scalar_lea.vmem %s5, %s766
        %p768 = pneg %p184
        %p769 = pneg %p181
        %p770 = scmp.lt.s32.totalorder %s41, 1
        %s771 = scalar_select %p770, %s41, 1
        %s772 = smul.addr %s771, 120
        %s773 = smul.addr %s772, 4
        %s774 = scalar_lea.vmem %s6, %s773
        %p775 = pneg %p210
        %p776 = pneg %p207
        %p777 = scmp.lt.s32.totalorder %s41, 1
        %s778 = scalar_select %p777, %s41, 1
        %s779 = smul.addr %s778, 5
        %s780 = scalar_lea.vmem %s7, %s779
        %p781 = pneg %p236
        %p782 = pneg %p233
        %p783 = scmp.lt.s32.totalorder %s41, 1
        %s784 = scalar_select %p783, %s41, 1
        %s785 = smul.addr %s784, 48
        %s786 = smul.addr %s785, 4
        %s787 = scalar_lea.vmem %s8, %s786
        %p788 = pneg %p262
        %p789 = pneg %p259
        %p790 = scmp.lt.s32.totalorder %s41, 1
        %s791 = scalar_select %p790, %s41, 1
        %s792 = smul.addr %s791, 2
        %s793 = scalar_lea.vmem %s9, %s792
        %p794 = pneg %p288
        %p795 = pneg %p285
        %p796 = scmp.lt.s32.totalorder %s41, 1
        %s797 = scalar_select %p796, %s41, 1
        %s798 = smul.addr %s797, 2
        %s799 = scalar_lea.vmem %s10, %s798
        %p800 = pneg %p314
        %p801 = pneg %p311
        %p802 = scmp.lt.s32.totalorder %s41, 1
        %s803 = scalar_select %p802, %s41, 1
        %s804 = smul.addr %s803, 2
        %s805 = scalar_lea.vmem %s11, %s804
        %p806 = pneg %p340
        %p807 = pneg %p337
        %p808 = scmp.lt.s32.totalorder %s41, 1
        %s809 = scalar_select %p808, %s41, 1
        %s810 = smul.addr %s809, 144
        %s811 = smul.addr %s810, 4
        %s812 = scalar_lea.vmem %s12, %s811
        %p813 = pneg %p366
        %p814 = pneg %p363
        %p815 = scmp.lt.s32.totalorder %s41, 1
        %s816 = scalar_select %p815, %s41, 1
        %s817 = smul.addr %s816, 6
        %s818 = scalar_lea.vmem %s13, %s817
        %p819 = pneg %p392
        %p820 = pneg %p389
        %p821 = scmp.lt.s32.totalorder %s41, 1
        %s822 = scalar_select %p821, %s41, 1
        %s823 = smul.addr %s822, 192
        %s824 = smul.addr %s823, 4
        %s825 = scalar_lea.vmem %s14, %s824
        %p826 = pneg %p418
        %p827 = pneg %p415
        %p828 = scmp.lt.s32.totalorder %s41, 1
        %s829 = scalar_select %p828, %s41, 1
        %s830 = smul.addr %s829, 2
        %s831 = scalar_lea.vmem %s15, %s830
        %p832 = pneg %p444
        %p833 = pneg %p441
        %p834 = pneg %p465
        %p835 = pneg %p462
        %p836 = pneg %p486
        %p837 = pneg %p483
        %p838 = pneg %p507
        %p839 = pneg %p504
        %p840 = pneg %p528
        %p841 = pneg %p525
        %p842 = pneg %p549
        %p843 = pneg %p546
        %p844 = pneg %p570
        %p845 = pneg %p567
        %p846 = pneg %p596
        %p847 = pneg %p593
        %s848 = sand.u32 %s583, 1
        %s849 = scalar_lea.sflag [#allocation4], %s848
        %s850 = sand.u32 %s583, 1
        %s851 = scalar_lea.vmem [#allocation3], %s850
        %p852 = scmp.lt.s32.totalorder %s40, 1
        %s853 = scalar_select %p852, %s40, 1
        %s854 = smul.addr %s853, 32
        %s855 = smul.addr %s854, 4
        %s856 = scalar_lea.vmem %s0, %s855
        %p857 = scmp.lt.s32.totalorder %s41, 1
        %s858 = scalar_select %p857, %s41, 1
        %s859 = smul.addr %s858, 2
        %s860 = scalar_lea.vmem %s4, %s859
        %p861 = scmp.lt.s32.totalorder %s41, 1
        %s862 = scalar_select %p861, %s41, 1
        %s863 = smul.addr %s862, 2
        %s864 = scalar_lea.vmem %s5, %s863
        %p865 = scmp.lt.s32.totalorder %s41, 1
        %s866 = scalar_select %p865, %s41, 1
        %s867 = smul.addr %s866, 120
        %s868 = smul.addr %s867, 4
        %s869 = scalar_lea.vmem %s6, %s868
        %p870 = scmp.lt.s32.totalorder %s41, 1
        %s871 = scalar_select %p870, %s41, 1
        %s872 = smul.addr %s871, 5
        %s873 = scalar_lea.vmem %s7, %s872
        %p874 = scmp.lt.s32.totalorder %s41, 1
        %s875 = scalar_select %p874, %s41, 1
        %s876 = smul.addr %s875, 48
        %s877 = smul.addr %s876, 4
        %s878 = scalar_lea.vmem %s8, %s877
        %p879 = scmp.lt.s32.totalorder %s41, 1
        %s880 = scalar_select %p879, %s41, 1
        %s881 = smul.addr %s880, 2
        %s882 = scalar_lea.vmem %s9, %s881
        %p883 = scmp.lt.s32.totalorder %s41, 1
        %s884 = scalar_select %p883, %s41, 1
        %s885 = smul.addr %s884, 2
        %s886 = scalar_lea.vmem %s10, %s885
        %p887 = scmp.lt.s32.totalorder %s41, 1
        %s888 = scalar_select %p887, %s41, 1
        %s889 = smul.addr %s888, 2
        %s890 = scalar_lea.vmem %s11, %s889
        %p891 = scmp.lt.s32.totalorder %s41, 1
        %s892 = scalar_select %p891, %s41, 1
        %s893 = smul.addr %s892, 144
        %s894 = smul.addr %s893, 4
        %s895 = scalar_lea.vmem %s12, %s894
        %p896 = scmp.lt.s32.totalorder %s41, 1
        %s897 = scalar_select %p896, %s41, 1
        %s898 = smul.addr %s897, 6
        %s899 = scalar_lea.vmem %s13, %s898
        %p900 = scmp.lt.s32.totalorder %s41, 1
        %s901 = scalar_select %p900, %s41, 1
        %s902 = smul.addr %s901, 192
        %s903 = smul.addr %s902, 4
        %s904 = scalar_lea.vmem %s14, %s903
        %p905 = scmp.lt.s32.totalorder %s41, 1
        %s906 = scalar_select %p905, %s41, 1
        %s907 = smul.addr %s906, 2
        %s908 = scalar_lea.vmem %s15, %s907
        %p910 = scmp.eq.s32.totalorder %s41, 0
        // Predicated region
        $region109: #{ast_forward.1} parent=107 // pred_check
          %p911 = pneg %p910
        $region110: #{ast_forward.1} parent=107 // pred_check_branch
          %913 = sbr.rel (%p911) target = $region112
        $region111: #{ast_forward.1} parent=107 // pred_region
          %v914 = vld [vmem:[%s856] sm:$0xff]
          %v915 = vld [vmem:[%s856 + $0x8] sm:$0xff]
          %v916 = vld [vmem:[%s856 + $0x10] sm:$0xff]
          %v917 = vld [vmem:[%s856 + $0x18] sm:$0xff]
          %v918 = vld [vmem:[%s856 + $0x20] sm:$0xff]
          %v919 = vld [vmem:[%s856 + $0x28] sm:$0xff]
          %v920 = vld [vmem:[%s856 + $0x30] sm:$0xff]
          %v921 = vld [vmem:[%s856 + $0x38] sm:$0xff]
          %v922 = vld [vmem:[%s856 + $0x40] sm:$0xff]
          %v923 = vld [vmem:[%s856 + $0x48] sm:$0xff]
          %v924 = vld [vmem:[%s856 + $0x50] sm:$0xff]
          %v925 = vld [vmem:[%s856 + $0x58] sm:$0xff]
          %v926 = vld [vmem:[%s856 + $0x60] sm:$0xff]
          %v927 = vld [vmem:[%s856 + $0x68] sm:$0xff]
          %v928 = vld [vmem:[%s856 + $0x70] sm:$0xff]
          %v929 = vld [vmem:[%s856 + $0x78] sm:$0xff]
          %v930 = vld [vmem:[%s1] sm:$0xff]
          %v931 = vld [vmem:[%s1 + $0x8] sm:$0xff]
          %v932 = vld [vmem:[%s1 + $0x10] sm:$0xff]
          %v933 = vld [vmem:[%s1 + $0x18] sm:$0xff]
          %v934 = vld [vmem:[%s1 + $0x20] sm:$0xff]
          %v935 = vld [vmem:[%s1 + $0x28] sm:$0xff]
          %v936 = vld [vmem:[%s1 + $0x30] sm:$0xff]
          %v937 = vld [vmem:[%s1 + $0x38] sm:$0xff]
          %v938 = vld [vmem:[%s1 + $0x40] sm:$0xff]
          %v939 = vld [vmem:[%s1 + $0x48] sm:$0xff]
          %v940 = vld [vmem:[%s1 + $0x50] sm:$0xff]
          %v941 = vld [vmem:[%s1 + $0x58] sm:$0xff]
          %v942 = vld [vmem:[%s1 + $0x60] sm:$0xff]
          %v943 = vld [vmem:[%s1 + $0x68] sm:$0xff]
          %v944 = vld [vmem:[%s1 + $0x70] sm:$0xff]
          %v945 = vld [vmem:[%s1 + $0x78] sm:$0xff]
          %v946 = vld [vmem:[%s1 + $0x80] sm:$0xff]
          %v947 = vld [vmem:[%s1 + $0x88] sm:$0xff]
          %v948 = vld [vmem:[%s1 + $0x90] sm:$0xff]
          %v949 = vld [vmem:[%s1 + $0x98] sm:$0xff]
          %v950 = vld [vmem:[%s1 + $0xa0] sm:$0xff]
          %v951 = vld [vmem:[%s1 + $0xa8] sm:$0xff]
          %v952 = vld [vmem:[%s1 + $0xb0] sm:$0xff]
          %v953 = vld [vmem:[%s1 + $0xb8] sm:$0xff]
          %v954 = vld [vmem:[%s1 + $0xc0] sm:$0xff]
          %v955 = vld [vmem:[%s1 + $0xc8] sm:$0xff]
          %v956 = vld [vmem:[%s1 + $0xd0] sm:$0xff]
          %v957 = vld [vmem:[%s1 + $0xd8] sm:$0xff]
          %v958 = vld [vmem:[%s1 + $0xe0] sm:$0xff]
          %v959 = vld [vmem:[%s1 + $0xe8] sm:$0xff]
          %v960 = vld [vmem:[%s1 + $0xf0] sm:$0xff]
          %v961 = vld [vmem:[%s1 + $0xf8] sm:$0xff]
          %v962 = vld [vmem:[%s2] sm:$0xff]
          %v963 = vld [vmem:[%s2 + $0x8] sm:$0xff]
          %v964 = vld [vmem:[%s2 + $0x10] sm:$0xff]
          %v965 = vld [vmem:[%s2 + $0x18] sm:$0xff]
          %v966 = vld [vmem:[%s2 + $0x20] sm:$0xff]
          %v967 = vld [vmem:[%s2 + $0x28] sm:$0xff]
          %v968 = vld [vmem:[%s2 + $0x30] sm:$0xff]
          %v969 = vld [vmem:[%s2 + $0x38] sm:$0xff]
          %v970 = vld [vmem:[%s2 + $0x40] sm:$0xff]
          %v971 = vld [vmem:[%s2 + $0x48] sm:$0xff]
          %v972 = vld [vmem:[%s2 + $0x50] sm:$0xff]
          %v973 = vld [vmem:[%s2 + $0x58] sm:$0xff]
          %v974 = vld [vmem:[%s2 + $0x60] sm:$0xff]
          %v975 = vld [vmem:[%s2 + $0x68] sm:$0xff]
          %v976 = vld [vmem:[%s2 + $0x70] sm:$0xff]
          %v977 = vld [vmem:[%s2 + $0x78] sm:$0xff]
          %v978 = vld [vmem:[%s2 + $0x80] sm:$0xff]
          %v979 = vld [vmem:[%s2 + $0x88] sm:$0xff]
          %v980 = vld [vmem:[%s2 + $0x90] sm:$0xff]
          %v981 = vld [vmem:[%s2 + $0x98] sm:$0xff]
          %v982 = vld [vmem:[%s2 + $0xa0] sm:$0xff]
          %v983 = vld [vmem:[%s2 + $0xa8] sm:$0xff]
          %v984 = vld [vmem:[%s2 + $0xb0] sm:$0xff]
          %v985 = vld [vmem:[%s2 + $0xb8] sm:$0xff]
          %v986 = vld [vmem:[%s2 + $0xc0] sm:$0xff]
          %v987 = vld [vmem:[%s2 + $0xc8] sm:$0xff]
          %v988 = vld [vmem:[%s2 + $0xd0] sm:$0xff]
          %v989 = vld [vmem:[%s2 + $0xd8] sm:$0xff]
          %v990 = vld [vmem:[%s2 + $0xe0] sm:$0xff]
          %v991 = vld [vmem:[%s2 + $0xe8] sm:$0xff]
          %v992 = vld [vmem:[%s2 + $0xf0] sm:$0xff]
          %v993 = vld [vmem:[%s2 + $0xf8] sm:$0xff]
          %v1010 = vunpack.c.l.b16 %v914
          %v1011 = vunpack.c.h.b16 %v914
          %v1012 = vunpack.c.l.b16 %v915
          %v1013 = vunpack.c.h.b16 %v915
          %v1014 = vunpack.c.l.b16 %v916
          %v1015 = vunpack.c.h.b16 %v916
          %v1016 = vunpack.c.l.b16 %v917
          %v1017 = vunpack.c.h.b16 %v917
          %v1018 = vunpack.c.l.b16 %v918
          %v1019 = vunpack.c.h.b16 %v918
          %v1020 = vunpack.c.l.b16 %v919
          %v1021 = vunpack.c.h.b16 %v919
          %v1022 = vunpack.c.l.b16 %v920
          %v1023 = vunpack.c.h.b16 %v920
          %v1024 = vunpack.c.l.b16 %v921
          %v1025 = vunpack.c.h.b16 %v921
          %v1026 = vunpack.c.l.b16 %v922
          %v1027 = vunpack.c.h.b16 %v922
          %v1028 = vunpack.c.l.b16 %v923
          %v1029 = vunpack.c.h.b16 %v923
          %v1030 = vunpack.c.l.b16 %v924
          %v1031 = vunpack.c.h.b16 %v924
          %v1032 = vunpack.c.l.b16 %v925
          %v1033 = vunpack.c.h.b16 %v925
          %v1034 = vunpack.c.l.b16 %v926
          %v1035 = vunpack.c.h.b16 %v926
          %v1036 = vunpack.c.l.b16 %v927
          %v1037 = vunpack.c.h.b16 %v927
          %v1038 = vunpack.c.l.b16 %v928
          %v1039 = vunpack.c.h.b16 %v928
          %v1040 = vunpack.c.l.b16 %v929
          %v1041 = vunpack.c.h.b16 %v929
          %v1042 = vpack.c.b16 %v1012, %v1010
          %v1043 = vpack.c.b16 %v1013, %v1011
          %v1044 = vpack.c.b16 %v1016, %v1014
          %v1045 = vpack.c.b16 %v1017, %v1015
          %v1046 = vpack.c.b16 %v1020, %v1018
          %v1047 = vpack.c.b16 %v1021, %v1019
          %v1048 = vpack.c.b16 %v1024, %v1022
          %v1049 = vpack.c.b16 %v1025, %v1023
          %v1050 = vpack.c.b16 %v1028, %v1026
          %v1051 = vpack.c.b16 %v1029, %v1027
          %v1052 = vpack.c.b16 %v1032, %v1030
          %v1053 = vpack.c.b16 %v1033, %v1031
          %v1054 = vpack.c.b16 %v1036, %v1034
          %v1055 = vpack.c.b16 %v1037, %v1035
          %v1056 = vpack.c.b16 %v1040, %v1038
          %v1057 = vpack.c.b16 %v1041, %v1039
          %v1106 = vunpack.c.l.b16 %v930
          %v1107 = vunpack.c.h.b16 %v930
          %v1108 = vunpack.c.l.b16 %v931
          %v1109 = vunpack.c.h.b16 %v931
          %v1110 = vunpack.c.l.b16 %v932
          %v1111 = vunpack.c.h.b16 %v932
          %v1112 = vunpack.c.l.b16 %v933
          %v1113 = vunpack.c.h.b16 %v933
          %v1114 = vunpack.c.l.b16 %v934
          %v1115 = vunpack.c.h.b16 %v934
          %v1116 = vunpack.c.l.b16 %v935
          %v1117 = vunpack.c.h.b16 %v935
          %v1118 = vunpack.c.l.b16 %v936
          %v1119 = vunpack.c.h.b16 %v936
          %v1120 = vunpack.c.l.b16 %v937
          %v1121 = vunpack.c.h.b16 %v937
          %v1122 = vunpack.c.l.b16 %v938
          %v1123 = vunpack.c.h.b16 %v938
          %v1124 = vunpack.c.l.b16 %v939
          %v1125 = vunpack.c.h.b16 %v939
          %v1126 = vunpack.c.l.b16 %v940
          %v1127 = vunpack.c.h.b16 %v940
          %v1128 = vunpack.c.l.b16 %v941
          %v1129 = vunpack.c.h.b16 %v941
          %v1130 = vunpack.c.l.b16 %v942
          %v1131 = vunpack.c.h.b16 %v942
          %v1132 = vunpack.c.l.b16 %v943
          %v1133 = vunpack.c.h.b16 %v943
          %v1134 = vunpack.c.l.b16 %v944
          %v1135 = vunpack.c.h.b16 %v944
          %v1136 = vunpack.c.l.b16 %v945
          %v1137 = vunpack.c.h.b16 %v945
          %v1138 = vunpack.c.l.b16 %v946
          %v1139 = vunpack.c.h.b16 %v946
          %v1140 = vunpack.c.l.b16 %v947
          %v1141 = vunpack.c.h.b16 %v947
          %v1142 = vunpack.c.l.b16 %v948
          %v1143 = vunpack.c.h.b16 %v948
          %v1144 = vunpack.c.l.b16 %v949
          %v1145 = vunpack.c.h.b16 %v949
          %v1146 = vunpack.c.l.b16 %v950
          %v1147 = vunpack.c.h.b16 %v950
          %v1148 = vunpack.c.l.b16 %v951
          %v1149 = vunpack.c.h.b16 %v951
          %v1150 = vunpack.c.l.b16 %v952
          %v1151 = vunpack.c.h.b16 %v952
          %v1152 = vunpack.c.l.b16 %v953
          %v1153 = vunpack.c.h.b16 %v953
          %v1154 = vunpack.c.l.b16 %v954
          %v1155 = vunpack.c.h.b16 %v954
          %v1156 = vunpack.c.l.b16 %v955
          %v1157 = vunpack.c.h.b16 %v955
          %v1158 = vunpack.c.l.b16 %v956
          %v1159 = vunpack.c.h.b16 %v956
          %v1160 = vunpack.c.l.b16 %v957
          %v1161 = vunpack.c.h.b16 %v957
          %v1162 = vunpack.c.l.b16 %v958
          %v1163 = vunpack.c.h.b16 %v958
          %v1164 = vunpack.c.l.b16 %v959
          %v1165 = vunpack.c.h.b16 %v959
          %v1166 = vunpack.c.l.b16 %v960
          %v1167 = vunpack.c.h.b16 %v960
          %v1168 = vunpack.c.l.b16 %v961
          %v1169 = vunpack.c.h.b16 %v961
          %v1170 = vpack.c.b16 %v1108, %v1106
          %v1171 = vpack.c.b16 %v1109, %v1107
          %v1172 = vpack.c.b16 %v1112, %v1110
          %v1173 = vpack.c.b16 %v1113, %v1111
          %v1174 = vpack.c.b16 %v1116, %v1114
          %v1175 = vpack.c.b16 %v1117, %v1115
          %v1176 = vpack.c.b16 %v1120, %v1118
          %v1177 = vpack.c.b16 %v1121, %v1119
          %v1178 = vpack.c.b16 %v1124, %v1122
          %v1179 = vpack.c.b16 %v1125, %v1123
          %v1180 = vpack.c.b16 %v1128, %v1126
          %v1181 = vpack.c.b16 %v1129, %v1127
          %v1182 = vpack.c.b16 %v1132, %v1130
          %v1183 = vpack.c.b16 %v1133, %v1131
          %v1184 = vpack.c.b16 %v1136, %v1134
          %v1185 = vpack.c.b16 %v1137, %v1135
          %v1186 = vpack.c.b16 %v1140, %v1138
          %v1187 = vpack.c.b16 %v1141, %v1139
          %v1188 = vpack.c.b16 %v1144, %v1142
          %v1189 = vpack.c.b16 %v1145, %v1143
          %v1190 = vpack.c.b16 %v1148, %v1146
          %v1191 = vpack.c.b16 %v1149, %v1147
          %v1192 = vpack.c.b16 %v1152, %v1150
          %v1193 = vpack.c.b16 %v1153, %v1151
          %v1194 = vpack.c.b16 %v1156, %v1154
          %v1195 = vpack.c.b16 %v1157, %v1155
          %v1196 = vpack.c.b16 %v1160, %v1158
          %v1197 = vpack.c.b16 %v1161, %v1159
          %v1198 = vpack.c.b16 %v1164, %v1162
          %v1199 = vpack.c.b16 %v1165, %v1163
          %v1200 = vpack.c.b16 %v1168, %v1166
          %v1201 = vpack.c.b16 %v1169, %v1167
          %1234 = vmatprep.subr.bf16.mxu0 %v1171
          %1235 = vmatpush1.bf16.msra.mxu0 %v1170
          %1236 = vmatprep.subr.bf16.mxu0 %v1173
          %1237 = vmatpush1.bf16.msra.mxu0 %v1172
          %1238 = vmatprep.subr.bf16.mxu0 %v1175
          %1239 = vmatpush1.bf16.msra.mxu0 %v1174
          %1240 = vmatprep.subr.bf16.mxu0 %v1177
          %1241 = vmatpush1.bf16.msra.mxu0 %v1176
          %1242 = vmatprep.subr.bf16.mxu0 %v1179
          %1243 = vmatpush1.bf16.msra.mxu0 %v1178
          %1244 = vmatprep.subr.bf16.mxu0 %v1181
          %1245 = vmatpush1.bf16.msra.mxu0 %v1180
          %1246 = vmatprep.subr.bf16.mxu0 %v1183
          %1247 = vmatpush1.bf16.msra.mxu0 %v1182
          %1248 = vmatprep.subr.bf16.mxu0 %v1185
          %1249 = vmatpush1.bf16.msra.mxu0 %v1184
          %1250 = vmatprep.subr.bf16.mxu0 %v1187
          %1251 = vmatpush1.bf16.msra.mxu0 %v1186
          %1252 = vmatprep.subr.bf16.mxu0 %v1189
          %1253 = vmatpush1.bf16.msra.mxu0 %v1188
          %1254 = vmatprep.subr.bf16.mxu0 %v1191
          %1255 = vmatpush1.bf16.msra.mxu0 %v1190
          %1256 = vmatprep.subr.bf16.mxu0 %v1193
          %1257 = vmatpush1.bf16.msra.mxu0 %v1192
          %1258 = vmatprep.subr.bf16.mxu0 %v1195
          %1259 = vmatpush1.bf16.msra.mxu0 %v1194
          %1260 = vmatprep.subr.bf16.mxu0 %v1197
          %1261 = vmatpush1.bf16.msra.mxu0 %v1196
          %1262 = vmatprep.subr.bf16.mxu0 %v1199
          %1263 = vmatpush1.bf16.msra.mxu0 %v1198
          %1264 = vmatprep.subr.bf16.mxu0 %v1201
          %1265 = vmatpush1.bf16.msra.mxu0 %v1200
          %1266 = vmatprep.mubr.bf16.mxu0 %v1043
          %1267 = vmatmul.mubr.bf16.gmra.mrb[0].mxu0 %v1042
          %v1268 = vpop.f32.mrb[0].mxu0
          %v1269 = vadd.f32 %v962, %v1268
          %v1270 = vpop.f32.mrb[0].mxu0
          %v1271 = vadd.f32 %v963, %v1270
          %v1272 = vpop.f32.mrb[0].mxu0
          %v1273 = vadd.f32 %v964, %v1272
          %v1274 = vpop.f32.mrb[0].mxu0
          %v1275 = vadd.f32 %v965, %v1274
          %1276 = vmatprep.mubr.bf16.mxu0 %v1045
          %1277 = vmatmul.mubr.bf16.gmra.mrb[0].mxu0 %v1044
          %v1278 = vpop.f32.mrb[0].mxu0
          %v1279 = vadd.f32 %v966, %v1278
          %v1280 = vpop.f32.mrb[0].mxu0
          %v1281 = vadd.f32 %v967, %v1280
          %v1282 = vpop.f32.mrb[0].mxu0
          %v1283 = vadd.f32 %v968, %v1282
          %v1284 = vpop.f32.mrb[0].mxu0
          %v1285 = vadd.f32 %v969, %v1284
          %1286 = vmatprep.mubr.bf16.mxu0 %v1047
          %1287 = vmatmul.mubr.bf16.gmra.mrb[0].mxu0 %v1046
          %v1288 = vpop.f32.mrb[0].mxu0
          %v1289 = vadd.f32 %v970, %v1288
          %v1290 = vpop.f32.mrb[0].mxu0
          %v1291 = vadd.f32 %v971, %v1290
          %v1292 = vpop.f32.mrb[0].mxu0
          %v1293 = vadd.f32 %v972, %v1292
          %v1294 = vpop.f32.mrb[0].mxu0
          %v1295 = vadd.f32 %v973, %v1294
          %1296 = vmatprep.mubr.bf16.mxu0 %v1049
          %1297 = vmatmul.mubr.bf16.gmra.mrb[0].mxu0 %v1048
          %v1298 = vpop.f32.mrb[0].mxu0
          %v1299 = vadd.f32 %v974, %v1298
          %v1300 = vpop.f32.mrb[0].mxu0
          %v1301 = vadd.f32 %v975, %v1300
          %v1302 = vpop.f32.mrb[0].mxu0
          %v1303 = vadd.f32 %v976, %v1302
          %v1304 = vpop.f32.mrb[0].mxu0
          %v1305 = vadd.f32 %v977, %v1304
          %1306 = vmatprep.mubr.bf16.mxu0 %v1051
          %1307 = vmatmul.mubr.bf16.gmra.mrb[0].mxu0 %v1050
          %v1308 = vpop.f32.mrb[0].mxu0
          %v1309 = vadd.f32 %v978, %v1308
          %v1310 = vpop.f32.mrb[0].mxu0
          %v1311 = vadd.f32 %v979, %v1310
          %v1312 = vpop.f32.mrb[0].mxu0
          %v1313 = vadd.f32 %v980, %v1312
          %v1314 = vpop.f32.mrb[0].mxu0
          %v1315 = vadd.f32 %v981, %v1314
          %1316 = vmatprep.mubr.bf16.mxu0 %v1053
          %1317 = vmatmul.mubr.bf16.gmra.mrb[0].mxu0 %v1052
          %v1318 = vpop.f32.mrb[0].mxu0
          %v1319 = vadd.f32 %v982, %v1318
          %v1320 = vpop.f32.mrb[0].mxu0
          %v1321 = vadd.f32 %v983, %v1320
          %v1322 = vpop.f32.mrb[0].mxu0
          %v1323 = vadd.f32 %v984, %v1322
          %v1324 = vpop.f32.mrb[0].mxu0
          %v1325 = vadd.f32 %v985, %v1324
          %1326 = vmatprep.mubr.bf16.mxu0 %v1055
          %1327 = vmatmul.mubr.bf16.gmra.mrb[0].mxu0 %v1054
          %v1328 = vpop.f32.mrb[0].mxu0
          %v1329 = vadd.f32 %v986, %v1328
          %v1330 = vpop.f32.mrb[0].mxu0
          %v1331 = vadd.f32 %v987, %v1330
          %v1332 = vpop.f32.mrb[0].mxu0
          %v1333 = vadd.f32 %v988, %v1332
          %v1334 = vpop.f32.mrb[0].mxu0
          %v1335 = vadd.f32 %v989, %v1334
          %1336 = vmatprep.mubr.bf16.mxu0 %v1057
          %1337 = vmatmul.mubr.bf16.gmra.mrb[0].mxu0 %v1056
          %v1338 = vpop.f32.mrb[0].mxu0
          %v1339 = vadd.f32 %v990, %v1338
          %v1340 = vpop.f32.mrb[0].mxu0
          %v1341 = vadd.f32 %v991, %v1340
          %v1342 = vpop.f32.mrb[0].mxu0
          %v1343 = vadd.f32 %v992, %v1342
          %v1344 = vpop.f32.mrb[0].mxu0
          %v1345 = vadd.f32 %v993, %v1344
          %1346 = vdwg.mxu0
          %1347 = vst [vmem:[#allocation2] sm:$0xff] %v1269
          %vm1348 = vcmask 523264
          %1349 = vst.msk [vmem:[#allocation2 + $0x8] sm:$0xff] %vm1348, %v1271
          %1350 = vst [vmem:[#allocation2 + $0x10] sm:$0xff] %v1273
          %1351 = vst.msk [vmem:[#allocation2 + $0x18] sm:$0xff] %vm1348, %v1275
          %1352 = vst [vmem:[#allocation2 + $0x20] sm:$0xff] %v1279
          %1353 = vst.msk [vmem:[#allocation2 + $0x28] sm:$0xff] %vm1348, %v1281
          %1354 = vst [vmem:[#allocation2 + $0x30] sm:$0xff] %v1283
          %1355 = vst.msk [vmem:[#allocation2 + $0x38] sm:$0xff] %vm1348, %v1285
          %1356 = vst [vmem:[#allocation2 + $0x40] sm:$0xff] %v1289
          %1357 = vst.msk [vmem:[#allocation2 + $0x48] sm:$0xff] %vm1348, %v1291
          %1358 = vst [vmem:[#allocation2 + $0x50] sm:$0xff] %v1293
          %1359 = vst.msk [vmem:[#allocation2 + $0x58] sm:$0xff] %vm1348, %v1295
          %1360 = vst [vmem:[#allocation2 + $0x60] sm:$0xff] %v1299
          %1361 = vst.msk [vmem:[#allocation2 + $0x68] sm:$0xff] %vm1348, %v1301
          %1362 = vst [vmem:[#allocation2 + $0x70] sm:$0xff] %v1303
          %1363 = vst.msk [vmem:[#allocation2 + $0x78] sm:$0xff] %vm1348, %v1305
          %1364 = vst [vmem:[#allocation2 + $0x80] sm:$0xff] %v1309
          %1365 = vst.msk [vmem:[#allocation2 + $0x88] sm:$0xff] %vm1348, %v1311
          %1366 = vst [vmem:[#allocation2 + $0x90] sm:$0xff] %v1313
          %1367 = vst.msk [vmem:[#allocation2 + $0x98] sm:$0xff] %vm1348, %v1315
          %1368 = vst [vmem:[#allocation2 + $0xa0] sm:$0xff] %v1319
          %1369 = vst.msk [vmem:[#allocation2 + $0xa8] sm:$0xff] %vm1348, %v1321
          %1370 = vst [vmem:[#allocation2 + $0xb0] sm:$0xff] %v1323
          %1371 = vst.msk [vmem:[#allocation2 + $0xb8] sm:$0xff] %vm1348, %v1325
          %1372 = vst [vmem:[#allocation2 + $0xc0] sm:$0xff] %v1329
          %1373 = vst.msk [vmem:[#allocation2 + $0xc8] sm:$0xff] %vm1348, %v1331
          %1374 = vst [vmem:[#allocation2 + $0xd0] sm:$0xff] %v1333
          %1375 = vst.msk [vmem:[#allocation2 + $0xd8] sm:$0xff] %vm1348, %v1335
          %1376 = vst [vmem:[#allocation2 + $0xe0] sm:$0xff] %v1339
          %1377 = vst.msk [vmem:[#allocation2 + $0xe8] sm:$0xff] %vm1348, %v1341
          %1378 = vst [vmem:[#allocation2 + $0xf0] sm:$0xff] %v1343
          %1379 = vst.msk [vmem:[#allocation2 + $0xf8] sm:$0xff] %vm1348, %v1345
        $region112: #{ast_forward.1} parent=107 // pred_fallthru
          _
        %v1380 = vld [vmem:[#allocation2] sm:$0xff]
        %v1381 = vld [vmem:[#allocation2 + $0x8] sm:$0xff]
        %v1382 = vld [vmem:[#allocation2 + $0x10] sm:$0xff]
        %v1383 = vld [vmem:[#allocation2 + $0x18] sm:$0xff]
        %v1384 = vld [vmem:[#allocation2 + $0x20] sm:$0xff]
        %v1385 = vld [vmem:[#allocation2 + $0x28] sm:$0xff]
        %v1386 = vld [vmem:[#allocation2 + $0x30] sm:$0xff]
        %v1387 = vld [vmem:[#allocation2 + $0x38] sm:$0xff]
        %v1388 = vld [vmem:[#allocation2 + $0x40] sm:$0xff]
        %v1389 = vld [vmem:[#allocation2 + $0x48] sm:$0xff]
        %v1390 = vld [vmem:[#allocation2 + $0x50] sm:$0xff]
        %v1391 = vld [vmem:[#allocation2 + $0x58] sm:$0xff]
        %v1392 = vld [vmem:[#allocation2 + $0x60] sm:$0xff]
        %v1393 = vld [vmem:[#allocation2 + $0x68] sm:$0xff]
        %v1394 = vld [vmem:[#allocation2 + $0x70] sm:$0xff]
        %v1395 = vld [vmem:[#allocation2 + $0x78] sm:$0xff]
        %v1396 = vld [vmem:[#allocation2 + $0x80] sm:$0xff]
        %v1397 = vld [vmem:[#allocation2 + $0x88] sm:$0xff]
        %v1398 = vld [vmem:[#allocation2 + $0x90] sm:$0xff]
        %v1399 = vld [vmem:[#allocation2 + $0x98] sm:$0xff]
        %v1400 = vld [vmem:[#allocation2 + $0xa0] sm:$0xff]
        %v1401 = vld [vmem:[#allocation2 + $0xa8] sm:$0xff]
        %v1402 = vld [vmem:[#allocation2 + $0xb0] sm:$0xff]
        %v1403 = vld [vmem:[#allocation2 + $0xb8] sm:$0xff]
        %v1404 = vld [vmem:[#allocation2 + $0xc0] sm:$0xff]
        %v1405 = vld [vmem:[#allocation2 + $0xc8] sm:$0xff]
        %v1406 = vld [vmem:[#allocation2 + $0xd0] sm:$0xff]
        %v1407 = vld [vmem:[#allocation2 + $0xd8] sm:$0xff]
        %v1408 = vld [vmem:[#allocation2 + $0xe0] sm:$0xff]
        %v1409 = vld [vmem:[#allocation2 + $0xe8] sm:$0xff]
        %v1410 = vld [vmem:[#allocation2 + $0xf0] sm:$0xff]
        %v1411 = vld [vmem:[#allocation2 + $0xf8] sm:$0xff]
        %v1412 = vld [vmem:[%s860] sm:$0x3]
        %v1413 = vld [vmem:[%s864] sm:$0x3]
        %vm1414 = vcmask 523264
        %v1415 = vsel %vm1414, %v1381, 0.0
        %v1416 = vadd.f32 %v1380, %v1415
        %1417 = vadd.xlane.f32.xlu0 %v1416
        %v1418 = vpop.xlane.xlu0 %1417
        %v1419 = vsel %vm1414, %v1383, 0.0
        %v1420 = vadd.f32 %v1382, %v1419
        %1421 = vadd.xlane.f32.xlu0 %v1420
        %v1422 = vpop.xlane.xlu0 %1421
        %v1423 = vsel %vm1414, %v1385, 0.0
        %v1424 = vadd.f32 %v1384, %v1423
        %1425 = vadd.xlane.f32.xlu0 %v1424
        %v1426 = vpop.xlane.xlu0 %1425
        %v1427 = vsel %vm1414, %v1387, 0.0
        %v1428 = vadd.f32 %v1386, %v1427
        %1429 = vadd.xlane.f32.xlu0 %v1428
        %v1430 = vpop.xlane.xlu0 %1429
        %v1431 = vsel %vm1414, %v1389, 0.0
        %v1432 = vadd.f32 %v1388, %v1431
        %1433 = vadd.xlane.f32.xlu0 %v1432
        %v1434 = vpop.xlane.xlu0 %1433
        %v1435 = vsel %vm1414, %v1391, 0.0
        %v1436 = vadd.f32 %v1390, %v1435
        %1437 = vadd.xlane.f32.xlu0 %v1436
        %v1438 = vpop.xlane.xlu0 %1437
        %v1439 = vsel %vm1414, %v1393, 0.0
        %v1440 = vadd.f32 %v1392, %v1439
        %1441 = vadd.xlane.f32.xlu0 %v1440
        %v1442 = vpop.xlane.xlu0 %1441
        %v1443 = vsel %vm1414, %v1395, 0.0
        %v1444 = vadd.f32 %v1394, %v1443
        %1445 = vadd.xlane.f32.xlu0 %v1444
        %v1446 = vpop.xlane.xlu0 %1445
        %v1447 = vsel %vm1414, %v1397, 0.0
        %v1448 = vadd.f32 %v1396, %v1447
        %1449 = vadd.xlane.f32.xlu0 %v1448
        %v1450 = vpop.xlane.xlu0 %1449
        %v1451 = vsel %vm1414, %v1399, 0.0
        %v1452 = vadd.f32 %v1398, %v1451
        %1453 = vadd.xlane.f32.xlu0 %v1452
        %v1454 = vpop.xlane.xlu0 %1453
        %v1455 = vsel %vm1414, %v1401, 0.0
        %v1456 = vadd.f32 %v1400, %v1455
        %1457 = vadd.xlane.f32.xlu0 %v1456
        %v1458 = vpop.xlane.xlu0 %1457
        %v1459 = vsel %vm1414, %v1403, 0.0
        %v1460 = vadd.f32 %v1402, %v1459
        %1461 = vadd.xlane.f32.xlu0 %v1460
        %v1462 = vpop.xlane.xlu0 %1461
        %v1463 = vsel %vm1414, %v1405, 0.0
        %v1464 = vadd.f32 %v1404, %v1463
        %1465 = vadd.xlane.f32.xlu0 %v1464
        %v1466 = vpop.xlane.xlu0 %1465
        %v1467 = vsel %vm1414, %v1407, 0.0
        %v1468 = vadd.f32 %v1406, %v1467
        %1469 = vadd.xlane.f32.xlu0 %v1468
        %v1470 = vpop.xlane.xlu0 %1469
        %v1471 = vsel %vm1414, %v1409, 0.0
        %v1472 = vadd.f32 %v1408, %v1471
        %1473 = vadd.xlane.f32.xlu0 %v1472
        %v1474 = vpop.xlane.xlu0 %1473
        %v1475 = vsel %vm1414, %v1411, 0.0
        %v1476 = vadd.f32 %v1410, %v1475
        %1477 = vadd.xlane.f32.xlu0 %v1476
        %v1478 = vpop.xlane.xlu0 %1477
        %v1479 = vrcp.pop 192.0
        %v1480 = vmul.f32 %v1418, %v1479
        %v1481 = vmul.f32 %v1422, %v1479
        %v1482 = vmul.f32 %v1426, %v1479
        %v1483 = vmul.f32 %v1430, %v1479
        %v1484 = vmul.f32 %v1434, %v1479
        %v1485 = vmul.f32 %v1438, %v1479
        %v1486 = vmul.f32 %v1442, %v1479
        %v1487 = vmul.f32 %v1446, %v1479
        %v1488 = vmul.f32 %v1450, %v1479
        %v1489 = vmul.f32 %v1454, %v1479
        %v1490 = vmul.f32 %v1458, %v1479
        %v1491 = vmul.f32 %v1462, %v1479
        %v1492 = vmul.f32 %v1466, %v1479
        %v1493 = vmul.f32 %v1470, %v1479
        %v1494 = vmul.f32 %v1474, %v1479
        %v1495 = vmul.f32 %v1478, %v1479
        %v1496 = vsub.f32 %v1380, %v1480
        %v1497 = vsub.f32 %v1381, %v1480
        %v1498 = vsub.f32 %v1382, %v1481
        %v1499 = vsub.f32 %v1383, %v1481
        %v1500 = vsub.f32 %v1384, %v1482
        %v1501 = vsub.f32 %v1385, %v1482
        %v1502 = vsub.f32 %v1386, %v1483
        %v1503 = vsub.f32 %v1387, %v1483
        %v1504 = vsub.f32 %v1388, %v1484
        %v1505 = vsub.f32 %v1389, %v1484
        %v1506 = vsub.f32 %v1390, %v1485
        %v1507 = vsub.f32 %v1391, %v1485
        %v1508 = vsub.f32 %v1392, %v1486
        %v1509 = vsub.f32 %v1393, %v1486
        %v1510 = vsub.f32 %v1394, %v1487
        %v1511 = vsub.f32 %v1395, %v1487
        %v1512 = vsub.f32 %v1396, %v1488
        %v1513 = vsub.f32 %v1397, %v1488
        %v1514 = vsub.f32 %v1398, %v1489
        %v1515 = vsub.f32 %v1399, %v1489
        %v1516 = vsub.f32 %v1400, %v1490
        %v1517 = vsub.f32 %v1401, %v1490
        %v1518 = vsub.f32 %v1402, %v1491
        %v1519 = vsub.f32 %v1403, %v1491
        %v1520 = vsub.f32 %v1404, %v1492
        %v1521 = vsub.f32 %v1405, %v1492
        %v1522 = vsub.f32 %v1406, %v1493
        %v1523 = vsub.f32 %v1407, %v1493
        %v1524 = vsub.f32 %v1408, %v1494
        %v1525 = vsub.f32 %v1409, %v1494
        %v1526 = vsub.f32 %v1410, %v1495
        %v1527 = vsub.f32 %v1411, %v1495
        %v1528 = vmul.f32 %v1496, %v1496
        %v1529 = vmul.f32 %v1497, %v1497
        %v1530 = vmul.f32 %v1498, %v1498
        %v1531 = vmul.f32 %v1499, %v1499
        %v1532 = vmul.f32 %v1500, %v1500
        %v1533 = vmul.f32 %v1501, %v1501
        %v1534 = vmul.f32 %v1502, %v1502
        %v1535 = vmul.f32 %v1503, %v1503
        %v1536 = vmul.f32 %v1504, %v1504
        %v1537 = vmul.f32 %v1505, %v1505
        %v1538 = vmul.f32 %v1506, %v1506
        %v1539 = vmul.f32 %v1507, %v1507
        %v1540 = vmul.f32 %v1508, %v1508
        %v1541 = vmul.f32 %v1509, %v1509
        %v1542 = vmul.f32 %v1510, %v1510
        %v1543 = vmul.f32 %v1511, %v1511
        %v1544 = vmul.f32 %v1512, %v1512
        %v1545 = vmul.f32 %v1513, %v1513
        %v1546 = vmul.f32 %v1514, %v1514
        %v1547 = vmul.f32 %v1515, %v1515
        %v1548 = vmul.f32 %v1516, %v1516
        %v1549 = vmul.f32 %v1517, %v1517
        %v1550 = vmul.f32 %v1518, %v1518
        %v1551 = vmul.f32 %v1519, %v1519
        %v1552 = vmul.f32 %v1520, %v1520
        %v1553 = vmul.f32 %v1521, %v1521
        %v1554 = vmul.f32 %v1522, %v1522
        %v1555 = vmul.f32 %v1523, %v1523
        %v1556 = vmul.f32 %v1524, %v1524
        %v1557 = vmul.f32 %v1525, %v1525
        %v1558 = vmul.f32 %v1526, %v1526
        %v1559 = vmul.f32 %v1527, %v1527
        %v1560 = vsel %vm1414, %v1529, 0.0
        %v1561 = vadd.f32 %v1528, %v1560
        %1562 = vadd.xlane.f32.xlu0 %v1561
        %v1563 = vpop.xlane.xlu0 %1562
        %v1564 = vsel %vm1414, %v1531, 0.0
        %v1565 = vadd.f32 %v1530, %v1564
        %1566 = vadd.xlane.f32.xlu0 %v1565
        %v1567 = vpop.xlane.xlu0 %1566
        %v1568 = vsel %vm1414, %v1533, 0.0
        %v1569 = vadd.f32 %v1532, %v1568
        %1570 = vadd.xlane.f32.xlu0 %v1569
        %v1571 = vpop.xlane.xlu0 %1570
        %v1572 = vsel %vm1414, %v1535, 0.0
        %v1573 = vadd.f32 %v1534, %v1572
        %1574 = vadd.xlane.f32.xlu0 %v1573
        %v1575 = vpop.xlane.xlu0 %1574
        %v1576 = vsel %vm1414, %v1537, 0.0
        %v1577 = vadd.f32 %v1536, %v1576
        %1578 = vadd.xlane.f32.xlu0 %v1577
        %v1579 = vpop.xlane.xlu0 %1578
        %v1580 = vsel %vm1414, %v1539, 0.0
        %v1581 = vadd.f32 %v1538, %v1580
        %1582 = vadd.xlane.f32.xlu0 %v1581
        %v1583 = vpop.xlane.xlu0 %1582
        %v1584 = vsel %vm1414, %v1541, 0.0
        %v1585 = vadd.f32 %v1540, %v1584
        %1586 = vadd.xlane.f32.xlu0 %v1585
        %v1587 = vpop.xlane.xlu0 %1586
        %v1588 = vsel %vm1414, %v1543, 0.0
        %v1589 = vadd.f32 %v1542, %v1588
        %1590 = vadd.xlane.f32.xlu0 %v1589
        %v1591 = vpop.xlane.xlu0 %1590
        %v1592 = vsel %vm1414, %v1545, 0.0
        %v1593 = vadd.f32 %v1544, %v1592
        %1594 = vadd.xlane.f32.xlu0 %v1593
        %v1595 = vpop.xlane.xlu0 %1594
        %v1596 = vsel %vm1414, %v1547, 0.0
        %v1597 = vadd.f32 %v1546, %v1596
        %1598 = vadd.xlane.f32.xlu0 %v1597
        %v1599 = vpop.xlane.xlu0 %1598
        %v1600 = vsel %vm1414, %v1549, 0.0
        %v1601 = vadd.f32 %v1548, %v1600
        %1602 = vadd.xlane.f32.xlu0 %v1601
        %v1603 = vpop.xlane.xlu0 %1602
        %v1604 = vsel %vm1414, %v1551, 0.0
        %v1605 = vadd.f32 %v1550, %v1604
        %1606 = vadd.xlane.f32.xlu0 %v1605
        %v1607 = vpop.xlane.xlu0 %1606
        %v1608 = vsel %vm1414, %v1553, 0.0
        %v1609 = vadd.f32 %v1552, %v1608
        %1610 = vadd.xlane.f32.xlu0 %v1609
        %v1611 = vpop.xlane.xlu0 %1610
        %v1612 = vsel %vm1414, %v1555, 0.0
        %v1613 = vadd.f32 %v1554, %v1612
        %1614 = vadd.xlane.f32.xlu0 %v1613
        %v1615 = vpop.xlane.xlu0 %1614
        %v1616 = vsel %vm1414, %v1557, 0.0
        %v1617 = vadd.f32 %v1556, %v1616
        %1618 = vadd.xlane.f32.xlu0 %v1617
        %v1619 = vpop.xlane.xlu0 %1618
        %v1620 = vsel %vm1414, %v1559, 0.0
        %v1621 = vadd.f32 %v1558, %v1620
        %1622 = vadd.xlane.f32.xlu0 %v1621
        %v1623 = vpop.xlane.xlu0 %1622
        %v1624 = vmul.f32 %v1563, %v1479
        %v1625 = vmul.f32 %v1567, %v1479
        %v1626 = vmul.f32 %v1571, %v1479
        %v1627 = vmul.f32 %v1575, %v1479
        %v1628 = vmul.f32 %v1579, %v1479
        %v1629 = vmul.f32 %v1583, %v1479
        %v1630 = vmul.f32 %v1587, %v1479
        %v1631 = vmul.f32 %v1591, %v1479
        %v1632 = vmul.f32 %v1595, %v1479
        %v1633 = vmul.f32 %v1599, %v1479
        %v1634 = vmul.f32 %v1603, %v1479
        %v1635 = vmul.f32 %v1607, %v1479
        %v1636 = vmul.f32 %v1611, %v1479
        %v1637 = vmul.f32 %v1615, %v1479
        %v1638 = vmul.f32 %v1619, %v1479
        %v1639 = vmul.f32 %v1623, %v1479
        %v1640 = vadd.f32 %v1624, 1e-06
        %v1641 = vadd.f32 %v1625, 1e-06
        %v1642 = vadd.f32 %v1626, 1e-06
        %v1643 = vadd.f32 %v1627, 1e-06
        %v1644 = vadd.f32 %v1628, 1e-06
        %v1645 = vadd.f32 %v1629, 1e-06
        %v1646 = vadd.f32 %v1630, 1e-06
        %v1647 = vadd.f32 %v1631, 1e-06
        %v1648 = vadd.f32 %v1632, 1e-06
        %v1649 = vadd.f32 %v1633, 1e-06
        %v1650 = vadd.f32 %v1634, 1e-06
        %v1651 = vadd.f32 %v1635, 1e-06
        %v1652 = vadd.f32 %v1636, 1e-06
        %v1653 = vadd.f32 %v1637, 1e-06
        %v1654 = vadd.f32 %v1638, 1e-06
        %v1655 = vadd.f32 %v1639, 1e-06
        %v1656 = vrsqrt.pop %v1640
        %v1657 = vrsqrt.pop %v1641
        %v1658 = vrsqrt.pop %v1642
        %v1659 = vrsqrt.pop %v1643
        %v1660 = vrsqrt.pop %v1644
        %v1661 = vrsqrt.pop %v1645
        %v1662 = vrsqrt.pop %v1646
        %v1663 = vrsqrt.pop %v1647
        %v1664 = vrsqrt.pop %v1648
        %v1665 = vrsqrt.pop %v1649
        %v1666 = vrsqrt.pop %v1650
        %v1667 = vrsqrt.pop %v1651
        %v1668 = vrsqrt.pop %v1652
        %v1669 = vrsqrt.pop %v1653
        %v1670 = vrsqrt.pop %v1654
        %v1671 = vrsqrt.pop %v1655
        %v1672 = vmul.f32 %v1496, %v1656
        %v1673 = vmul.f32 %v1497, %v1656
        %v1674 = vmul.f32 %v1498, %v1657
        %v1675 = vmul.f32 %v1499, %v1657
        %v1676 = vmul.f32 %v1500, %v1658
        %v1677 = vmul.f32 %v1501, %v1658
        %v1678 = vmul.f32 %v1502, %v1659
        %v1679 = vmul.f32 %v1503, %v1659
        %v1680 = vmul.f32 %v1504, %v1660
        %v1681 = vmul.f32 %v1505, %v1660
        %v1682 = vmul.f32 %v1506, %v1661
        %v1683 = vmul.f32 %v1507, %v1661
        %v1684 = vmul.f32 %v1508, %v1662
        %v1685 = vmul.f32 %v1509, %v1662
        %v1686 = vmul.f32 %v1510, %v1663
        %v1687 = vmul.f32 %v1511, %v1663
        %v1688 = vmul.f32 %v1512, %v1664
        %v1689 = vmul.f32 %v1513, %v1664
        %v1690 = vmul.f32 %v1514, %v1665
        %v1691 = vmul.f32 %v1515, %v1665
        %v1692 = vmul.f32 %v1516, %v1666
        %v1693 = vmul.f32 %v1517, %v1666
        %v1694 = vmul.f32 %v1518, %v1667
        %v1695 = vmul.f32 %v1519, %v1667
        %v1696 = vmul.f32 %v1520, %v1668
        %v1697 = vmul.f32 %v1521, %v1668
        %v1698 = vmul.f32 %v1522, %v1669
        %v1699 = vmul.f32 %v1523, %v1669
        %v1700 = vmul.f32 %v1524, %v1670
        %v1701 = vmul.f32 %v1525, %v1670
        %v1702 = vmul.f32 %v1526, %v1671
        %v1703 = vmul.f32 %v1527, %v1671
        %v1705 = vlaneseq
        %v1706 = vshrl.u32 %v1705, 7
        %v1707 = vsub.s32 0, %v1706
        %v1708 = vrot.slane %v1412, %v1707
        %v1709 = vlaneseq
        %v1710 = vshrl.u32 %v1709, 7
        %v1711 = vsub.s32 1, %v1710
        %v1712 = vrot.slane %v1412, %v1711
        %v1715 = vmul.f32 %v1672, %v1708
        %v1716 = vmul.f32 %v1673, %v1712
        %v1717 = vmul.f32 %v1674, %v1708
        %v1718 = vmul.f32 %v1675, %v1712
        %v1719 = vmul.f32 %v1676, %v1708
        %v1720 = vmul.f32 %v1677, %v1712
        %v1721 = vmul.f32 %v1678, %v1708
        %v1722 = vmul.f32 %v1679, %v1712
        %v1723 = vmul.f32 %v1680, %v1708
        %v1724 = vmul.f32 %v1681, %v1712
        %v1725 = vmul.f32 %v1682, %v1708
        %v1726 = vmul.f32 %v1683, %v1712
        %v1727 = vmul.f32 %v1684, %v1708
        %v1728 = vmul.f32 %v1685, %v1712
        %v1729 = vmul.f32 %v1686, %v1708
        %v1730 = vmul.f32 %v1687, %v1712
        %v1731 = vmul.f32 %v1688, %v1708
        %v1732 = vmul.f32 %v1689, %v1712
        %v1733 = vmul.f32 %v1690, %v1708
        %v1734 = vmul.f32 %v1691, %v1712
        %v1735 = vmul.f32 %v1692, %v1708
        %v1736 = vmul.f32 %v1693, %v1712
        %v1737 = vmul.f32 %v1694, %v1708
        %v1738 = vmul.f32 %v1695, %v1712
        %v1739 = vmul.f32 %v1696, %v1708
        %v1740 = vmul.f32 %v1697, %v1712
        %v1741 = vmul.f32 %v1698, %v1708
        %v1742 = vmul.f32 %v1699, %v1712
        %v1743 = vmul.f32 %v1700, %v1708
        %v1744 = vmul.f32 %v1701, %v1712
        %v1745 = vmul.f32 %v1702, %v1708
        %v1746 = vmul.f32 %v1703, %v1712
        %v1748 = vlaneseq
        %v1749 = vshrl.u32 %v1748, 7
        %v1750 = vsub.s32 0, %v1749
        %v1751 = vrot.slane %v1413, %v1750
        %v1752 = vlaneseq
        %v1753 = vshrl.u32 %v1752, 7
        %v1754 = vsub.s32 1, %v1753
        %v1755 = vrot.slane %v1413, %v1754
        %v1758 = vadd.f32 %v1715, %v1751
        %v1759 = vadd.f32 %v1716, %v1755
        %v1760 = vadd.f32 %v1717, %v1751
        %v1761 = vadd.f32 %v1718, %v1755
        %v1762 = vadd.f32 %v1719, %v1751
        %v1763 = vadd.f32 %v1720, %v1755
        %v1764 = vadd.f32 %v1721, %v1751
        %v1765 = vadd.f32 %v1722, %v1755
        %v1766 = vadd.f32 %v1723, %v1751
        %v1767 = vadd.f32 %v1724, %v1755
        %v1768 = vadd.f32 %v1725, %v1751
        %v1769 = vadd.f32 %v1726, %v1755
        %v1770 = vadd.f32 %v1727, %v1751
        %v1771 = vadd.f32 %v1728, %v1755
        %v1772 = vadd.f32 %v1729, %v1751
        %v1773 = vadd.f32 %v1730, %v1755
        %v1774 = vadd.f32 %v1731, %v1751
        %v1775 = vadd.f32 %v1732, %v1755
        %v1776 = vadd.f32 %v1733, %v1751
        %v1777 = vadd.f32 %v1734, %v1755
        %v1778 = vadd.f32 %v1735, %v1751
        %v1779 = vadd.f32 %v1736, %v1755
        %v1780 = vadd.f32 %v1737, %v1751
        %v1781 = vadd.f32 %v1738, %v1755
        %v1782 = vadd.f32 %v1739, %v1751
        %v1783 = vadd.f32 %v1740, %v1755
        %v1784 = vadd.f32 %v1741, %v1751
        %v1785 = vadd.f32 %v1742, %v1755
        %v1786 = vadd.f32 %v1743, %v1751
        %v1787 = vadd.f32 %v1744, %v1755
        %v1788 = vadd.f32 %v1745, %v1751
        %v1789 = vadd.f32 %v1746, %v1755
        %v1790 = vpack.c.bf16 %v1760, %v1758
        %v1791 = vpack.c.bf16 %v1761, %v1759
        %v1792 = vpack.c.bf16 %v1764, %v1762
        %v1793 = vpack.c.bf16 %v1765, %v1763
        %v1794 = vpack.c.bf16 %v1768, %v1766
        %v1795 = vpack.c.bf16 %v1769, %v1767
        %v1796 = vpack.c.bf16 %v1772, %v1770
        %v1797 = vpack.c.bf16 %v1773, %v1771
        %v1798 = vpack.c.bf16 %v1776, %v1774
        %v1799 = vpack.c.bf16 %v1777, %v1775
        %v1800 = vpack.c.bf16 %v1780, %v1778
        %v1801 = vpack.c.bf16 %v1781, %v1779
        %v1802 = vpack.c.bf16 %v1784, %v1782
        %v1803 = vpack.c.bf16 %v1785, %v1783
        %v1804 = vpack.c.bf16 %v1788, %v1786
        %v1805 = vpack.c.bf16 %v1789, %v1787
        %v1806 = vld [vmem:[%s869] sm:$0xff]
        %v1807 = vld [vmem:[%s869 + $0x8] sm:$0xff]
        %v1808 = vld [vmem:[%s869 + $0x10] sm:$0xf]
        %v1809 = vld [vmem:[%s869 + $0x14] sm:$0xff]
        %v1810 = vld [vmem:[%s869 + $0x1c] sm:$0xff]
        %v1811 = vld [vmem:[%s869 + $0x24] sm:$0xf]
        %v1812 = vld [vmem:[%s869 + $0x28] sm:$0xff]
        %v1813 = vld [vmem:[%s869 + $0x30] sm:$0xff]
        %v1814 = vld [vmem:[%s869 + $0x38] sm:$0xf]
        %v1815 = vld [vmem:[%s869 + $0x3c] sm:$0xff]
        %v1816 = vld [vmem:[%s869 + $0x44] sm:$0xff]
        %v1817 = vld [vmem:[%s869 + $0x4c] sm:$0xf]
        %v1818 = vld [vmem:[%s869 + $0x50] sm:$0xff]
        %v1819 = vld [vmem:[%s869 + $0x58] sm:$0xff]
        %v1820 = vld [vmem:[%s869 + $0x60] sm:$0xf]
        %v1821 = vld [vmem:[%s869 + $0x64] sm:$0xff]
        %v1822 = vld [vmem:[%s869 + $0x6c] sm:$0xff]
        %v1823 = vld [vmem:[%s869 + $0x74] sm:$0xf]
        %v1824 = vld [vmem:[%s869 + $0x78] sm:$0xff]
        %v1825 = vld [vmem:[%s869 + $0x80] sm:$0xff]
        %v1826 = vld [vmem:[%s869 + $0x88] sm:$0xf]
        %v1827 = vld [vmem:[%s869 + $0x8c] sm:$0xff]
        %v1828 = vld [vmem:[%s869 + $0x94] sm:$0xff]
        %v1829 = vld [vmem:[%s869 + $0x9c] sm:$0xf]
        %v1830 = vld [vmem:[%s869 + $0xa0] sm:$0xff]
        %v1831 = vld [vmem:[%s869 + $0xa8] sm:$0xff]
        %v1832 = vld [vmem:[%s869 + $0xb0] sm:$0xf]
        %v1833 = vld [vmem:[%s869 + $0xb4] sm:$0xff]
        %v1834 = vld [vmem:[%s869 + $0xbc] sm:$0xff]
        %v1835 = vld [vmem:[%s869 + $0xc4] sm:$0xf]
        %v1836 = vld [vmem:[%s869 + $0xc8] sm:$0xff]
        %v1837 = vld [vmem:[%s869 + $0xd0] sm:$0xff]
        %v1838 = vld [vmem:[%s869 + $0xd8] sm:$0xf]
        %v1839 = vld [vmem:[%s869 + $0xdc] sm:$0xff]
        %v1840 = vld [vmem:[%s869 + $0xe4] sm:$0xff]
        %v1841 = vld [vmem:[%s869 + $0xec] sm:$0xf]
        %v1842 = vld [vmem:[%s869 + $0xf0] sm:$0xff]
        %v1843 = vld [vmem:[%s869 + $0xf8] sm:$0xff]
        %v1844 = vld [vmem:[%s869 + $0x100] sm:$0xf]
        %v1845 = vld [vmem:[%s869 + $0x104] sm:$0xff]
        %v1846 = vld [vmem:[%s869 + $0x10c] sm:$0xff]
        %v1847 = vld [vmem:[%s869 + $0x114] sm:$0xf]
        %v1848 = vld [vmem:[%s869 + $0x118] sm:$0xff]
        %v1849 = vld [vmem:[%s869 + $0x120] sm:$0xff]
        %v1850 = vld [vmem:[%s869 + $0x128] sm:$0xf]
        %v1851 = vld [vmem:[%s869 + $0x12c] sm:$0xff]
        %v1852 = vld [vmem:[%s869 + $0x134] sm:$0xff]
        %v1853 = vld [vmem:[%s869 + $0x13c] sm:$0xf]
        %v1854 = vld [vmem:[%s869 + $0x140] sm:$0xff]
        %v1855 = vld [vmem:[%s869 + $0x148] sm:$0xff]
        %v1856 = vld [vmem:[%s869 + $0x150] sm:$0xf]
        %v1857 = vld [vmem:[%s869 + $0x154] sm:$0xff]
        %v1858 = vld [vmem:[%s869 + $0x15c] sm:$0xff]
        %v1859 = vld [vmem:[%s869 + $0x164] sm:$0xf]
        %v1860 = vld [vmem:[%s869 + $0x168] sm:$0xff]
        %v1861 = vld [vmem:[%s869 + $0x170] sm:$0xff]
        %v1862 = vld [vmem:[%s869 + $0x178] sm:$0xf]
        %v1863 = vld [vmem:[%s869 + $0x17c] sm:$0xff]
        %v1864 = vld [vmem:[%s869 + $0x184] sm:$0xff]
        %v1865 = vld [vmem:[%s869 + $0x18c] sm:$0xf]
        %v1866 = vld [vmem:[%s869 + $0x190] sm:$0xff]
        %v1867 = vld [vmem:[%s869 + $0x198] sm:$0xff]
        %v1868 = vld [vmem:[%s869 + $0x1a0] sm:$0xf]
        %v1869 = vld [vmem:[%s869 + $0x1a4] sm:$0xff]
        %v1870 = vld [vmem:[%s869 + $0x1ac] sm:$0xff]
        %v1871 = vld [vmem:[%s869 + $0x1b4] sm:$0xf]
        %v1872 = vld [vmem:[%s869 + $0x1b8] sm:$0xff]
        %v1873 = vld [vmem:[%s869 + $0x1c0] sm:$0xff]
        %v1874 = vld [vmem:[%s869 + $0x1c8] sm:$0xf]
        %v1875 = vld [vmem:[%s869 + $0x1cc] sm:$0xff]
        %v1876 = vld [vmem:[%s869 + $0x1d4] sm:$0xff]
        %v1877 = vld [vmem:[%s869 + $0x1dc] sm:$0xf]
        %v1878 = vld [vmem:[%s873] sm:$0x1f]
        %v1880 = vlaneseq
        %v1881 = vshrl.u32 %v1880, 7
        %v1882 = vsub.s32 0, %v1881
        %v1883 = vrot.slane %v1878, %v1882
        %v1884 = vlaneseq
        %v1885 = vshrl.u32 %v1884, 7
        %v1886 = vsub.s32 1, %v1885
        %v1887 = vrot.slane %v1878, %v1886
        %v1888 = vlaneseq
        %v1889 = vshrl.u32 %v1888, 7
        %v1890 = vsub.s32 2, %v1889
        %v1891 = vrot.slane %v1878, %v1890
        %v1892 = vlaneseq
        %v1893 = vshrl.u32 %v1892, 7
        %v1894 = vsub.s32 3, %v1893
        %v1895 = vrot.slane %v1878, %v1894
        %v1896 = vlaneseq
        %v1897 = vshrl.u32 %v1896, 7
        %v1898 = vsub.s32 4, %v1897
        %v1899 = vrot.slane %v1878, %v1898
        %v1977 = vunpack.c.l.b16 %v1806
        %v1978 = vunpack.c.h.b16 %v1806
        %v1979 = vunpack.c.l.b16 %v1807
        %v1980 = vunpack.c.h.b16 %v1807
        %v1981 = vunpack.c.l.b16 %v1808
        %v1982 = vunpack.c.l.b16 %v1809
        %v1983 = vunpack.c.h.b16 %v1809
        %v1984 = vunpack.c.l.b16 %v1810
        %v1985 = vunpack.c.h.b16 %v1810
        %v1986 = vunpack.c.l.b16 %v1811
        %v1987 = vunpack.c.l.b16 %v1812
        %v1988 = vunpack.c.h.b16 %v1812
        %v1989 = vunpack.c.l.b16 %v1813
        %v1990 = vunpack.c.h.b16 %v1813
        %v1991 = vunpack.c.l.b16 %v1814
        %v1992 = vunpack.c.l.b16 %v1815
        %v1993 = vunpack.c.h.b16 %v1815
        %v1994 = vunpack.c.l.b16 %v1816
        %v1995 = vunpack.c.h.b16 %v1816
        %v1996 = vunpack.c.l.b16 %v1817
        %v1997 = vunpack.c.l.b16 %v1818
        %v1998 = vunpack.c.h.b16 %v1818
        %v1999 = vunpack.c.l.b16 %v1819
        %v2000 = vunpack.c.h.b16 %v1819
        %v2001 = vunpack.c.l.b16 %v1820
        %v2002 = vunpack.c.l.b16 %v1821
        %v2003 = vunpack.c.h.b16 %v1821
        %v2004 = vunpack.c.l.b16 %v1822
        %v2005 = vunpack.c.h.b16 %v1822
        %v2006 = vunpack.c.l.b16 %v1823
        %v2007 = vunpack.c.l.b16 %v1824
        %v2008 = vunpack.c.h.b16 %v1824
        %v2009 = vunpack.c.l.b16 %v1825
        %v2010 = vunpack.c.h.b16 %v1825
        %v2011 = vunpack.c.l.b16 %v1826
        %v2012 = vunpack.c.l.b16 %v1827
        %v2013 = vunpack.c.h.b16 %v1827
        %v2014 = vunpack.c.l.b16 %v1828
        %v2015 = vunpack.c.h.b16 %v1828
        %v2016 = vunpack.c.l.b16 %v1829
        %v2017 = vunpack.c.l.b16 %v1830
        %v2018 = vunpack.c.h.b16 %v1830
        %v2019 = vunpack.c.l.b16 %v1831
        %v2020 = vunpack.c.h.b16 %v1831
        %v2021 = vunpack.c.l.b16 %v1832
        %v2022 = vunpack.c.l.b16 %v1833
        %v2023 = vunpack.c.h.b16 %v1833
        %v2024 = vunpack.c.l.b16 %v1834
        %v2025 = vunpack.c.h.b16 %v1834
        %v2026 = vunpack.c.l.b16 %v1835
        %v2027 = vunpack.c.l.b16 %v1836
        %v2028 = vunpack.c.h.b16 %v1836
        %v2029 = vunpack.c.l.b16 %v1837
        %v2030 = vunpack.c.h.b16 %v1837
        %v2031 = vunpack.c.l.b16 %v1838
        %v2032 = vunpack.c.l.b16 %v1839
        %v2033 = vunpack.c.h.b16 %v1839
        %v2034 = vunpack.c.l.b16 %v1840
        %v2035 = vunpack.c.h.b16 %v1840
        %v2036 = vunpack.c.l.b16 %v1841
        %v2037 = vunpack.c.l.b16 %v1842
        %v2038 = vunpack.c.h.b16 %v1842
        %v2039 = vunpack.c.l.b16 %v1843
        %v2040 = vunpack.c.h.b16 %v1843
        %v2041 = vunpack.c.l.b16 %v1844
        %v2042 = vunpack.c.l.b16 %v1845
        %v2043 = vunpack.c.h.b16 %v1845
        %v2044 = vunpack.c.l.b16 %v1846
        %v2045 = vunpack.c.h.b16 %v1846
        %v2046 = vunpack.c.l.b16 %v1847
        %v2047 = vunpack.c.l.b16 %v1848
        %v2048 = vunpack.c.h.b16 %v1848
        %v2049 = vunpack.c.l.b16 %v1849
        %v2050 = vunpack.c.h.b16 %v1849
        %v2051 = vunpack.c.l.b16 %v1850
        %v2052 = vunpack.c.l.b16 %v1851
        %v2053 = vunpack.c.h.b16 %v1851
        %v2054 = vunpack.c.l.b16 %v1852
        %v2055 = vunpack.c.h.b16 %v1852
        %v2056 = vunpack.c.l.b16 %v1853
        %v2057 = vunpack.c.l.b16 %v1854
        %v2058 = vunpack.c.h.b16 %v1854
        %v2059 = vunpack.c.l.b16 %v1855
        %v2060 = vunpack.c.h.b16 %v1855
        %v2061 = vunpack.c.l.b16 %v1856
        %v2062 = vunpack.c.l.b16 %v1857
        %v2063 = vunpack.c.h.b16 %v1857
        %v2064 = vunpack.c.l.b16 %v1858
        %v2065 = vunpack.c.h.b16 %v1858
        %v2066 = vunpack.c.l.b16 %v1859
        %v2067 = vunpack.c.l.b16 %v1860
        %v2068 = vunpack.c.h.b16 %v1860
        %v2069 = vunpack.c.l.b16 %v1861
        %v2070 = vunpack.c.h.b16 %v1861
        %v2071 = vunpack.c.l.b16 %v1862
        %v2072 = vunpack.c.l.b16 %v1863
        %v2073 = vunpack.c.h.b16 %v1863
        %v2074 = vunpack.c.l.b16 %v1864
        %v2075 = vunpack.c.h.b16 %v1864
        %v2076 = vunpack.c.l.b16 %v1865
        %v2077 = vunpack.c.l.b16 %v1866
        %v2078 = vunpack.c.h.b16 %v1866
        %v2079 = vunpack.c.l.b16 %v1867
        %v2080 = vunpack.c.h.b16 %v1867
        %v2081 = vunpack.c.l.b16 %v1868
        %v2082 = vunpack.c.l.b16 %v1869
        %v2083 = vunpack.c.h.b16 %v1869
        %v2084 = vunpack.c.l.b16 %v1870
        %v2085 = vunpack.c.h.b16 %v1870
        %v2086 = vunpack.c.l.b16 %v1871
        %v2087 = vunpack.c.l.b16 %v1872
        %v2088 = vunpack.c.h.b16 %v1872
        %v2089 = vunpack.c.l.b16 %v1873
        %v2090 = vunpack.c.h.b16 %v1873
        %v2091 = vunpack.c.l.b16 %v1874
        %v2092 = vunpack.c.l.b16 %v1875
        %v2093 = vunpack.c.h.b16 %v1875
        %v2094 = vunpack.c.l.b16 %v1876
        %v2095 = vunpack.c.h.b16 %v1876
        %v2096 = vunpack.c.l.b16 %v1877
        %v2097 = vpack.c.b16 %v1982, %v1977
        %v2098 = vpack.c.b16 %v1983, %v1978
        %v2099 = vpack.c.b16 %v1984, %v1979
        %v2100 = vpack.c.b16 %v1985, %v1980
        %v2101 = vpack.c.b16 %v1986, %v1981
        %v2102 = vpack.c.b16 %v1992, %v1987
        %v2103 = vpack.c.b16 %v1993, %v1988
        %v2104 = vpack.c.b16 %v1994, %v1989
        %v2105 = vpack.c.b16 %v1995, %v1990
        %v2106 = vpack.c.b16 %v1996, %v1991
        %v2107 = vpack.c.b16 %v2002, %v1997
        %v2108 = vpack.c.b16 %v2003, %v1998
        %v2109 = vpack.c.b16 %v2004, %v1999
        %v2110 = vpack.c.b16 %v2005, %v2000
        %v2111 = vpack.c.b16 %v2006, %v2001
        %v2112 = vpack.c.b16 %v2012, %v2007
        %v2113 = vpack.c.b16 %v2013, %v2008
        %v2114 = vpack.c.b16 %v2014, %v2009
        %v2115 = vpack.c.b16 %v2015, %v2010
        %v2116 = vpack.c.b16 %v2016, %v2011
        %v2117 = vpack.c.b16 %v2022, %v2017
        %v2118 = vpack.c.b16 %v2023, %v2018
        %v2119 = vpack.c.b16 %v2024, %v2019
        %v2120 = vpack.c.b16 %v2025, %v2020
        %v2121 = vpack.c.b16 %v2026, %v2021
        %v2122 = vpack.c.b16 %v2032, %v2027
        %v2123 = vpack.c.b16 %v2033, %v2028
        %v2124 = vpack.c.b16 %v2034, %v2029
        %v2125 = vpack.c.b16 %v2035, %v2030
        %v2126 = vpack.c.b16 %v2036, %v2031
        %v2127 = vpack.c.b16 %v2042, %v2037
        %v2128 = vpack.c.b16 %v2043, %v2038
        %v2129 = vpack.c.b16 %v2044, %v2039
        %v2130 = vpack.c.b16 %v2045, %v2040
        %v2131 = vpack.c.b16 %v2046, %v2041
        %v2132 = vpack.c.b16 %v2052, %v2047
        %v2133 = vpack.c.b16 %v2053, %v2048
        %v2134 = vpack.c.b16 %v2054, %v2049
        %v2135 = vpack.c.b16 %v2055, %v2050
        %v2136 = vpack.c.b16 %v2056, %v2051
        %v2137 = vpack.c.b16 %v2062, %v2057
        %v2138 = vpack.c.b16 %v2063, %v2058
        %v2139 = vpack.c.b16 %v2064, %v2059
        %v2140 = vpack.c.b16 %v2065, %v2060
        %v2141 = vpack.c.b16 %v2066, %v2061
        %v2142 = vpack.c.b16 %v2072, %v2067
        %v2143 = vpack.c.b16 %v2073, %v2068
        %v2144 = vpack.c.b16 %v2074, %v2069
        %v2145 = vpack.c.b16 %v2075, %v2070
        %v2146 = vpack.c.b16 %v2076, %v2071
        %v2147 = vpack.c.b16 %v2082, %v2077
        %v2148 = vpack.c.b16 %v2083, %v2078
        %v2149 = vpack.c.b16 %v2084, %v2079
        %v2150 = vpack.c.b16 %v2085, %v2080
        %v2151 = vpack.c.b16 %v2086, %v2081
        %v2152 = vpack.c.b16 %v2092, %v2087
        %v2153 = vpack.c.b16 %v2093, %v2088
        %v2154 = vpack.c.b16 %v2094, %v2089
        %v2155 = vpack.c.b16 %v2095, %v2090
        %v2156 = vpack.c.b16 %v2096, %v2091
        %v2218 = vsel %vm1414, %v1791, 0
        %v2221 = vsel %vm1414, %v1793, 0
        %v2224 = vsel %vm1414, %v1795, 0
        %v2227 = vsel %vm1414, %v1797, 0
        %v2230 = vsel %vm1414, %v1799, 0
        %v2233 = vsel %vm1414, %v1801, 0
        %v2236 = vsel %vm1414, %v1803, 0
        %v2239 = vsel %vm1414, %v1805, 0
        %2241 = vmatprep.subr.bf16.mxu0 %v2098
        %2242 = vmatpush1.bf16.msra.mxu0 %v2097
        %2243 = vmatprep.subr.bf16.mxu0 %v2103
        %2244 = vmatpush1.bf16.msra.mxu0 %v2102
        %2245 = vmatprep.subr.bf16.mxu0 %v2108
        %2246 = vmatpush1.bf16.msra.mxu0 %v2107
        %2247 = vmatprep.subr.bf16.mxu0 %v2113
        %2248 = vmatpush1.bf16.msra.mxu0 %v2112
        %2249 = vmatprep.subr.bf16.mxu0 %v2118
        %2250 = vmatpush1.bf16.msra.mxu0 %v2117
        %2251 = vmatprep.subr.bf16.mxu0 %v2123
        %2252 = vmatpush1.bf16.msra.mxu0 %v2122
        %2253 = vmatprep.subr.bf16.mxu0 %v2128
        %2254 = vmatpush1.bf16.msra.mxu0 %v2127
        %2255 = vmatprep.subr.bf16.mxu0 %v2133
        %2256 = vmatpush1.bf16.msra.mxu0 %v2132
        %2257 = vmatprep.subr.bf16.mxu0 %v2138
        %2258 = vmatpush1.bf16.msra.mxu0 %v2137
        %2259 = vmatprep.subr.bf16.mxu0 %v2143
        %2260 = vmatpush1.bf16.msra.mxu0 %v2142
        %2261 = vmatprep.subr.bf16.mxu0 %v2148
        %2262 = vmatpush1.bf16.msra.mxu0 %v2147
        %2263 = vmatprep.subr.bf16.mxu0 %v2153
        %2264 = vmatpush1.bf16.msra.mxu0 %v2152
        %2265 = vmatprep.subr.bf16.mxu0 0
        %2266 = vmatpush1.bf16.msra.mxu0 0
        %2267 = vmatprep.subr.bf16.mxu0 0
        %2268 = vmatpush1.bf16.msra.mxu0 0
        %2269 = vmatprep.subr.bf16.mxu0 0
        %2270 = vmatpush1.bf16.msra.mxu0 0
        %2271 = vmatprep.subr.bf16.mxu0 0
        %2272 = vmatpush1.bf16.msra.mxu0 0
        %2273 = vmatprep.mubr.bf16.mxu0 %v2218
        %2274 = vmatmul.mubr.bf16.gmra.mrb[0].mxu0 %v1790
        %v2275 = vpop.f32.mrb[0].mxu0
        %v2276 = vadd.f32 %v1883, %v2275
        %v2277 = vpop.f32.mrb[0].mxu0
        %v2278 = vadd.f32 %v1887, %v2277
        %v2279 = vpop.f32.mrb[0].mxu0
        %v2280 = vadd.f32 %v1883, %v2279
        %v2281 = vpop.f32.mrb[0].mxu0
        %v2282 = vadd.f32 %v1887, %v2281
        %2283 = vmatprep.mubr.bf16.mxu0 %v2221
        %2284 = vmatmul.mubr.bf16.gmra.mrb[0].mxu0 %v1792
        %v2285 = vpop.f32.mrb[0].mxu0
        %v2286 = vadd.f32 %v1883, %v2285
        %v2287 = vpop.f32.mrb[0].mxu0
        %v2288 = vadd.f32 %v1887, %v2287
        %v2289 = vpop.f32.mrb[0].mxu0
        %v2290 = vadd.f32 %v1883, %v2289
        %v2291 = vpop.f32.mrb[0].mxu0
        %v2292 = vadd.f32 %v1887, %v2291
        %2293 = vmatprep.mubr.bf16.mxu0 %v2224
        %2294 = vmatmul.mubr.bf16.gmra.mrb[0].mxu0 %v1794
        %v2295 = vpop.f32.mrb[0].mxu0
        %v2296 = vadd.f32 %v1883, %v2295
        %v2297 = vpop.f32.mrb[0].mxu0
        %v2298 = vadd.f32 %v1887, %v2297
        %v2299 = vpop.f32.mrb[0].mxu0
        %v2300 = vadd.f32 %v1883, %v2299
        %v2301 = vpop.f32.mrb[0].mxu0
        %v2302 = vadd.f32 %v1887, %v2301
        %2303 = vmatprep.mubr.bf16.mxu0 %v2227
        %2304 = vmatmul.mubr.bf16.gmra.mrb[0].mxu0 %v1796
        %v2305 = vpop.f32.mrb[0].mxu0
        %v2306 = vadd.f32 %v1883, %v2305
        %v2307 = vpop.f32.mrb[0].mxu0
        %v2308 = vadd.f32 %v1887, %v2307
        %v2309 = vpop.f32.mrb[0].mxu0
        %v2310 = vadd.f32 %v1883, %v2309
        %v2311 = vpop.f32.mrb[0].mxu0
        %v2312 = vadd.f32 %v1887, %v2311
        %2313 = vmatprep.mubr.bf16.mxu0 %v2230
        %2314 = vmatmul.mubr.bf16.gmra.mrb[0].mxu0 %v1798
        %v2315 = vpop.f32.mrb[0].mxu0
        %v2316 = vadd.f32 %v1883, %v2315
        %v2317 = vpop.f32.mrb[0].mxu0
        %v2318 = vadd.f32 %v1887, %v2317
        %v2319 = vpop.f32.mrb[0].mxu0
        %v2320 = vadd.f32 %v1883, %v2319
        %v2321 = vpop.f32.mrb[0].mxu0
        %v2322 = vadd.f32 %v1887, %v2321
        %2323 = vmatprep.mubr.bf16.mxu0 %v2233
        %2324 = vmatmul.mubr.bf16.gmra.mrb[0].mxu0 %v1800
        %v2325 = vpop.f32.mrb[0].mxu0
        %v2326 = vadd.f32 %v1883, %v2325
        %v2327 = vpop.f32.mrb[0].mxu0
        %v2328 = vadd.f32 %v1887, %v2327
        %v2329 = vpop.f32.mrb[0].mxu0
        %v2330 = vadd.f32 %v1883, %v2329
        %v2331 = vpop.f32.mrb[0].mxu0
        %v2332 = vadd.f32 %v1887, %v2331
        %2333 = vmatprep.mubr.bf16.mxu0 %v2236
        %2334 = vmatmul.mubr.bf16.gmra.mrb[0].mxu0 %v1802
        %v2335 = vpop.f32.mrb[0].mxu0
        %v2336 = vadd.f32 %v1883, %v2335
        %v2337 = vpop.f32.mrb[0].mxu0
        %v2338 = vadd.f32 %v1887, %v2337
        %v2339 = vpop.f32.mrb[0].mxu0
        %v2340 = vadd.f32 %v1883, %v2339
        %v2341 = vpop.f32.mrb[0].mxu0
        %v2342 = vadd.f32 %v1887, %v2341
        %2343 = vmatprep.mubr.bf16.mxu0 %v2239
        %2344 = vmatmul.mubr.bf16.gmra.mrb[0].mxu0 %v1804
        %v2345 = vpop.f32.mrb[0].mxu0
        %v2346 = vadd.f32 %v1883, %v2345
        %v2347 = vpop.f32.mrb[0].mxu0
        %v2348 = vadd.f32 %v1887, %v2347
        %v2349 = vpop.f32.mrb[0].mxu0
        %v2350 = vadd.f32 %v1883, %v2349
        %v2351 = vpop.f32.mrb[0].mxu0
        %v2352 = vadd.f32 %v1887, %v2351
        %2353 = vdwg.mxu0
        %2354 = vmatprep.subr.bf16.mxu0 %v2100
        %2355 = vmatpush1.bf16.msra.mxu0 %v2099
        %2356 = vmatprep.subr.bf16.mxu0 %v2105
        %2357 = vmatpush1.bf16.msra.mxu0 %v2104
        %2358 = vmatprep.subr.bf16.mxu0 %v2110
        %2359 = vmatpush1.bf16.msra.mxu0 %v2109
        %2360 = vmatprep.subr.bf16.mxu0 %v2115
        %2361 = vmatpush1.bf16.msra.mxu0 %v2114
        %2362 = vmatprep.subr.bf16.mxu0 %v2120
        %2363 = vmatpush1.bf16.msra.mxu0 %v2119
        %2364 = vmatprep.subr.bf16.mxu0 %v2125
        %2365 = vmatpush1.bf16.msra.mxu0 %v2124
        %2366 = vmatprep.subr.bf16.mxu0 %v2130
        %2367 = vmatpush1.bf16.msra.mxu0 %v2129
        %2368 = vmatprep.subr.bf16.mxu0 %v2135
        %2369 = vmatpush1.bf16.msra.mxu0 %v2134
        %2370 = vmatprep.subr.bf16.mxu0 %v2140
        %2371 = vmatpush1.bf16.msra.mxu0 %v2139
        %2372 = vmatprep.subr.bf16.mxu0 %v2145
        %2373 = vmatpush1.bf16.msra.mxu0 %v2144
        %2374 = vmatprep.subr.bf16.mxu0 %v2150
        %2375 = vmatpush1.bf16.msra.mxu0 %v2149
        %2376 = vmatprep.subr.bf16.mxu0 %v2155
        %2377 = vmatpush1.bf16.msra.mxu0 %v2154
        %2378 = vmatprep.subr.bf16.mxu0 0
        %2379 = vmatpush1.bf16.msra.mxu0 0
        %2380 = vmatprep.subr.bf16.mxu0 0
        %2381 = vmatpush1.bf16.msra.mxu0 0
        %2382 = vmatprep.subr.bf16.mxu0 0
        %2383 = vmatpush1.bf16.msra.mxu0 0
        %2384 = vmatprep.subr.bf16.mxu0 0
        %2385 = vmatpush1.bf16.msra.mxu0 0
        %2386 = vmatprep.mubr.bf16.mxu0 %v2218
        %2387 = vmatmul.mubr.bf16.gmra.mrb[0].mxu0 %v1790
        %v2388 = vpop.f32.mrb[0].mxu0
        %v2389 = vadd.f32 %v1891, %v2388
        %v2390 = vpop.f32.mrb[0].mxu0
        %v2391 = vadd.f32 %v1895, %v2390
        %v2392 = vpop.f32.mrb[0].mxu0
        %v2393 = vadd.f32 %v1891, %v2392
        %v2394 = vpop.f32.mrb[0].mxu0
        %v2395 = vadd.f32 %v1895, %v2394
        %2396 = vmatprep.mubr.bf16.mxu0 %v2221
        %2397 = vmatmul.mubr.bf16.gmra.mrb[0].mxu0 %v1792
        %v2398 = vpop.f32.mrb[0].mxu0
        %v2399 = vadd.f32 %v1891, %v2398
        %v2400 = vpop.f32.mrb[0].mxu0
        %v2401 = vadd.f32 %v1895, %v2400
        %v2402 = vpop.f32.mrb[0].mxu0
        %v2403 = vadd.f32 %v1891, %v2402
        %v2404 = vpop.f32.mrb[0].mxu0
        %v2405 = vadd.f32 %v1895, %v2404
        %2406 = vmatprep.mubr.bf16.mxu0 %v2224
        %2407 = vmatmul.mubr.bf16.gmra.mrb[0].mxu0 %v1794
        %v2408 = vpop.f32.mrb[0].mxu0
        %v2409 = vadd.f32 %v1891, %v2408
        %v2410 = vpop.f32.mrb[0].mxu0
        %v2411 = vadd.f32 %v1895, %v2410
        %v2412 = vpop.f32.mrb[0].mxu0
        %v2413 = vadd.f32 %v1891, %v2412
        %v2414 = vpop.f32.mrb[0].mxu0
        %v2415 = vadd.f32 %v1895, %v2414
        %2416 = vmatprep.mubr.bf16.mxu0 %v2227
        %2417 = vmatmul.mubr.bf16.gmra.mrb[0].mxu0 %v1796
        %v2418 = vpop.f32.mrb[0].mxu0
        %v2419 = vadd.f32 %v1891, %v2418
        %v2420 = vpop.f32.mrb[0].mxu0
        %v2421 = vadd.f32 %v1895, %v2420
        %v2422 = vpop.f32.mrb[0].mxu0
        %v2423 = vadd.f32 %v1891, %v2422
        %v2424 = vpop.f32.mrb[0].mxu0
        %v2425 = vadd.f32 %v1895, %v2424
        %2426 = vmatprep.mubr.bf16.mxu0 %v2230
        %2427 = vmatmul.mubr.bf16.gmra.mrb[0].mxu0 %v1798
        %v2428 = vpop.f32.mrb[0].mxu0
        %v2429 = vadd.f32 %v1891, %v2428
        %v2430 = vpop.f32.mrb[0].mxu0
        %v2431 = vadd.f32 %v1895, %v2430
        %v2432 = vpop.f32.mrb[0].mxu0
        %v2433 = vadd.f32 %v1891, %v2432
        %v2434 = vpop.f32.mrb[0].mxu0
        %v2435 = vadd.f32 %v1895, %v2434
        %2436 = vmatprep.mubr.bf16.mxu0 %v2233
        %2437 = vmatmul.mubr.bf16.gmra.mrb[0].mxu0 %v1800
        %v2438 = vpop.f32.mrb[0].mxu0
        %v2439 = vadd.f32 %v1891, %v2438
        %v2440 = vpop.f32.mrb[0].mxu0
        %v2441 = vadd.f32 %v1895, %v2440
        %v2442 = vpop.f32.mrb[0].mxu0
        %v2443 = vadd.f32 %v1891, %v2442
        %v2444 = vpop.f32.mrb[0].mxu0
        %v2445 = vadd.f32 %v1895, %v2444
        %2446 = vmatprep.mubr.bf16.mxu0 %v2236
        %2447 = vmatmul.mubr.bf16.gmra.mrb[0].mxu0 %v1802
        %v2448 = vpop.f32.mrb[0].mxu0
        %v2449 = vadd.f32 %v1891, %v2448
        %v2450 = vpop.f32.mrb[0].mxu0
        %v2451 = vadd.f32 %v1895, %v2450
        %v2452 = vpop.f32.mrb[0].mxu0
        %v2453 = vadd.f32 %v1891, %v2452
        %v2454 = vpop.f32.mrb[0].mxu0
        %v2455 = vadd.f32 %v1895, %v2454
        %2456 = vmatprep.mubr.bf16.mxu0 %v2239
        %2457 = vmatmul.mubr.bf16.gmra.mrb[0].mxu0 %v1804
        %v2458 = vpop.f32.mrb[0].mxu0
        %v2459 = vadd.f32 %v1891, %v2458
        %v2460 = vpop.f32.mrb[0].mxu0
        %v2461 = vadd.f32 %v1895, %v2460
        %v2462 = vpop.f32.mrb[0].mxu0
        %v2463 = vadd.f32 %v1891, %v2462
        %v2464 = vpop.f32.mrb[0].mxu0
        %v2465 = vadd.f32 %v1895, %v2464
        %2466 = vdwg.mxu0
        %2467 = vmatprep.subr.bf16.mxu0 0
        %2468 = vmatpush1.bf16.msra.mxu0 %v2101
        %2469 = vmatprep.subr.bf16.mxu0 0
        %2470 = vmatpush1.bf16.msra.mxu0 %v2106
        %2471 = vmatprep.subr.bf16.mxu0 0
        %2472 = vmatpush1.bf16.msra.mxu0 %v2111
        %2473 = vmatprep.subr.bf16.mxu0 0
        %2474 = vmatpush1.bf16.msra.mxu0 %v2116
        %2475 = vmatprep.subr.bf16.mxu0 0
        %2476 = vmatpush1.bf16.msra.mxu0 %v2121
        %2477 = vmatprep.subr.bf16.mxu0 0
        %2478 = vmatpush1.bf16.msra.mxu0 %v2126
        %2479 = vmatprep.subr.bf16.mxu0 0
        %2480 = vmatpush1.bf16.msra.mxu0 %v2131
        %2481 = vmatprep.subr.bf16.mxu0 0
        %2482 = vmatpush1.bf16.msra.mxu0 %v2136
        %2483 = vmatprep.subr.bf16.mxu0 0
        %2484 = vmatpush1.bf16.msra.mxu0 %v2141
        %2485 = vmatprep.subr.bf16.mxu0 0
        %2486 = vmatpush1.bf16.msra.mxu0 %v2146
        %2487 = vmatprep.subr.bf16.mxu0 0
        %2488 = vmatpush1.bf16.msra.mxu0 %v2151
        %2489 = vmatprep.subr.bf16.mxu0 0
        %2490 = vmatpush1.bf16.msra.mxu0 %v2156
        %2491 = vmatprep.subr.bf16.mxu0 0
        %2492 = vmatpush1.bf16.msra.mxu0 0
        %2493 = vmatprep.subr.bf16.mxu0 0
        %2494 = vmatpush1.bf16.msra.mxu0 0
        %2495 = vmatprep.subr.bf16.mxu0 0
        %2496 = vmatpush1.bf16.msra.mxu0 0
        %2497 = vmatprep.subr.bf16.mxu0 0
        %2498 = vmatpush1.bf16.msra.mxu0 0
        %2499 = vmatprep.mubr.bf16.mxu0 %v2218
        %2500 = vmatmul.mubr.bf16.gmra.mrb[0].mxu0 %v1790
        %v2501 = vpop.f32.mrb[0].mxu0
        %v2502 = vadd.f32 %v1899, %v2501
        %v2503 = vpop.f32.mrb[0].mxu0
        %v2504 = vpop.f32.mrb[0].mxu0
        %v2505 = vadd.f32 %v1899, %v2504
        %v2506 = vpop.f32.mrb[0].mxu0
        %2507 = vmatprep.mubr.bf16.mxu0 %v2221
        %2508 = vmatmul.mubr.bf16.gmra.mrb[0].mxu0 %v1792
        %v2509 = vpop.f32.mrb[0].mxu0
        %v2510 = vadd.f32 %v1899, %v2509
        %v2511 = vpop.f32.mrb[0].mxu0
        %v2512 = vpop.f32.mrb[0].mxu0
        %v2513 = vadd.f32 %v1899, %v2512
        %v2514 = vpop.f32.mrb[0].mxu0
        %2515 = vmatprep.mubr.bf16.mxu0 %v2224
        %2516 = vmatmul.mubr.bf16.gmra.mrb[0].mxu0 %v1794
        %v2517 = vpop.f32.mrb[0].mxu0
        %v2518 = vadd.f32 %v1899, %v2517
        %v2519 = vpop.f32.mrb[0].mxu0
        %v2520 = vpop.f32.mrb[0].mxu0
        %v2521 = vadd.f32 %v1899, %v2520
        %v2522 = vpop.f32.mrb[0].mxu0
        %2523 = vmatprep.mubr.bf16.mxu0 %v2227
        %2524 = vmatmul.mubr.bf16.gmra.mrb[0].mxu0 %v1796
        %v2525 = vpop.f32.mrb[0].mxu0
        %v2526 = vadd.f32 %v1899, %v2525
        %v2527 = vpop.f32.mrb[0].mxu0
        %v2528 = vpop.f32.mrb[0].mxu0
        %v2529 = vadd.f32 %v1899, %v2528
        %v2530 = vpop.f32.mrb[0].mxu0
        %2531 = vmatprep.mubr.bf16.mxu0 %v2230
        %2532 = vmatmul.mubr.bf16.gmra.mrb[0].mxu0 %v1798
        %v2533 = vpop.f32.mrb[0].mxu0
        %v2534 = vadd.f32 %v1899, %v2533
        %v2535 = vpop.f32.mrb[0].mxu0
        %v2536 = vpop.f32.mrb[0].mxu0
        %v2537 = vadd.f32 %v1899, %v2536
        %v2538 = vpop.f32.mrb[0].mxu0
        %2539 = vmatprep.mubr.bf16.mxu0 %v2233
        %2540 = vmatmul.mubr.bf16.gmra.mrb[0].mxu0 %v1800
        %v2541 = vpop.f32.mrb[0].mxu0
        %v2542 = vadd.f32 %v1899, %v2541
        %v2543 = vpop.f32.mrb[0].mxu0
        %v2544 = vpop.f32.mrb[0].mxu0
        %v2545 = vadd.f32 %v1899, %v2544
        %v2546 = vpop.f32.mrb[0].mxu0
        %2547 = vmatprep.mubr.bf16.mxu0 %v2236
        %2548 = vmatmul.mubr.bf16.gmra.mrb[0].mxu0 %v1802
        %v2549 = vpop.f32.mrb[0].mxu0
        %v2550 = vadd.f32 %v1899, %v2549
        %v2551 = vpop.f32.mrb[0].mxu0
        %v2552 = vpop.f32.mrb[0].mxu0
        %v2553 = vadd.f32 %v1899, %v2552
        %v2554 = vpop.f32.mrb[0].mxu0
        %2555 = vmatprep.mubr.bf16.mxu0 %v2239
        %2556 = vmatmul.mubr.bf16.gmra.mrb[0].mxu0 %v1804
        %v2557 = vpop.f32.mrb[0].mxu0
        %v2558 = vadd.f32 %v1899, %v2557
        %v2559 = vpop.f32.mrb[0].mxu0
        %v2560 = vpop.f32.mrb[0].mxu0
        %v2561 = vadd.f32 %v1899, %v2560
        %v2562 = vpop.f32.mrb[0].mxu0
        %2563 = vdwg.mxu0
        %v2564 = vpack.c.bf16 %v2280, %v2276
        %v2565 = vpack.c.bf16 %v2282, %v2278
        %v2566 = vpack.c.bf16 %v2393, %v2389
        %v2567 = vpack.c.bf16 %v2395, %v2391
        %v2568 = vpack.c.bf16 %v2505, %v2502
        %v2569 = vpack.c.bf16 %v2290, %v2286
        %v2570 = vpack.c.bf16 %v2292, %v2288
        %v2571 = vpack.c.bf16 %v2403, %v2399
        %v2572 = vpack.c.bf16 %v2405, %v2401
        %v2573 = vpack.c.bf16 %v2513, %v2510
        %v2574 = vpack.c.bf16 %v2300, %v2296
        %v2575 = vpack.c.bf16 %v2302, %v2298
        %v2576 = vpack.c.bf16 %v2413, %v2409
        %v2577 = vpack.c.bf16 %v2415, %v2411
        %v2578 = vpack.c.bf16 %v2521, %v2518
        %v2579 = vpack.c.bf16 %v2310, %v2306
        %v2580 = vpack.c.bf16 %v2312, %v2308
        %v2581 = vpack.c.bf16 %v2423, %v2419
        %v2582 = vpack.c.bf16 %v2425, %v2421
        %v2583 = vpack.c.bf16 %v2529, %v2526
        %v2584 = vpack.c.bf16 %v2320, %v2316
        %v2585 = vpack.c.bf16 %v2322, %v2318
        %v2586 = vpack.c.bf16 %v2433, %v2429
        %v2587 = vpack.c.bf16 %v2435, %v2431
        %v2588 = vpack.c.bf16 %v2537, %v2534
        %v2589 = vpack.c.bf16 %v2330, %v2326
        %v2590 = vpack.c.bf16 %v2332, %v2328
        %v2591 = vpack.c.bf16 %v2443, %v2439
        %v2592 = vpack.c.bf16 %v2445, %v2441
        %v2593 = vpack.c.bf16 %v2545, %v2542
        %v2594 = vpack.c.bf16 %v2340, %v2336
        %v2595 = vpack.c.bf16 %v2342, %v2338
        %v2596 = vpack.c.bf16 %v2453, %v2449
        %v2597 = vpack.c.bf16 %v2455, %v2451
        %v2598 = vpack.c.bf16 %v2553, %v2550
        %v2599 = vpack.c.bf16 %v2350, %v2346
        %v2600 = vpack.c.bf16 %v2352, %v2348
        %v2601 = vpack.c.bf16 %v2463, %v2459
        %v2602 = vpack.c.bf16 %v2465, %v2461
        %v2603 = vpack.c.bf16 %v2561, %v2558
        %v2604 = vld [vmem:[%s3] sm:$0x1]
        %2613 = vrot.lane.b32.xlu0 %v2565, 64
        %v2614 = vpop.permute.xlu0 %2613
        %2615 = vrot.lane.b32.xlu0 %v2570, 64
        %v2616 = vpop.permute.xlu0 %2615
        %2617 = vrot.lane.b32.xlu0 %v2575, 64
        %v2618 = vpop.permute.xlu0 %2617
        %2619 = vrot.lane.b32.xlu0 %v2580, 64
        %v2620 = vpop.permute.xlu0 %2619
        %2621 = vrot.lane.b32.xlu0 %v2585, 64
        %v2622 = vpop.permute.xlu0 %2621
        %2623 = vrot.lane.b32.xlu0 %v2590, 64
        %v2624 = vpop.permute.xlu0 %2623
        %2625 = vrot.lane.b32.xlu0 %v2595, 64
        %v2626 = vpop.permute.xlu0 %2625
        %2627 = vrot.lane.b32.xlu0 %v2600, 64
        %v2628 = vpop.permute.xlu0 %2627
        %v2630 = vsel %vm1414, %v2564, 0
        %v2633 = vsel %vm1414, %v2569, 0
        %v2636 = vsel %vm1414, %v2574, 0
        %v2639 = vsel %vm1414, %v2579, 0
        %v2642 = vsel %vm1414, %v2584, 0
        %v2645 = vsel %vm1414, %v2589, 0
        %v2648 = vsel %vm1414, %v2594, 0
        %v2651 = vsel %vm1414, %v2599, 0
        %v2654 = vsel %vm1414, %v2614, 0
        %v2657 = vsel %vm1414, %v2616, 0
        %v2660 = vsel %vm1414, %v2618, 0
        %v2663 = vsel %vm1414, %v2620, 0
        %v2666 = vsel %vm1414, %v2622, 0
        %v2669 = vsel %vm1414, %v2624, 0
        %v2672 = vsel %vm1414, %v2626, 0
        %v2675 = vsel %vm1414, %v2628, 0
        %2677 = vmatprep.subr.bf16.mxu0 0
        %2678 = vmatpush1.bf16.xpose.msra.mxu0 %v2654
        %2679 = vmatprep.subr.bf16.mxu0 0
        %2680 = vmatpush1.bf16.xpose.msra.mxu0 %v2657
        %2681 = vmatprep.subr.bf16.mxu0 0
        %2682 = vmatpush1.bf16.xpose.msra.mxu0 %v2660
        %2683 = vmatprep.subr.bf16.mxu0 0
        %2684 = vmatpush1.bf16.xpose.msra.mxu0 %v2663
        %2685 = vmatprep.subr.bf16.mxu0 0
        %2686 = vmatpush1.bf16.xpose.msra.mxu0 %v2666
        %2687 = vmatprep.subr.bf16.mxu0 0
        %2688 = vmatpush1.bf16.xpose.msra.mxu0 %v2669
        %2689 = vmatprep.subr.bf16.mxu0 0
        %2690 = vmatpush1.bf16.xpose.msra.mxu0 %v2672
        %2691 = vmatprep.subr.bf16.mxu0 0
        %2692 = vmatpush1.bf16.xpose.msra.mxu0 %v2675
        %2693 = vmatprep.subr.bf16.mxu0 0
        %2694 = vmatpush1.bf16.xpose.msra.mxu0 0
        %2695 = vmatprep.subr.bf16.mxu0 0
        %2696 = vmatpush1.bf16.xpose.msra.mxu0 0
        %2697 = vmatprep.subr.bf16.mxu0 0
        %2698 = vmatpush1.bf16.xpose.msra.mxu0 0
        %2699 = vmatprep.subr.bf16.mxu0 0
        %2700 = vmatpush1.bf16.xpose.msra.mxu0 0
        %2701 = vmatprep.subr.bf16.mxu0 0
        %2702 = vmatpush1.bf16.xpose.msra.mxu0 0
        %2703 = vmatprep.subr.bf16.mxu0 0
        %2704 = vmatpush1.bf16.xpose.msra.mxu0 0
        %2705 = vmatprep.subr.bf16.mxu0 0
        %2706 = vmatpush1.bf16.xpose.msra.mxu0 0
        %2707 = vmatprep.subr.bf16.mxu0 0
        %2708 = vmatpush1.bf16.xpose.msra.mxu0 0
        %2709 = vmatprep.mubr.bf16.mxu0 0
        %2710 = vmatmul.mubr.bf16.gmra.mrb[0].mxu0 %v2630
        %v2711 = vpop.f32.mrb[0].mxu0
        %v2712 = vadd.f32 0.0, %v2711
        %v2713 = vpop.f32.mrb[0].mxu0
        %v2714 = vpop.f32.mrb[0].mxu0
        %v2715 = vadd.f32 0.0, %v2714
        %v2716 = vpop.f32.mrb[0].mxu0
        %2717 = vmatprep.mubr.bf16.mxu0 0
        %2718 = vmatmul.mubr.bf16.gmra.mrb[0].mxu0 %v2633
        %v2719 = vpop.f32.mrb[0].mxu0
        %v2720 = vadd.f32 0.0, %v2719
        %v2721 = vpop.f32.mrb[0].mxu0
        %v2722 = vpop.f32.mrb[0].mxu0
        %v2723 = vadd.f32 0.0, %v2722
        %v2724 = vpop.f32.mrb[0].mxu0
        %2725 = vmatprep.mubr.bf16.mxu0 0
        %2726 = vmatmul.mubr.bf16.gmra.mrb[0].mxu0 %v2636
        %v2727 = vpop.f32.mrb[0].mxu0
        %v2728 = vadd.f32 0.0, %v2727
        %v2729 = vpop.f32.mrb[0].mxu0
        %v2730 = vpop.f32.mrb[0].mxu0
        %v2731 = vadd.f32 0.0, %v2730
        %v2732 = vpop.f32.mrb[0].mxu0
        %2733 = vmatprep.mubr.bf16.mxu0 0
        %2734 = vmatmul.mubr.bf16.gmra.mrb[0].mxu0 %v2639
        %v2735 = vpop.f32.mrb[0].mxu0
        %v2736 = vadd.f32 0.0, %v2735
        %v2737 = vpop.f32.mrb[0].mxu0
        %v2738 = vpop.f32.mrb[0].mxu0
        %v2739 = vadd.f32 0.0, %v2738
        %v2740 = vpop.f32.mrb[0].mxu0
        %2741 = vmatprep.mubr.bf16.mxu0 0
        %2742 = vmatmul.mubr.bf16.gmra.mrb[0].mxu0 %v2642
        %v2743 = vpop.f32.mrb[0].mxu0
        %v2744 = vadd.f32 0.0, %v2743
        %v2745 = vpop.f32.mrb[0].mxu0
        %v2746 = vpop.f32.mrb[0].mxu0
        %v2747 = vadd.f32 0.0, %v2746
        %v2748 = vpop.f32.mrb[0].mxu0
        %2749 = vmatprep.mubr.bf16.mxu0 0
        %2750 = vmatmul.mubr.bf16.gmra.mrb[0].mxu0 %v2645
        %v2751 = vpop.f32.mrb[0].mxu0
        %v2752 = vadd.f32 0.0, %v2751
        %v2753 = vpop.f32.mrb[0].mxu0
        %v2754 = vpop.f32.mrb[0].mxu0
        %v2755 = vadd.f32 0.0, %v2754
        %v2756 = vpop.f32.mrb[0].mxu0
        %2757 = vmatprep.mubr.bf16.mxu0 0
        %2758 = vmatmul.mubr.bf16.gmra.mrb[0].mxu0 %v2648
        %v2759 = vpop.f32.mrb[0].mxu0
        %v2760 = vadd.f32 0.0, %v2759
        %v2761 = vpop.f32.mrb[0].mxu0
        %v2762 = vpop.f32.mrb[0].mxu0
        %v2763 = vadd.f32 0.0, %v2762
        %v2764 = vpop.f32.mrb[0].mxu0
        %2765 = vmatprep.mubr.bf16.mxu0 0
        %2766 = vmatmul.mubr.bf16.gmra.mrb[0].mxu0 %v2651
        %v2767 = vpop.f32.mrb[0].mxu0
        %v2768 = vadd.f32 0.0, %v2767
        %v2769 = vpop.f32.mrb[0].mxu0
        %v2770 = vpop.f32.mrb[0].mxu0
        %v2771 = vadd.f32 0.0, %v2770
        %v2772 = vpop.f32.mrb[0].mxu0
        %2773 = vdwg.mxu0
        %v2774 = vmul.f32 %v2712, 0.125
        %v2775 = vmul.f32 %v2715, 0.125
        %v2776 = vmul.f32 %v2720, 0.125
        %v2777 = vmul.f32 %v2723, 0.125
        %v2778 = vmul.f32 %v2728, 0.125
        %v2779 = vmul.f32 %v2731, 0.125
        %v2780 = vmul.f32 %v2736, 0.125
        %v2781 = vmul.f32 %v2739, 0.125
        %v2782 = vmul.f32 %v2744, 0.125
        %v2783 = vmul.f32 %v2747, 0.125
        %v2784 = vmul.f32 %v2752, 0.125
        %v2785 = vmul.f32 %v2755, 0.125
        %v2786 = vmul.f32 %v2760, 0.125
        %v2787 = vmul.f32 %v2763, 0.125
        %v2788 = vmul.f32 %v2768, 0.125
        %v2789 = vmul.f32 %v2771, 0.125
        %v2791 = vlaneseq
        %v2792 = vshrl.u32 %v2791, 7
        %v2793 = vsub.s32 0, %v2792
        %v2794 = vrot.slane %v2604, %v2793
        %v2796 = vadd.f32 %v2774, %v2794
        %v2797 = vadd.f32 %v2775, %v2794
        %v2798 = vadd.f32 %v2776, %v2794
        %v2799 = vadd.f32 %v2777, %v2794
        %v2800 = vadd.f32 %v2778, %v2794
        %v2801 = vadd.f32 %v2779, %v2794
        %v2802 = vadd.f32 %v2780, %v2794
        %v2803 = vadd.f32 %v2781, %v2794
        %v2804 = vadd.f32 %v2782, %v2794
        %v2805 = vadd.f32 %v2783, %v2794
        %v2806 = vadd.f32 %v2784, %v2794
        %v2807 = vadd.f32 %v2785, %v2794
        %v2808 = vadd.f32 %v2786, %v2794
        %v2809 = vadd.f32 %v2787, %v2794
        %v2810 = vadd.f32 %v2788, %v2794
        %v2811 = vadd.f32 %v2789, %v2794
        %2812 = vmax.xlane.f32.xlu0 %v2796
        %v2813 = vpop.xlane.xlu0 %2812
        %2814 = vmax.xlane.f32.xlu0 %v2797
        %v2815 = vpop.xlane.xlu0 %2814
        %2816 = vmax.xlane.f32.xlu0 %v2798
        %v2817 = vpop.xlane.xlu0 %2816
        %2818 = vmax.xlane.f32.xlu0 %v2799
        %v2819 = vpop.xlane.xlu0 %2818
        %2820 = vmax.xlane.f32.xlu0 %v2800
        %v2821 = vpop.xlane.xlu0 %2820
        %2822 = vmax.xlane.f32.xlu0 %v2801
        %v2823 = vpop.xlane.xlu0 %2822
        %2824 = vmax.xlane.f32.xlu0 %v2802
        %v2825 = vpop.xlane.xlu0 %2824
        %2826 = vmax.xlane.f32.xlu0 %v2803
        %v2827 = vpop.xlane.xlu0 %2826
        %2828 = vmax.xlane.f32.xlu0 %v2804
        %v2829 = vpop.xlane.xlu0 %2828
        %2830 = vmax.xlane.f32.xlu0 %v2805
        %v2831 = vpop.xlane.xlu0 %2830
        %2832 = vmax.xlane.f32.xlu0 %v2806
        %v2833 = vpop.xlane.xlu0 %2832
        %2834 = vmax.xlane.f32.xlu0 %v2807
        %v2835 = vpop.xlane.xlu0 %2834
        %2836 = vmax.xlane.f32.xlu0 %v2808
        %v2837 = vpop.xlane.xlu0 %2836
        %2838 = vmax.xlane.f32.xlu0 %v2809
        %v2839 = vpop.xlane.xlu0 %2838
        %2840 = vmax.xlane.f32.xlu0 %v2810
        %v2841 = vpop.xlane.xlu0 %2840
        %2842 = vmax.xlane.f32.xlu0 %v2811
        %v2843 = vpop.xlane.xlu0 %2842
        %v2844 = vsub.f32 %v2796, %v2813
        %v2845 = vsub.f32 %v2797, %v2815
        %v2846 = vsub.f32 %v2798, %v2817
        %v2847 = vsub.f32 %v2799, %v2819
        %v2848 = vsub.f32 %v2800, %v2821
        %v2849 = vsub.f32 %v2801, %v2823
        %v2850 = vsub.f32 %v2802, %v2825
        %v2851 = vsub.f32 %v2803, %v2827
        %v2852 = vsub.f32 %v2804, %v2829
        %v2853 = vsub.f32 %v2805, %v2831
        %v2854 = vsub.f32 %v2806, %v2833
        %v2855 = vsub.f32 %v2807, %v2835
        %v2856 = vsub.f32 %v2808, %v2837
        %v2857 = vsub.f32 %v2809, %v2839
        %v2858 = vsub.f32 %v2810, %v2841
        %v2859 = vsub.f32 %v2811, %v2843
        %v2860 = vmul.f32 %v2844, 1.442695
        %v2861 = vpow.pop %v2860
        %v2862 = vmul.f32 %v2845, 1.442695
        %v2863 = vpow.pop %v2862
        %v2864 = vmul.f32 %v2846, 1.442695
        %v2865 = vpow.pop %v2864
        %v2866 = vmul.f32 %v2847, 1.442695
        %v2867 = vpow.pop %v2866
        %v2868 = vmul.f32 %v2848, 1.442695
        %v2869 = vpow.pop %v2868
        %v2870 = vmul.f32 %v2849, 1.442695
        %v2871 = vpow.pop %v2870
        %v2872 = vmul.f32 %v2850, 1.442695
        %v2873 = vpow.pop %v2872
        %v2874 = vmul.f32 %v2851, 1.442695
        %v2875 = vpow.pop %v2874
        %v2876 = vmul.f32 %v2852, 1.442695
        %v2877 = vpow.pop %v2876
        %v2878 = vmul.f32 %v2853, 1.442695
        %v2879 = vpow.pop %v2878
        %v2880 = vmul.f32 %v2854, 1.442695
        %v2881 = vpow.pop %v2880
        %v2882 = vmul.f32 %v2855, 1.442695
        %v2883 = vpow.pop %v2882
        %v2884 = vmul.f32 %v2856, 1.442695
        %v2885 = vpow.pop %v2884
        %v2886 = vmul.f32 %v2857, 1.442695
        %v2887 = vpow.pop %v2886
        %v2888 = vmul.f32 %v2858, 1.442695
        %v2889 = vpow.pop %v2888
        %v2890 = vmul.f32 %v2859, 1.442695
        %v2891 = vpow.pop %v2890
        %2892 = vadd.xlane.f32.xlu0 %v2861
        %v2893 = vpop.xlane.xlu0 %2892
        %2894 = vadd.xlane.f32.xlu0 %v2863
        %v2895 = vpop.xlane.xlu0 %2894
        %2896 = vadd.xlane.f32.xlu0 %v2865
        %v2897 = vpop.xlane.xlu0 %2896
        %2898 = vadd.xlane.f32.xlu0 %v2867
        %v2899 = vpop.xlane.xlu0 %2898
        %2900 = vadd.xlane.f32.xlu0 %v2869
        %v2901 = vpop.xlane.xlu0 %2900
        %2902 = vadd.xlane.f32.xlu0 %v2871
        %v2903 = vpop.xlane.xlu0 %2902
        %2904 = vadd.xlane.f32.xlu0 %v2873
        %v2905 = vpop.xlane.xlu0 %2904
        %2906 = vadd.xlane.f32.xlu0 %v2875
        %v2907 = vpop.xlane.xlu0 %2906
        %2908 = vadd.xlane.f32.xlu0 %v2877
        %v2909 = vpop.xlane.xlu0 %2908
        %2910 = vadd.xlane.f32.xlu0 %v2879
        %v2911 = vpop.xlane.xlu0 %2910
        %2912 = vadd.xlane.f32.xlu0 %v2881
        %v2913 = vpop.xlane.xlu0 %2912
        %2914 = vadd.xlane.f32.xlu0 %v2883
        %v2915 = vpop.xlane.xlu0 %2914
        %2916 = vadd.xlane.f32.xlu0 %v2885
        %v2917 = vpop.xlane.xlu0 %2916
        %2918 = vadd.xlane.f32.xlu0 %v2887
        %v2919 = vpop.xlane.xlu0 %2918
        %2920 = vadd.xlane.f32.xlu0 %v2889
        %v2921 = vpop.xlane.xlu0 %2920
        %2922 = vadd.xlane.f32.xlu0 %v2891
        %v2923 = vpop.xlane.xlu0 %2922
        %v2924 = vrcp.pop %v2893
        %v2925 = vrcp.pop %v2895
        %v2926 = vrcp.pop %v2897
        %v2927 = vrcp.pop %v2899
        %v2928 = vrcp.pop %v2901
        %v2929 = vrcp.pop %v2903
        %v2930 = vrcp.pop %v2905
        %v2931 = vrcp.pop %v2907
        %v2932 = vrcp.pop %v2909
        %v2933 = vrcp.pop %v2911
        %v2934 = vrcp.pop %v2913
        %v2935 = vrcp.pop %v2915
        %v2936 = vrcp.pop %v2917
        %v2937 = vrcp.pop %v2919
        %v2938 = vrcp.pop %v2921
        %v2939 = vrcp.pop %v2923
        %v2940 = vmul.f32 %v2861, %v2924
        %v2941 = vmul.f32 %v2863, %v2925
        %v2942 = vmul.f32 %v2865, %v2926
        %v2943 = vmul.f32 %v2867, %v2927
        %v2944 = vmul.f32 %v2869, %v2928
        %v2945 = vmul.f32 %v2871, %v2929
        %v2946 = vmul.f32 %v2873, %v2930
        %v2947 = vmul.f32 %v2875, %v2931
        %v2948 = vmul.f32 %v2877, %v2932
        %v2949 = vmul.f32 %v2879, %v2933
        %v2950 = vmul.f32 %v2881, %v2934
        %v2951 = vmul.f32 %v2883, %v2935
        %v2952 = vmul.f32 %v2885, %v2936
        %v2953 = vmul.f32 %v2887, %v2937
        %v2954 = vmul.f32 %v2889, %v2938
        %v2955 = vmul.f32 %v2891, %v2939
        %v2956 = vpack.c.bf16 %v2941, %v2940
        %v2957 = vpack.c.bf16 %v2943, %v2942
        %v2958 = vpack.c.bf16 %v2945, %v2944
        %v2959 = vpack.c.bf16 %v2947, %v2946
        %v2960 = vpack.c.bf16 %v2949, %v2948
        %v2961 = vpack.c.bf16 %v2951, %v2950
        %v2962 = vpack.c.bf16 %v2953, %v2952
        %v2963 = vpack.c.bf16 %v2955, %v2954
        %2964 = vmatprep.subr.bf16.mxu0 0
        %2965 = vmatpush1.bf16.msra.mxu0 %v2567
        %2966 = vmatprep.subr.bf16.mxu0 0
        %2967 = vmatpush1.bf16.msra.mxu0 %v2572
        %2968 = vmatprep.subr.bf16.mxu0 0
        %2969 = vmatpush1.bf16.msra.mxu0 %v2577
        %2970 = vmatprep.subr.bf16.mxu0 0
        %2971 = vmatpush1.bf16.msra.mxu0 %v2582
        %2972 = vmatprep.subr.bf16.mxu0 0
        %2973 = vmatpush1.bf16.msra.mxu0 %v2587
        %2974 = vmatprep.subr.bf16.mxu0 0
        %2975 = vmatpush1.bf16.msra.mxu0 %v2592
        %2976 = vmatprep.subr.bf16.mxu0 0
        %2977 = vmatpush1.bf16.msra.mxu0 %v2597
        %2978 = vmatprep.subr.bf16.mxu0 0
        %2979 = vmatpush1.bf16.msra.mxu0 %v2602
        %2980 = vmatprep.subr.bf16.mxu0 0
        %2981 = vmatpush1.bf16.msra.mxu0 0
        %2982 = vmatprep.subr.bf16.mxu0 0
        %2983 = vmatpush1.bf16.msra.mxu0 0
        %2984 = vmatprep.subr.bf16.mxu0 0
        %2985 = vmatpush1.bf16.msra.mxu0 0
        %2986 = vmatprep.subr.bf16.mxu0 0
        %2987 = vmatpush1.bf16.msra.mxu0 0
        %2988 = vmatprep.subr.bf16.mxu0 0
        %2989 = vmatpush1.bf16.msra.mxu0 0
        %2990 = vmatprep.subr.bf16.mxu0 0
        %2991 = vmatpush1.bf16.msra.mxu0 0
        %2992 = vmatprep.subr.bf16.mxu0 0
        %2993 = vmatpush1.bf16.msra.mxu0 0
        %2994 = vmatprep.subr.bf16.mxu0 0
        %2995 = vmatpush1.bf16.msra.mxu0 0
        %2996 = vmatprep.mubr.bf16.mxu0 0
        %2997 = vmatmul.mubr.bf16.gmra.mrb[0].mxu0 %v2956
        %v2998 = vpop.f32.mrb[0].mxu0
        %v2999 = vadd.f32 0.0, %v2998
        %v3000 = vpop.f32.mrb[0].mxu0
        %v3001 = vpop.f32.mrb[0].mxu0
        %v3002 = vadd.f32 0.0, %v3001
        %v3003 = vpop.f32.mrb[0].mxu0
        %3004 = vmatprep.mubr.bf16.mxu0 0
        %3005 = vmatmul.mubr.bf16.gmra.mrb[0].mxu0 %v2957
        %v3006 = vpop.f32.mrb[0].mxu0
        %v3007 = vadd.f32 0.0, %v3006
        %v3008 = vpop.f32.mrb[0].mxu0
        %v3009 = vpop.f32.mrb[0].mxu0
        %v3010 = vadd.f32 0.0, %v3009
        %v3011 = vpop.f32.mrb[0].mxu0
        %3012 = vmatprep.mubr.bf16.mxu0 0
        %3013 = vmatmul.mubr.bf16.gmra.mrb[0].mxu0 %v2958
        %v3014 = vpop.f32.mrb[0].mxu0
        %v3015 = vadd.f32 0.0, %v3014
        %v3016 = vpop.f32.mrb[0].mxu0
        %v3017 = vpop.f32.mrb[0].mxu0
        %v3018 = vadd.f32 0.0, %v3017
        %v3019 = vpop.f32.mrb[0].mxu0
        %3020 = vmatprep.mubr.bf16.mxu0 0
        %3021 = vmatmul.mubr.bf16.gmra.mrb[0].mxu0 %v2959
        %v3022 = vpop.f32.mrb[0].mxu0
        %v3023 = vadd.f32 0.0, %v3022
        %v3024 = vpop.f32.mrb[0].mxu0
        %v3025 = vpop.f32.mrb[0].mxu0
        %v3026 = vadd.f32 0.0, %v3025
        %v3027 = vpop.f32.mrb[0].mxu0
        %3028 = vmatprep.mubr.bf16.mxu0 0
        %3029 = vmatmul.mubr.bf16.gmra.mrb[0].mxu0 %v2960
        %v3030 = vpop.f32.mrb[0].mxu0
        %v3031 = vadd.f32 0.0, %v3030
        %v3032 = vpop.f32.mrb[0].mxu0
        %v3033 = vpop.f32.mrb[0].mxu0
        %v3034 = vadd.f32 0.0, %v3033
        %v3035 = vpop.f32.mrb[0].mxu0
        %3036 = vmatprep.mubr.bf16.mxu0 0
        %3037 = vmatmul.mubr.bf16.gmra.mrb[0].mxu0 %v2961
        %v3038 = vpop.f32.mrb[0].mxu0
        %v3039 = vadd.f32 0.0, %v3038
        %v3040 = vpop.f32.mrb[0].mxu0
        %v3041 = vpop.f32.mrb[0].mxu0
        %v3042 = vadd.f32 0.0, %v3041
        %v3043 = vpop.f32.mrb[0].mxu0
        %3044 = vmatprep.mubr.bf16.mxu0 0
        %3045 = vmatmul.mubr.bf16.gmra.mrb[0].mxu0 %v2962
        %v3046 = vpop.f32.mrb[0].mxu0
        %v3047 = vadd.f32 0.0, %v3046
        %v3048 = vpop.f32.mrb[0].mxu0
        %v3049 = vpop.f32.mrb[0].mxu0
        %v3050 = vadd.f32 0.0, %v3049
        %v3051 = vpop.f32.mrb[0].mxu0
        %3052 = vmatprep.mubr.bf16.mxu0 0
        %3053 = vmatmul.mubr.bf16.gmra.mrb[0].mxu0 %v2963
        %v3054 = vpop.f32.mrb[0].mxu0
        %v3055 = vadd.f32 0.0, %v3054
        %v3056 = vpop.f32.mrb[0].mxu0
        %v3057 = vpop.f32.mrb[0].mxu0
        %v3058 = vadd.f32 0.0, %v3057
        %v3059 = vpop.f32.mrb[0].mxu0
        %3060 = vdwg.mxu0
        %v3061 = vpack.c.bf16 %v3002, %v2999
        %v3062 = vpack.c.bf16 %v3010, %v3007
        %v3063 = vpack.c.bf16 %v3018, %v3015
        %v3064 = vpack.c.bf16 %v3026, %v3023
        %v3065 = vpack.c.bf16 %v3034, %v3031
        %v3066 = vpack.c.bf16 %v3042, %v3039
        %v3067 = vpack.c.bf16 %v3050, %v3047
        %v3068 = vpack.c.bf16 %v3058, %v3055
        %3077 = vrot.lane.b32.xlu0 %v2564, 64
        %v3078 = vpop.permute.xlu0 %3077
        %3079 = vrot.lane.b32.xlu0 %v2569, 64
        %v3080 = vpop.permute.xlu0 %3079
        %3081 = vrot.lane.b32.xlu0 %v2574, 64
        %v3082 = vpop.permute.xlu0 %3081
        %3083 = vrot.lane.b32.xlu0 %v2579, 64
        %v3084 = vpop.permute.xlu0 %3083
        %3085 = vrot.lane.b32.xlu0 %v2584, 64
        %v3086 = vpop.permute.xlu0 %3085
        %3087 = vrot.lane.b32.xlu0 %v2589, 64
        %v3088 = vpop.permute.xlu0 %3087
        %3089 = vrot.lane.b32.xlu0 %v2594, 64
        %v3090 = vpop.permute.xlu0 %3089
        %3091 = vrot.lane.b32.xlu0 %v2599, 64
        %v3092 = vpop.permute.xlu0 %3091
        %v3094 = vsel %vm1414, %v3078, 0
        %v3097 = vsel %vm1414, %v3080, 0
        %v3100 = vsel %vm1414, %v3082, 0
        %v3103 = vsel %vm1414, %v3084, 0
        %v3106 = vsel %vm1414, %v3086, 0
        %v3109 = vsel %vm1414, %v3088, 0
        %v3112 = vsel %vm1414, %v3090, 0
        %v3115 = vsel %vm1414, %v3092, 0
        %v3118 = vsel %vm1414, %v2566, 0
        %v3121 = vsel %vm1414, %v2571, 0
        %v3124 = vsel %vm1414, %v2576, 0
        %v3127 = vsel %vm1414, %v2581, 0
        %v3130 = vsel %vm1414, %v2586, 0
        %v3133 = vsel %vm1414, %v2591, 0
        %v3136 = vsel %vm1414, %v2596, 0
        %v3139 = vsel %vm1414, %v2601, 0
        %3141 = vmatprep.subr.bf16.mxu0 0
        %3142 = vmatpush1.bf16.xpose.msra.mxu0 %v3118
        %3143 = vmatprep.subr.bf16.mxu0 0
        %3144 = vmatpush1.bf16.xpose.msra.mxu0 %v3121
        %3145 = vmatprep.subr.bf16.mxu0 0
        %3146 = vmatpush1.bf16.xpose.msra.mxu0 %v3124
        %3147 = vmatprep.subr.bf16.mxu0 0
        %3148 = vmatpush1.bf16.xpose.msra.mxu0 %v3127
        %3149 = vmatprep.subr.bf16.mxu0 0
        %3150 = vmatpush1.bf16.xpose.msra.mxu0 %v3130
        %3151 = vmatprep.subr.bf16.mxu0 0
        %3152 = vmatpush1.bf16.xpose.msra.mxu0 %v3133
        %3153 = vmatprep.subr.bf16.mxu0 0
        %3154 = vmatpush1.bf16.xpose.msra.mxu0 %v3136
        %3155 = vmatprep.subr.bf16.mxu0 0
        %3156 = vmatpush1.bf16.xpose.msra.mxu0 %v3139
        %3157 = vmatprep.subr.bf16.mxu0 0
        %3158 = vmatpush1.bf16.xpose.msra.mxu0 0
        %3159 = vmatprep.subr.bf16.mxu0 0
        %3160 = vmatpush1.bf16.xpose.msra.mxu0 0
        %3161 = vmatprep.subr.bf16.mxu0 0
        %3162 = vmatpush1.bf16.xpose.msra.mxu0 0
        %3163 = vmatprep.subr.bf16.mxu0 0
        %3164 = vmatpush1.bf16.xpose.msra.mxu0 0
        %3165 = vmatprep.subr.bf16.mxu0 0
        %3166 = vmatpush1.bf16.xpose.msra.mxu0 0
        %3167 = vmatprep.subr.bf16.mxu0 0
        %3168 = vmatpush1.bf16.xpose.msra.mxu0 0
        %3169 = vmatprep.subr.bf16.mxu0 0
        %3170 = vmatpush1.bf16.xpose.msra.mxu0 0
        %3171 = vmatprep.subr.bf16.mxu0 0
        %3172 = vmatpush1.bf16.xpose.msra.mxu0 0
        %3173 = vmatprep.mubr.bf16.mxu0 0
        %3174 = vmatmul.mubr.bf16.gmra.mrb[0].mxu0 %v3094
        %v3175 = vpop.f32.mrb[0].mxu0
        %v3176 = vadd.f32 0.0, %v3175
        %v3177 = vpop.f32.mrb[0].mxu0
        %v3178 = vpop.f32.mrb[0].mxu0
        %v3179 = vadd.f32 0.0, %v3178
        %v3180 = vpop.f32.mrb[0].mxu0
        %3181 = vmatprep.mubr.bf16.mxu0 0
        %3182 = vmatmul.mubr.bf16.gmra.mrb[0].mxu0 %v3097
        %v3183 = vpop.f32.mrb[0].mxu0
        %v3184 = vadd.f32 0.0, %v3183
        %v3185 = vpop.f32.mrb[0].mxu0
        %v3186 = vpop.f32.mrb[0].mxu0
        %v3187 = vadd.f32 0.0, %v3186
        %v3188 = vpop.f32.mrb[0].mxu0
        %3189 = vmatprep.mubr.bf16.mxu0 0
        %3190 = vmatmul.mubr.bf16.gmra.mrb[0].mxu0 %v3100
        %v3191 = vpop.f32.mrb[0].mxu0
        %v3192 = vadd.f32 0.0, %v3191
        %v3193 = vpop.f32.mrb[0].mxu0
        %v3194 = vpop.f32.mrb[0].mxu0
        %v3195 = vadd.f32 0.0, %v3194
        %v3196 = vpop.f32.mrb[0].mxu0
        %3197 = vmatprep.mubr.bf16.mxu0 0
        %3198 = vmatmul.mubr.bf16.gmra.mrb[0].mxu0 %v3103
        %v3199 = vpop.f32.mrb[0].mxu0
        %v3200 = vadd.f32 0.0, %v3199
        %v3201 = vpop.f32.mrb[0].mxu0
        %v3202 = vpop.f32.mrb[0].mxu0
        %v3203 = vadd.f32 0.0, %v3202
        %v3204 = vpop.f32.mrb[0].mxu0
        %3205 = vmatprep.mubr.bf16.mxu0 0
        %3206 = vmatmul.mubr.bf16.gmra.mrb[0].mxu0 %v3106
        %v3207 = vpop.f32.mrb[0].mxu0
        %v3208 = vadd.f32 0.0, %v3207
        %v3209 = vpop.f32.mrb[0].mxu0
        %v3210 = vpop.f32.mrb[0].mxu0
        %v3211 = vadd.f32 0.0, %v3210
        %v3212 = vpop.f32.mrb[0].mxu0
        %3213 = vmatprep.mubr.bf16.mxu0 0
        %3214 = vmatmul.mubr.bf16.gmra.mrb[0].mxu0 %v3109
        %v3215 = vpop.f32.mrb[0].mxu0
        %v3216 = vadd.f32 0.0, %v3215
        %v3217 = vpop.f32.mrb[0].mxu0
        %v3218 = vpop.f32.mrb[0].mxu0
        %v3219 = vadd.f32 0.0, %v3218
        %v3220 = vpop.f32.mrb[0].mxu0
        %3221 = vmatprep.mubr.bf16.mxu0 0
        %3222 = vmatmul.mubr.bf16.gmra.mrb[0].mxu0 %v3112
        %v3223 = vpop.f32.mrb[0].mxu0
        %v3224 = vadd.f32 0.0, %v3223
        %v3225 = vpop.f32.mrb[0].mxu0
        %v3226 = vpop.f32.mrb[0].mxu0
        %v3227 = vadd.f32 0.0, %v3226
        %v3228 = vpop.f32.mrb[0].mxu0
        %3229 = vmatprep.mubr.bf16.mxu0 0
        %3230 = vmatmul.mubr.bf16.gmra.mrb[0].mxu0 %v3115
        %v3231 = vpop.f32.mrb[0].mxu0
        %v3232 = vadd.f32 0.0, %v3231
        %v3233 = vpop.f32.mrb[0].mxu0
        %v3234 = vpop.f32.mrb[0].mxu0
        %v3235 = vadd.f32 0.0, %v3234
        %v3236 = vpop.f32.mrb[0].mxu0
        %3237 = vdwg.mxu0
        %v3238 = vmul.f32 %v3176, 0.125
        %v3239 = vmul.f32 %v3179, 0.125
        %v3240 = vmul.f32 %v3184, 0.125
        %v3241 = vmul.f32 %v3187, 0.125
        %v3242 = vmul.f32 %v3192, 0.125
        %v3243 = vmul.f32 %v3195, 0.125
        %v3244 = vmul.f32 %v3200, 0.125
        %v3245 = vmul.f32 %v3203, 0.125
        %v3246 = vmul.f32 %v3208, 0.125
        %v3247 = vmul.f32 %v3211, 0.125
        %v3248 = vmul.f32 %v3216, 0.125
        %v3249 = vmul.f32 %v3219, 0.125
        %v3250 = vmul.f32 %v3224, 0.125
        %v3251 = vmul.f32 %v3227, 0.125
        %v3252 = vmul.f32 %v3232, 0.125
        %v3253 = vmul.f32 %v3235, 0.125
        %v3254 = vadd.f32 %v3238, %v2794
        %v3255 = vadd.f32 %v3239, %v2794
        %v3256 = vadd.f32 %v3240, %v2794
        %v3257 = vadd.f32 %v3241, %v2794
        %v3258 = vadd.f32 %v3242, %v2794
        %v3259 = vadd.f32 %v3243, %v2794
        %v3260 = vadd.f32 %v3244, %v2794
        %v3261 = vadd.f32 %v3245, %v2794
        %v3262 = vadd.f32 %v3246, %v2794
        %v3263 = vadd.f32 %v3247, %v2794
        %v3264 = vadd.f32 %v3248, %v2794
        %v3265 = vadd.f32 %v3249, %v2794
        %v3266 = vadd.f32 %v3250, %v2794
        %v3267 = vadd.f32 %v3251, %v2794
        %v3268 = vadd.f32 %v3252, %v2794
        %v3269 = vadd.f32 %v3253, %v2794
        %3270 = vmax.xlane.f32.xlu0 %v3254
        %v3271 = vpop.xlane.xlu0 %3270
        %3272 = vmax.xlane.f32.xlu0 %v3255
        %v3273 = vpop.xlane.xlu0 %3272
        %3274 = vmax.xlane.f32.xlu0 %v3256
        %v3275 = vpop.xlane.xlu0 %3274
        %3276 = vmax.xlane.f32.xlu0 %v3257
        %v3277 = vpop.xlane.xlu0 %3276
        %3278 = vmax.xlane.f32.xlu0 %v3258
        %v3279 = vpop.xlane.xlu0 %3278
        %3280 = vmax.xlane.f32.xlu0 %v3259
        %v3281 = vpop.xlane.xlu0 %3280
        %3282 = vmax.xlane.f32.xlu0 %v3260
        %v3283 = vpop.xlane.xlu0 %3282
        %3284 = vmax.xlane.f32.xlu0 %v3261
        %v3285 = vpop.xlane.xlu0 %3284
        %3286 = vmax.xlane.f32.xlu0 %v3262
        %v3287 = vpop.xlane.xlu0 %3286
        %3288 = vmax.xlane.f32.xlu0 %v3263
        %v3289 = vpop.xlane.xlu0 %3288
        %3290 = vmax.xlane.f32.xlu0 %v3264
        %v3291 = vpop.xlane.xlu0 %3290
        %3292 = vmax.xlane.f32.xlu0 %v3265
        %v3293 = vpop.xlane.xlu0 %3292
        %3294 = vmax.xlane.f32.xlu0 %v3266
        %v3295 = vpop.xlane.xlu0 %3294
        %3296 = vmax.xlane.f32.xlu0 %v3267
        %v3297 = vpop.xlane.xlu0 %3296
        %3298 = vmax.xlane.f32.xlu0 %v3268
        %v3299 = vpop.xlane.xlu0 %3298
        %3300 = vmax.xlane.f32.xlu0 %v3269
        %v3301 = vpop.xlane.xlu0 %3300
        %v3302 = vsub.f32 %v3254, %v3271
        %v3303 = vsub.f32 %v3255, %v3273
        %v3304 = vsub.f32 %v3256, %v3275
        %v3305 = vsub.f32 %v3257, %v3277
        %v3306 = vsub.f32 %v3258, %v3279
        %v3307 = vsub.f32 %v3259, %v3281
        %v3308 = vsub.f32 %v3260, %v3283
        %v3309 = vsub.f32 %v3261, %v3285
        %v3310 = vsub.f32 %v3262, %v3287
        %v3311 = vsub.f32 %v3263, %v3289
        %v3312 = vsub.f32 %v3264, %v3291
        %v3313 = vsub.f32 %v3265, %v3293
        %v3314 = vsub.f32 %v3266, %v3295
        %v3315 = vsub.f32 %v3267, %v3297
        %v3316 = vsub.f32 %v3268, %v3299
        %v3317 = vsub.f32 %v3269, %v3301
        %v3318 = vmul.f32 %v3302, 1.442695
        %v3319 = vpow.pop %v3318
        %v3320 = vmul.f32 %v3303, 1.442695
        %v3321 = vpow.pop %v3320
        %v3322 = vmul.f32 %v3304, 1.442695
        %v3323 = vpow.pop %v3322
        %v3324 = vmul.f32 %v3305, 1.442695
        %v3325 = vpow.pop %v3324
        %v3326 = vmul.f32 %v3306, 1.442695
        %v3327 = vpow.pop %v3326
        %v3328 = vmul.f32 %v3307, 1.442695
        %v3329 = vpow.pop %v3328
        %v3330 = vmul.f32 %v3308, 1.442695
        %v3331 = vpow.pop %v3330
        %v3332 = vmul.f32 %v3309, 1.442695
        %v3333 = vpow.pop %v3332
        %v3334 = vmul.f32 %v3310, 1.442695
        %v3335 = vpow.pop %v3334
        %v3336 = vmul.f32 %v3311, 1.442695
        %v3337 = vpow.pop %v3336
        %v3338 = vmul.f32 %v3312, 1.442695
        %v3339 = vpow.pop %v3338
        %v3340 = vmul.f32 %v3313, 1.442695
        %v3341 = vpow.pop %v3340
        %v3342 = vmul.f32 %v3314, 1.442695
        %v3343 = vpow.pop %v3342
        %v3344 = vmul.f32 %v3315, 1.442695
        %v3345 = vpow.pop %v3344
        %v3346 = vmul.f32 %v3316, 1.442695
        %v3347 = vpow.pop %v3346
        %v3348 = vmul.f32 %v3317, 1.442695
        %v3349 = vpow.pop %v3348
        %3350 = vadd.xlane.f32.xlu0 %v3319
        %v3351 = vpop.xlane.xlu0 %3350
        %3352 = vadd.xlane.f32.xlu0 %v3321
        %v3353 = vpop.xlane.xlu0 %3352
        %3354 = vadd.xlane.f32.xlu0 %v3323
        %v3355 = vpop.xlane.xlu0 %3354
        %3356 = vadd.xlane.f32.xlu0 %v3325
        %v3357 = vpop.xlane.xlu0 %3356
        %3358 = vadd.xlane.f32.xlu0 %v3327
        %v3359 = vpop.xlane.xlu0 %3358
        %3360 = vadd.xlane.f32.xlu0 %v3329
        %v3361 = vpop.xlane.xlu0 %3360
        %3362 = vadd.xlane.f32.xlu0 %v3331
        %v3363 = vpop.xlane.xlu0 %3362
        %3364 = vadd.xlane.f32.xlu0 %v3333
        %v3365 = vpop.xlane.xlu0 %3364
        %3366 = vadd.xlane.f32.xlu0 %v3335
        %v3367 = vpop.xlane.xlu0 %3366
        %3368 = vadd.xlane.f32.xlu0 %v3337
        %v3369 = vpop.xlane.xlu0 %3368
        %3370 = vadd.xlane.f32.xlu0 %v3339
        %v3371 = vpop.xlane.xlu0 %3370
        %3372 = vadd.xlane.f32.xlu0 %v3341
        %v3373 = vpop.xlane.xlu0 %3372
        %3374 = vadd.xlane.f32.xlu0 %v3343
        %v3375 = vpop.xlane.xlu0 %3374
        %3376 = vadd.xlane.f32.xlu0 %v3345
        %v3377 = vpop.xlane.xlu0 %3376
        %3378 = vadd.xlane.f32.xlu0 %v3347
        %v3379 = vpop.xlane.xlu0 %3378
        %3380 = vadd.xlane.f32.xlu0 %v3349
        %v3381 = vpop.xlane.xlu0 %3380
        %v3382 = vrcp.pop %v3351
        %v3383 = vrcp.pop %v3353
        %v3384 = vrcp.pop %v3355
        %v3385 = vrcp.pop %v3357
        %v3386 = vrcp.pop %v3359
        %v3387 = vrcp.pop %v3361
        %v3388 = vrcp.pop %v3363
        %v3389 = vrcp.pop %v3365
        %v3390 = vrcp.pop %v3367
        %v3391 = vrcp.pop %v3369
        %v3392 = vrcp.pop %v3371
        %v3393 = vrcp.pop %v3373
        %v3394 = vrcp.pop %v3375
        %v3395 = vrcp.pop %v3377
        %v3396 = vrcp.pop %v3379
        %v3397 = vrcp.pop %v3381
        %v3398 = vmul.f32 %v3319, %v3382
        %v3399 = vmul.f32 %v3321, %v3383
        %v3400 = vmul.f32 %v3323, %v3384
        %v3401 = vmul.f32 %v3325, %v3385
        %v3402 = vmul.f32 %v3327, %v3386
        %v3403 = vmul.f32 %v3329, %v3387
        %v3404 = vmul.f32 %v3331, %v3388
        %v3405 = vmul.f32 %v3333, %v3389
        %v3406 = vmul.f32 %v3335, %v3390
        %v3407 = vmul.f32 %v3337, %v3391
        %v3408 = vmul.f32 %v3339, %v3392
        %v3409 = vmul.f32 %v3341, %v3393
        %v3410 = vmul.f32 %v3343, %v3394
        %v3411 = vmul.f32 %v3345, %v3395
        %v3412 = vmul.f32 %v3347, %v3396
        %v3413 = vmul.f32 %v3349, %v3397
        %v3414 = vpack.c.bf16 %v3399, %v3398
        %v3415 = vpack.c.bf16 %v3401, %v3400
        %v3416 = vpack.c.bf16 %v3403, %v3402
        %v3417 = vpack.c.bf16 %v3405, %v3404
        %v3418 = vpack.c.bf16 %v3407, %v3406
        %v3419 = vpack.c.bf16 %v3409, %v3408
        %v3420 = vpack.c.bf16 %v3411, %v3410
        %v3421 = vpack.c.bf16 %v3413, %v3412
        %3430 = vrot.lane.b32.xlu0 %v2567, 64
        %v3431 = vpop.permute.xlu0 %3430
        %3432 = vrot.lane.b32.xlu0 %v2572, 64
        %v3433 = vpop.permute.xlu0 %3432
        %3434 = vrot.lane.b32.xlu0 %v2577, 64
        %v3435 = vpop.permute.xlu0 %3434
        %3436 = vrot.lane.b32.xlu0 %v2582, 64
        %v3437 = vpop.permute.xlu0 %3436
        %3438 = vrot.lane.b32.xlu0 %v2587, 64
        %v3439 = vpop.permute.xlu0 %3438
        %3440 = vrot.lane.b32.xlu0 %v2592, 64
        %v3441 = vpop.permute.xlu0 %3440
        %3442 = vrot.lane.b32.xlu0 %v2597, 64
        %v3443 = vpop.permute.xlu0 %3442
        %3444 = vrot.lane.b32.xlu0 %v2602, 64
        %v3445 = vpop.permute.xlu0 %3444
        %3454 = vmatprep.subr.bf16.mxu0 0
        %3455 = vmatpush1.bf16.msra.mxu0 %v3431
        %3456 = vmatprep.subr.bf16.mxu0 0
        %3457 = vmatpush1.bf16.msra.mxu0 %v3433
        %3458 = vmatprep.subr.bf16.mxu0 0
        %3459 = vmatpush1.bf16.msra.mxu0 %v3435
        %3460 = vmatprep.subr.bf16.mxu0 0
        %3461 = vmatpush1.bf16.msra.mxu0 %v3437
        %3462 = vmatprep.subr.bf16.mxu0 0
        %3463 = vmatpush1.bf16.msra.mxu0 %v3439
        %3464 = vmatprep.subr.bf16.mxu0 0
        %3465 = vmatpush1.bf16.msra.mxu0 %v3441
        %3466 = vmatprep.subr.bf16.mxu0 0
        %3467 = vmatpush1.bf16.msra.mxu0 %v3443
        %3468 = vmatprep.subr.bf16.mxu0 0
        %3469 = vmatpush1.bf16.msra.mxu0 %v3445
        %3470 = vmatprep.subr.bf16.mxu0 0
        %3471 = vmatpush1.bf16.msra.mxu0 0
        %3472 = vmatprep.subr.bf16.mxu0 0
        %3473 = vmatpush1.bf16.msra.mxu0 0
        %3474 = vmatprep.subr.bf16.mxu0 0
        %3475 = vmatpush1.bf16.msra.mxu0 0
        %3476 = vmatprep.subr.bf16.mxu0 0
        %3477 = vmatpush1.bf16.msra.mxu0 0
        %3478 = vmatprep.subr.bf16.mxu0 0
        %3479 = vmatpush1.bf16.msra.mxu0 0
        %3480 = vmatprep.subr.bf16.mxu0 0
        %3481 = vmatpush1.bf16.msra.mxu0 0
        %3482 = vmatprep.subr.bf16.mxu0 0
        %3483 = vmatpush1.bf16.msra.mxu0 0
        %3484 = vmatprep.subr.bf16.mxu0 0
        %3485 = vmatpush1.bf16.msra.mxu0 0
        %3486 = vmatprep.mubr.bf16.mxu0 0
        %3487 = vmatmul.mubr.bf16.gmra.mrb[0].mxu0 %v3414
        %v3488 = vpop.f32.mrb[0].mxu0
        %v3489 = vadd.f32 0.0, %v3488
        %v3490 = vpop.f32.mrb[0].mxu0
        %v3491 = vpop.f32.mrb[0].mxu0
        %v3492 = vadd.f32 0.0, %v3491
        %v3493 = vpop.f32.mrb[0].mxu0
        %3494 = vmatprep.mubr.bf16.mxu0 0
        %3495 = vmatmul.mubr.bf16.gmra.mrb[0].mxu0 %v3415
        %v3496 = vpop.f32.mrb[0].mxu0
        %v3497 = vadd.f32 0.0, %v3496
        %v3498 = vpop.f32.mrb[0].mxu0
        %v3499 = vpop.f32.mrb[0].mxu0
        %v3500 = vadd.f32 0.0, %v3499
        %v3501 = vpop.f32.mrb[0].mxu0
        %3502 = vmatprep.mubr.bf16.mxu0 0
        %3503 = vmatmul.mubr.bf16.gmra.mrb[0].mxu0 %v3416
        %v3504 = vpop.f32.mrb[0].mxu0
        %v3505 = vadd.f32 0.0, %v3504
        %v3506 = vpop.f32.mrb[0].mxu0
        %v3507 = vpop.f32.mrb[0].mxu0
        %v3508 = vadd.f32 0.0, %v3507
        %v3509 = vpop.f32.mrb[0].mxu0
        %3510 = vmatprep.mubr.bf16.mxu0 0
        %3511 = vmatmul.mubr.bf16.gmra.mrb[0].mxu0 %v3417
        %v3512 = vpop.f32.mrb[0].mxu0
        %v3513 = vadd.f32 0.0, %v3512
        %v3514 = vpop.f32.mrb[0].mxu0
        %v3515 = vpop.f32.mrb[0].mxu0
        %v3516 = vadd.f32 0.0, %v3515
        %v3517 = vpop.f32.mrb[0].mxu0
        %3518 = vmatprep.mubr.bf16.mxu0 0
        %3519 = vmatmul.mubr.bf16.gmra.mrb[0].mxu0 %v3418
        %v3520 = vpop.f32.mrb[0].mxu0
        %v3521 = vadd.f32 0.0, %v3520
        %v3522 = vpop.f32.mrb[0].mxu0
        %v3523 = vpop.f32.mrb[0].mxu0
        %v3524 = vadd.f32 0.0, %v3523
        %v3525 = vpop.f32.mrb[0].mxu0
        %3526 = vmatprep.mubr.bf16.mxu0 0
        %3527 = vmatmul.mubr.bf16.gmra.mrb[0].mxu0 %v3419
        %v3528 = vpop.f32.mrb[0].mxu0
        %v3529 = vadd.f32 0.0, %v3528
        %v3530 = vpop.f32.mrb[0].mxu0
        %v3531 = vpop.f32.mrb[0].mxu0
        %v3532 = vadd.f32 0.0, %v3531
        %v3533 = vpop.f32.mrb[0].mxu0
        %3534 = vmatprep.mubr.bf16.mxu0 0
        %3535 = vmatmul.mubr.bf16.gmra.mrb[0].mxu0 %v3420
        %v3536 = vpop.f32.mrb[0].mxu0
        %v3537 = vadd.f32 0.0, %v3536
        %v3538 = vpop.f32.mrb[0].mxu0
        %v3539 = vpop.f32.mrb[0].mxu0
        %v3540 = vadd.f32 0.0, %v3539
        %v3541 = vpop.f32.mrb[0].mxu0
        %3542 = vmatprep.mubr.bf16.mxu0 0
        %3543 = vmatmul.mubr.bf16.gmra.mrb[0].mxu0 %v3421
        %v3544 = vpop.f32.mrb[0].mxu0
        %v3545 = vadd.f32 0.0, %v3544
        %v3546 = vpop.f32.mrb[0].mxu0
        %v3547 = vpop.f32.mrb[0].mxu0
        %v3548 = vadd.f32 0.0, %v3547
        %v3549 = vpop.f32.mrb[0].mxu0
        %3550 = vdwg.mxu0
        %v3551 = vpack.c.bf16 %v3492, %v3489
        %v3552 = vpack.c.bf16 %v3500, %v3497
        %v3553 = vpack.c.bf16 %v3508, %v3505
        %v3554 = vpack.c.bf16 %v3516, %v3513
        %v3555 = vpack.c.bf16 %v3524, %v3521
        %v3556 = vpack.c.bf16 %v3532, %v3529
        %v3557 = vpack.c.bf16 %v3540, %v3537
        %v3558 = vpack.c.bf16 %v3548, %v3545
        %3567 = vrot.lane.b32.xlu0 %v2566, 64
        %v3568 = vpop.permute.xlu0 %3567
        %3569 = vrot.lane.b32.xlu0 %v2571, 64
        %v3570 = vpop.permute.xlu0 %3569
        %3571 = vrot.lane.b32.xlu0 %v2576, 64
        %v3572 = vpop.permute.xlu0 %3571
        %3573 = vrot.lane.b32.xlu0 %v2581, 64
        %v3574 = vpop.permute.xlu0 %3573
        %3575 = vrot.lane.b32.xlu0 %v2586, 64
        %v3576 = vpop.permute.xlu0 %3575
        %3577 = vrot.lane.b32.xlu0 %v2591, 64
        %v3578 = vpop.permute.xlu0 %3577
        %3579 = vrot.lane.b32.xlu0 %v2596, 64
        %v3580 = vpop.permute.xlu0 %3579
        %3581 = vrot.lane.b32.xlu0 %v2601, 64
        %v3582 = vpop.permute.xlu0 %3581
        %v3584 = vsel %vm1414, %v2565, 0
        %v3587 = vsel %vm1414, %v2570, 0
        %v3590 = vsel %vm1414, %v2575, 0
        %v3593 = vsel %vm1414, %v2580, 0
        %v3596 = vsel %vm1414, %v2585, 0
        %v3599 = vsel %vm1414, %v2590, 0
        %v3602 = vsel %vm1414, %v2595, 0
        %v3605 = vsel %vm1414, %v2600, 0
        %v3608 = vsel %vm1414, %v3568, 0
        %v3611 = vsel %vm1414, %v3570, 0
        %v3614 = vsel %vm1414, %v3572, 0
        %v3617 = vsel %vm1414, %v3574, 0
        %v3620 = vsel %vm1414, %v3576, 0
        %v3623 = vsel %vm1414, %v3578, 0
        %v3626 = vsel %vm1414, %v3580, 0
        %v3629 = vsel %vm1414, %v3582, 0
        %3631 = vmatprep.subr.bf16.mxu0 0
        %3632 = vmatpush1.bf16.xpose.msra.mxu0 %v3608
        %3633 = vmatprep.subr.bf16.mxu0 0
        %3634 = vmatpush1.bf16.xpose.msra.mxu0 %v3611
        %3635 = vmatprep.subr.bf16.mxu0 0
        %3636 = vmatpush1.bf16.xpose.msra.mxu0 %v3614
        %3637 = vmatprep.subr.bf16.mxu0 0
        %3638 = vmatpush1.bf16.xpose.msra.mxu0 %v3617
        %3639 = vmatprep.subr.bf16.mxu0 0
        %3640 = vmatpush1.bf16.xpose.msra.mxu0 %v3620
        %3641 = vmatprep.subr.bf16.mxu0 0
        %3642 = vmatpush1.bf16.xpose.msra.mxu0 %v3623
        %3643 = vmatprep.subr.bf16.mxu0 0
        %3644 = vmatpush1.bf16.xpose.msra.mxu0 %v3626
        %3645 = vmatprep.subr.bf16.mxu0 0
        %3646 = vmatpush1.bf16.xpose.msra.mxu0 %v3629
        %3647 = vmatprep.subr.bf16.mxu0 0
        %3648 = vmatpush1.bf16.xpose.msra.mxu0 0
        %3649 = vmatprep.subr.bf16.mxu0 0
        %3650 = vmatpush1.bf16.xpose.msra.mxu0 0
        %3651 = vmatprep.subr.bf16.mxu0 0
        %3652 = vmatpush1.bf16.xpose.msra.mxu0 0
        %3653 = vmatprep.subr.bf16.mxu0 0
        %3654 = vmatpush1.bf16.xpose.msra.mxu0 0
        %3655 = vmatprep.subr.bf16.mxu0 0
        %3656 = vmatpush1.bf16.xpose.msra.mxu0 0
        %3657 = vmatprep.subr.bf16.mxu0 0
        %3658 = vmatpush1.bf16.xpose.msra.mxu0 0
        %3659 = vmatprep.subr.bf16.mxu0 0
        %3660 = vmatpush1.bf16.xpose.msra.mxu0 0
        %3661 = vmatprep.subr.bf16.mxu0 0
        %3662 = vmatpush1.bf16.xpose.msra.mxu0 0
        %3663 = vmatprep.mubr.bf16.mxu0 0
        %3664 = vmatmul.mubr.bf16.gmra.mrb[0].mxu0 %v3584
        %v3665 = vpop.f32.mrb[0].mxu0
        %v3666 = vadd.f32 0.0, %v3665
        %v3667 = vpop.f32.mrb[0].mxu0
        %v3668 = vpop.f32.mrb[0].mxu0
        %v3669 = vadd.f32 0.0, %v3668
        %v3670 = vpop.f32.mrb[0].mxu0
        %3671 = vmatprep.mubr.bf16.mxu0 0
        %3672 = vmatmul.mubr.bf16.gmra.mrb[0].mxu0 %v3587
        %v3673 = vpop.f32.mrb[0].mxu0
        %v3674 = vadd.f32 0.0, %v3673
        %v3675 = vpop.f32.mrb[0].mxu0
        %v3676 = vpop.f32.mrb[0].mxu0
        %v3677 = vadd.f32 0.0, %v3676
        %v3678 = vpop.f32.mrb[0].mxu0
        %3679 = vmatprep.mubr.bf16.mxu0 0
        %3680 = vmatmul.mubr.bf16.gmra.mrb[0].mxu0 %v3590
        %v3681 = vpop.f32.mrb[0].mxu0
        %v3682 = vadd.f32 0.0, %v3681
        %v3683 = vpop.f32.mrb[0].mxu0
        %v3684 = vpop.f32.mrb[0].mxu0
        %v3685 = vadd.f32 0.0, %v3684
        %v3686 = vpop.f32.mrb[0].mxu0
        %3687 = vmatprep.mubr.bf16.mxu0 0
        %3688 = vmatmul.mubr.bf16.gmra.mrb[0].mxu0 %v3593
        %v3689 = vpop.f32.mrb[0].mxu0
        %v3690 = vadd.f32 0.0, %v3689
        %v3691 = vpop.f32.mrb[0].mxu0
        %v3692 = vpop.f32.mrb[0].mxu0
        %v3693 = vadd.f32 0.0, %v3692
        %v3694 = vpop.f32.mrb[0].mxu0
        %3695 = vmatprep.mubr.bf16.mxu0 0
        %3696 = vmatmul.mubr.bf16.gmra.mrb[0].mxu0 %v3596
        %v3697 = vpop.f32.mrb[0].mxu0
        %v3698 = vadd.f32 0.0, %v3697
        %v3699 = vpop.f32.mrb[0].mxu0
        %v3700 = vpop.f32.mrb[0].mxu0
        %v3701 = vadd.f32 0.0, %v3700
        %v3702 = vpop.f32.mrb[0].mxu0
        %3703 = vmatprep.mubr.bf16.mxu0 0
        %3704 = vmatmul.mubr.bf16.gmra.mrb[0].mxu0 %v3599
        %v3705 = vpop.f32.mrb[0].mxu0
        %v3706 = vadd.f32 0.0, %v3705
        %v3707 = vpop.f32.mrb[0].mxu0
        %v3708 = vpop.f32.mrb[0].mxu0
        %v3709 = vadd.f32 0.0, %v3708
        %v3710 = vpop.f32.mrb[0].mxu0
        %3711 = vmatprep.mubr.bf16.mxu0 0
        %3712 = vmatmul.mubr.bf16.gmra.mrb[0].mxu0 %v3602
        %v3713 = vpop.f32.mrb[0].mxu0
        %v3714 = vadd.f32 0.0, %v3713
        %v3715 = vpop.f32.mrb[0].mxu0
        %v3716 = vpop.f32.mrb[0].mxu0
        %v3717 = vadd.f32 0.0, %v3716
        %v3718 = vpop.f32.mrb[0].mxu0
        %3719 = vmatprep.mubr.bf16.mxu0 0
        %3720 = vmatmul.mubr.bf16.gmra.mrb[0].mxu0 %v3605
        %v3721 = vpop.f32.mrb[0].mxu0
        %v3722 = vadd.f32 0.0, %v3721
        %v3723 = vpop.f32.mrb[0].mxu0
        %v3724 = vpop.f32.mrb[0].mxu0
        %v3725 = vadd.f32 0.0, %v3724
        %v3726 = vpop.f32.mrb[0].mxu0
        %3727 = vdwg.mxu0
        %v3728 = vmul.f32 %v3666, 0.125
        %v3729 = vmul.f32 %v3669, 0.125
        %v3730 = vmul.f32 %v3674, 0.125
        %v3731 = vmul.f32 %v3677, 0.125
        %v3732 = vmul.f32 %v3682, 0.125
        %v3733 = vmul.f32 %v3685, 0.125
        %v3734 = vmul.f32 %v3690, 0.125
        %v3735 = vmul.f32 %v3693, 0.125
        %v3736 = vmul.f32 %v3698, 0.125
        %v3737 = vmul.f32 %v3701, 0.125
        %v3738 = vmul.f32 %v3706, 0.125
        %v3739 = vmul.f32 %v3709, 0.125
        %v3740 = vmul.f32 %v3714, 0.125
        %v3741 = vmul.f32 %v3717, 0.125
        %v3742 = vmul.f32 %v3722, 0.125
        %v3743 = vmul.f32 %v3725, 0.125
        %v3744 = vadd.f32 %v3728, %v2794
        %v3745 = vadd.f32 %v3729, %v2794
        %v3746 = vadd.f32 %v3730, %v2794
        %v3747 = vadd.f32 %v3731, %v2794
        %v3748 = vadd.f32 %v3732, %v2794
        %v3749 = vadd.f32 %v3733, %v2794
        %v3750 = vadd.f32 %v3734, %v2794
        %v3751 = vadd.f32 %v3735, %v2794
        %v3752 = vadd.f32 %v3736, %v2794
        %v3753 = vadd.f32 %v3737, %v2794
        %v3754 = vadd.f32 %v3738, %v2794
        %v3755 = vadd.f32 %v3739, %v2794
        %v3756 = vadd.f32 %v3740, %v2794
        %v3757 = vadd.f32 %v3741, %v2794
        %v3758 = vadd.f32 %v3742, %v2794
        %v3759 = vadd.f32 %v3743, %v2794
        %3760 = vmax.xlane.f32.xlu0 %v3744
        %v3761 = vpop.xlane.xlu0 %3760
        %3762 = vmax.xlane.f32.xlu0 %v3745
        %v3763 = vpop.xlane.xlu0 %3762
        %3764 = vmax.xlane.f32.xlu0 %v3746
        %v3765 = vpop.xlane.xlu0 %3764
        %3766 = vmax.xlane.f32.xlu0 %v3747
        %v3767 = vpop.xlane.xlu0 %3766
        %3768 = vmax.xlane.f32.xlu0 %v3748
        %v3769 = vpop.xlane.xlu0 %3768
        %3770 = vmax.xlane.f32.xlu0 %v3749
        %v3771 = vpop.xlane.xlu0 %3770
        %3772 = vmax.xlane.f32.xlu0 %v3750
        %v3773 = vpop.xlane.xlu0 %3772
        %3774 = vmax.xlane.f32.xlu0 %v3751
        %v3775 = vpop.xlane.xlu0 %3774
        %3776 = vmax.xlane.f32.xlu0 %v3752
        %v3777 = vpop.xlane.xlu0 %3776
        %3778 = vmax.xlane.f32.xlu0 %v3753
        %v3779 = vpop.xlane.xlu0 %3778
        %3780 = vmax.xlane.f32.xlu0 %v3754
        %v3781 = vpop.xlane.xlu0 %3780
        %3782 = vmax.xlane.f32.xlu0 %v3755
        %v3783 = vpop.xlane.xlu0 %3782
        %3784 = vmax.xlane.f32.xlu0 %v3756
        %v3785 = vpop.xlane.xlu0 %3784
        %3786 = vmax.xlane.f32.xlu0 %v3757
        %v3787 = vpop.xlane.xlu0 %3786
        %3788 = vmax.xlane.f32.xlu0 %v3758
        %v3789 = vpop.xlane.xlu0 %3788
        %3790 = vmax.xlane.f32.xlu0 %v3759
        %v3791 = vpop.xlane.xlu0 %3790
        %v3792 = vsub.f32 %v3744, %v3761
        %v3793 = vsub.f32 %v3745, %v3763
        %v3794 = vsub.f32 %v3746, %v3765
        %v3795 = vsub.f32 %v3747, %v3767
        %v3796 = vsub.f32 %v3748, %v3769
        %v3797 = vsub.f32 %v3749, %v3771
        %v3798 = vsub.f32 %v3750, %v3773
        %v3799 = vsub.f32 %v3751, %v3775
        %v3800 = vsub.f32 %v3752, %v3777
        %v3801 = vsub.f32 %v3753, %v3779
        %v3802 = vsub.f32 %v3754, %v3781
        %v3803 = vsub.f32 %v3755, %v3783
        %v3804 = vsub.f32 %v3756, %v3785
        %v3805 = vsub.f32 %v3757, %v3787
        %v3806 = vsub.f32 %v3758, %v3789
        %v3807 = vsub.f32 %v3759, %v3791
        %v3808 = vmul.f32 %v3792, 1.442695
        %v3809 = vpow.pop %v3808
        %v3810 = vmul.f32 %v3793, 1.442695
        %v3811 = vpow.pop %v3810
        %v3812 = vmul.f32 %v3794, 1.442695
        %v3813 = vpow.pop %v3812
        %v3814 = vmul.f32 %v3795, 1.442695
        %v3815 = vpow.pop %v3814
        %v3816 = vmul.f32 %v3796, 1.442695
        %v3817 = vpow.pop %v3816
        %v3818 = vmul.f32 %v3797, 1.442695
        %v3819 = vpow.pop %v3818
        %v3820 = vmul.f32 %v3798, 1.442695
        %v3821 = vpow.pop %v3820
        %v3822 = vmul.f32 %v3799, 1.442695
        %v3823 = vpow.pop %v3822
        %v3824 = vmul.f32 %v3800, 1.442695
        %v3825 = vpow.pop %v3824
        %v3826 = vmul.f32 %v3801, 1.442695
        %v3827 = vpow.pop %v3826
        %v3828 = vmul.f32 %v3802, 1.442695
        %v3829 = vpow.pop %v3828
        %v3830 = vmul.f32 %v3803, 1.442695
        %v3831 = vpow.pop %v3830
        %v3832 = vmul.f32 %v3804, 1.442695
        %v3833 = vpow.pop %v3832
        %v3834 = vmul.f32 %v3805, 1.442695
        %v3835 = vpow.pop %v3834
        %v3836 = vmul.f32 %v3806, 1.442695
        %v3837 = vpow.pop %v3836
        %v3838 = vmul.f32 %v3807, 1.442695
        %v3839 = vpow.pop %v3838
        %3840 = vadd.xlane.f32.xlu0 %v3809
        %v3841 = vpop.xlane.xlu0 %3840
        %3842 = vadd.xlane.f32.xlu0 %v3811
        %v3843 = vpop.xlane.xlu0 %3842
        %3844 = vadd.xlane.f32.xlu0 %v3813
        %v3845 = vpop.xlane.xlu0 %3844
        %3846 = vadd.xlane.f32.xlu0 %v3815
        %v3847 = vpop.xlane.xlu0 %3846
        %3848 = vadd.xlane.f32.xlu0 %v3817
        %v3849 = vpop.xlane.xlu0 %3848
        %3850 = vadd.xlane.f32.xlu0 %v3819
        %v3851 = vpop.xlane.xlu0 %3850
        %3852 = vadd.xlane.f32.xlu0 %v3821
        %v3853 = vpop.xlane.xlu0 %3852
        %3854 = vadd.xlane.f32.xlu0 %v3823
        %v3855 = vpop.xlane.xlu0 %3854
        %3856 = vadd.xlane.f32.xlu0 %v3825
        %v3857 = vpop.xlane.xlu0 %3856
        %3858 = vadd.xlane.f32.xlu0 %v3827
        %v3859 = vpop.xlane.xlu0 %3858
        %3860 = vadd.xlane.f32.xlu0 %v3829
        %v3861 = vpop.xlane.xlu0 %3860
        %3862 = vadd.xlane.f32.xlu0 %v3831
        %v3863 = vpop.xlane.xlu0 %3862
        %3864 = vadd.xlane.f32.xlu0 %v3833
        %v3865 = vpop.xlane.xlu0 %3864
        %3866 = vadd.xlane.f32.xlu0 %v3835
        %v3867 = vpop.xlane.xlu0 %3866
        %3868 = vadd.xlane.f32.xlu0 %v3837
        %v3869 = vpop.xlane.xlu0 %3868
        %3870 = vadd.xlane.f32.xlu0 %v3839
        %v3871 = vpop.xlane.xlu0 %3870
        %v3872 = vrcp.pop %v3841
        %v3873 = vrcp.pop %v3843
        %v3874 = vrcp.pop %v3845
        %v3875 = vrcp.pop %v3847
        %v3876 = vrcp.pop %v3849
        %v3877 = vrcp.pop %v3851
        %v3878 = vrcp.pop %v3853
        %v3879 = vrcp.pop %v3855
        %v3880 = vrcp.pop %v3857
        %v3881 = vrcp.pop %v3859
        %v3882 = vrcp.pop %v3861
        %v3883 = vrcp.pop %v3863
        %v3884 = vrcp.pop %v3865
        %v3885 = vrcp.pop %v3867
        %v3886 = vrcp.pop %v3869
        %v3887 = vrcp.pop %v3871
        %v3888 = vmul.f32 %v3809, %v3872
        %v3889 = vmul.f32 %v3811, %v3873
        %v3890 = vmul.f32 %v3813, %v3874
        %v3891 = vmul.f32 %v3815, %v3875
        %v3892 = vmul.f32 %v3817, %v3876
        %v3893 = vmul.f32 %v3819, %v3877
        %v3894 = vmul.f32 %v3821, %v3878
        %v3895 = vmul.f32 %v3823, %v3879
        %v3896 = vmul.f32 %v3825, %v3880
        %v3897 = vmul.f32 %v3827, %v3881
        %v3898 = vmul.f32 %v3829, %v3882
        %v3899 = vmul.f32 %v3831, %v3883
        %v3900 = vmul.f32 %v3833, %v3884
        %v3901 = vmul.f32 %v3835, %v3885
        %v3902 = vmul.f32 %v3837, %v3886
        %v3903 = vmul.f32 %v3839, %v3887
        %v3904 = vpack.c.bf16 %v3889, %v3888
        %v3905 = vpack.c.bf16 %v3891, %v3890
        %v3906 = vpack.c.bf16 %v3893, %v3892
        %v3907 = vpack.c.bf16 %v3895, %v3894
        %v3908 = vpack.c.bf16 %v3897, %v3896
        %v3909 = vpack.c.bf16 %v3899, %v3898
        %v3910 = vpack.c.bf16 %v3901, %v3900
        %v3911 = vpack.c.bf16 %v3903, %v3902
        %3912 = vmatprep.subr.bf16.mxu0 0
        %3913 = vmatpush1.bf16.msra.mxu0 %v2568
        %3914 = vmatprep.subr.bf16.mxu0 0
        %3915 = vmatpush1.bf16.msra.mxu0 %v2573
        %3916 = vmatprep.subr.bf16.mxu0 0
        %3917 = vmatpush1.bf16.msra.mxu0 %v2578
        %3918 = vmatprep.subr.bf16.mxu0 0
        %3919 = vmatpush1.bf16.msra.mxu0 %v2583
        %3920 = vmatprep.subr.bf16.mxu0 0
        %3921 = vmatpush1.bf16.msra.mxu0 %v2588
        %3922 = vmatprep.subr.bf16.mxu0 0
        %3923 = vmatpush1.bf16.msra.mxu0 %v2593
        %3924 = vmatprep.subr.bf16.mxu0 0
        %3925 = vmatpush1.bf16.msra.mxu0 %v2598
        %3926 = vmatprep.subr.bf16.mxu0 0
        %3927 = vmatpush1.bf16.msra.mxu0 %v2603
        %3928 = vmatprep.subr.bf16.mxu0 0
        %3929 = vmatpush1.bf16.msra.mxu0 0
        %3930 = vmatprep.subr.bf16.mxu0 0
        %3931 = vmatpush1.bf16.msra.mxu0 0
        %3932 = vmatprep.subr.bf16.mxu0 0
        %3933 = vmatpush1.bf16.msra.mxu0 0
        %3934 = vmatprep.subr.bf16.mxu0 0
        %3935 = vmatpush1.bf16.msra.mxu0 0
        %3936 = vmatprep.subr.bf16.mxu0 0
        %3937 = vmatpush1.bf16.msra.mxu0 0
        %3938 = vmatprep.subr.bf16.mxu0 0
        %3939 = vmatpush1.bf16.msra.mxu0 0
        %3940 = vmatprep.subr.bf16.mxu0 0
        %3941 = vmatpush1.bf16.msra.mxu0 0
        %3942 = vmatprep.subr.bf16.mxu0 0
        %3943 = vmatpush1.bf16.msra.mxu0 0
        %3944 = vmatprep.mubr.bf16.mxu0 0
        %3945 = vmatmul.mubr.bf16.gmra.mrb[0].mxu0 %v3904
        %v3946 = vpop.f32.mrb[0].mxu0
        %v3947 = vadd.f32 0.0, %v3946
        %v3948 = vpop.f32.mrb[0].mxu0
        %v3949 = vpop.f32.mrb[0].mxu0
        %v3950 = vadd.f32 0.0, %v3949
        %v3951 = vpop.f32.mrb[0].mxu0
        %3952 = vmatprep.mubr.bf16.mxu0 0
        %3953 = vmatmul.mubr.bf16.gmra.mrb[0].mxu0 %v3905
        %v3954 = vpop.f32.mrb[0].mxu0
        %v3955 = vadd.f32 0.0, %v3954
        %v3956 = vpop.f32.mrb[0].mxu0
        %v3957 = vpop.f32.mrb[0].mxu0
        %v3958 = vadd.f32 0.0, %v3957
        %v3959 = vpop.f32.mrb[0].mxu0
        %3960 = vmatprep.mubr.bf16.mxu0 0
        %3961 = vmatmul.mubr.bf16.gmra.mrb[0].mxu0 %v3906
        %v3962 = vpop.f32.mrb[0].mxu0
        %v3963 = vadd.f32 0.0, %v3962
        %v3964 = vpop.f32.mrb[0].mxu0
        %v3965 = vpop.f32.mrb[0].mxu0
        %v3966 = vadd.f32 0.0, %v3965
        %v3967 = vpop.f32.mrb[0].mxu0
        %3968 = vmatprep.mubr.bf16.mxu0 0
        %3969 = vmatmul.mubr.bf16.gmra.mrb[0].mxu0 %v3907
        %v3970 = vpop.f32.mrb[0].mxu0
        %v3971 = vadd.f32 0.0, %v3970
        %v3972 = vpop.f32.mrb[0].mxu0
        %v3973 = vpop.f32.mrb[0].mxu0
        %v3974 = vadd.f32 0.0, %v3973
        %v3975 = vpop.f32.mrb[0].mxu0
        %3976 = vmatprep.mubr.bf16.mxu0 0
        %3977 = vmatmul.mubr.bf16.gmra.mrb[0].mxu0 %v3908
        %v3978 = vpop.f32.mrb[0].mxu0
        %v3979 = vadd.f32 0.0, %v3978
        %v3980 = vpop.f32.mrb[0].mxu0
        %v3981 = vpop.f32.mrb[0].mxu0
        %v3982 = vadd.f32 0.0, %v3981
        %v3983 = vpop.f32.mrb[0].mxu0
        %3984 = vmatprep.mubr.bf16.mxu0 0
        %3985 = vmatmul.mubr.bf16.gmra.mrb[0].mxu0 %v3909
        %v3986 = vpop.f32.mrb[0].mxu0
        %v3987 = vadd.f32 0.0, %v3986
        %v3988 = vpop.f32.mrb[0].mxu0
        %v3989 = vpop.f32.mrb[0].mxu0
        %v3990 = vadd.f32 0.0, %v3989
        %v3991 = vpop.f32.mrb[0].mxu0
        %3992 = vmatprep.mubr.bf16.mxu0 0
        %3993 = vmatmul.mubr.bf16.gmra.mrb[0].mxu0 %v3910
        %v3994 = vpop.f32.mrb[0].mxu0
        %v3995 = vadd.f32 0.0, %v3994
        %v3996 = vpop.f32.mrb[0].mxu0
        %v3997 = vpop.f32.mrb[0].mxu0
        %v3998 = vadd.f32 0.0, %v3997
        %v3999 = vpop.f32.mrb[0].mxu0
        %4000 = vmatprep.mubr.bf16.mxu0 0
        %4001 = vmatmul.mubr.bf16.gmra.mrb[0].mxu0 %v3911
        %v4002 = vpop.f32.mrb[0].mxu0
        %v4003 = vadd.f32 0.0, %v4002
        %v4004 = vpop.f32.mrb[0].mxu0
        %v4005 = vpop.f32.mrb[0].mxu0
        %v4006 = vadd.f32 0.0, %v4005
        %v4007 = vpop.f32.mrb[0].mxu0
        %4008 = vdwg.mxu0
        %v4009 = vpack.c.bf16 %v3950, %v3947
        %v4010 = vpack.c.bf16 %v3958, %v3955
        %v4011 = vpack.c.bf16 %v3966, %v3963
        %v4012 = vpack.c.bf16 %v3974, %v3971
        %v4013 = vpack.c.bf16 %v3982, %v3979
        %v4014 = vpack.c.bf16 %v3990, %v3987
        %v4015 = vpack.c.bf16 %v3998, %v3995
        %v4016 = vpack.c.bf16 %v4006, %v4003
        %4025 = vrot.lane.b32.xlu0 %v3551, 64
        %v4026 = vpop.permute.xlu0 %4025
        %4027 = vrot.lane.b32.xlu0 %v3552, 64
        %v4028 = vpop.permute.xlu0 %4027
        %4029 = vrot.lane.b32.xlu0 %v3553, 64
        %v4030 = vpop.permute.xlu0 %4029
        %4031 = vrot.lane.b32.xlu0 %v3554, 64
        %v4032 = vpop.permute.xlu0 %4031
        %4033 = vrot.lane.b32.xlu0 %v3555, 64
        %v4034 = vpop.permute.xlu0 %4033
        %4035 = vrot.lane.b32.xlu0 %v3556, 64
        %v4036 = vpop.permute.xlu0 %4035
        %4037 = vrot.lane.b32.xlu0 %v3557, 64
        %v4038 = vpop.permute.xlu0 %4037
        %4039 = vrot.lane.b32.xlu0 %v3558, 64
        %v4040 = vpop.permute.xlu0 %4039
        %v4043 = vsel %vm1414, %v3061, %v4026
        %v4047 = vsel %vm1414, %v3062, %v4028
        %v4051 = vsel %vm1414, %v3063, %v4030
        %v4055 = vsel %vm1414, %v3064, %v4032
        %v4059 = vsel %vm1414, %v3065, %v4034
        %v4063 = vsel %vm1414, %v3066, %v4036
        %v4067 = vsel %vm1414, %v3067, %v4038
        %v4071 = vsel %vm1414, %v3068, %v4040
        %v4073 = vld [vmem:[%s878] sm:$0xff]
        %v4074 = vld [vmem:[%s878 + $0x8] sm:$0xff]
        %v4075 = vld [vmem:[%s878 + $0x10] sm:$0xff]
        %v4076 = vld [vmem:[%s878 + $0x18] sm:$0xff]
        %v4077 = vld [vmem:[%s878 + $0x20] sm:$0xff]
        %v4078 = vld [vmem:[%s878 + $0x28] sm:$0xff]
        %v4079 = vld [vmem:[%s878 + $0x30] sm:$0xff]
        %v4080 = vld [vmem:[%s878 + $0x38] sm:$0xff]
        %v4081 = vld [vmem:[%s878 + $0x40] sm:$0xff]
        %v4082 = vld [vmem:[%s878 + $0x48] sm:$0xff]
        %v4083 = vld [vmem:[%s878 + $0x50] sm:$0xff]
        %v4084 = vld [vmem:[%s878 + $0x58] sm:$0xff]
        %v4085 = vld [vmem:[%s878 + $0x60] sm:$0xff]
        %v4086 = vld [vmem:[%s878 + $0x68] sm:$0xff]
        %v4087 = vld [vmem:[%s878 + $0x70] sm:$0xff]
        %v4088 = vld [vmem:[%s878 + $0x78] sm:$0xff]
        %v4089 = vld [vmem:[%s878 + $0x80] sm:$0xff]
        %v4090 = vld [vmem:[%s878 + $0x88] sm:$0xff]
        %v4091 = vld [vmem:[%s878 + $0x90] sm:$0xff]
        %v4092 = vld [vmem:[%s878 + $0x98] sm:$0xff]
        %v4093 = vld [vmem:[%s878 + $0xa0] sm:$0xff]
        %v4094 = vld [vmem:[%s878 + $0xa8] sm:$0xff]
        %v4095 = vld [vmem:[%s878 + $0xb0] sm:$0xff]
        %v4096 = vld [vmem:[%s878 + $0xb8] sm:$0xff]
        %v4121 = vunpack.c.l.b16 %v4073
        %v4122 = vunpack.c.h.b16 %v4073
        %v4123 = vunpack.c.l.b16 %v4074
        %v4124 = vunpack.c.h.b16 %v4074
        %v4125 = vunpack.c.l.b16 %v4075
        %v4126 = vunpack.c.h.b16 %v4075
        %v4127 = vunpack.c.l.b16 %v4076
        %v4128 = vunpack.c.h.b16 %v4076
        %v4129 = vunpack.c.l.b16 %v4077
        %v4130 = vunpack.c.h.b16 %v4077
        %v4131 = vunpack.c.l.b16 %v4078
        %v4132 = vunpack.c.h.b16 %v4078
        %v4133 = vunpack.c.l.b16 %v4079
        %v4134 = vunpack.c.h.b16 %v4079
        %v4135 = vunpack.c.l.b16 %v4080
        %v4136 = vunpack.c.h.b16 %v4080
        %v4137 = vunpack.c.l.b16 %v4081
        %v4138 = vunpack.c.h.b16 %v4081
        %v4139 = vunpack.c.l.b16 %v4082
        %v4140 = vunpack.c.h.b16 %v4082
        %v4141 = vunpack.c.l.b16 %v4083
        %v4142 = vunpack.c.h.b16 %v4083
        %v4143 = vunpack.c.l.b16 %v4084
        %v4144 = vunpack.c.h.b16 %v4084
        %v4145 = vunpack.c.l.b16 %v4085
        %v4146 = vunpack.c.h.b16 %v4085
        %v4147 = vunpack.c.l.b16 %v4086
        %v4148 = vunpack.c.h.b16 %v4086
        %v4149 = vunpack.c.l.b16 %v4087
        %v4150 = vunpack.c.h.b16 %v4087
        %v4151 = vunpack.c.l.b16 %v4088
        %v4152 = vunpack.c.h.b16 %v4088
        %v4153 = vunpack.c.l.b16 %v4089
        %v4154 = vunpack.c.h.b16 %v4089
        %v4155 = vunpack.c.l.b16 %v4090
        %v4156 = vunpack.c.h.b16 %v4090
        %v4157 = vunpack.c.l.b16 %v4091
        %v4158 = vunpack.c.h.b16 %v4091
        %v4159 = vunpack.c.l.b16 %v4092
        %v4160 = vunpack.c.h.b16 %v4092
        %v4161 = vunpack.c.l.b16 %v4093
        %v4162 = vunpack.c.h.b16 %v4093
        %v4163 = vunpack.c.l.b16 %v4094
        %v4164 = vunpack.c.h.b16 %v4094
        %v4165 = vunpack.c.l.b16 %v4095
        %v4166 = vunpack.c.h.b16 %v4095
        %v4167 = vunpack.c.l.b16 %v4096
        %v4168 = vunpack.c.h.b16 %v4096
        %v4169 = vpack.c.b16 %v4123, %v4121
        %v4170 = vpack.c.b16 %v4124, %v4122
        %v4171 = vpack.c.b16 %v4127, %v4125
        %v4172 = vpack.c.b16 %v4128, %v4126
        %v4173 = vpack.c.b16 %v4131, %v4129
        %v4174 = vpack.c.b16 %v4132, %v4130
        %v4175 = vpack.c.b16 %v4135, %v4133
        %v4176 = vpack.c.b16 %v4136, %v4134
        %v4177 = vpack.c.b16 %v4139, %v4137
        %v4178 = vpack.c.b16 %v4140, %v4138
        %v4179 = vpack.c.b16 %v4143, %v4141
        %v4180 = vpack.c.b16 %v4144, %v4142
        %v4181 = vpack.c.b16 %v4147, %v4145
        %v4182 = vpack.c.b16 %v4148, %v4146
        %v4183 = vpack.c.b16 %v4151, %v4149
        %v4184 = vpack.c.b16 %v4152, %v4150
        %v4185 = vpack.c.b16 %v4155, %v4153
        %v4186 = vpack.c.b16 %v4156, %v4154
        %v4187 = vpack.c.b16 %v4159, %v4157
        %v4188 = vpack.c.b16 %v4160, %v4158
        %v4189 = vpack.c.b16 %v4163, %v4161
        %v4190 = vpack.c.b16 %v4164, %v4162
        %v4191 = vpack.c.b16 %v4167, %v4165
        %v4192 = vpack.c.b16 %v4168, %v4166
        %v4218 = vsel %vm1414, %v4009, 0
        %v4221 = vsel %vm1414, %v4010, 0
        %v4224 = vsel %vm1414, %v4011, 0
        %v4227 = vsel %vm1414, %v4012, 0
        %v4230 = vsel %vm1414, %v4013, 0
        %v4233 = vsel %vm1414, %v4014, 0
        %v4236 = vsel %vm1414, %v4015, 0
        %v4239 = vsel %vm1414, %v4016, 0
        %4241 = vmatprep.subr.bf16.mxu0 %v4170
        %4242 = vmatpush1.bf16.msra.mxu0 %v4169
        %4243 = vmatprep.subr.bf16.mxu0 %v4172
        %4244 = vmatpush1.bf16.msra.mxu0 %v4171
        %4245 = vmatprep.subr.bf16.mxu0 %v4174
        %4246 = vmatpush1.bf16.msra.mxu0 %v4173
        %4247 = vmatprep.subr.bf16.mxu0 %v4176
        %4248 = vmatpush1.bf16.msra.mxu0 %v4175
        %4249 = vmatprep.subr.bf16.mxu0 %v4178
        %4250 = vmatpush1.bf16.msra.mxu0 %v4177
        %4251 = vmatprep.subr.bf16.mxu0 %v4180
        %4252 = vmatpush1.bf16.msra.mxu0 %v4179
        %4253 = vmatprep.subr.bf16.mxu0 %v4182
        %4254 = vmatpush1.bf16.msra.mxu0 %v4181
        %4255 = vmatprep.subr.bf16.mxu0 %v4184
        %4256 = vmatpush1.bf16.msra.mxu0 %v4183
        %4257 = vmatprep.subr.bf16.mxu0 %v4186
        %4258 = vmatpush1.bf16.msra.mxu0 %v4185
        %4259 = vmatprep.subr.bf16.mxu0 %v4188
        %4260 = vmatpush1.bf16.msra.mxu0 %v4187
        %4261 = vmatprep.subr.bf16.mxu0 %v4190
        %4262 = vmatpush1.bf16.msra.mxu0 %v4189
        %4263 = vmatprep.subr.bf16.mxu0 %v4192
        %4264 = vmatpush1.bf16.msra.mxu0 %v4191
        %4265 = vmatprep.subr.bf16.mxu0 0
        %4266 = vmatpush1.bf16.msra.mxu0 0
        %4267 = vmatprep.subr.bf16.mxu0 0
        %4268 = vmatpush1.bf16.msra.mxu0 0
        %4269 = vmatprep.subr.bf16.mxu0 0
        %4270 = vmatpush1.bf16.msra.mxu0 0
        %4271 = vmatprep.subr.bf16.mxu0 0
        %4272 = vmatpush1.bf16.msra.mxu0 0
        %4273 = vmatprep.mubr.bf16.mxu0 %v4218
        %4274 = vmatmul.mubr.bf16.gmra.mrb[0].mxu0 %v4043
        %v4275 = vpop.f32.mrb[0].mxu0
        %v4276 = vadd.f32 0.0, %v4275
        %v4277 = vpop.f32.mrb[0].mxu0
        %v4278 = vadd.f32 0.0, %v4277
        %v4279 = vpop.f32.mrb[0].mxu0
        %v4280 = vadd.f32 0.0, %v4279
        %v4281 = vpop.f32.mrb[0].mxu0
        %v4282 = vadd.f32 0.0, %v4281
        %4283 = vmatprep.mubr.bf16.mxu0 %v4221
        %4284 = vmatmul.mubr.bf16.gmra.mrb[0].mxu0 %v4047
        %v4285 = vpop.f32.mrb[0].mxu0
        %v4286 = vadd.f32 0.0, %v4285
        %v4287 = vpop.f32.mrb[0].mxu0
        %v4288 = vadd.f32 0.0, %v4287
        %v4289 = vpop.f32.mrb[0].mxu0
        %v4290 = vadd.f32 0.0, %v4289
        %v4291 = vpop.f32.mrb[0].mxu0
        %v4292 = vadd.f32 0.0, %v4291
        %4293 = vmatprep.mubr.bf16.mxu0 %v4224
        %4294 = vmatmul.mubr.bf16.gmra.mrb[0].mxu0 %v4051
        %v4295 = vpop.f32.mrb[0].mxu0
        %v4296 = vadd.f32 0.0, %v4295
        %v4297 = vpop.f32.mrb[0].mxu0
        %v4298 = vadd.f32 0.0, %v4297
        %v4299 = vpop.f32.mrb[0].mxu0
        %v4300 = vadd.f32 0.0, %v4299
        %v4301 = vpop.f32.mrb[0].mxu0
        %v4302 = vadd.f32 0.0, %v4301
        %4303 = vmatprep.mubr.bf16.mxu0 %v4227
        %4304 = vmatmul.mubr.bf16.gmra.mrb[0].mxu0 %v4055
        %v4305 = vpop.f32.mrb[0].mxu0
        %v4306 = vadd.f32 0.0, %v4305
        %v4307 = vpop.f32.mrb[0].mxu0
        %v4308 = vadd.f32 0.0, %v4307
        %v4309 = vpop.f32.mrb[0].mxu0
        %v4310 = vadd.f32 0.0, %v4309
        %v4311 = vpop.f32.mrb[0].mxu0
        %v4312 = vadd.f32 0.0, %v4311
        %4313 = vmatprep.mubr.bf16.mxu0 %v4230
        %4314 = vmatmul.mubr.bf16.gmra.mrb[0].mxu0 %v4059
        %v4315 = vpop.f32.mrb[0].mxu0
        %v4316 = vadd.f32 0.0, %v4315
        %v4317 = vpop.f32.mrb[0].mxu0
        %v4318 = vadd.f32 0.0, %v4317
        %v4319 = vpop.f32.mrb[0].mxu0
        %v4320 = vadd.f32 0.0, %v4319
        %v4321 = vpop.f32.mrb[0].mxu0
        %v4322 = vadd.f32 0.0, %v4321
        %4323 = vmatprep.mubr.bf16.mxu0 %v4233
        %4324 = vmatmul.mubr.bf16.gmra.mrb[0].mxu0 %v4063
        %v4325 = vpop.f32.mrb[0].mxu0
        %v4326 = vadd.f32 0.0, %v4325
        %v4327 = vpop.f32.mrb[0].mxu0
        %v4328 = vadd.f32 0.0, %v4327
        %v4329 = vpop.f32.mrb[0].mxu0
        %v4330 = vadd.f32 0.0, %v4329
        %v4331 = vpop.f32.mrb[0].mxu0
        %v4332 = vadd.f32 0.0, %v4331
        %4333 = vmatprep.mubr.bf16.mxu0 %v4236
        %4334 = vmatmul.mubr.bf16.gmra.mrb[0].mxu0 %v4067
        %v4335 = vpop.f32.mrb[0].mxu0
        %v4336 = vadd.f32 0.0, %v4335
        %v4337 = vpop.f32.mrb[0].mxu0
        %v4338 = vadd.f32 0.0, %v4337
        %v4339 = vpop.f32.mrb[0].mxu0
        %v4340 = vadd.f32 0.0, %v4339
        %v4341 = vpop.f32.mrb[0].mxu0
        %v4342 = vadd.f32 0.0, %v4341
        %4343 = vmatprep.mubr.bf16.mxu0 %v4239
        %4344 = vmatmul.mubr.bf16.gmra.mrb[0].mxu0 %v4071
        %v4345 = vpop.f32.mrb[0].mxu0
        %v4346 = vadd.f32 0.0, %v4345
        %v4347 = vpop.f32.mrb[0].mxu0
        %v4348 = vadd.f32 0.0, %v4347
        %v4349 = vpop.f32.mrb[0].mxu0
        %v4350 = vadd.f32 0.0, %v4349
        %v4351 = vpop.f32.mrb[0].mxu0
        %v4352 = vadd.f32 0.0, %v4351
        %4353 = vdwg.mxu0
        %v4354 = vadd.f32 %v1380, %v4276
        %v4355 = vadd.f32 %v1381, %v4278
        %v4356 = vadd.f32 %v1382, %v4280
        %v4357 = vadd.f32 %v1383, %v4282
        %v4358 = vadd.f32 %v1384, %v4286
        %v4359 = vadd.f32 %v1385, %v4288
        %v4360 = vadd.f32 %v1386, %v4290
        %v4361 = vadd.f32 %v1387, %v4292
        %v4362 = vadd.f32 %v1388, %v4296
        %v4363 = vadd.f32 %v1389, %v4298
        %v4364 = vadd.f32 %v1390, %v4300
        %v4365 = vadd.f32 %v1391, %v4302
        %v4366 = vadd.f32 %v1392, %v4306
        %v4367 = vadd.f32 %v1393, %v4308
        %v4368 = vadd.f32 %v1394, %v4310
        %v4369 = vadd.f32 %v1395, %v4312
        %v4370 = vadd.f32 %v1396, %v4316
        %v4371 = vadd.f32 %v1397, %v4318
        %v4372 = vadd.f32 %v1398, %v4320
        %v4373 = vadd.f32 %v1399, %v4322
        %v4374 = vadd.f32 %v1400, %v4326
        %v4375 = vadd.f32 %v1401, %v4328
        %v4376 = vadd.f32 %v1402, %v4330
        %v4377 = vadd.f32 %v1403, %v4332
        %v4378 = vadd.f32 %v1404, %v4336
        %v4379 = vadd.f32 %v1405, %v4338
        %v4380 = vadd.f32 %v1406, %v4340
        %v4381 = vadd.f32 %v1407, %v4342
        %v4382 = vadd.f32 %v1408, %v4346
        %v4383 = vadd.f32 %v1409, %v4348
        %v4384 = vadd.f32 %v1410, %v4350
        %v4385 = vadd.f32 %v1411, %v4352
        %v4386 = vld [vmem:[%s882] sm:$0x3]
        %v4388 = vlaneseq
        %v4389 = vshrl.u32 %v4388, 7
        %v4390 = vsub.s32 0, %v4389
        %v4391 = vrot.slane %v4386, %v4390
        %v4392 = vlaneseq
        %v4393 = vshrl.u32 %v4392, 7
        %v4394 = vsub.s32 1, %v4393
        %v4395 = vrot.slane %v4386, %v4394
        %v4398 = vadd.f32 %v4354, %v4391
        %v4399 = vadd.f32 %v4355, %v4395
        %v4400 = vadd.f32 %v4356, %v4391
        %v4401 = vadd.f32 %v4357, %v4395
        %v4402 = vadd.f32 %v4358, %v4391
        %v4403 = vadd.f32 %v4359, %v4395
        %v4404 = vadd.f32 %v4360, %v4391
        %v4405 = vadd.f32 %v4361, %v4395
        %v4406 = vadd.f32 %v4362, %v4391
        %v4407 = vadd.f32 %v4363, %v4395
        %v4408 = vadd.f32 %v4364, %v4391
        %v4409 = vadd.f32 %v4365, %v4395
        %v4410 = vadd.f32 %v4366, %v4391
        %v4411 = vadd.f32 %v4367, %v4395
        %v4412 = vadd.f32 %v4368, %v4391
        %v4413 = vadd.f32 %v4369, %v4395
        %v4414 = vadd.f32 %v4370, %v4391
        %v4415 = vadd.f32 %v4371, %v4395
        %v4416 = vadd.f32 %v4372, %v4391
        %v4417 = vadd.f32 %v4373, %v4395
        %v4418 = vadd.f32 %v4374, %v4391
        %v4419 = vadd.f32 %v4375, %v4395
        %v4420 = vadd.f32 %v4376, %v4391
        %v4421 = vadd.f32 %v4377, %v4395
        %v4422 = vadd.f32 %v4378, %v4391
        %v4423 = vadd.f32 %v4379, %v4395
        %v4424 = vadd.f32 %v4380, %v4391
        %v4425 = vadd.f32 %v4381, %v4395
        %v4426 = vadd.f32 %v4382, %v4391
        %v4427 = vadd.f32 %v4383, %v4395
        %v4428 = vadd.f32 %v4384, %v4391
        %v4429 = vadd.f32 %v4385, %v4395
        %v4430 = vld [vmem:[%s886] sm:$0x3]
        %v4431 = vld [vmem:[%s890] sm:$0x3]
        %v4432 = vsel %vm1414, %v4399, 0.0
        %v4433 = vadd.f32 %v4398, %v4432
        %4434 = vadd.xlane.f32.xlu0 %v4433
        %v4435 = vpop.xlane.xlu0 %4434
        %v4436 = vsel %vm1414, %v4401, 0.0
        %v4437 = vadd.f32 %v4400, %v4436
        %4438 = vadd.xlane.f32.xlu0 %v4437
        %v4439 = vpop.xlane.xlu0 %4438
        %v4440 = vsel %vm1414, %v4403, 0.0
        %v4441 = vadd.f32 %v4402, %v4440
        %4442 = vadd.xlane.f32.xlu0 %v4441
        %v4443 = vpop.xlane.xlu0 %4442
        %v4444 = vsel %vm1414, %v4405, 0.0
        %v4445 = vadd.f32 %v4404, %v4444
        %4446 = vadd.xlane.f32.xlu0 %v4445
        %v4447 = vpop.xlane.xlu0 %4446
        %v4448 = vsel %vm1414, %v4407, 0.0
        %v4449 = vadd.f32 %v4406, %v4448
        %4450 = vadd.xlane.f32.xlu0 %v4449
        %v4451 = vpop.xlane.xlu0 %4450
        %v4452 = vsel %vm1414, %v4409, 0.0
        %v4453 = vadd.f32 %v4408, %v4452
        %4454 = vadd.xlane.f32.xlu0 %v4453
        %v4455 = vpop.xlane.xlu0 %4454
        %v4456 = vsel %vm1414, %v4411, 0.0
        %v4457 = vadd.f32 %v4410, %v4456
        %4458 = vadd.xlane.f32.xlu0 %v4457
        %v4459 = vpop.xlane.xlu0 %4458
        %v4460 = vsel %vm1414, %v4413, 0.0
        %v4461 = vadd.f32 %v4412, %v4460
        %4462 = vadd.xlane.f32.xlu0 %v4461
        %v4463 = vpop.xlane.xlu0 %4462
        %v4464 = vsel %vm1414, %v4415, 0.0
        %v4465 = vadd.f32 %v4414, %v4464
        %4466 = vadd.xlane.f32.xlu0 %v4465
        %v4467 = vpop.xlane.xlu0 %4466
        %v4468 = vsel %vm1414, %v4417, 0.0
        %v4469 = vadd.f32 %v4416, %v4468
        %4470 = vadd.xlane.f32.xlu0 %v4469
        %v4471 = vpop.xlane.xlu0 %4470
        %v4472 = vsel %vm1414, %v4419, 0.0
        %v4473 = vadd.f32 %v4418, %v4472
        %4474 = vadd.xlane.f32.xlu0 %v4473
        %v4475 = vpop.xlane.xlu0 %4474
        %v4476 = vsel %vm1414, %v4421, 0.0
        %v4477 = vadd.f32 %v4420, %v4476
        %4478 = vadd.xlane.f32.xlu0 %v4477
        %v4479 = vpop.xlane.xlu0 %4478
        %v4480 = vsel %vm1414, %v4423, 0.0
        %v4481 = vadd.f32 %v4422, %v4480
        %4482 = vadd.xlane.f32.xlu0 %v4481
        %v4483 = vpop.xlane.xlu0 %4482
        %v4484 = vsel %vm1414, %v4425, 0.0
        %v4485 = vadd.f32 %v4424, %v4484
        %4486 = vadd.xlane.f32.xlu0 %v4485
        %v4487 = vpop.xlane.xlu0 %4486
        %v4488 = vsel %vm1414, %v4427, 0.0
        %v4489 = vadd.f32 %v4426, %v4488
        %4490 = vadd.xlane.f32.xlu0 %v4489
        %v4491 = vpop.xlane.xlu0 %4490
        %v4492 = vsel %vm1414, %v4429, 0.0
        %v4493 = vadd.f32 %v4428, %v4492
        %4494 = vadd.xlane.f32.xlu0 %v4493
        %v4495 = vpop.xlane.xlu0 %4494
        %v4496 = vmul.f32 %v4435, %v1479
        %v4497 = vmul.f32 %v4439, %v1479
        %v4498 = vmul.f32 %v4443, %v1479
        %v4499 = vmul.f32 %v4447, %v1479
        %v4500 = vmul.f32 %v4451, %v1479
        %v4501 = vmul.f32 %v4455, %v1479
        %v4502 = vmul.f32 %v4459, %v1479
        %v4503 = vmul.f32 %v4463, %v1479
        %v4504 = vmul.f32 %v4467, %v1479
        %v4505 = vmul.f32 %v4471, %v1479
        %v4506 = vmul.f32 %v4475, %v1479
        %v4507 = vmul.f32 %v4479, %v1479
        %v4508 = vmul.f32 %v4483, %v1479
        %v4509 = vmul.f32 %v4487, %v1479
        %v4510 = vmul.f32 %v4491, %v1479
        %v4511 = vmul.f32 %v4495, %v1479
        %v4512 = vsub.f32 %v4398, %v4496
        %v4513 = vsub.f32 %v4399, %v4496
        %v4514 = vsub.f32 %v4400, %v4497
        %v4515 = vsub.f32 %v4401, %v4497
        %v4516 = vsub.f32 %v4402, %v4498
        %v4517 = vsub.f32 %v4403, %v4498
        %v4518 = vsub.f32 %v4404, %v4499
        %v4519 = vsub.f32 %v4405, %v4499
        %v4520 = vsub.f32 %v4406, %v4500
        %v4521 = vsub.f32 %v4407, %v4500
        %v4522 = vsub.f32 %v4408, %v4501
        %v4523 = vsub.f32 %v4409, %v4501
        %v4524 = vsub.f32 %v4410, %v4502
        %v4525 = vsub.f32 %v4411, %v4502
        %v4526 = vsub.f32 %v4412, %v4503
        %v4527 = vsub.f32 %v4413, %v4503
        %v4528 = vsub.f32 %v4414, %v4504
        %v4529 = vsub.f32 %v4415, %v4504
        %v4530 = vsub.f32 %v4416, %v4505
        %v4531 = vsub.f32 %v4417, %v4505
        %v4532 = vsub.f32 %v4418, %v4506
        %v4533 = vsub.f32 %v4419, %v4506
        %v4534 = vsub.f32 %v4420, %v4507
        %v4535 = vsub.f32 %v4421, %v4507
        %v4536 = vsub.f32 %v4422, %v4508
        %v4537 = vsub.f32 %v4423, %v4508
        %v4538 = vsub.f32 %v4424, %v4509
        %v4539 = vsub.f32 %v4425, %v4509
        %v4540 = vsub.f32 %v4426, %v4510
        %v4541 = vsub.f32 %v4427, %v4510
        %v4542 = vsub.f32 %v4428, %v4511
        %v4543 = vsub.f32 %v4429, %v4511
        %v4544 = vmul.f32 %v4512, %v4512
        %v4545 = vmul.f32 %v4513, %v4513
        %v4546 = vmul.f32 %v4514, %v4514
        %v4547 = vmul.f32 %v4515, %v4515
        %v4548 = vmul.f32 %v4516, %v4516
        %v4549 = vmul.f32 %v4517, %v4517
        %v4550 = vmul.f32 %v4518, %v4518
        %v4551 = vmul.f32 %v4519, %v4519
        %v4552 = vmul.f32 %v4520, %v4520
        %v4553 = vmul.f32 %v4521, %v4521
        %v4554 = vmul.f32 %v4522, %v4522
        %v4555 = vmul.f32 %v4523, %v4523
        %v4556 = vmul.f32 %v4524, %v4524
        %v4557 = vmul.f32 %v4525, %v4525
        %v4558 = vmul.f32 %v4526, %v4526
        %v4559 = vmul.f32 %v4527, %v4527
        %v4560 = vmul.f32 %v4528, %v4528
        %v4561 = vmul.f32 %v4529, %v4529
        %v4562 = vmul.f32 %v4530, %v4530
        %v4563 = vmul.f32 %v4531, %v4531
        %v4564 = vmul.f32 %v4532, %v4532
        %v4565 = vmul.f32 %v4533, %v4533
        %v4566 = vmul.f32 %v4534, %v4534
        %v4567 = vmul.f32 %v4535, %v4535
        %v4568 = vmul.f32 %v4536, %v4536
        %v4569 = vmul.f32 %v4537, %v4537
        %v4570 = vmul.f32 %v4538, %v4538
        %v4571 = vmul.f32 %v4539, %v4539
        %v4572 = vmul.f32 %v4540, %v4540
        %v4573 = vmul.f32 %v4541, %v4541
        %v4574 = vmul.f32 %v4542, %v4542
        %v4575 = vmul.f32 %v4543, %v4543
        %v4576 = vsel %vm1414, %v4545, 0.0
        %v4577 = vadd.f32 %v4544, %v4576
        %4578 = vadd.xlane.f32.xlu0 %v4577
        %v4579 = vpop.xlane.xlu0 %4578
        %v4580 = vsel %vm1414, %v4547, 0.0
        %v4581 = vadd.f32 %v4546, %v4580
        %4582 = vadd.xlane.f32.xlu0 %v4581
        %v4583 = vpop.xlane.xlu0 %4582
        %v4584 = vsel %vm1414, %v4549, 0.0
        %v4585 = vadd.f32 %v4548, %v4584
        %4586 = vadd.xlane.f32.xlu0 %v4585
        %v4587 = vpop.xlane.xlu0 %4586
        %v4588 = vsel %vm1414, %v4551, 0.0
        %v4589 = vadd.f32 %v4550, %v4588
        %4590 = vadd.xlane.f32.xlu0 %v4589
        %v4591 = vpop.xlane.xlu0 %4590
        %v4592 = vsel %vm1414, %v4553, 0.0
        %v4593 = vadd.f32 %v4552, %v4592
        %4594 = vadd.xlane.f32.xlu0 %v4593
        %v4595 = vpop.xlane.xlu0 %4594
        %v4596 = vsel %vm1414, %v4555, 0.0
        %v4597 = vadd.f32 %v4554, %v4596
        %4598 = vadd.xlane.f32.xlu0 %v4597
        %v4599 = vpop.xlane.xlu0 %4598
        %v4600 = vsel %vm1414, %v4557, 0.0
        %v4601 = vadd.f32 %v4556, %v4600
        %4602 = vadd.xlane.f32.xlu0 %v4601
        %v4603 = vpop.xlane.xlu0 %4602
        %v4604 = vsel %vm1414, %v4559, 0.0
        %v4605 = vadd.f32 %v4558, %v4604
        %4606 = vadd.xlane.f32.xlu0 %v4605
        %v4607 = vpop.xlane.xlu0 %4606
        %v4608 = vsel %vm1414, %v4561, 0.0
        %v4609 = vadd.f32 %v4560, %v4608
        %4610 = vadd.xlane.f32.xlu0 %v4609
        %v4611 = vpop.xlane.xlu0 %4610
        %v4612 = vsel %vm1414, %v4563, 0.0
        %v4613 = vadd.f32 %v4562, %v4612
        %4614 = vadd.xlane.f32.xlu0 %v4613
        %v4615 = vpop.xlane.xlu0 %4614
        %v4616 = vsel %vm1414, %v4565, 0.0
        %v4617 = vadd.f32 %v4564, %v4616
        %4618 = vadd.xlane.f32.xlu0 %v4617
        %v4619 = vpop.xlane.xlu0 %4618
        %v4620 = vsel %vm1414, %v4567, 0.0
        %v4621 = vadd.f32 %v4566, %v4620
        %4622 = vadd.xlane.f32.xlu0 %v4621
        %v4623 = vpop.xlane.xlu0 %4622
        %v4624 = vsel %vm1414, %v4569, 0.0
        %v4625 = vadd.f32 %v4568, %v4624
        %4626 = vadd.xlane.f32.xlu0 %v4625
        %v4627 = vpop.xlane.xlu0 %4626
        %v4628 = vsel %vm1414, %v4571, 0.0
        %v4629 = vadd.f32 %v4570, %v4628
        %4630 = vadd.xlane.f32.xlu0 %v4629
        %v4631 = vpop.xlane.xlu0 %4630
        %v4632 = vsel %vm1414, %v4573, 0.0
        %v4633 = vadd.f32 %v4572, %v4632
        %4634 = vadd.xlane.f32.xlu0 %v4633
        %v4635 = vpop.xlane.xlu0 %4634
        %v4636 = vsel %vm1414, %v4575, 0.0
        %v4637 = vadd.f32 %v4574, %v4636
        %4638 = vadd.xlane.f32.xlu0 %v4637
        %v4639 = vpop.xlane.xlu0 %4638
        %v4640 = vmul.f32 %v4579, %v1479
        %v4641 = vmul.f32 %v4583, %v1479
        %v4642 = vmul.f32 %v4587, %v1479
        %v4643 = vmul.f32 %v4591, %v1479
        %v4644 = vmul.f32 %v4595, %v1479
        %v4645 = vmul.f32 %v4599, %v1479
        %v4646 = vmul.f32 %v4603, %v1479
        %v4647 = vmul.f32 %v4607, %v1479
        %v4648 = vmul.f32 %v4611, %v1479
        %v4649 = vmul.f32 %v4615, %v1479
        %v4650 = vmul.f32 %v4619, %v1479
        %v4651 = vmul.f32 %v4623, %v1479
        %v4652 = vmul.f32 %v4627, %v1479
        %v4653 = vmul.f32 %v4631, %v1479
        %v4654 = vmul.f32 %v4635, %v1479
        %v4655 = vmul.f32 %v4639, %v1479
        %v4656 = vadd.f32 %v4640, 1e-06
        %v4657 = vadd.f32 %v4641, 1e-06
        %v4658 = vadd.f32 %v4642, 1e-06
        %v4659 = vadd.f32 %v4643, 1e-06
        %v4660 = vadd.f32 %v4644, 1e-06
        %v4661 = vadd.f32 %v4645, 1e-06
        %v4662 = vadd.f32 %v4646, 1e-06
        %v4663 = vadd.f32 %v4647, 1e-06
        %v4664 = vadd.f32 %v4648, 1e-06
        %v4665 = vadd.f32 %v4649, 1e-06
        %v4666 = vadd.f32 %v4650, 1e-06
        %v4667 = vadd.f32 %v4651, 1e-06
        %v4668 = vadd.f32 %v4652, 1e-06
        %v4669 = vadd.f32 %v4653, 1e-06
        %v4670 = vadd.f32 %v4654, 1e-06
        %v4671 = vadd.f32 %v4655, 1e-06
        %v4672 = vrsqrt.pop %v4656
        %v4673 = vrsqrt.pop %v4657
        %v4674 = vrsqrt.pop %v4658
        %v4675 = vrsqrt.pop %v4659
        %v4676 = vrsqrt.pop %v4660
        %v4677 = vrsqrt.pop %v4661
        %v4678 = vrsqrt.pop %v4662
        %v4679 = vrsqrt.pop %v4663
        %v4680 = vrsqrt.pop %v4664
        %v4681 = vrsqrt.pop %v4665
        %v4682 = vrsqrt.pop %v4666
        %v4683 = vrsqrt.pop %v4667
        %v4684 = vrsqrt.pop %v4668
        %v4685 = vrsqrt.pop %v4669
        %v4686 = vrsqrt.pop %v4670
        %v4687 = vrsqrt.pop %v4671
        %v4688 = vmul.f32 %v4512, %v4672
        %v4689 = vmul.f32 %v4513, %v4672
        %v4690 = vmul.f32 %v4514, %v4673
        %v4691 = vmul.f32 %v4515, %v4673
        %v4692 = vmul.f32 %v4516, %v4674
        %v4693 = vmul.f32 %v4517, %v4674
        %v4694 = vmul.f32 %v4518, %v4675
        %v4695 = vmul.f32 %v4519, %v4675
        %v4696 = vmul.f32 %v4520, %v4676
        %v4697 = vmul.f32 %v4521, %v4676
        %v4698 = vmul.f32 %v4522, %v4677
        %v4699 = vmul.f32 %v4523, %v4677
        %v4700 = vmul.f32 %v4524, %v4678
        %v4701 = vmul.f32 %v4525, %v4678
        %v4702 = vmul.f32 %v4526, %v4679
        %v4703 = vmul.f32 %v4527, %v4679
        %v4704 = vmul.f32 %v4528, %v4680
        %v4705 = vmul.f32 %v4529, %v4680
        %v4706 = vmul.f32 %v4530, %v4681
        %v4707 = vmul.f32 %v4531, %v4681
        %v4708 = vmul.f32 %v4532, %v4682
        %v4709 = vmul.f32 %v4533, %v4682
        %v4710 = vmul.f32 %v4534, %v4683
        %v4711 = vmul.f32 %v4535, %v4683
        %v4712 = vmul.f32 %v4536, %v4684
        %v4713 = vmul.f32 %v4537, %v4684
        %v4714 = vmul.f32 %v4538, %v4685
        %v4715 = vmul.f32 %v4539, %v4685
        %v4716 = vmul.f32 %v4540, %v4686
        %v4717 = vmul.f32 %v4541, %v4686
        %v4718 = vmul.f32 %v4542, %v4687
        %v4719 = vmul.f32 %v4543, %v4687
        %v4721 = vlaneseq
        %v4722 = vshrl.u32 %v4721, 7
        %v4723 = vsub.s32 0, %v4722
        %v4724 = vrot.slane %v4430, %v4723
        %v4725 = vlaneseq
        %v4726 = vshrl.u32 %v4725, 7
        %v4727 = vsub.s32 1, %v4726
        %v4728 = vrot.slane %v4430, %v4727
        %v4731 = vmul.f32 %v4688, %v4724
        %v4732 = vmul.f32 %v4689, %v4728
        %v4733 = vmul.f32 %v4690, %v4724
        %v4734 = vmul.f32 %v4691, %v4728
        %v4735 = vmul.f32 %v4692, %v4724
        %v4736 = vmul.f32 %v4693, %v4728
        %v4737 = vmul.f32 %v4694, %v4724
        %v4738 = vmul.f32 %v4695, %v4728
        %v4739 = vmul.f32 %v4696, %v4724
        %v4740 = vmul.f32 %v4697, %v4728
        %v4741 = vmul.f32 %v4698, %v4724
        %v4742 = vmul.f32 %v4699, %v4728
        %v4743 = vmul.f32 %v4700, %v4724
        %v4744 = vmul.f32 %v4701, %v4728
        %v4745 = vmul.f32 %v4702, %v4724
        %v4746 = vmul.f32 %v4703, %v4728
        %v4747 = vmul.f32 %v4704, %v4724
        %v4748 = vmul.f32 %v4705, %v4728
        %v4749 = vmul.f32 %v4706, %v4724
        %v4750 = vmul.f32 %v4707, %v4728
        %v4751 = vmul.f32 %v4708, %v4724
        %v4752 = vmul.f32 %v4709, %v4728
        %v4753 = vmul.f32 %v4710, %v4724
        %v4754 = vmul.f32 %v4711, %v4728
        %v4755 = vmul.f32 %v4712, %v4724
        %v4756 = vmul.f32 %v4713, %v4728
        %v4757 = vmul.f32 %v4714, %v4724
        %v4758 = vmul.f32 %v4715, %v4728
        %v4759 = vmul.f32 %v4716, %v4724
        %v4760 = vmul.f32 %v4717, %v4728
        %v4761 = vmul.f32 %v4718, %v4724
        %v4762 = vmul.f32 %v4719, %v4728
        %v4764 = vlaneseq
        %v4765 = vshrl.u32 %v4764, 7
        %v4766 = vsub.s32 0, %v4765
        %v4767 = vrot.slane %v4431, %v4766
        %v4768 = vlaneseq
        %v4769 = vshrl.u32 %v4768, 7
        %v4770 = vsub.s32 1, %v4769
        %v4771 = vrot.slane %v4431, %v4770
        %v4774 = vadd.f32 %v4731, %v4767
        %v4775 = vadd.f32 %v4732, %v4771
        %v4776 = vadd.f32 %v4733, %v4767
        %v4777 = vadd.f32 %v4734, %v4771
        %v4778 = vadd.f32 %v4735, %v4767
        %v4779 = vadd.f32 %v4736, %v4771
        %v4780 = vadd.f32 %v4737, %v4767
        %v4781 = vadd.f32 %v4738, %v4771
        %v4782 = vadd.f32 %v4739, %v4767
        %v4783 = vadd.f32 %v4740, %v4771
        %v4784 = vadd.f32 %v4741, %v4767
        %v4785 = vadd.f32 %v4742, %v4771
        %v4786 = vadd.f32 %v4743, %v4767
        %v4787 = vadd.f32 %v4744, %v4771
        %v4788 = vadd.f32 %v4745, %v4767
        %v4789 = vadd.f32 %v4746, %v4771
        %v4790 = vadd.f32 %v4747, %v4767
        %v4791 = vadd.f32 %v4748, %v4771
        %v4792 = vadd.f32 %v4749, %v4767
        %v4793 = vadd.f32 %v4750, %v4771
        %v4794 = vadd.f32 %v4751, %v4767
        %v4795 = vadd.f32 %v4752, %v4771
        %v4796 = vadd.f32 %v4753, %v4767
        %v4797 = vadd.f32 %v4754, %v4771
        %v4798 = vadd.f32 %v4755, %v4767
        %v4799 = vadd.f32 %v4756, %v4771
        %v4800 = vadd.f32 %v4757, %v4767
        %v4801 = vadd.f32 %v4758, %v4771
        %v4802 = vadd.f32 %v4759, %v4767
        %v4803 = vadd.f32 %v4760, %v4771
        %v4804 = vadd.f32 %v4761, %v4767
        %v4805 = vadd.f32 %v4762, %v4771
        %v4806 = vpack.c.bf16 %v4776, %v4774
        %v4807 = vpack.c.bf16 %v4777, %v4775
        %v4808 = vpack.c.bf16 %v4780, %v4778
        %v4809 = vpack.c.bf16 %v4781, %v4779
        %v4810 = vpack.c.bf16 %v4784, %v4782
        %v4811 = vpack.c.bf16 %v4785, %v4783
        %v4812 = vpack.c.bf16 %v4788, %v4786
        %v4813 = vpack.c.bf16 %v4789, %v4787
        %v4814 = vpack.c.bf16 %v4792, %v4790
        %v4815 = vpack.c.bf16 %v4793, %v4791
        %v4816 = vpack.c.bf16 %v4796, %v4794
        %v4817 = vpack.c.bf16 %v4797, %v4795
        %v4818 = vpack.c.bf16 %v4800, %v4798
        %v4819 = vpack.c.bf16 %v4801, %v4799
        %v4820 = vpack.c.bf16 %v4804, %v4802
        %v4821 = vpack.c.bf16 %v4805, %v4803
        %v4822 = vld [vmem:[%s895] sm:$0xff]
        %v4823 = vld [vmem:[%s895 + $0x8] sm:$0xff]
        %v4824 = vld [vmem:[%s895 + $0x10] sm:$0xff]
        %v4825 = vld [vmem:[%s895 + $0x18] sm:$0xff]
        %v4826 = vld [vmem:[%s895 + $0x20] sm:$0xff]
        %v4827 = vld [vmem:[%s895 + $0x28] sm:$0xff]
        %v4828 = vld [vmem:[%s895 + $0x30] sm:$0xff]
        %v4829 = vld [vmem:[%s895 + $0x38] sm:$0xff]
        %v4830 = vld [vmem:[%s895 + $0x40] sm:$0xff]
        %v4831 = vld [vmem:[%s895 + $0x48] sm:$0xff]
        %v4832 = vld [vmem:[%s895 + $0x50] sm:$0xff]
        %v4833 = vld [vmem:[%s895 + $0x58] sm:$0xff]
        %v4834 = vld [vmem:[%s895 + $0x60] sm:$0xff]
        %v4835 = vld [vmem:[%s895 + $0x68] sm:$0xff]
        %v4836 = vld [vmem:[%s895 + $0x70] sm:$0xff]
        %v4837 = vld [vmem:[%s895 + $0x78] sm:$0xff]
        %v4838 = vld [vmem:[%s895 + $0x80] sm:$0xff]
        %v4839 = vld [vmem:[%s895 + $0x88] sm:$0xff]
        %v4840 = vld [vmem:[%s895 + $0x90] sm:$0xff]
        %v4841 = vld [vmem:[%s895 + $0x98] sm:$0xff]
        %v4842 = vld [vmem:[%s895 + $0xa0] sm:$0xff]
        %v4843 = vld [vmem:[%s895 + $0xa8] sm:$0xff]
        %v4844 = vld [vmem:[%s895 + $0xb0] sm:$0xff]
        %v4845 = vld [vmem:[%s895 + $0xb8] sm:$0xff]
        %v4846 = vld [vmem:[%s895 + $0xc0] sm:$0xff]
        %v4847 = vld [vmem:[%s895 + $0xc8] sm:$0xff]
        %v4848 = vld [vmem:[%s895 + $0xd0] sm:$0xff]
        %v4849 = vld [vmem:[%s895 + $0xd8] sm:$0xff]
        %v4850 = vld [vmem:[%s895 + $0xe0] sm:$0xff]
        %v4851 = vld [vmem:[%s895 + $0xe8] sm:$0xff]
        %v4852 = vld [vmem:[%s895 + $0xf0] sm:$0xff]
        %v4853 = vld [vmem:[%s895 + $0xf8] sm:$0xff]
        %v4854 = vld [vmem:[%s895 + $0x100] sm:$0xff]
        %v4855 = vld [vmem:[%s895 + $0x108] sm:$0xff]
        %v4856 = vld [vmem:[%s895 + $0x110] sm:$0xff]
        %v4857 = vld [vmem:[%s895 + $0x118] sm:$0xff]
        %v4858 = vld [vmem:[%s895 + $0x120] sm:$0xff]
        %v4859 = vld [vmem:[%s895 + $0x128] sm:$0xff]
        %v4860 = vld [vmem:[%s895 + $0x130] sm:$0xff]
        %v4861 = vld [vmem:[%s895 + $0x138] sm:$0xff]
        %v4862 = vld [vmem:[%s895 + $0x140] sm:$0xff]
        %v4863 = vld [vmem:[%s895 + $0x148] sm:$0xff]
        %v4864 = vld [vmem:[%s895 + $0x150] sm:$0xff]
        %v4865 = vld [vmem:[%s895 + $0x158] sm:$0xff]
        %v4866 = vld [vmem:[%s895 + $0x160] sm:$0xff]
        %v4867 = vld [vmem:[%s895 + $0x168] sm:$0xff]
        %v4868 = vld [vmem:[%s895 + $0x170] sm:$0xff]
        %v4869 = vld [vmem:[%s895 + $0x178] sm:$0xff]
        %v4870 = vld [vmem:[%s895 + $0x180] sm:$0xff]
        %v4871 = vld [vmem:[%s895 + $0x188] sm:$0xff]
        %v4872 = vld [vmem:[%s895 + $0x190] sm:$0xff]
        %v4873 = vld [vmem:[%s895 + $0x198] sm:$0xff]
        %v4874 = vld [vmem:[%s895 + $0x1a0] sm:$0xff]
        %v4875 = vld [vmem:[%s895 + $0x1a8] sm:$0xff]
        %v4876 = vld [vmem:[%s895 + $0x1b0] sm:$0xff]
        %v4877 = vld [vmem:[%s895 + $0x1b8] sm:$0xff]
        %v4878 = vld [vmem:[%s895 + $0x1c0] sm:$0xff]
        %v4879 = vld [vmem:[%s895 + $0x1c8] sm:$0xff]
        %v4880 = vld [vmem:[%s895 + $0x1d0] sm:$0xff]
        %v4881 = vld [vmem:[%s895 + $0x1d8] sm:$0xff]
        %v4882 = vld [vmem:[%s895 + $0x1e0] sm:$0xff]
        %v4883 = vld [vmem:[%s895 + $0x1e8] sm:$0xff]
        %v4884 = vld [vmem:[%s895 + $0x1f0] sm:$0xff]
        %v4885 = vld [vmem:[%s895 + $0x1f8] sm:$0xff]
        %v4886 = vld [vmem:[%s895 + $0x200] sm:$0xff]
        %v4887 = vld [vmem:[%s895 + $0x208] sm:$0xff]
        %v4888 = vld [vmem:[%s895 + $0x210] sm:$0xff]
        %v4889 = vld [vmem:[%s895 + $0x218] sm:$0xff]
        %v4890 = vld [vmem:[%s895 + $0x220] sm:$0xff]
        %v4891 = vld [vmem:[%s895 + $0x228] sm:$0xff]
        %v4892 = vld [vmem:[%s895 + $0x230] sm:$0xff]
        %v4893 = vld [vmem:[%s895 + $0x238] sm:$0xff]
        %v4894 = vld [vmem:[%s899] sm:$0x3f]
        %v4896 = vlaneseq
        %v4897 = vshrl.u32 %v4896, 7
        %v4898 = vsub.s32 0, %v4897
        %v4899 = vrot.slane %v4894, %v4898
        %v4900 = vlaneseq
        %v4901 = vshrl.u32 %v4900, 7
        %v4902 = vsub.s32 1, %v4901
        %v4903 = vrot.slane %v4894, %v4902
        %v4904 = vlaneseq
        %v4905 = vshrl.u32 %v4904, 7
        %v4906 = vsub.s32 2, %v4905
        %v4907 = vrot.slane %v4894, %v4906
        %v4908 = vlaneseq
        %v4909 = vshrl.u32 %v4908, 7
        %v4910 = vsub.s32 3, %v4909
        %v4911 = vrot.slane %v4894, %v4910
        %v4912 = vlaneseq
        %v4913 = vshrl.u32 %v4912, 7
        %v4914 = vsub.s32 4, %v4913
        %v4915 = vrot.slane %v4894, %v4914
        %v4916 = vlaneseq
        %v4917 = vshrl.u32 %v4916, 7
        %v4918 = vsub.s32 5, %v4917
        %v4919 = vrot.slane %v4894, %v4918
        %v4998 = vunpack.c.l.b16 %v4822
        %v4999 = vunpack.c.h.b16 %v4822
        %v5000 = vunpack.c.l.b16 %v4823
        %v5001 = vunpack.c.h.b16 %v4823
        %v5002 = vunpack.c.l.b16 %v4824
        %v5003 = vunpack.c.h.b16 %v4824
        %v5004 = vunpack.c.l.b16 %v4825
        %v5005 = vunpack.c.h.b16 %v4825
        %v5006 = vunpack.c.l.b16 %v4826
        %v5007 = vunpack.c.h.b16 %v4826
        %v5008 = vunpack.c.l.b16 %v4827
        %v5009 = vunpack.c.h.b16 %v4827
        %v5010 = vunpack.c.l.b16 %v4828
        %v5011 = vunpack.c.h.b16 %v4828
        %v5012 = vunpack.c.l.b16 %v4829
        %v5013 = vunpack.c.h.b16 %v4829
        %v5014 = vunpack.c.l.b16 %v4830
        %v5015 = vunpack.c.h.b16 %v4830
        %v5016 = vunpack.c.l.b16 %v4831
        %v5017 = vunpack.c.h.b16 %v4831
        %v5018 = vunpack.c.l.b16 %v4832
        %v5019 = vunpack.c.h.b16 %v4832
        %v5020 = vunpack.c.l.b16 %v4833
        %v5021 = vunpack.c.h.b16 %v4833
        %v5022 = vunpack.c.l.b16 %v4834
        %v5023 = vunpack.c.h.b16 %v4834
        %v5024 = vunpack.c.l.b16 %v4835
        %v5025 = vunpack.c.h.b16 %v4835
        %v5026 = vunpack.c.l.b16 %v4836
        %v5027 = vunpack.c.h.b16 %v4836
        %v5028 = vunpack.c.l.b16 %v4837
        %v5029 = vunpack.c.h.b16 %v4837
        %v5030 = vunpack.c.l.b16 %v4838
        %v5031 = vunpack.c.h.b16 %v4838
        %v5032 = vunpack.c.l.b16 %v4839
        %v5033 = vunpack.c.h.b16 %v4839
        %v5034 = vunpack.c.l.b16 %v4840
        %v5035 = vunpack.c.h.b16 %v4840
        %v5036 = vunpack.c.l.b16 %v4841
        %v5037 = vunpack.c.h.b16 %v4841
        %v5038 = vunpack.c.l.b16 %v4842
        %v5039 = vunpack.c.h.b16 %v4842
        %v5040 = vunpack.c.l.b16 %v4843
        %v5041 = vunpack.c.h.b16 %v4843
        %v5042 = vunpack.c.l.b16 %v4844
        %v5043 = vunpack.c.h.b16 %v4844
        %v5044 = vunpack.c.l.b16 %v4845
        %v5045 = vunpack.c.h.b16 %v4845
        %v5046 = vunpack.c.l.b16 %v4846
        %v5047 = vunpack.c.h.b16 %v4846
        %v5048 = vunpack.c.l.b16 %v4847
        %v5049 = vunpack.c.h.b16 %v4847
        %v5050 = vunpack.c.l.b16 %v4848
        %v5051 = vunpack.c.h.b16 %v4848
        %v5052 = vunpack.c.l.b16 %v4849
        %v5053 = vunpack.c.h.b16 %v4849
        %v5054 = vunpack.c.l.b16 %v4850
        %v5055 = vunpack.c.h.b16 %v4850
        %v5056 = vunpack.c.l.b16 %v4851
        %v5057 = vunpack.c.h.b16 %v4851
        %v5058 = vunpack.c.l.b16 %v4852
        %v5059 = vunpack.c.h.b16 %v4852
        %v5060 = vunpack.c.l.b16 %v4853
        %v5061 = vunpack.c.h.b16 %v4853
        %v5062 = vunpack.c.l.b16 %v4854
        %v5063 = vunpack.c.h.b16 %v4854
        %v5064 = vunpack.c.l.b16 %v4855
        %v5065 = vunpack.c.h.b16 %v4855
        %v5066 = vunpack.c.l.b16 %v4856
        %v5067 = vunpack.c.h.b16 %v4856
        %v5068 = vunpack.c.l.b16 %v4857
        %v5069 = vunpack.c.h.b16 %v4857
        %v5070 = vunpack.c.l.b16 %v4858
        %v5071 = vunpack.c.h.b16 %v4858
        %v5072 = vunpack.c.l.b16 %v4859
        %v5073 = vunpack.c.h.b16 %v4859
        %v5074 = vunpack.c.l.b16 %v4860
        %v5075 = vunpack.c.h.b16 %v4860
        %v5076 = vunpack.c.l.b16 %v4861
        %v5077 = vunpack.c.h.b16 %v4861
        %v5078 = vunpack.c.l.b16 %v4862
        %v5079 = vunpack.c.h.b16 %v4862
        %v5080 = vunpack.c.l.b16 %v4863
        %v5081 = vunpack.c.h.b16 %v4863
        %v5082 = vunpack.c.l.b16 %v4864
        %v5083 = vunpack.c.h.b16 %v4864
        %v5084 = vunpack.c.l.b16 %v4865
        %v5085 = vunpack.c.h.b16 %v4865
        %v5086 = vunpack.c.l.b16 %v4866
        %v5087 = vunpack.c.h.b16 %v4866
        %v5088 = vunpack.c.l.b16 %v4867
        %v5089 = vunpack.c.h.b16 %v4867
        %v5090 = vunpack.c.l.b16 %v4868
        %v5091 = vunpack.c.h.b16 %v4868
        %v5092 = vunpack.c.l.b16 %v4869
        %v5093 = vunpack.c.h.b16 %v4869
        %v5094 = vunpack.c.l.b16 %v4870
        %v5095 = vunpack.c.h.b16 %v4870
        %v5096 = vunpack.c.l.b16 %v4871
        %v5097 = vunpack.c.h.b16 %v4871
        %v5098 = vunpack.c.l.b16 %v4872
        %v5099 = vunpack.c.h.b16 %v4872
        %v5100 = vunpack.c.l.b16 %v4873
        %v5101 = vunpack.c.h.b16 %v4873
        %v5102 = vunpack.c.l.b16 %v4874
        %v5103 = vunpack.c.h.b16 %v4874
        %v5104 = vunpack.c.l.b16 %v4875
        %v5105 = vunpack.c.h.b16 %v4875
        %v5106 = vunpack.c.l.b16 %v4876
        %v5107 = vunpack.c.h.b16 %v4876
        %v5108 = vunpack.c.l.b16 %v4877
        %v5109 = vunpack.c.h.b16 %v4877
        %v5110 = vunpack.c.l.b16 %v4878
        %v5111 = vunpack.c.h.b16 %v4878
        %v5112 = vunpack.c.l.b16 %v4879
        %v5113 = vunpack.c.h.b16 %v4879
        %v5114 = vunpack.c.l.b16 %v4880
        %v5115 = vunpack.c.h.b16 %v4880
        %v5116 = vunpack.c.l.b16 %v4881
        %v5117 = vunpack.c.h.b16 %v4881
        %v5118 = vunpack.c.l.b16 %v4882
        %v5119 = vunpack.c.h.b16 %v4882
        %v5120 = vunpack.c.l.b16 %v4883
        %v5121 = vunpack.c.h.b16 %v4883
        %v5122 = vunpack.c.l.b16 %v4884
        %v5123 = vunpack.c.h.b16 %v4884
        %v5124 = vunpack.c.l.b16 %v4885
        %v5125 = vunpack.c.h.b16 %v4885
        %v5126 = vunpack.c.l.b16 %v4886
        %v5127 = vunpack.c.h.b16 %v4886
        %v5128 = vunpack.c.l.b16 %v4887
        %v5129 = vunpack.c.h.b16 %v4887
        %v5130 = vunpack.c.l.b16 %v4888
        %v5131 = vunpack.c.h.b16 %v4888
        %v5132 = vunpack.c.l.b16 %v4889
        %v5133 = vunpack.c.h.b16 %v4889
        %v5134 = vunpack.c.l.b16 %v4890
        %v5135 = vunpack.c.h.b16 %v4890
        %v5136 = vunpack.c.l.b16 %v4891
        %v5137 = vunpack.c.h.b16 %v4891
        %v5138 = vunpack.c.l.b16 %v4892
        %v5139 = vunpack.c.h.b16 %v4892
        %v5140 = vunpack.c.l.b16 %v4893
        %v5141 = vunpack.c.h.b16 %v4893
        %v5142 = vpack.c.b16 %v5004, %v4998
        %v5143 = vpack.c.b16 %v5005, %v4999
        %v5144 = vpack.c.b16 %v5006, %v5000
        %v5145 = vpack.c.b16 %v5007, %v5001
        %v5146 = vpack.c.b16 %v5008, %v5002
        %v5147 = vpack.c.b16 %v5009, %v5003
        %v5148 = vpack.c.b16 %v5016, %v5010
        %v5149 = vpack.c.b16 %v5017, %v5011
        %v5150 = vpack.c.b16 %v5018, %v5012
        %v5151 = vpack.c.b16 %v5019, %v5013
        %v5152 = vpack.c.b16 %v5020, %v5014
        %v5153 = vpack.c.b16 %v5021, %v5015
        %v5154 = vpack.c.b16 %v5028, %v5022
        %v5155 = vpack.c.b16 %v5029, %v5023
        %v5156 = vpack.c.b16 %v5030, %v5024
        %v5157 = vpack.c.b16 %v5031, %v5025
        %v5158 = vpack.c.b16 %v5032, %v5026
        %v5159 = vpack.c.b16 %v5033, %v5027
        %v5160 = vpack.c.b16 %v5040, %v5034
        %v5161 = vpack.c.b16 %v5041, %v5035
        %v5162 = vpack.c.b16 %v5042, %v5036
        %v5163 = vpack.c.b16 %v5043, %v5037
        %v5164 = vpack.c.b16 %v5044, %v5038
        %v5165 = vpack.c.b16 %v5045, %v5039
        %v5166 = vpack.c.b16 %v5052, %v5046
        %v5167 = vpack.c.b16 %v5053, %v5047
        %v5168 = vpack.c.b16 %v5054, %v5048
        %v5169 = vpack.c.b16 %v5055, %v5049
        %v5170 = vpack.c.b16 %v5056, %v5050
        %v5171 = vpack.c.b16 %v5057, %v5051
        %v5172 = vpack.c.b16 %v5064, %v5058
        %v5173 = vpack.c.b16 %v5065, %v5059
        %v5174 = vpack.c.b16 %v5066, %v5060
        %v5175 = vpack.c.b16 %v5067, %v5061
        %v5176 = vpack.c.b16 %v5068, %v5062
        %v5177 = vpack.c.b16 %v5069, %v5063
        %v5178 = vpack.c.b16 %v5076, %v5070
        %v5179 = vpack.c.b16 %v5077, %v5071
        %v5180 = vpack.c.b16 %v5078, %v5072
        %v5181 = vpack.c.b16 %v5079, %v5073
        %v5182 = vpack.c.b16 %v5080, %v5074
        %v5183 = vpack.c.b16 %v5081, %v5075
        %v5184 = vpack.c.b16 %v5088, %v5082
        %v5185 = vpack.c.b16 %v5089, %v5083
        %v5186 = vpack.c.b16 %v5090, %v5084
        %v5187 = vpack.c.b16 %v5091, %v5085
        %v5188 = vpack.c.b16 %v5092, %v5086
        %v5189 = vpack.c.b16 %v5093, %v5087
        %v5190 = vpack.c.b16 %v5100, %v5094
        %v5191 = vpack.c.b16 %v5101, %v5095
        %v5192 = vpack.c.b16 %v5102, %v5096
        %v5193 = vpack.c.b16 %v5103, %v5097
        %v5194 = vpack.c.b16 %v5104, %v5098
        %v5195 = vpack.c.b16 %v5105, %v5099
        %v5196 = vpack.c.b16 %v5112, %v5106
        %v5197 = vpack.c.b16 %v5113, %v5107
        %v5198 = vpack.c.b16 %v5114, %v5108
        %v5199 = vpack.c.b16 %v5115, %v5109
        %v5200 = vpack.c.b16 %v5116, %v5110
        %v5201 = vpack.c.b16 %v5117, %v5111
        %v5202 = vpack.c.b16 %v5124, %v5118
        %v5203 = vpack.c.b16 %v5125, %v5119
        %v5204 = vpack.c.b16 %v5126, %v5120
        %v5205 = vpack.c.b16 %v5127, %v5121
        %v5206 = vpack.c.b16 %v5128, %v5122
        %v5207 = vpack.c.b16 %v5129, %v5123
        %v5208 = vpack.c.b16 %v5136, %v5130
        %v5209 = vpack.c.b16 %v5137, %v5131
        %v5210 = vpack.c.b16 %v5138, %v5132
        %v5211 = vpack.c.b16 %v5139, %v5133
        %v5212 = vpack.c.b16 %v5140, %v5134
        %v5213 = vpack.c.b16 %v5141, %v5135
        %v5287 = vsel %vm1414, %v4807, 0
        %v5290 = vsel %vm1414, %v4809, 0
        %v5293 = vsel %vm1414, %v4811, 0
        %v5296 = vsel %vm1414, %v4813, 0
        %v5299 = vsel %vm1414, %v4815, 0
        %v5302 = vsel %vm1414, %v4817, 0
        %v5305 = vsel %vm1414, %v4819, 0
        %v5308 = vsel %vm1414, %v4821, 0
        %5310 = vmatprep.subr.bf16.mxu0 %v5143
        %5311 = vmatpush1.bf16.msra.mxu0 %v5142
        %5312 = vmatprep.subr.bf16.mxu0 %v5149
        %5313 = vmatpush1.bf16.msra.mxu0 %v5148
        %5314 = vmatprep.subr.bf16.mxu0 %v5155
        %5315 = vmatpush1.bf16.msra.mxu0 %v5154
        %5316 = vmatprep.subr.bf16.mxu0 %v5161
        %5317 = vmatpush1.bf16.msra.mxu0 %v5160
        %5318 = vmatprep.subr.bf16.mxu0 %v5167
        %5319 = vmatpush1.bf16.msra.mxu0 %v5166
        %5320 = vmatprep.subr.bf16.mxu0 %v5173
        %5321 = vmatpush1.bf16.msra.mxu0 %v5172
        %5322 = vmatprep.subr.bf16.mxu0 %v5179
        %5323 = vmatpush1.bf16.msra.mxu0 %v5178
        %5324 = vmatprep.subr.bf16.mxu0 %v5185
        %5325 = vmatpush1.bf16.msra.mxu0 %v5184
        %5326 = vmatprep.subr.bf16.mxu0 %v5191
        %5327 = vmatpush1.bf16.msra.mxu0 %v5190
        %5328 = vmatprep.subr.bf16.mxu0 %v5197
        %5329 = vmatpush1.bf16.msra.mxu0 %v5196
        %5330 = vmatprep.subr.bf16.mxu0 %v5203
        %5331 = vmatpush1.bf16.msra.mxu0 %v5202
        %5332 = vmatprep.subr.bf16.mxu0 %v5209
        %5333 = vmatpush1.bf16.msra.mxu0 %v5208
        %5334 = vmatprep.subr.bf16.mxu0 0
        %5335 = vmatpush1.bf16.msra.mxu0 0
        %5336 = vmatprep.subr.bf16.mxu0 0
        %5337 = vmatpush1.bf16.msra.mxu0 0
        %5338 = vmatprep.subr.bf16.mxu0 0
        %5339 = vmatpush1.bf16.msra.mxu0 0
        %5340 = vmatprep.subr.bf16.mxu0 0
        %5341 = vmatpush1.bf16.msra.mxu0 0
        %5342 = vmatprep.mubr.bf16.mxu0 %v5287
        %5343 = vmatmul.mubr.bf16.gmra.mrb[0].mxu0 %v4806
        %v5344 = vpop.f32.mrb[0].mxu0
        %v5345 = vadd.f32 %v4899, %v5344
        %v5346 = vpop.f32.mrb[0].mxu0
        %v5347 = vadd.f32 %v4903, %v5346
        %v5348 = vpop.f32.mrb[0].mxu0
        %v5349 = vadd.f32 %v4899, %v5348
        %v5350 = vpop.f32.mrb[0].mxu0
        %v5351 = vadd.f32 %v4903, %v5350
        %5352 = vmatprep.mubr.bf16.mxu0 %v5290
        %5353 = vmatmul.mubr.bf16.gmra.mrb[0].mxu0 %v4808
        %v5354 = vpop.f32.mrb[0].mxu0
        %v5355 = vadd.f32 %v4899, %v5354
        %v5356 = vpop.f32.mrb[0].mxu0
        %v5357 = vadd.f32 %v4903, %v5356
        %v5358 = vpop.f32.mrb[0].mxu0
        %v5359 = vadd.f32 %v4899, %v5358
        %v5360 = vpop.f32.mrb[0].mxu0
        %v5361 = vadd.f32 %v4903, %v5360
        %5362 = vmatprep.mubr.bf16.mxu0 %v5293
        %5363 = vmatmul.mubr.bf16.gmra.mrb[0].mxu0 %v4810
        %v5364 = vpop.f32.mrb[0].mxu0
        %v5365 = vadd.f32 %v4899, %v5364
        %v5366 = vpop.f32.mrb[0].mxu0
        %v5367 = vadd.f32 %v4903, %v5366
        %v5368 = vpop.f32.mrb[0].mxu0
        %v5369 = vadd.f32 %v4899, %v5368
        %v5370 = vpop.f32.mrb[0].mxu0
        %v5371 = vadd.f32 %v4903, %v5370
        %5372 = vmatprep.mubr.bf16.mxu0 %v5296
        %5373 = vmatmul.mubr.bf16.gmra.mrb[0].mxu0 %v4812
        %v5374 = vpop.f32.mrb[0].mxu0
        %v5375 = vadd.f32 %v4899, %v5374
        %v5376 = vpop.f32.mrb[0].mxu0
        %v5377 = vadd.f32 %v4903, %v5376
        %v5378 = vpop.f32.mrb[0].mxu0
        %v5379 = vadd.f32 %v4899, %v5378
        %v5380 = vpop.f32.mrb[0].mxu0
        %v5381 = vadd.f32 %v4903, %v5380
        %5382 = vmatprep.mubr.bf16.mxu0 %v5299
        %5383 = vmatmul.mubr.bf16.gmra.mrb[0].mxu0 %v4814
        %v5384 = vpop.f32.mrb[0].mxu0
        %v5385 = vadd.f32 %v4899, %v5384
        %v5386 = vpop.f32.mrb[0].mxu0
        %v5387 = vadd.f32 %v4903, %v5386
        %v5388 = vpop.f32.mrb[0].mxu0
        %v5389 = vadd.f32 %v4899, %v5388
        %v5390 = vpop.f32.mrb[0].mxu0
        %v5391 = vadd.f32 %v4903, %v5390
        %5392 = vmatprep.mubr.bf16.mxu0 %v5302
        %5393 = vmatmul.mubr.bf16.gmra.mrb[0].mxu0 %v4816
        %v5394 = vpop.f32.mrb[0].mxu0
        %v5395 = vadd.f32 %v4899, %v5394
        %v5396 = vpop.f32.mrb[0].mxu0
        %v5397 = vadd.f32 %v4903, %v5396
        %v5398 = vpop.f32.mrb[0].mxu0
        %v5399 = vadd.f32 %v4899, %v5398
        %v5400 = vpop.f32.mrb[0].mxu0
        %v5401 = vadd.f32 %v4903, %v5400
        %5402 = vmatprep.mubr.bf16.mxu0 %v5305
        %5403 = vmatmul.mubr.bf16.gmra.mrb[0].mxu0 %v4818
        %v5404 = vpop.f32.mrb[0].mxu0
        %v5405 = vadd.f32 %v4899, %v5404
        %v5406 = vpop.f32.mrb[0].mxu0
        %v5407 = vadd.f32 %v4903, %v5406
        %v5408 = vpop.f32.mrb[0].mxu0
        %v5409 = vadd.f32 %v4899, %v5408
        %v5410 = vpop.f32.mrb[0].mxu0
        %v5411 = vadd.f32 %v4903, %v5410
        %5412 = vmatprep.mubr.bf16.mxu0 %v5308
        %5413 = vmatmul.mubr.bf16.gmra.mrb[0].mxu0 %v4820
        %v5414 = vpop.f32.mrb[0].mxu0
        %v5415 = vadd.f32 %v4899, %v5414
        %v5416 = vpop.f32.mrb[0].mxu0
        %v5417 = vadd.f32 %v4903, %v5416
        %v5418 = vpop.f32.mrb[0].mxu0
        %v5419 = vadd.f32 %v4899, %v5418
        %v5420 = vpop.f32.mrb[0].mxu0
        %v5421 = vadd.f32 %v4903, %v5420
        %5422 = vdwg.mxu0
        %5423 = vmatprep.subr.bf16.mxu0 %v5145
        %5424 = vmatpush1.bf16.msra.mxu0 %v5144
        %5425 = vmatprep.subr.bf16.mxu0 %v5151
        %5426 = vmatpush1.bf16.msra.mxu0 %v5150
        %5427 = vmatprep.subr.bf16.mxu0 %v5157
        %5428 = vmatpush1.bf16.msra.mxu0 %v5156
        %5429 = vmatprep.subr.bf16.mxu0 %v5163
        %5430 = vmatpush1.bf16.msra.mxu0 %v5162
        %5431 = vmatprep.subr.bf16.mxu0 %v5169
        %5432 = vmatpush1.bf16.msra.mxu0 %v5168
        %5433 = vmatprep.subr.bf16.mxu0 %v5175
        %5434 = vmatpush1.bf16.msra.mxu0 %v5174
        %5435 = vmatprep.subr.bf16.mxu0 %v5181
        %5436 = vmatpush1.bf16.msra.mxu0 %v5180
        %5437 = vmatprep.subr.bf16.mxu0 %v5187
        %5438 = vmatpush1.bf16.msra.mxu0 %v5186
        %5439 = vmatprep.subr.bf16.mxu0 %v5193
        %5440 = vmatpush1.bf16.msra.mxu0 %v5192
        %5441 = vmatprep.subr.bf16.mxu0 %v5199
        %5442 = vmatpush1.bf16.msra.mxu0 %v5198
        %5443 = vmatprep.subr.bf16.mxu0 %v5205
        %5444 = vmatpush1.bf16.msra.mxu0 %v5204
        %5445 = vmatprep.subr.bf16.mxu0 %v5211
        %5446 = vmatpush1.bf16.msra.mxu0 %v5210
        %5447 = vmatprep.subr.bf16.mxu0 0
        %5448 = vmatpush1.bf16.msra.mxu0 0
        %5449 = vmatprep.subr.bf16.mxu0 0
        %5450 = vmatpush1.bf16.msra.mxu0 0
        %5451 = vmatprep.subr.bf16.mxu0 0
        %5452 = vmatpush1.bf16.msra.mxu0 0
        %5453 = vmatprep.subr.bf16.mxu0 0
        %5454 = vmatpush1.bf16.msra.mxu0 0
        %5455 = vmatprep.mubr.bf16.mxu0 %v5287
        %5456 = vmatmul.mubr.bf16.gmra.mrb[0].mxu0 %v4806
        %v5457 = vpop.f32.mrb[0].mxu0
        %v5458 = vadd.f32 %v4907, %v5457
        %v5459 = vpop.f32.mrb[0].mxu0
        %v5460 = vadd.f32 %v4911, %v5459
        %v5461 = vpop.f32.mrb[0].mxu0
        %v5462 = vadd.f32 %v4907, %v5461
        %v5463 = vpop.f32.mrb[0].mxu0
        %v5464 = vadd.f32 %v4911, %v5463
        %5465 = vmatprep.mubr.bf16.mxu0 %v5290
        %5466 = vmatmul.mubr.bf16.gmra.mrb[0].mxu0 %v4808
        %v5467 = vpop.f32.mrb[0].mxu0
        %v5468 = vadd.f32 %v4907, %v5467
        %v5469 = vpop.f32.mrb[0].mxu0
        %v5470 = vadd.f32 %v4911, %v5469
        %v5471 = vpop.f32.mrb[0].mxu0
        %v5472 = vadd.f32 %v4907, %v5471
        %v5473 = vpop.f32.mrb[0].mxu0
        %v5474 = vadd.f32 %v4911, %v5473
        %5475 = vmatprep.mubr.bf16.mxu0 %v5293
        %5476 = vmatmul.mubr.bf16.gmra.mrb[0].mxu0 %v4810
        %v5477 = vpop.f32.mrb[0].mxu0
        %v5478 = vadd.f32 %v4907, %v5477
        %v5479 = vpop.f32.mrb[0].mxu0
        %v5480 = vadd.f32 %v4911, %v5479
        %v5481 = vpop.f32.mrb[0].mxu0
        %v5482 = vadd.f32 %v4907, %v5481
        %v5483 = vpop.f32.mrb[0].mxu0
        %v5484 = vadd.f32 %v4911, %v5483
        %5485 = vmatprep.mubr.bf16.mxu0 %v5296
        %5486 = vmatmul.mubr.bf16.gmra.mrb[0].mxu0 %v4812
        %v5487 = vpop.f32.mrb[0].mxu0
        %v5488 = vadd.f32 %v4907, %v5487
        %v5489 = vpop.f32.mrb[0].mxu0
        %v5490 = vadd.f32 %v4911, %v5489
        %v5491 = vpop.f32.mrb[0].mxu0
        %v5492 = vadd.f32 %v4907, %v5491
        %v5493 = vpop.f32.mrb[0].mxu0
        %v5494 = vadd.f32 %v4911, %v5493
        %5495 = vmatprep.mubr.bf16.mxu0 %v5299
        %5496 = vmatmul.mubr.bf16.gmra.mrb[0].mxu0 %v4814
        %v5497 = vpop.f32.mrb[0].mxu0
        %v5498 = vadd.f32 %v4907, %v5497
        %v5499 = vpop.f32.mrb[0].mxu0
        %v5500 = vadd.f32 %v4911, %v5499
        %v5501 = vpop.f32.mrb[0].mxu0
        %v5502 = vadd.f32 %v4907, %v5501
        %v5503 = vpop.f32.mrb[0].mxu0
        %v5504 = vadd.f32 %v4911, %v5503
        %5505 = vmatprep.mubr.bf16.mxu0 %v5302
        %5506 = vmatmul.mubr.bf16.gmra.mrb[0].mxu0 %v4816
        %v5507 = vpop.f32.mrb[0].mxu0
        %v5508 = vadd.f32 %v4907, %v5507
        %v5509 = vpop.f32.mrb[0].mxu0
        %v5510 = vadd.f32 %v4911, %v5509
        %v5511 = vpop.f32.mrb[0].mxu0
        %v5512 = vadd.f32 %v4907, %v5511
        %v5513 = vpop.f32.mrb[0].mxu0
        %v5514 = vadd.f32 %v4911, %v5513
        %5515 = vmatprep.mubr.bf16.mxu0 %v5305
        %5516 = vmatmul.mubr.bf16.gmra.mrb[0].mxu0 %v4818
        %v5517 = vpop.f32.mrb[0].mxu0
        %v5518 = vadd.f32 %v4907, %v5517
        %v5519 = vpop.f32.mrb[0].mxu0
        %v5520 = vadd.f32 %v4911, %v5519
        %v5521 = vpop.f32.mrb[0].mxu0
        %v5522 = vadd.f32 %v4907, %v5521
        %v5523 = vpop.f32.mrb[0].mxu0
        %v5524 = vadd.f32 %v4911, %v5523
        %5525 = vmatprep.mubr.bf16.mxu0 %v5308
        %5526 = vmatmul.mubr.bf16.gmra.mrb[0].mxu0 %v4820
        %v5527 = vpop.f32.mrb[0].mxu0
        %v5528 = vadd.f32 %v4907, %v5527
        %v5529 = vpop.f32.mrb[0].mxu0
        %v5530 = vadd.f32 %v4911, %v5529
        %v5531 = vpop.f32.mrb[0].mxu0
        %v5532 = vadd.f32 %v4907, %v5531
        %v5533 = vpop.f32.mrb[0].mxu0
        %v5534 = vadd.f32 %v4911, %v5533
        %5535 = vdwg.mxu0
        %5536 = vmatprep.subr.bf16.mxu0 %v5147
        %5537 = vmatpush1.bf16.msra.mxu0 %v5146
        %5538 = vmatprep.subr.bf16.mxu0 %v5153
        %5539 = vmatpush1.bf16.msra.mxu0 %v5152
        %5540 = vmatprep.subr.bf16.mxu0 %v5159
        %5541 = vmatpush1.bf16.msra.mxu0 %v5158
        %5542 = vmatprep.subr.bf16.mxu0 %v5165
        %5543 = vmatpush1.bf16.msra.mxu0 %v5164
        %5544 = vmatprep.subr.bf16.mxu0 %v5171
        %5545 = vmatpush1.bf16.msra.mxu0 %v5170
        %5546 = vmatprep.subr.bf16.mxu0 %v5177
        %5547 = vmatpush1.bf16.msra.mxu0 %v5176
        %5548 = vmatprep.subr.bf16.mxu0 %v5183
        %5549 = vmatpush1.bf16.msra.mxu0 %v5182
        %5550 = vmatprep.subr.bf16.mxu0 %v5189
        %5551 = vmatpush1.bf16.msra.mxu0 %v5188
        %5552 = vmatprep.subr.bf16.mxu0 %v5195
        %5553 = vmatpush1.bf16.msra.mxu0 %v5194
        %5554 = vmatprep.subr.bf16.mxu0 %v5201
        %5555 = vmatpush1.bf16.msra.mxu0 %v5200
        %5556 = vmatprep.subr.bf16.mxu0 %v5207
        %5557 = vmatpush1.bf16.msra.mxu0 %v5206
        %5558 = vmatprep.subr.bf16.mxu0 %v5213
        %5559 = vmatpush1.bf16.msra.mxu0 %v5212
        %5560 = vmatprep.subr.bf16.mxu0 0
        %5561 = vmatpush1.bf16.msra.mxu0 0
        %5562 = vmatprep.subr.bf16.mxu0 0
        %5563 = vmatpush1.bf16.msra.mxu0 0
        %5564 = vmatprep.subr.bf16.mxu0 0
        %5565 = vmatpush1.bf16.msra.mxu0 0
        %5566 = vmatprep.subr.bf16.mxu0 0
        %5567 = vmatpush1.bf16.msra.mxu0 0
        %5568 = vmatprep.mubr.bf16.mxu0 %v5287
        %5569 = vmatmul.mubr.bf16.gmra.mrb[0].mxu0 %v4806
        %v5570 = vpop.f32.mrb[0].mxu0
        %v5571 = vadd.f32 %v4915, %v5570
        %v5572 = vpop.f32.mrb[0].mxu0
        %v5573 = vadd.f32 %v4919, %v5572
        %v5574 = vpop.f32.mrb[0].mxu0
        %v5575 = vadd.f32 %v4915, %v5574
        %v5576 = vpop.f32.mrb[0].mxu0
        %v5577 = vadd.f32 %v4919, %v5576
        %5578 = vmatprep.mubr.bf16.mxu0 %v5290
        %5579 = vmatmul.mubr.bf16.gmra.mrb[0].mxu0 %v4808
        %v5580 = vpop.f32.mrb[0].mxu0
        %v5581 = vadd.f32 %v4915, %v5580
        %v5582 = vpop.f32.mrb[0].mxu0
        %v5583 = vadd.f32 %v4919, %v5582
        %v5584 = vpop.f32.mrb[0].mxu0
        %v5585 = vadd.f32 %v4915, %v5584
        %v5586 = vpop.f32.mrb[0].mxu0
        %v5587 = vadd.f32 %v4919, %v5586
        %5588 = vmatprep.mubr.bf16.mxu0 %v5293
        %5589 = vmatmul.mubr.bf16.gmra.mrb[0].mxu0 %v4810
        %v5590 = vpop.f32.mrb[0].mxu0
        %v5591 = vadd.f32 %v4915, %v5590
        %v5592 = vpop.f32.mrb[0].mxu0
        %v5593 = vadd.f32 %v4919, %v5592
        %v5594 = vpop.f32.mrb[0].mxu0
        %v5595 = vadd.f32 %v4915, %v5594
        %v5596 = vpop.f32.mrb[0].mxu0
        %v5597 = vadd.f32 %v4919, %v5596
        %5598 = vmatprep.mubr.bf16.mxu0 %v5296
        %5599 = vmatmul.mubr.bf16.gmra.mrb[0].mxu0 %v4812
        %v5600 = vpop.f32.mrb[0].mxu0
        %v5601 = vadd.f32 %v4915, %v5600
        %v5602 = vpop.f32.mrb[0].mxu0
        %v5603 = vadd.f32 %v4919, %v5602
        %v5604 = vpop.f32.mrb[0].mxu0
        %v5605 = vadd.f32 %v4915, %v5604
        %v5606 = vpop.f32.mrb[0].mxu0
        %v5607 = vadd.f32 %v4919, %v5606
        %5608 = vmatprep.mubr.bf16.mxu0 %v5299
        %5609 = vmatmul.mubr.bf16.gmra.mrb[0].mxu0 %v4814
        %v5610 = vpop.f32.mrb[0].mxu0
        %v5611 = vadd.f32 %v4915, %v5610
        %v5612 = vpop.f32.mrb[0].mxu0
        %v5613 = vadd.f32 %v4919, %v5612
        %v5614 = vpop.f32.mrb[0].mxu0
        %v5615 = vadd.f32 %v4915, %v5614
        %v5616 = vpop.f32.mrb[0].mxu0
        %v5617 = vadd.f32 %v4919, %v5616
        %5618 = vmatprep.mubr.bf16.mxu0 %v5302
        %5619 = vmatmul.mubr.bf16.gmra.mrb[0].mxu0 %v4816
        %v5620 = vpop.f32.mrb[0].mxu0
        %v5621 = vadd.f32 %v4915, %v5620
        %v5622 = vpop.f32.mrb[0].mxu0
        %v5623 = vadd.f32 %v4919, %v5622
        %v5624 = vpop.f32.mrb[0].mxu0
        %v5625 = vadd.f32 %v4915, %v5624
        %v5626 = vpop.f32.mrb[0].mxu0
        %v5627 = vadd.f32 %v4919, %v5626
        %5628 = vmatprep.mubr.bf16.mxu0 %v5305
        %5629 = vmatmul.mubr.bf16.gmra.mrb[0].mxu0 %v4818
        %v5630 = vpop.f32.mrb[0].mxu0
        %v5631 = vadd.f32 %v4915, %v5630
        %v5632 = vpop.f32.mrb[0].mxu0
        %v5633 = vadd.f32 %v4919, %v5632
        %v5634 = vpop.f32.mrb[0].mxu0
        %v5635 = vadd.f32 %v4915, %v5634
        %v5636 = vpop.f32.mrb[0].mxu0
        %v5637 = vadd.f32 %v4919, %v5636
        %5638 = vmatprep.mubr.bf16.mxu0 %v5308
        %5639 = vmatmul.mubr.bf16.gmra.mrb[0].mxu0 %v4820
        %v5640 = vpop.f32.mrb[0].mxu0
        %v5641 = vadd.f32 %v4915, %v5640
        %v5642 = vpop.f32.mrb[0].mxu0
        %v5643 = vadd.f32 %v4919, %v5642
        %v5644 = vpop.f32.mrb[0].mxu0
        %v5645 = vadd.f32 %v4915, %v5644
        %v5646 = vpop.f32.mrb[0].mxu0
        %v5647 = vadd.f32 %v4919, %v5646
        %5648 = vdwg.mxu0
        %v5649 = vmul.f32 %v5345, %v5345
        %v5650 = vmul.f32 %v5347, %v5347
        %v5651 = vmul.f32 %v5458, %v5458
        %v5652 = vmul.f32 %v5460, %v5460
        %v5653 = vmul.f32 %v5571, %v5571
        %v5654 = vmul.f32 %v5573, %v5573
        %v5655 = vmul.f32 %v5349, %v5349
        %v5656 = vmul.f32 %v5351, %v5351
        %v5657 = vmul.f32 %v5462, %v5462
        %v5658 = vmul.f32 %v5464, %v5464
        %v5659 = vmul.f32 %v5575, %v5575
        %v5660 = vmul.f32 %v5577, %v5577
        %v5661 = vmul.f32 %v5355, %v5355
        %v5662 = vmul.f32 %v5357, %v5357
        %v5663 = vmul.f32 %v5468, %v5468
        %v5664 = vmul.f32 %v5470, %v5470
        %v5665 = vmul.f32 %v5581, %v5581
        %v5666 = vmul.f32 %v5583, %v5583
        %v5667 = vmul.f32 %v5359, %v5359
        %v5668 = vmul.f32 %v5361, %v5361
        %v5669 = vmul.f32 %v5472, %v5472
        %v5670 = vmul.f32 %v5474, %v5474
        %v5671 = vmul.f32 %v5585, %v5585
        %v5672 = vmul.f32 %v5587, %v5587
        %v5673 = vmul.f32 %v5365, %v5365
        %v5674 = vmul.f32 %v5367, %v5367
        %v5675 = vmul.f32 %v5478, %v5478
        %v5676 = vmul.f32 %v5480, %v5480
        %v5677 = vmul.f32 %v5591, %v5591
        %v5678 = vmul.f32 %v5593, %v5593
        %v5679 = vmul.f32 %v5369, %v5369
        %v5680 = vmul.f32 %v5371, %v5371
        %v5681 = vmul.f32 %v5482, %v5482
        %v5682 = vmul.f32 %v5484, %v5484
        %v5683 = vmul.f32 %v5595, %v5595
        %v5684 = vmul.f32 %v5597, %v5597
        %v5685 = vmul.f32 %v5375, %v5375
        %v5686 = vmul.f32 %v5377, %v5377
        %v5687 = vmul.f32 %v5488, %v5488
        %v5688 = vmul.f32 %v5490, %v5490
        %v5689 = vmul.f32 %v5601, %v5601
        %v5690 = vmul.f32 %v5603, %v5603
        %v5691 = vmul.f32 %v5379, %v5379
        %v5692 = vmul.f32 %v5381, %v5381
        %v5693 = vmul.f32 %v5492, %v5492
        %v5694 = vmul.f32 %v5494, %v5494
        %v5695 = vmul.f32 %v5605, %v5605
        %v5696 = vmul.f32 %v5607, %v5607
        %v5697 = vmul.f32 %v5385, %v5385
        %v5698 = vmul.f32 %v5387, %v5387
        %v5699 = vmul.f32 %v5498, %v5498
        %v5700 = vmul.f32 %v5500, %v5500
        %v5701 = vmul.f32 %v5611, %v5611
        %v5702 = vmul.f32 %v5613, %v5613
        %v5703 = vmul.f32 %v5389, %v5389
        %v5704 = vmul.f32 %v5391, %v5391
        %v5705 = vmul.f32 %v5502, %v5502
        %v5706 = vmul.f32 %v5504, %v5504
        %v5707 = vmul.f32 %v5615, %v5615
        %v5708 = vmul.f32 %v5617, %v5617
        %v5709 = vmul.f32 %v5395, %v5395
        %v5710 = vmul.f32 %v5397, %v5397
        %v5711 = vmul.f32 %v5508, %v5508
        %v5712 = vmul.f32 %v5510, %v5510
        %v5713 = vmul.f32 %v5621, %v5621
        %v5714 = vmul.f32 %v5623, %v5623
        %v5715 = vmul.f32 %v5399, %v5399
        %v5716 = vmul.f32 %v5401, %v5401
        %v5717 = vmul.f32 %v5512, %v5512
        %v5718 = vmul.f32 %v5514, %v5514
        %v5719 = vmul.f32 %v5625, %v5625
        %v5720 = vmul.f32 %v5627, %v5627
        %v5721 = vmul.f32 %v5405, %v5405
        %v5722 = vmul.f32 %v5407, %v5407
        %v5723 = vmul.f32 %v5518, %v5518
        %v5724 = vmul.f32 %v5520, %v5520
        %v5725 = vmul.f32 %v5631, %v5631
        %v5726 = vmul.f32 %v5633, %v5633
        %v5727 = vmul.f32 %v5409, %v5409
        %v5728 = vmul.f32 %v5411, %v5411
        %v5729 = vmul.f32 %v5522, %v5522
        %v5730 = vmul.f32 %v5524, %v5524
        %v5731 = vmul.f32 %v5635, %v5635
        %v5732 = vmul.f32 %v5637, %v5637
        %v5733 = vmul.f32 %v5415, %v5415
        %v5734 = vmul.f32 %v5417, %v5417
        %v5735 = vmul.f32 %v5528, %v5528
        %v5736 = vmul.f32 %v5530, %v5530
        %v5737 = vmul.f32 %v5641, %v5641
        %v5738 = vmul.f32 %v5643, %v5643
        %v5739 = vmul.f32 %v5419, %v5419
        %v5740 = vmul.f32 %v5421, %v5421
        %v5741 = vmul.f32 %v5532, %v5532
        %v5742 = vmul.f32 %v5534, %v5534
        %v5743 = vmul.f32 %v5645, %v5645
        %v5744 = vmul.f32 %v5647, %v5647
        %v5745 = vmul.f32 %v5345, %v5649
        %v5746 = vmul.f32 %v5347, %v5650
        %v5747 = vmul.f32 %v5458, %v5651
        %v5748 = vmul.f32 %v5460, %v5652
        %v5749 = vmul.f32 %v5571, %v5653
        %v5750 = vmul.f32 %v5573, %v5654
        %v5751 = vmul.f32 %v5349, %v5655
        %v5752 = vmul.f32 %v5351, %v5656
        %v5753 = vmul.f32 %v5462, %v5657
        %v5754 = vmul.f32 %v5464, %v5658
        %v5755 = vmul.f32 %v5575, %v5659
        %v5756 = vmul.f32 %v5577, %v5660
        %v5757 = vmul.f32 %v5355, %v5661
        %v5758 = vmul.f32 %v5357, %v5662
        %v5759 = vmul.f32 %v5468, %v5663
        %v5760 = vmul.f32 %v5470, %v5664
        %v5761 = vmul.f32 %v5581, %v5665
        %v5762 = vmul.f32 %v5583, %v5666
        %v5763 = vmul.f32 %v5359, %v5667
        %v5764 = vmul.f32 %v5361, %v5668
        %v5765 = vmul.f32 %v5472, %v5669
        %v5766 = vmul.f32 %v5474, %v5670
        %v5767 = vmul.f32 %v5585, %v5671
        %v5768 = vmul.f32 %v5587, %v5672
        %v5769 = vmul.f32 %v5365, %v5673
        %v5770 = vmul.f32 %v5367, %v5674
        %v5771 = vmul.f32 %v5478, %v5675
        %v5772 = vmul.f32 %v5480, %v5676
        %v5773 = vmul.f32 %v5591, %v5677
        %v5774 = vmul.f32 %v5593, %v5678
        %v5775 = vmul.f32 %v5369, %v5679
        %v5776 = vmul.f32 %v5371, %v5680
        %v5777 = vmul.f32 %v5482, %v5681
        %v5778 = vmul.f32 %v5484, %v5682
        %v5779 = vmul.f32 %v5595, %v5683
        %v5780 = vmul.f32 %v5597, %v5684
        %v5781 = vmul.f32 %v5375, %v5685
        %v5782 = vmul.f32 %v5377, %v5686
        %v5783 = vmul.f32 %v5488, %v5687
        %v5784 = vmul.f32 %v5490, %v5688
        %v5785 = vmul.f32 %v5601, %v5689
        %v5786 = vmul.f32 %v5603, %v5690
        %v5787 = vmul.f32 %v5379, %v5691
        %v5788 = vmul.f32 %v5381, %v5692
        %v5789 = vmul.f32 %v5492, %v5693
        %v5790 = vmul.f32 %v5494, %v5694
        %v5791 = vmul.f32 %v5605, %v5695
        %v5792 = vmul.f32 %v5607, %v5696
        %v5793 = vmul.f32 %v5385, %v5697
        %v5794 = vmul.f32 %v5387, %v5698
        %v5795 = vmul.f32 %v5498, %v5699
        %v5796 = vmul.f32 %v5500, %v5700
        %v5797 = vmul.f32 %v5611, %v5701
        %v5798 = vmul.f32 %v5613, %v5702
        %v5799 = vmul.f32 %v5389, %v5703
        %v5800 = vmul.f32 %v5391, %v5704
        %v5801 = vmul.f32 %v5502, %v5705
        %v5802 = vmul.f32 %v5504, %v5706
        %v5803 = vmul.f32 %v5615, %v5707
        %v5804 = vmul.f32 %v5617, %v5708
        %v5805 = vmul.f32 %v5395, %v5709
        %v5806 = vmul.f32 %v5397, %v5710
        %v5807 = vmul.f32 %v5508, %v5711
        %v5808 = vmul.f32 %v5510, %v5712
        %v5809 = vmul.f32 %v5621, %v5713
        %v5810 = vmul.f32 %v5623, %v5714
        %v5811 = vmul.f32 %v5399, %v5715
        %v5812 = vmul.f32 %v5401, %v5716
        %v5813 = vmul.f32 %v5512, %v5717
        %v5814 = vmul.f32 %v5514, %v5718
        %v5815 = vmul.f32 %v5625, %v5719
        %v5816 = vmul.f32 %v5627, %v5720
        %v5817 = vmul.f32 %v5405, %v5721
        %v5818 = vmul.f32 %v5407, %v5722
        %v5819 = vmul.f32 %v5518, %v5723
        %v5820 = vmul.f32 %v5520, %v5724
        %v5821 = vmul.f32 %v5631, %v5725
        %v5822 = vmul.f32 %v5633, %v5726
        %v5823 = vmul.f32 %v5409, %v5727
        %v5824 = vmul.f32 %v5411, %v5728
        %v5825 = vmul.f32 %v5522, %v5729
        %v5826 = vmul.f32 %v5524, %v5730
        %v5827 = vmul.f32 %v5635, %v5731
        %v5828 = vmul.f32 %v5637, %v5732
        %v5829 = vmul.f32 %v5415, %v5733
        %v5830 = vmul.f32 %v5417, %v5734
        %v5831 = vmul.f32 %v5528, %v5735
        %v5832 = vmul.f32 %v5530, %v5736
        %v5833 = vmul.f32 %v5641, %v5737
        %v5834 = vmul.f32 %v5643, %v5738
        %v5835 = vmul.f32 %v5419, %v5739
        %v5836 = vmul.f32 %v5421, %v5740
        %v5837 = vmul.f32 %v5532, %v5741
        %v5838 = vmul.f32 %v5534, %v5742
        %v5839 = vmul.f32 %v5645, %v5743
        %v5840 = vmul.f32 %v5647, %v5744
        %v5841 = vmul.f32 %v5745, 0.044715
        %v5842 = vmul.f32 %v5746, 0.044715
        %v5843 = vmul.f32 %v5747, 0.044715
        %v5844 = vmul.f32 %v5748, 0.044715
        %v5845 = vmul.f32 %v5749, 0.044715
        %v5846 = vmul.f32 %v5750, 0.044715
        %v5847 = vmul.f32 %v5751, 0.044715
        %v5848 = vmul.f32 %v5752, 0.044715
        %v5849 = vmul.f32 %v5753, 0.044715
        %v5850 = vmul.f32 %v5754, 0.044715
        %v5851 = vmul.f32 %v5755, 0.044715
        %v5852 = vmul.f32 %v5756, 0.044715
        %v5853 = vmul.f32 %v5757, 0.044715
        %v5854 = vmul.f32 %v5758, 0.044715
        %v5855 = vmul.f32 %v5759, 0.044715
        %v5856 = vmul.f32 %v5760, 0.044715
        %v5857 = vmul.f32 %v5761, 0.044715
        %v5858 = vmul.f32 %v5762, 0.044715
        %v5859 = vmul.f32 %v5763, 0.044715
        %v5860 = vmul.f32 %v5764, 0.044715
        %v5861 = vmul.f32 %v5765, 0.044715
        %v5862 = vmul.f32 %v5766, 0.044715
        %v5863 = vmul.f32 %v5767, 0.044715
        %v5864 = vmul.f32 %v5768, 0.044715
        %v5865 = vmul.f32 %v5769, 0.044715
        %v5866 = vmul.f32 %v5770, 0.044715
        %v5867 = vmul.f32 %v5771, 0.044715
        %v5868 = vmul.f32 %v5772, 0.044715
        %v5869 = vmul.f32 %v5773, 0.044715
        %v5870 = vmul.f32 %v5774, 0.044715
        %v5871 = vmul.f32 %v5775, 0.044715
        %v5872 = vmul.f32 %v5776, 0.044715
        %v5873 = vmul.f32 %v5777, 0.044715
        %v5874 = vmul.f32 %v5778, 0.044715
        %v5875 = vmul.f32 %v5779, 0.044715
        %v5876 = vmul.f32 %v5780, 0.044715
        %v5877 = vmul.f32 %v5781, 0.044715
        %v5878 = vmul.f32 %v5782, 0.044715
        %v5879 = vmul.f32 %v5783, 0.044715
        %v5880 = vmul.f32 %v5784, 0.044715
        %v5881 = vmul.f32 %v5785, 0.044715
        %v5882 = vmul.f32 %v5786, 0.044715
        %v5883 = vmul.f32 %v5787, 0.044715
        %v5884 = vmul.f32 %v5788, 0.044715
        %v5885 = vmul.f32 %v5789, 0.044715
        %v5886 = vmul.f32 %v5790, 0.044715
        %v5887 = vmul.f32 %v5791, 0.044715
        %v5888 = vmul.f32 %v5792, 0.044715
        %v5889 = vmul.f32 %v5793, 0.044715
        %v5890 = vmul.f32 %v5794, 0.044715
        %v5891 = vmul.f32 %v5795, 0.044715
        %v5892 = vmul.f32 %v5796, 0.044715
        %v5893 = vmul.f32 %v5797, 0.044715
        %v5894 = vmul.f32 %v5798, 0.044715
        %v5895 = vmul.f32 %v5799, 0.044715
        %v5896 = vmul.f32 %v5800, 0.044715
        %v5897 = vmul.f32 %v5801, 0.044715
        %v5898 = vmul.f32 %v5802, 0.044715
        %v5899 = vmul.f32 %v5803, 0.044715
        %v5900 = vmul.f32 %v5804, 0.044715
        %v5901 = vmul.f32 %v5805, 0.044715
        %v5902 = vmul.f32 %v5806, 0.044715
        %v5903 = vmul.f32 %v5807, 0.044715
        %v5904 = vmul.f32 %v5808, 0.044715
        %v5905 = vmul.f32 %v5809, 0.044715
        %v5906 = vmul.f32 %v5810, 0.044715
        %v5907 = vmul.f32 %v5811, 0.044715
        %v5908 = vmul.f32 %v5812, 0.044715
        %v5909 = vmul.f32 %v5813, 0.044715
        %v5910 = vmul.f32 %v5814, 0.044715
        %v5911 = vmul.f32 %v5815, 0.044715
        %v5912 = vmul.f32 %v5816, 0.044715
        %v5913 = vmul.f32 %v5817, 0.044715
        %v5914 = vmul.f32 %v5818, 0.044715
        %v5915 = vmul.f32 %v5819, 0.044715
        %v5916 = vmul.f32 %v5820, 0.044715
        %v5917 = vmul.f32 %v5821, 0.044715
        %v5918 = vmul.f32 %v5822, 0.044715
        %v5919 = vmul.f32 %v5823, 0.044715
        %v5920 = vmul.f32 %v5824, 0.044715
        %v5921 = vmul.f32 %v5825, 0.044715
        %v5922 = vmul.f32 %v5826, 0.044715
        %v5923 = vmul.f32 %v5827, 0.044715
        %v5924 = vmul.f32 %v5828, 0.044715
        %v5925 = vmul.f32 %v5829, 0.044715
        %v5926 = vmul.f32 %v5830, 0.044715
        %v5927 = vmul.f32 %v5831, 0.044715
        %v5928 = vmul.f32 %v5832, 0.044715
        %v5929 = vmul.f32 %v5833, 0.044715
        %v5930 = vmul.f32 %v5834, 0.044715
        %v5931 = vmul.f32 %v5835, 0.044715
        %v5932 = vmul.f32 %v5836, 0.044715
        %v5933 = vmul.f32 %v5837, 0.044715
        %v5934 = vmul.f32 %v5838, 0.044715
        %v5935 = vmul.f32 %v5839, 0.044715
        %v5936 = vmul.f32 %v5840, 0.044715
        %v5937 = vadd.f32 %v5345, %v5841
        %v5938 = vadd.f32 %v5347, %v5842
        %v5939 = vadd.f32 %v5458, %v5843
        %v5940 = vadd.f32 %v5460, %v5844
        %v5941 = vadd.f32 %v5571, %v5845
        %v5942 = vadd.f32 %v5573, %v5846
        %v5943 = vadd.f32 %v5349, %v5847
        %v5944 = vadd.f32 %v5351, %v5848
        %v5945 = vadd.f32 %v5462, %v5849
        %v5946 = vadd.f32 %v5464, %v5850
        %v5947 = vadd.f32 %v5575, %v5851
        %v5948 = vadd.f32 %v5577, %v5852
        %v5949 = vadd.f32 %v5355, %v5853
        %v5950 = vadd.f32 %v5357, %v5854
        %v5951 = vadd.f32 %v5468, %v5855
        %v5952 = vadd.f32 %v5470, %v5856
        %v5953 = vadd.f32 %v5581, %v5857
        %v5954 = vadd.f32 %v5583, %v5858
        %v5955 = vadd.f32 %v5359, %v5859
        %v5956 = vadd.f32 %v5361, %v5860
        %v5957 = vadd.f32 %v5472, %v5861
        %v5958 = vadd.f32 %v5474, %v5862
        %v5959 = vadd.f32 %v5585, %v5863
        %v5960 = vadd.f32 %v5587, %v5864
        %v5961 = vadd.f32 %v5365, %v5865
        %v5962 = vadd.f32 %v5367, %v5866
        %v5963 = vadd.f32 %v5478, %v5867
        %v5964 = vadd.f32 %v5480, %v5868
        %v5965 = vadd.f32 %v5591, %v5869
        %v5966 = vadd.f32 %v5593, %v5870
        %v5967 = vadd.f32 %v5369, %v5871
        %v5968 = vadd.f32 %v5371, %v5872
        %v5969 = vadd.f32 %v5482, %v5873
        %v5970 = vadd.f32 %v5484, %v5874
        %v5971 = vadd.f32 %v5595, %v5875
        %v5972 = vadd.f32 %v5597, %v5876
        %v5973 = vadd.f32 %v5375, %v5877
        %v5974 = vadd.f32 %v5377, %v5878
        %v5975 = vadd.f32 %v5488, %v5879
        %v5976 = vadd.f32 %v5490, %v5880
        %v5977 = vadd.f32 %v5601, %v5881
        %v5978 = vadd.f32 %v5603, %v5882
        %v5979 = vadd.f32 %v5379, %v5883
        %v5980 = vadd.f32 %v5381, %v5884
        %v5981 = vadd.f32 %v5492, %v5885
        %v5982 = vadd.f32 %v5494, %v5886
        %v5983 = vadd.f32 %v5605, %v5887
        %v5984 = vadd.f32 %v5607, %v5888
        %v5985 = vadd.f32 %v5385, %v5889
        %v5986 = vadd.f32 %v5387, %v5890
        %v5987 = vadd.f32 %v5498, %v5891
        %v5988 = vadd.f32 %v5500, %v5892
        %v5989 = vadd.f32 %v5611, %v5893
        %v5990 = vadd.f32 %v5613, %v5894
        %v5991 = vadd.f32 %v5389, %v5895
        %v5992 = vadd.f32 %v5391, %v5896
        %v5993 = vadd.f32 %v5502, %v5897
        %v5994 = vadd.f32 %v5504, %v5898
        %v5995 = vadd.f32 %v5615, %v5899
        %v5996 = vadd.f32 %v5617, %v5900
        %v5997 = vadd.f32 %v5395, %v5901
        %v5998 = vadd.f32 %v5397, %v5902
        %v5999 = vadd.f32 %v5508, %v5903
        %v6000 = vadd.f32 %v5510, %v5904
        %v6001 = vadd.f32 %v5621, %v5905
        %v6002 = vadd.f32 %v5623, %v5906
        %v6003 = vadd.f32 %v5399, %v5907
        %v6004 = vadd.f32 %v5401, %v5908
        %v6005 = vadd.f32 %v5512, %v5909
        %v6006 = vadd.f32 %v5514, %v5910
        %v6007 = vadd.f32 %v5625, %v5911
        %v6008 = vadd.f32 %v5627, %v5912
        %v6009 = vadd.f32 %v5405, %v5913
        %v6010 = vadd.f32 %v5407, %v5914
        %v6011 = vadd.f32 %v5518, %v5915
        %v6012 = vadd.f32 %v5520, %v5916
        %v6013 = vadd.f32 %v5631, %v5917
        %v6014 = vadd.f32 %v5633, %v5918
        %v6015 = vadd.f32 %v5409, %v5919
        %v6016 = vadd.f32 %v5411, %v5920
        %v6017 = vadd.f32 %v5522, %v5921
        %v6018 = vadd.f32 %v5524, %v5922
        %v6019 = vadd.f32 %v5635, %v5923
        %v6020 = vadd.f32 %v5637, %v5924
        %v6021 = vadd.f32 %v5415, %v5925
        %v6022 = vadd.f32 %v5417, %v5926
        %v6023 = vadd.f32 %v5528, %v5927
        %v6024 = vadd.f32 %v5530, %v5928
        %v6025 = vadd.f32 %v5641, %v5929
        %v6026 = vadd.f32 %v5643, %v5930
        %v6027 = vadd.f32 %v5419, %v5931
        %v6028 = vadd.f32 %v5421, %v5932
        %v6029 = vadd.f32 %v5532, %v5933
        %v6030 = vadd.f32 %v5534, %v5934
        %v6031 = vadd.f32 %v5645, %v5935
        %v6032 = vadd.f32 %v5647, %v5936
        %v6033 = vmul.f32 %v5937, 0.7978846
        %v6034 = vmul.f32 %v5938, 0.7978846
        %v6035 = vmul.f32 %v5939, 0.7978846
        %v6036 = vmul.f32 %v5940, 0.7978846
        %v6037 = vmul.f32 %v5941, 0.7978846
        %v6038 = vmul.f32 %v5942, 0.7978846
        %v6039 = vmul.f32 %v5943, 0.7978846
        %v6040 = vmul.f32 %v5944, 0.7978846
        %v6041 = vmul.f32 %v5945, 0.7978846
        %v6042 = vmul.f32 %v5946, 0.7978846
        %v6043 = vmul.f32 %v5947, 0.7978846
        %v6044 = vmul.f32 %v5948, 0.7978846
        %v6045 = vmul.f32 %v5949, 0.7978846
        %v6046 = vmul.f32 %v5950, 0.7978846
        %v6047 = vmul.f32 %v5951, 0.7978846
        %v6048 = vmul.f32 %v5952, 0.7978846
        %v6049 = vmul.f32 %v5953, 0.7978846
        %v6050 = vmul.f32 %v5954, 0.7978846
        %v6051 = vmul.f32 %v5955, 0.7978846
        %v6052 = vmul.f32 %v5956, 0.7978846
        %v6053 = vmul.f32 %v5957, 0.7978846
        %v6054 = vmul.f32 %v5958, 0.7978846
        %v6055 = vmul.f32 %v5959, 0.7978846
        %v6056 = vmul.f32 %v5960, 0.7978846
        %v6057 = vmul.f32 %v5961, 0.7978846
        %v6058 = vmul.f32 %v5962, 0.7978846
        %v6059 = vmul.f32 %v5963, 0.7978846
        %v6060 = vmul.f32 %v5964, 0.7978846
        %v6061 = vmul.f32 %v5965, 0.7978846
        %v6062 = vmul.f32 %v5966, 0.7978846
        %v6063 = vmul.f32 %v5967, 0.7978846
        %v6064 = vmul.f32 %v5968, 0.7978846
        %v6065 = vmul.f32 %v5969, 0.7978846
        %v6066 = vmul.f32 %v5970, 0.7978846
        %v6067 = vmul.f32 %v5971, 0.7978846
        %v6068 = vmul.f32 %v5972, 0.7978846
        %v6069 = vmul.f32 %v5973, 0.7978846
        %v6070 = vmul.f32 %v5974, 0.7978846
        %v6071 = vmul.f32 %v5975, 0.7978846
        %v6072 = vmul.f32 %v5976, 0.7978846
        %v6073 = vmul.f32 %v5977, 0.7978846
        %v6074 = vmul.f32 %v5978, 0.7978846
        %v6075 = vmul.f32 %v5979, 0.7978846
        %v6076 = vmul.f32 %v5980, 0.7978846
        %v6077 = vmul.f32 %v5981, 0.7978846
        %v6078 = vmul.f32 %v5982, 0.7978846
        %v6079 = vmul.f32 %v5983, 0.7978846
        %v6080 = vmul.f32 %v5984, 0.7978846
        %v6081 = vmul.f32 %v5985, 0.7978846
        %v6082 = vmul.f32 %v5986, 0.7978846
        %v6083 = vmul.f32 %v5987, 0.7978846
        %v6084 = vmul.f32 %v5988, 0.7978846
        %v6085 = vmul.f32 %v5989, 0.7978846
        %v6086 = vmul.f32 %v5990, 0.7978846
        %v6087 = vmul.f32 %v5991, 0.7978846
        %v6088 = vmul.f32 %v5992, 0.7978846
        %v6089 = vmul.f32 %v5993, 0.7978846
        %v6090 = vmul.f32 %v5994, 0.7978846
        %v6091 = vmul.f32 %v5995, 0.7978846
        %v6092 = vmul.f32 %v5996, 0.7978846
        %v6093 = vmul.f32 %v5997, 0.7978846
        %v6094 = vmul.f32 %v5998, 0.7978846
        %v6095 = vmul.f32 %v5999, 0.7978846
        %v6096 = vmul.f32 %v6000, 0.7978846
        %v6097 = vmul.f32 %v6001, 0.7978846
        %v6098 = vmul.f32 %v6002, 0.7978846
        %v6099 = vmul.f32 %v6003, 0.7978846
        %v6100 = vmul.f32 %v6004, 0.7978846
        %v6101 = vmul.f32 %v6005, 0.7978846
        %v6102 = vmul.f32 %v6006, 0.7978846
        %v6103 = vmul.f32 %v6007, 0.7978846
        %v6104 = vmul.f32 %v6008, 0.7978846
        %v6105 = vmul.f32 %v6009, 0.7978846
        %v6106 = vmul.f32 %v6010, 0.7978846
        %v6107 = vmul.f32 %v6011, 0.7978846
        %v6108 = vmul.f32 %v6012, 0.7978846
        %v6109 = vmul.f32 %v6013, 0.7978846
        %v6110 = vmul.f32 %v6014, 0.7978846
        %v6111 = vmul.f32 %v6015, 0.7978846
        %v6112 = vmul.f32 %v6016, 0.7978846
        %v6113 = vmul.f32 %v6017, 0.7978846
        %v6114 = vmul.f32 %v6018, 0.7978846
        %v6115 = vmul.f32 %v6019, 0.7978846
        %v6116 = vmul.f32 %v6020, 0.7978846
        %v6117 = vmul.f32 %v6021, 0.7978846
        %v6118 = vmul.f32 %v6022, 0.7978846
        %v6119 = vmul.f32 %v6023, 0.7978846
        %v6120 = vmul.f32 %v6024, 0.7978846
        %v6121 = vmul.f32 %v6025, 0.7978846
        %v6122 = vmul.f32 %v6026, 0.7978846
        %v6123 = vmul.f32 %v6027, 0.7978846
        %v6124 = vmul.f32 %v6028, 0.7978846
        %v6125 = vmul.f32 %v6029, 0.7978846
        %v6126 = vmul.f32 %v6030, 0.7978846
        %v6127 = vmul.f32 %v6031, 0.7978846
        %v6128 = vmul.f32 %v6032, 0.7978846
        %v6129 = vtanh.pop %v6033
        %v6130 = vtanh.pop %v6034
        %v6131 = vtanh.pop %v6035
        %v6132 = vtanh.pop %v6036
        %v6133 = vtanh.pop %v6037
        %v6134 = vtanh.pop %v6038
        %v6135 = vtanh.pop %v6039
        %v6136 = vtanh.pop %v6040
        %v6137 = vtanh.pop %v6041
        %v6138 = vtanh.pop %v6042
        %v6139 = vtanh.pop %v6043
        %v6140 = vtanh.pop %v6044
        %v6141 = vtanh.pop %v6045
        %v6142 = vtanh.pop %v6046
        %v6143 = vtanh.pop %v6047
        %v6144 = vtanh.pop %v6048
        %v6145 = vtanh.pop %v6049
        %v6146 = vtanh.pop %v6050
        %v6147 = vtanh.pop %v6051
        %v6148 = vtanh.pop %v6052
        %v6149 = vtanh.pop %v6053
        %v6150 = vtanh.pop %v6054
        %v6151 = vtanh.pop %v6055
        %v6152 = vtanh.pop %v6056
        %v6153 = vtanh.pop %v6057
        %v6154 = vtanh.pop %v6058
        %v6155 = vtanh.pop %v6059
        %v6156 = vtanh.pop %v6060
        %v6157 = vtanh.pop %v6061
        %v6158 = vtanh.pop %v6062
        %v6159 = vtanh.pop %v6063
        %v6160 = vtanh.pop %v6064
        %v6161 = vtanh.pop %v6065
        %v6162 = vtanh.pop %v6066
        %v6163 = vtanh.pop %v6067
        %v6164 = vtanh.pop %v6068
        %v6165 = vtanh.pop %v6069
        %v6166 = vtanh.pop %v6070
        %v6167 = vtanh.pop %v6071
        %v6168 = vtanh.pop %v6072
        %v6169 = vtanh.pop %v6073
        %v6170 = vtanh.pop %v6074
        %v6171 = vtanh.pop %v6075
        %v6172 = vtanh.pop %v6076
        %v6173 = vtanh.pop %v6077
        %v6174 = vtanh.pop %v6078
        %v6175 = vtanh.pop %v6079
        %v6176 = vtanh.pop %v6080
        %v6177 = vtanh.pop %v6081
        %v6178 = vtanh.pop %v6082
        %v6179 = vtanh.pop %v6083
        %v6180 = vtanh.pop %v6084
        %v6181 = vtanh.pop %v6085
        %v6182 = vtanh.pop %v6086
        %v6183 = vtanh.pop %v6087
        %v6184 = vtanh.pop %v6088
        %v6185 = vtanh.pop %v6089
        %v6186 = vtanh.pop %v6090
        %v6187 = vtanh.pop %v6091
        %v6188 = vtanh.pop %v6092
        %v6189 = vtanh.pop %v6093
        %v6190 = vtanh.pop %v6094
        %v6191 = vtanh.pop %v6095
        %v6192 = vtanh.pop %v6096
        %v6193 = vtanh.pop %v6097
        %v6194 = vtanh.pop %v6098
        %v6195 = vtanh.pop %v6099
        %v6196 = vtanh.pop %v6100
        %v6197 = vtanh.pop %v6101
        %v6198 = vtanh.pop %v6102
        %v6199 = vtanh.pop %v6103
        %v6200 = vtanh.pop %v6104
        %v6201 = vtanh.pop %v6105
        %v6202 = vtanh.pop %v6106
        %v6203 = vtanh.pop %v6107
        %v6204 = vtanh.pop %v6108
        %v6205 = vtanh.pop %v6109
        %v6206 = vtanh.pop %v6110
        %v6207 = vtanh.pop %v6111
        %v6208 = vtanh.pop %v6112
        %v6209 = vtanh.pop %v6113
        %v6210 = vtanh.pop %v6114
        %v6211 = vtanh.pop %v6115
        %v6212 = vtanh.pop %v6116
        %v6213 = vtanh.pop %v6117
        %v6214 = vtanh.pop %v6118
        %v6215 = vtanh.pop %v6119
        %v6216 = vtanh.pop %v6120
        %v6217 = vtanh.pop %v6121
        %v6218 = vtanh.pop %v6122
        %v6219 = vtanh.pop %v6123
        %v6220 = vtanh.pop %v6124
        %v6221 = vtanh.pop %v6125
        %v6222 = vtanh.pop %v6126
        %v6223 = vtanh.pop %v6127
        %v6224 = vtanh.pop %v6128
        %v6225 = vadd.f32 %v6129, 1.0
        %v6226 = vadd.f32 %v6130, 1.0
        %v6227 = vadd.f32 %v6131, 1.0
        %v6228 = vadd.f32 %v6132, 1.0
        %v6229 = vadd.f32 %v6133, 1.0
        %v6230 = vadd.f32 %v6134, 1.0
        %v6231 = vadd.f32 %v6135, 1.0
        %v6232 = vadd.f32 %v6136, 1.0
        %v6233 = vadd.f32 %v6137, 1.0
        %v6234 = vadd.f32 %v6138, 1.0
        %v6235 = vadd.f32 %v6139, 1.0
        %v6236 = vadd.f32 %v6140, 1.0
        %v6237 = vadd.f32 %v6141, 1.0
        %v6238 = vadd.f32 %v6142, 1.0
        %v6239 = vadd.f32 %v6143, 1.0
        %v6240 = vadd.f32 %v6144, 1.0
        %v6241 = vadd.f32 %v6145, 1.0
        %v6242 = vadd.f32 %v6146, 1.0
        %v6243 = vadd.f32 %v6147, 1.0
        %v6244 = vadd.f32 %v6148, 1.0
        %v6245 = vadd.f32 %v6149, 1.0
        %v6246 = vadd.f32 %v6150, 1.0
        %v6247 = vadd.f32 %v6151, 1.0
        %v6248 = vadd.f32 %v6152, 1.0
        %v6249 = vadd.f32 %v6153, 1.0
        %v6250 = vadd.f32 %v6154, 1.0
        %v6251 = vadd.f32 %v6155, 1.0
        %v6252 = vadd.f32 %v6156, 1.0
        %v6253 = vadd.f32 %v6157, 1.0
        %v6254 = vadd.f32 %v6158, 1.0
        %v6255 = vadd.f32 %v6159, 1.0
        %v6256 = vadd.f32 %v6160, 1.0
        %v6257 = vadd.f32 %v6161, 1.0
        %v6258 = vadd.f32 %v6162, 1.0
        %v6259 = vadd.f32 %v6163, 1.0
        %v6260 = vadd.f32 %v6164, 1.0
        %v6261 = vadd.f32 %v6165, 1.0
        %v6262 = vadd.f32 %v6166, 1.0
        %v6263 = vadd.f32 %v6167, 1.0
        %v6264 = vadd.f32 %v6168, 1.0
        %v6265 = vadd.f32 %v6169, 1.0
        %v6266 = vadd.f32 %v6170, 1.0
        %v6267 = vadd.f32 %v6171, 1.0
        %v6268 = vadd.f32 %v6172, 1.0
        %v6269 = vadd.f32 %v6173, 1.0
        %v6270 = vadd.f32 %v6174, 1.0
        %v6271 = vadd.f32 %v6175, 1.0
        %v6272 = vadd.f32 %v6176, 1.0
        %v6273 = vadd.f32 %v6177, 1.0
        %v6274 = vadd.f32 %v6178, 1.0
        %v6275 = vadd.f32 %v6179, 1.0
        %v6276 = vadd.f32 %v6180, 1.0
        %v6277 = vadd.f32 %v6181, 1.0
        %v6278 = vadd.f32 %v6182, 1.0
        %v6279 = vadd.f32 %v6183, 1.0
        %v6280 = vadd.f32 %v6184, 1.0
        %v6281 = vadd.f32 %v6185, 1.0
        %v6282 = vadd.f32 %v6186, 1.0
        %v6283 = vadd.f32 %v6187, 1.0
        %v6284 = vadd.f32 %v6188, 1.0
        %v6285 = vadd.f32 %v6189, 1.0
        %v6286 = vadd.f32 %v6190, 1.0
        %v6287 = vadd.f32 %v6191, 1.0
        %v6288 = vadd.f32 %v6192, 1.0
        %v6289 = vadd.f32 %v6193, 1.0
        %v6290 = vadd.f32 %v6194, 1.0
        %v6291 = vadd.f32 %v6195, 1.0
        %v6292 = vadd.f32 %v6196, 1.0
        %v6293 = vadd.f32 %v6197, 1.0
        %v6294 = vadd.f32 %v6198, 1.0
        %v6295 = vadd.f32 %v6199, 1.0
        %v6296 = vadd.f32 %v6200, 1.0
        %v6297 = vadd.f32 %v6201, 1.0
        %v6298 = vadd.f32 %v6202, 1.0
        %v6299 = vadd.f32 %v6203, 1.0
        %v6300 = vadd.f32 %v6204, 1.0
        %v6301 = vadd.f32 %v6205, 1.0
        %v6302 = vadd.f32 %v6206, 1.0
        %v6303 = vadd.f32 %v6207, 1.0
        %v6304 = vadd.f32 %v6208, 1.0
        %v6305 = vadd.f32 %v6209, 1.0
        %v6306 = vadd.f32 %v6210, 1.0
        %v6307 = vadd.f32 %v6211, 1.0
        %v6308 = vadd.f32 %v6212, 1.0
        %v6309 = vadd.f32 %v6213, 1.0
        %v6310 = vadd.f32 %v6214, 1.0
        %v6311 = vadd.f32 %v6215, 1.0
        %v6312 = vadd.f32 %v6216, 1.0
        %v6313 = vadd.f32 %v6217, 1.0
        %v6314 = vadd.f32 %v6218, 1.0
        %v6315 = vadd.f32 %v6219, 1.0
        %v6316 = vadd.f32 %v6220, 1.0
        %v6317 = vadd.f32 %v6221, 1.0
        %v6318 = vadd.f32 %v6222, 1.0
        %v6319 = vadd.f32 %v6223, 1.0
        %v6320 = vadd.f32 %v6224, 1.0
        %v6321 = vmul.f32 %v6225, 0.5
        %v6322 = vmul.f32 %v6226, 0.5
        %v6323 = vmul.f32 %v6227, 0.5
        %v6324 = vmul.f32 %v6228, 0.5
        %v6325 = vmul.f32 %v6229, 0.5
        %v6326 = vmul.f32 %v6230, 0.5
        %v6327 = vmul.f32 %v6231, 0.5
        %v6328 = vmul.f32 %v6232, 0.5
        %v6329 = vmul.f32 %v6233, 0.5
        %v6330 = vmul.f32 %v6234, 0.5
        %v6331 = vmul.f32 %v6235, 0.5
        %v6332 = vmul.f32 %v6236, 0.5
        %v6333 = vmul.f32 %v6237, 0.5
        %v6334 = vmul.f32 %v6238, 0.5
        %v6335 = vmul.f32 %v6239, 0.5
        %v6336 = vmul.f32 %v6240, 0.5
        %v6337 = vmul.f32 %v6241, 0.5
        %v6338 = vmul.f32 %v6242, 0.5
        %v6339 = vmul.f32 %v6243, 0.5
        %v6340 = vmul.f32 %v6244, 0.5
        %v6341 = vmul.f32 %v6245, 0.5
        %v6342 = vmul.f32 %v6246, 0.5
        %v6343 = vmul.f32 %v6247, 0.5
        %v6344 = vmul.f32 %v6248, 0.5
        %v6345 = vmul.f32 %v6249, 0.5
        %v6346 = vmul.f32 %v6250, 0.5
        %v6347 = vmul.f32 %v6251, 0.5
        %v6348 = vmul.f32 %v6252, 0.5
        %v6349 = vmul.f32 %v6253, 0.5
        %v6350 = vmul.f32 %v6254, 0.5
        %v6351 = vmul.f32 %v6255, 0.5
        %v6352 = vmul.f32 %v6256, 0.5
        %v6353 = vmul.f32 %v6257, 0.5
        %v6354 = vmul.f32 %v6258, 0.5
        %v6355 = vmul.f32 %v6259, 0.5
        %v6356 = vmul.f32 %v6260, 0.5
        %v6357 = vmul.f32 %v6261, 0.5
        %v6358 = vmul.f32 %v6262, 0.5
        %v6359 = vmul.f32 %v6263, 0.5
        %v6360 = vmul.f32 %v6264, 0.5
        %v6361 = vmul.f32 %v6265, 0.5
        %v6362 = vmul.f32 %v6266, 0.5
        %v6363 = vmul.f32 %v6267, 0.5
        %v6364 = vmul.f32 %v6268, 0.5
        %v6365 = vmul.f32 %v6269, 0.5
        %v6366 = vmul.f32 %v6270, 0.5
        %v6367 = vmul.f32 %v6271, 0.5
        %v6368 = vmul.f32 %v6272, 0.5
        %v6369 = vmul.f32 %v6273, 0.5
        %v6370 = vmul.f32 %v6274, 0.5
        %v6371 = vmul.f32 %v6275, 0.5
        %v6372 = vmul.f32 %v6276, 0.5
        %v6373 = vmul.f32 %v6277, 0.5
        %v6374 = vmul.f32 %v6278, 0.5
        %v6375 = vmul.f32 %v6279, 0.5
        %v6376 = vmul.f32 %v6280, 0.5
        %v6377 = vmul.f32 %v6281, 0.5
        %v6378 = vmul.f32 %v6282, 0.5
        %v6379 = vmul.f32 %v6283, 0.5
        %v6380 = vmul.f32 %v6284, 0.5
        %v6381 = vmul.f32 %v6285, 0.5
        %v6382 = vmul.f32 %v6286, 0.5
        %v6383 = vmul.f32 %v6287, 0.5
        %v6384 = vmul.f32 %v6288, 0.5
        %v6385 = vmul.f32 %v6289, 0.5
        %v6386 = vmul.f32 %v6290, 0.5
        %v6387 = vmul.f32 %v6291, 0.5
        %v6388 = vmul.f32 %v6292, 0.5
        %v6389 = vmul.f32 %v6293, 0.5
        %v6390 = vmul.f32 %v6294, 0.5
        %v6391 = vmul.f32 %v6295, 0.5
        %v6392 = vmul.f32 %v6296, 0.5
        %v6393 = vmul.f32 %v6297, 0.5
        %v6394 = vmul.f32 %v6298, 0.5
        %v6395 = vmul.f32 %v6299, 0.5
        %v6396 = vmul.f32 %v6300, 0.5
        %v6397 = vmul.f32 %v6301, 0.5
        %v6398 = vmul.f32 %v6302, 0.5
        %v6399 = vmul.f32 %v6303, 0.5
        %v6400 = vmul.f32 %v6304, 0.5
        %v6401 = vmul.f32 %v6305, 0.5
        %v6402 = vmul.f32 %v6306, 0.5
        %v6403 = vmul.f32 %v6307, 0.5
        %v6404 = vmul.f32 %v6308, 0.5
        %v6405 = vmul.f32 %v6309, 0.5
        %v6406 = vmul.f32 %v6310, 0.5
        %v6407 = vmul.f32 %v6311, 0.5
        %v6408 = vmul.f32 %v6312, 0.5
        %v6409 = vmul.f32 %v6313, 0.5
        %v6410 = vmul.f32 %v6314, 0.5
        %v6411 = vmul.f32 %v6315, 0.5
        %v6412 = vmul.f32 %v6316, 0.5
        %v6413 = vmul.f32 %v6317, 0.5
        %v6414 = vmul.f32 %v6318, 0.5
        %v6415 = vmul.f32 %v6319, 0.5
        %v6416 = vmul.f32 %v6320, 0.5
        %v6417 = vmul.f32 %v5345, %v6321
        %v6418 = vmul.f32 %v5347, %v6322
        %v6419 = vmul.f32 %v5458, %v6323
        %v6420 = vmul.f32 %v5460, %v6324
        %v6421 = vmul.f32 %v5571, %v6325
        %v6422 = vmul.f32 %v5573, %v6326
        %v6423 = vmul.f32 %v5349, %v6327
        %v6424 = vmul.f32 %v5351, %v6328
        %v6425 = vmul.f32 %v5462, %v6329
        %v6426 = vmul.f32 %v5464, %v6330
        %v6427 = vmul.f32 %v5575, %v6331
        %v6428 = vmul.f32 %v5577, %v6332
        %v6429 = vmul.f32 %v5355, %v6333
        %v6430 = vmul.f32 %v5357, %v6334
        %v6431 = vmul.f32 %v5468, %v6335
        %v6432 = vmul.f32 %v5470, %v6336
        %v6433 = vmul.f32 %v5581, %v6337
        %v6434 = vmul.f32 %v5583, %v6338
        %v6435 = vmul.f32 %v5359, %v6339
        %v6436 = vmul.f32 %v5361, %v6340
        %v6437 = vmul.f32 %v5472, %v6341
        %v6438 = vmul.f32 %v5474, %v6342
        %v6439 = vmul.f32 %v5585, %v6343
        %v6440 = vmul.f32 %v5587, %v6344
        %v6441 = vmul.f32 %v5365, %v6345
        %v6442 = vmul.f32 %v5367, %v6346
        %v6443 = vmul.f32 %v5478, %v6347
        %v6444 = vmul.f32 %v5480, %v6348
        %v6445 = vmul.f32 %v5591, %v6349
        %v6446 = vmul.f32 %v5593, %v6350
        %v6447 = vmul.f32 %v5369, %v6351
        %v6448 = vmul.f32 %v5371, %v6352
        %v6449 = vmul.f32 %v5482, %v6353
        %v6450 = vmul.f32 %v5484, %v6354
        %v6451 = vmul.f32 %v5595, %v6355
        %v6452 = vmul.f32 %v5597, %v6356
        %v6453 = vmul.f32 %v5375, %v6357
        %v6454 = vmul.f32 %v5377, %v6358
        %v6455 = vmul.f32 %v5488, %v6359
        %v6456 = vmul.f32 %v5490, %v6360
        %v6457 = vmul.f32 %v5601, %v6361
        %v6458 = vmul.f32 %v5603, %v6362
        %v6459 = vmul.f32 %v5379, %v6363
        %v6460 = vmul.f32 %v5381, %v6364
        %v6461 = vmul.f32 %v5492, %v6365
        %v6462 = vmul.f32 %v5494, %v6366
        %v6463 = vmul.f32 %v5605, %v6367
        %v6464 = vmul.f32 %v5607, %v6368
        %v6465 = vmul.f32 %v5385, %v6369
        %v6466 = vmul.f32 %v5387, %v6370
        %v6467 = vmul.f32 %v5498, %v6371
        %v6468 = vmul.f32 %v5500, %v6372
        %v6469 = vmul.f32 %v5611, %v6373
        %v6470 = vmul.f32 %v5613, %v6374
        %v6471 = vmul.f32 %v5389, %v6375
        %v6472 = vmul.f32 %v5391, %v6376
        %v6473 = vmul.f32 %v5502, %v6377
        %v6474 = vmul.f32 %v5504, %v6378
        %v6475 = vmul.f32 %v5615, %v6379
        %v6476 = vmul.f32 %v5617, %v6380
        %v6477 = vmul.f32 %v5395, %v6381
        %v6478 = vmul.f32 %v5397, %v6382
        %v6479 = vmul.f32 %v5508, %v6383
        %v6480 = vmul.f32 %v5510, %v6384
        %v6481 = vmul.f32 %v5621, %v6385
        %v6482 = vmul.f32 %v5623, %v6386
        %v6483 = vmul.f32 %v5399, %v6387
        %v6484 = vmul.f32 %v5401, %v6388
        %v6485 = vmul.f32 %v5512, %v6389
        %v6486 = vmul.f32 %v5514, %v6390
        %v6487 = vmul.f32 %v5625, %v6391
        %v6488 = vmul.f32 %v5627, %v6392
        %v6489 = vmul.f32 %v5405, %v6393
        %v6490 = vmul.f32 %v5407, %v6394
        %v6491 = vmul.f32 %v5518, %v6395
        %v6492 = vmul.f32 %v5520, %v6396
        %v6493 = vmul.f32 %v5631, %v6397
        %v6494 = vmul.f32 %v5633, %v6398
        %v6495 = vmul.f32 %v5409, %v6399
        %v6496 = vmul.f32 %v5411, %v6400
        %v6497 = vmul.f32 %v5522, %v6401
        %v6498 = vmul.f32 %v5524, %v6402
        %v6499 = vmul.f32 %v5635, %v6403
        %v6500 = vmul.f32 %v5637, %v6404
        %v6501 = vmul.f32 %v5415, %v6405
        %v6502 = vmul.f32 %v5417, %v6406
        %v6503 = vmul.f32 %v5528, %v6407
        %v6504 = vmul.f32 %v5530, %v6408
        %v6505 = vmul.f32 %v5641, %v6409
        %v6506 = vmul.f32 %v5643, %v6410
        %v6507 = vmul.f32 %v5419, %v6411
        %v6508 = vmul.f32 %v5421, %v6412
        %v6509 = vmul.f32 %v5532, %v6413
        %v6510 = vmul.f32 %v5534, %v6414
        %v6511 = vmul.f32 %v5645, %v6415
        %v6512 = vmul.f32 %v5647, %v6416
        %v6513 = vpack.c.bf16 %v6423, %v6417
        %v6514 = vpack.c.bf16 %v6424, %v6418
        %v6515 = vpack.c.bf16 %v6425, %v6419
        %v6516 = vpack.c.bf16 %v6426, %v6420
        %v6517 = vpack.c.bf16 %v6427, %v6421
        %v6518 = vpack.c.bf16 %v6428, %v6422
        %v6519 = vpack.c.bf16 %v6435, %v6429
        %v6520 = vpack.c.bf16 %v6436, %v6430
        %v6521 = vpack.c.bf16 %v6437, %v6431
        %v6522 = vpack.c.bf16 %v6438, %v6432
        %v6523 = vpack.c.bf16 %v6439, %v6433
        %v6524 = vpack.c.bf16 %v6440, %v6434
        %v6525 = vpack.c.bf16 %v6447, %v6441
        %v6526 = vpack.c.bf16 %v6448, %v6442
        %v6527 = vpack.c.bf16 %v6449, %v6443
        %v6528 = vpack.c.bf16 %v6450, %v6444
        %v6529 = vpack.c.bf16 %v6451, %v6445
        %v6530 = vpack.c.bf16 %v6452, %v6446
        %v6531 = vpack.c.bf16 %v6459, %v6453
        %v6532 = vpack.c.bf16 %v6460, %v6454
        %v6533 = vpack.c.bf16 %v6461, %v6455
        %v6534 = vpack.c.bf16 %v6462, %v6456
        %v6535 = vpack.c.bf16 %v6463, %v6457
        %v6536 = vpack.c.bf16 %v6464, %v6458
        %v6537 = vpack.c.bf16 %v6471, %v6465
        %v6538 = vpack.c.bf16 %v6472, %v6466
        %v6539 = vpack.c.bf16 %v6473, %v6467
        %v6540 = vpack.c.bf16 %v6474, %v6468
        %v6541 = vpack.c.bf16 %v6475, %v6469
        %v6542 = vpack.c.bf16 %v6476, %v6470
        %v6543 = vpack.c.bf16 %v6483, %v6477
        %v6544 = vpack.c.bf16 %v6484, %v6478
        %v6545 = vpack.c.bf16 %v6485, %v6479
        %v6546 = vpack.c.bf16 %v6486, %v6480
        %v6547 = vpack.c.bf16 %v6487, %v6481
        %v6548 = vpack.c.bf16 %v6488, %v6482
        %v6549 = vpack.c.bf16 %v6495, %v6489
        %v6550 = vpack.c.bf16 %v6496, %v6490
        %v6551 = vpack.c.bf16 %v6497, %v6491
        %v6552 = vpack.c.bf16 %v6498, %v6492
        %v6553 = vpack.c.bf16 %v6499, %v6493
        %v6554 = vpack.c.bf16 %v6500, %v6494
        %v6555 = vpack.c.bf16 %v6507, %v6501
        %v6556 = vpack.c.bf16 %v6508, %v6502
        %v6557 = vpack.c.bf16 %v6509, %v6503
        %v6558 = vpack.c.bf16 %v6510, %v6504
        %v6559 = vpack.c.bf16 %v6511, %v6505
        %v6560 = vpack.c.bf16 %v6512, %v6506
        %v6561 = vld [vmem:[%s904] sm:$0xff]
        %v6562 = vld [vmem:[%s904 + $0x8] sm:$0xff]
        %v6563 = vld [vmem:[%s904 + $0x10] sm:$0xff]
        %v6564 = vld [vmem:[%s904 + $0x18] sm:$0xff]
        %v6565 = vld [vmem:[%s904 + $0x20] sm:$0xff]
        %v6566 = vld [vmem:[%s904 + $0x28] sm:$0xff]
        %v6567 = vld [vmem:[%s904 + $0x30] sm:$0xff]
        %v6568 = vld [vmem:[%s904 + $0x38] sm:$0xff]
        %v6569 = vld [vmem:[%s904 + $0x40] sm:$0xff]
        %v6570 = vld [vmem:[%s904 + $0x48] sm:$0xff]
        %v6571 = vld [vmem:[%s904 + $0x50] sm:$0xff]
        %v6572 = vld [vmem:[%s904 + $0x58] sm:$0xff]
        %v6573 = vld [vmem:[%s904 + $0x60] sm:$0xff]
        %v6574 = vld [vmem:[%s904 + $0x68] sm:$0xff]
        %v6575 = vld [vmem:[%s904 + $0x70] sm:$0xff]
        %v6576 = vld [vmem:[%s904 + $0x78] sm:$0xff]
        %v6577 = vld [vmem:[%s904 + $0x80] sm:$0xff]
        %v6578 = vld [vmem:[%s904 + $0x88] sm:$0xff]
        %v6579 = vld [vmem:[%s904 + $0x90] sm:$0xff]
        %v6580 = vld [vmem:[%s904 + $0x98] sm:$0xff]
        %v6581 = vld [vmem:[%s904 + $0xa0] sm:$0xff]
        %v6582 = vld [vmem:[%s904 + $0xa8] sm:$0xff]
        %v6583 = vld [vmem:[%s904 + $0xb0] sm:$0xff]
        %v6584 = vld [vmem:[%s904 + $0xb8] sm:$0xff]
        %v6585 = vld [vmem:[%s904 + $0xc0] sm:$0xff]
        %v6586 = vld [vmem:[%s904 + $0xc8] sm:$0xff]
        %v6587 = vld [vmem:[%s904 + $0xd0] sm:$0xff]
        %v6588 = vld [vmem:[%s904 + $0xd8] sm:$0xff]
        %v6589 = vld [vmem:[%s904 + $0xe0] sm:$0xff]
        %v6590 = vld [vmem:[%s904 + $0xe8] sm:$0xff]
        %v6591 = vld [vmem:[%s904 + $0xf0] sm:$0xff]
        %v6592 = vld [vmem:[%s904 + $0xf8] sm:$0xff]
        %v6593 = vld [vmem:[%s904 + $0x100] sm:$0xff]
        %v6594 = vld [vmem:[%s904 + $0x108] sm:$0xff]
        %v6595 = vld [vmem:[%s904 + $0x110] sm:$0xff]
        %v6596 = vld [vmem:[%s904 + $0x118] sm:$0xff]
        %v6597 = vld [vmem:[%s904 + $0x120] sm:$0xff]
        %v6598 = vld [vmem:[%s904 + $0x128] sm:$0xff]
        %v6599 = vld [vmem:[%s904 + $0x130] sm:$0xff]
        %v6600 = vld [vmem:[%s904 + $0x138] sm:$0xff]
        %v6601 = vld [vmem:[%s904 + $0x140] sm:$0xff]
        %v6602 = vld [vmem:[%s904 + $0x148] sm:$0xff]
        %v6603 = vld [vmem:[%s904 + $0x150] sm:$0xff]
        %v6604 = vld [vmem:[%s904 + $0x158] sm:$0xff]
        %v6605 = vld [vmem:[%s904 + $0x160] sm:$0xff]
        %v6606 = vld [vmem:[%s904 + $0x168] sm:$0xff]
        %v6607 = vld [vmem:[%s904 + $0x170] sm:$0xff]
        %v6608 = vld [vmem:[%s904 + $0x178] sm:$0xff]
        %v6609 = vld [vmem:[%s904 + $0x180] sm:$0xff]
        %v6610 = vld [vmem:[%s904 + $0x188] sm:$0xff]
        %v6611 = vld [vmem:[%s904 + $0x190] sm:$0xff]
        %v6612 = vld [vmem:[%s904 + $0x198] sm:$0xff]
        %v6613 = vld [vmem:[%s904 + $0x1a0] sm:$0xff]
        %v6614 = vld [vmem:[%s904 + $0x1a8] sm:$0xff]
        %v6615 = vld [vmem:[%s904 + $0x1b0] sm:$0xff]
        %v6616 = vld [vmem:[%s904 + $0x1b8] sm:$0xff]
        %v6617 = vld [vmem:[%s904 + $0x1c0] sm:$0xff]
        %v6618 = vld [vmem:[%s904 + $0x1c8] sm:$0xff]
        %v6619 = vld [vmem:[%s904 + $0x1d0] sm:$0xff]
        %v6620 = vld [vmem:[%s904 + $0x1d8] sm:$0xff]
        %v6621 = vld [vmem:[%s904 + $0x1e0] sm:$0xff]
        %v6622 = vld [vmem:[%s904 + $0x1e8] sm:$0xff]
        %v6623 = vld [vmem:[%s904 + $0x1f0] sm:$0xff]
        %v6624 = vld [vmem:[%s904 + $0x1f8] sm:$0xff]
        %v6625 = vld [vmem:[%s904 + $0x200] sm:$0xff]
        %v6626 = vld [vmem:[%s904 + $0x208] sm:$0xff]
        %v6627 = vld [vmem:[%s904 + $0x210] sm:$0xff]
        %v6628 = vld [vmem:[%s904 + $0x218] sm:$0xff]
        %v6629 = vld [vmem:[%s904 + $0x220] sm:$0xff]
        %v6630 = vld [vmem:[%s904 + $0x228] sm:$0xff]
        %v6631 = vld [vmem:[%s904 + $0x230] sm:$0xff]
        %v6632 = vld [vmem:[%s904 + $0x238] sm:$0xff]
        %v6633 = vld [vmem:[%s904 + $0x240] sm:$0xff]
        %v6634 = vld [vmem:[%s904 + $0x248] sm:$0xff]
        %v6635 = vld [vmem:[%s904 + $0x250] sm:$0xff]
        %v6636 = vld [vmem:[%s904 + $0x258] sm:$0xff]
        %v6637 = vld [vmem:[%s904 + $0x260] sm:$0xff]
        %v6638 = vld [vmem:[%s904 + $0x268] sm:$0xff]
        %v6639 = vld [vmem:[%s904 + $0x270] sm:$0xff]
        %v6640 = vld [vmem:[%s904 + $0x278] sm:$0xff]
        %v6641 = vld [vmem:[%s904 + $0x280] sm:$0xff]
        %v6642 = vld [vmem:[%s904 + $0x288] sm:$0xff]
        %v6643 = vld [vmem:[%s904 + $0x290] sm:$0xff]
        %v6644 = vld [vmem:[%s904 + $0x298] sm:$0xff]
        %v6645 = vld [vmem:[%s904 + $0x2a0] sm:$0xff]
        %v6646 = vld [vmem:[%s904 + $0x2a8] sm:$0xff]
        %v6647 = vld [vmem:[%s904 + $0x2b0] sm:$0xff]
        %v6648 = vld [vmem:[%s904 + $0x2b8] sm:$0xff]
        %v6649 = vld [vmem:[%s904 + $0x2c0] sm:$0xff]
        %v6650 = vld [vmem:[%s904 + $0x2c8] sm:$0xff]
        %v6651 = vld [vmem:[%s904 + $0x2d0] sm:$0xff]
        %v6652 = vld [vmem:[%s904 + $0x2d8] sm:$0xff]
        %v6653 = vld [vmem:[%s904 + $0x2e0] sm:$0xff]
        %v6654 = vld [vmem:[%s904 + $0x2e8] sm:$0xff]
        %v6655 = vld [vmem:[%s904 + $0x2f0] sm:$0xff]
        %v6656 = vld [vmem:[%s904 + $0x2f8] sm:$0xff]
        %v6753 = vunpack.c.l.b16 %v6561
        %v6754 = vunpack.c.h.b16 %v6561
        %v6755 = vunpack.c.l.b16 %v6562
        %v6756 = vunpack.c.h.b16 %v6562
        %v6757 = vunpack.c.l.b16 %v6563
        %v6758 = vunpack.c.h.b16 %v6563
        %v6759 = vunpack.c.l.b16 %v6564
        %v6760 = vunpack.c.h.b16 %v6564
        %v6761 = vunpack.c.l.b16 %v6565
        %v6762 = vunpack.c.h.b16 %v6565
        %v6763 = vunpack.c.l.b16 %v6566
        %v6764 = vunpack.c.h.b16 %v6566
        %v6765 = vunpack.c.l.b16 %v6567
        %v6766 = vunpack.c.h.b16 %v6567
        %v6767 = vunpack.c.l.b16 %v6568
        %v6768 = vunpack.c.h.b16 %v6568
        %v6769 = vunpack.c.l.b16 %v6569
        %v6770 = vunpack.c.h.b16 %v6569
        %v6771 = vunpack.c.l.b16 %v6570
        %v6772 = vunpack.c.h.b16 %v6570
        %v6773 = vunpack.c.l.b16 %v6571
        %v6774 = vunpack.c.h.b16 %v6571
        %v6775 = vunpack.c.l.b16 %v6572
        %v6776 = vunpack.c.h.b16 %v6572
        %v6777 = vunpack.c.l.b16 %v6573
        %v6778 = vunpack.c.h.b16 %v6573
        %v6779 = vunpack.c.l.b16 %v6574
        %v6780 = vunpack.c.h.b16 %v6574
        %v6781 = vunpack.c.l.b16 %v6575
        %v6782 = vunpack.c.h.b16 %v6575
        %v6783 = vunpack.c.l.b16 %v6576
        %v6784 = vunpack.c.h.b16 %v6576
        %v6785 = vunpack.c.l.b16 %v6577
        %v6786 = vunpack.c.h.b16 %v6577
        %v6787 = vunpack.c.l.b16 %v6578
        %v6788 = vunpack.c.h.b16 %v6578
        %v6789 = vunpack.c.l.b16 %v6579
        %v6790 = vunpack.c.h.b16 %v6579
        %v6791 = vunpack.c.l.b16 %v6580
        %v6792 = vunpack.c.h.b16 %v6580
        %v6793 = vunpack.c.l.b16 %v6581
        %v6794 = vunpack.c.h.b16 %v6581
        %v6795 = vunpack.c.l.b16 %v6582
        %v6796 = vunpack.c.h.b16 %v6582
        %v6797 = vunpack.c.l.b16 %v6583
        %v6798 = vunpack.c.h.b16 %v6583
        %v6799 = vunpack.c.l.b16 %v6584
        %v6800 = vunpack.c.h.b16 %v6584
        %v6801 = vunpack.c.l.b16 %v6585
        %v6802 = vunpack.c.h.b16 %v6585
        %v6803 = vunpack.c.l.b16 %v6586
        %v6804 = vunpack.c.h.b16 %v6586
        %v6805 = vunpack.c.l.b16 %v6587
        %v6806 = vunpack.c.h.b16 %v6587
        %v6807 = vunpack.c.l.b16 %v6588
        %v6808 = vunpack.c.h.b16 %v6588
        %v6809 = vunpack.c.l.b16 %v6589
        %v6810 = vunpack.c.h.b16 %v6589
        %v6811 = vunpack.c.l.b16 %v6590
        %v6812 = vunpack.c.h.b16 %v6590
        %v6813 = vunpack.c.l.b16 %v6591
        %v6814 = vunpack.c.h.b16 %v6591
        %v6815 = vunpack.c.l.b16 %v6592
        %v6816 = vunpack.c.h.b16 %v6592
        %v6817 = vunpack.c.l.b16 %v6593
        %v6818 = vunpack.c.h.b16 %v6593
        %v6819 = vunpack.c.l.b16 %v6594
        %v6820 = vunpack.c.h.b16 %v6594
        %v6821 = vunpack.c.l.b16 %v6595
        %v6822 = vunpack.c.h.b16 %v6595
        %v6823 = vunpack.c.l.b16 %v6596
        %v6824 = vunpack.c.h.b16 %v6596
        %v6825 = vunpack.c.l.b16 %v6597
        %v6826 = vunpack.c.h.b16 %v6597
        %v6827 = vunpack.c.l.b16 %v6598
        %v6828 = vunpack.c.h.b16 %v6598
        %v6829 = vunpack.c.l.b16 %v6599
        %v6830 = vunpack.c.h.b16 %v6599
        %v6831 = vunpack.c.l.b16 %v6600
        %v6832 = vunpack.c.h.b16 %v6600
        %v6833 = vunpack.c.l.b16 %v6601
        %v6834 = vunpack.c.h.b16 %v6601
        %v6835 = vunpack.c.l.b16 %v6602
        %v6836 = vunpack.c.h.b16 %v6602
        %v6837 = vunpack.c.l.b16 %v6603
        %v6838 = vunpack.c.h.b16 %v6603
        %v6839 = vunpack.c.l.b16 %v6604
        %v6840 = vunpack.c.h.b16 %v6604
        %v6841 = vunpack.c.l.b16 %v6605
        %v6842 = vunpack.c.h.b16 %v6605
        %v6843 = vunpack.c.l.b16 %v6606
        %v6844 = vunpack.c.h.b16 %v6606
        %v6845 = vunpack.c.l.b16 %v6607
        %v6846 = vunpack.c.h.b16 %v6607
        %v6847 = vunpack.c.l.b16 %v6608
        %v6848 = vunpack.c.h.b16 %v6608
        %v6849 = vunpack.c.l.b16 %v6609
        %v6850 = vunpack.c.h.b16 %v6609
        %v6851 = vunpack.c.l.b16 %v6610
        %v6852 = vunpack.c.h.b16 %v6610
        %v6853 = vunpack.c.l.b16 %v6611
        %v6854 = vunpack.c.h.b16 %v6611
        %v6855 = vunpack.c.l.b16 %v6612
        %v6856 = vunpack.c.h.b16 %v6612
        %v6857 = vunpack.c.l.b16 %v6613
        %v6858 = vunpack.c.h.b16 %v6613
        %v6859 = vunpack.c.l.b16 %v6614
        %v6860 = vunpack.c.h.b16 %v6614
        %v6861 = vunpack.c.l.b16 %v6615
        %v6862 = vunpack.c.h.b16 %v6615
        %v6863 = vunpack.c.l.b16 %v6616
        %v6864 = vunpack.c.h.b16 %v6616
        %v6865 = vunpack.c.l.b16 %v6617
        %v6866 = vunpack.c.h.b16 %v6617
        %v6867 = vunpack.c.l.b16 %v6618
        %v6868 = vunpack.c.h.b16 %v6618
        %v6869 = vunpack.c.l.b16 %v6619
        %v6870 = vunpack.c.h.b16 %v6619
        %v6871 = vunpack.c.l.b16 %v6620
        %v6872 = vunpack.c.h.b16 %v6620
        %v6873 = vunpack.c.l.b16 %v6621
        %v6874 = vunpack.c.h.b16 %v6621
        %v6875 = vunpack.c.l.b16 %v6622
        %v6876 = vunpack.c.h.b16 %v6622
        %v6877 = vunpack.c.l.b16 %v6623
        %v6878 = vunpack.c.h.b16 %v6623
        %v6879 = vunpack.c.l.b16 %v6624
        %v6880 = vunpack.c.h.b16 %v6624
        %v6881 = vunpack.c.l.b16 %v6625
        %v6882 = vunpack.c.h.b16 %v6625
        %v6883 = vunpack.c.l.b16 %v6626
        %v6884 = vunpack.c.h.b16 %v6626
        %v6885 = vunpack.c.l.b16 %v6627
        %v6886 = vunpack.c.h.b16 %v6627
        %v6887 = vunpack.c.l.b16 %v6628
        %v6888 = vunpack.c.h.b16 %v6628
        %v6889 = vunpack.c.l.b16 %v6629
        %v6890 = vunpack.c.h.b16 %v6629
        %v6891 = vunpack.c.l.b16 %v6630
        %v6892 = vunpack.c.h.b16 %v6630
        %v6893 = vunpack.c.l.b16 %v6631
        %v6894 = vunpack.c.h.b16 %v6631
        %v6895 = vunpack.c.l.b16 %v6632
        %v6896 = vunpack.c.h.b16 %v6632
        %v6897 = vunpack.c.l.b16 %v6633
        %v6898 = vunpack.c.h.b16 %v6633
        %v6899 = vunpack.c.l.b16 %v6634
        %v6900 = vunpack.c.h.b16 %v6634
        %v6901 = vunpack.c.l.b16 %v6635
        %v6902 = vunpack.c.h.b16 %v6635
        %v6903 = vunpack.c.l.b16 %v6636
        %v6904 = vunpack.c.h.b16 %v6636
        %v6905 = vunpack.c.l.b16 %v6637
        %v6906 = vunpack.c.h.b16 %v6637
        %v6907 = vunpack.c.l.b16 %v6638
        %v6908 = vunpack.c.h.b16 %v6638
        %v6909 = vunpack.c.l.b16 %v6639
        %v6910 = vunpack.c.h.b16 %v6639
        %v6911 = vunpack.c.l.b16 %v6640
        %v6912 = vunpack.c.h.b16 %v6640
        %v6913 = vunpack.c.l.b16 %v6641
        %v6914 = vunpack.c.h.b16 %v6641
        %v6915 = vunpack.c.l.b16 %v6642
        %v6916 = vunpack.c.h.b16 %v6642
        %v6917 = vunpack.c.l.b16 %v6643
        %v6918 = vunpack.c.h.b16 %v6643
        %v6919 = vunpack.c.l.b16 %v6644
        %v6920 = vunpack.c.h.b16 %v6644
        %v6921 = vunpack.c.l.b16 %v6645
        %v6922 = vunpack.c.h.b16 %v6645
        %v6923 = vunpack.c.l.b16 %v6646
        %v6924 = vunpack.c.h.b16 %v6646
        %v6925 = vunpack.c.l.b16 %v6647
        %v6926 = vunpack.c.h.b16 %v6647
        %v6927 = vunpack.c.l.b16 %v6648
        %v6928 = vunpack.c.h.b16 %v6648
        %v6929 = vunpack.c.l.b16 %v6649
        %v6930 = vunpack.c.h.b16 %v6649
        %v6931 = vunpack.c.l.b16 %v6650
        %v6932 = vunpack.c.h.b16 %v6650
        %v6933 = vunpack.c.l.b16 %v6651
        %v6934 = vunpack.c.h.b16 %v6651
        %v6935 = vunpack.c.l.b16 %v6652
        %v6936 = vunpack.c.h.b16 %v6652
        %v6937 = vunpack.c.l.b16 %v6653
        %v6938 = vunpack.c.h.b16 %v6653
        %v6939 = vunpack.c.l.b16 %v6654
        %v6940 = vunpack.c.h.b16 %v6654
        %v6941 = vunpack.c.l.b16 %v6655
        %v6942 = vunpack.c.h.b16 %v6655
        %v6943 = vunpack.c.l.b16 %v6656
        %v6944 = vunpack.c.h.b16 %v6656
        %v6945 = vpack.c.b16 %v6755, %v6753
        %v6946 = vpack.c.b16 %v6756, %v6754
        %v6947 = vpack.c.b16 %v6759, %v6757
        %v6948 = vpack.c.b16 %v6760, %v6758
        %v6949 = vpack.c.b16 %v6763, %v6761
        %v6950 = vpack.c.b16 %v6764, %v6762
        %v6951 = vpack.c.b16 %v6767, %v6765
        %v6952 = vpack.c.b16 %v6768, %v6766
        %v6953 = vpack.c.b16 %v6771, %v6769
        %v6954 = vpack.c.b16 %v6772, %v6770
        %v6955 = vpack.c.b16 %v6775, %v6773
        %v6956 = vpack.c.b16 %v6776, %v6774
        %v6957 = vpack.c.b16 %v6779, %v6777
        %v6958 = vpack.c.b16 %v6780, %v6778
        %v6959 = vpack.c.b16 %v6783, %v6781
        %v6960 = vpack.c.b16 %v6784, %v6782
        %v6961 = vpack.c.b16 %v6787, %v6785
        %v6962 = vpack.c.b16 %v6788, %v6786
        %v6963 = vpack.c.b16 %v6791, %v6789
        %v6964 = vpack.c.b16 %v6792, %v6790
        %v6965 = vpack.c.b16 %v6795, %v6793
        %v6966 = vpack.c.b16 %v6796, %v6794
        %v6967 = vpack.c.b16 %v6799, %v6797
        %v6968 = vpack.c.b16 %v6800, %v6798
        %v6969 = vpack.c.b16 %v6803, %v6801
        %v6970 = vpack.c.b16 %v6804, %v6802
        %v6971 = vpack.c.b16 %v6807, %v6805
        %v6972 = vpack.c.b16 %v6808, %v6806
        %v6973 = vpack.c.b16 %v6811, %v6809
        %v6974 = vpack.c.b16 %v6812, %v6810
        %v6975 = vpack.c.b16 %v6815, %v6813
        %v6976 = vpack.c.b16 %v6816, %v6814
        %v6977 = vpack.c.b16 %v6819, %v6817
        %v6978 = vpack.c.b16 %v6820, %v6818
        %v6979 = vpack.c.b16 %v6823, %v6821
        %v6980 = vpack.c.b16 %v6824, %v6822
        %v6981 = vpack.c.b16 %v6827, %v6825
        %v6982 = vpack.c.b16 %v6828, %v6826
        %v6983 = vpack.c.b16 %v6831, %v6829
        %v6984 = vpack.c.b16 %v6832, %v6830
        %v6985 = vpack.c.b16 %v6835, %v6833
        %v6986 = vpack.c.b16 %v6836, %v6834
        %v6987 = vpack.c.b16 %v6839, %v6837
        %v6988 = vpack.c.b16 %v6840, %v6838
        %v6989 = vpack.c.b16 %v6843, %v6841
        %v6990 = vpack.c.b16 %v6844, %v6842
        %v6991 = vpack.c.b16 %v6847, %v6845
        %v6992 = vpack.c.b16 %v6848, %v6846
        %v6993 = vpack.c.b16 %v6851, %v6849
        %v6994 = vpack.c.b16 %v6852, %v6850
        %v6995 = vpack.c.b16 %v6855, %v6853
        %v6996 = vpack.c.b16 %v6856, %v6854
        %v6997 = vpack.c.b16 %v6859, %v6857
        %v6998 = vpack.c.b16 %v6860, %v6858
        %v6999 = vpack.c.b16 %v6863, %v6861
        %v7000 = vpack.c.b16 %v6864, %v6862
        %v7001 = vpack.c.b16 %v6867, %v6865
        %v7002 = vpack.c.b16 %v6868, %v6866
        %v7003 = vpack.c.b16 %v6871, %v6869
        %v7004 = vpack.c.b16 %v6872, %v6870
        %v7005 = vpack.c.b16 %v6875, %v6873
        %v7006 = vpack.c.b16 %v6876, %v6874
        %v7007 = vpack.c.b16 %v6879, %v6877
        %v7008 = vpack.c.b16 %v6880, %v6878
        %v7009 = vpack.c.b16 %v6883, %v6881
        %v7010 = vpack.c.b16 %v6884, %v6882
        %v7011 = vpack.c.b16 %v6887, %v6885
        %v7012 = vpack.c.b16 %v6888, %v6886
        %v7013 = vpack.c.b16 %v6891, %v6889
        %v7014 = vpack.c.b16 %v6892, %v6890
        %v7015 = vpack.c.b16 %v6895, %v6893
        %v7016 = vpack.c.b16 %v6896, %v6894
        %v7017 = vpack.c.b16 %v6899, %v6897
        %v7018 = vpack.c.b16 %v6900, %v6898
        %v7019 = vpack.c.b16 %v6903, %v6901
        %v7020 = vpack.c.b16 %v6904, %v6902
        %v7021 = vpack.c.b16 %v6907, %v6905
        %v7022 = vpack.c.b16 %v6908, %v6906
        %v7023 = vpack.c.b16 %v6911, %v6909
        %v7024 = vpack.c.b16 %v6912, %v6910
        %v7025 = vpack.c.b16 %v6915, %v6913
        %v7026 = vpack.c.b16 %v6916, %v6914
        %v7027 = vpack.c.b16 %v6919, %v6917
        %v7028 = vpack.c.b16 %v6920, %v6918
        %v7029 = vpack.c.b16 %v6923, %v6921
        %v7030 = vpack.c.b16 %v6924, %v6922
        %v7031 = vpack.c.b16 %v6927, %v6925
        %v7032 = vpack.c.b16 %v6928, %v6926
        %v7033 = vpack.c.b16 %v6931, %v6929
        %v7034 = vpack.c.b16 %v6932, %v6930
        %v7035 = vpack.c.b16 %v6935, %v6933
        %v7036 = vpack.c.b16 %v6936, %v6934
        %v7037 = vpack.c.b16 %v6939, %v6937
        %v7038 = vpack.c.b16 %v6940, %v6938
        %v7039 = vpack.c.b16 %v6943, %v6941
        %v7040 = vpack.c.b16 %v6944, %v6942
        %7137 = vmatprep.subr.bf16.mxu0 %v6946
        %7138 = vmatpush1.bf16.msra.mxu0 %v6945
        %7139 = vmatprep.subr.bf16.mxu0 %v6948
        %7140 = vmatpush1.bf16.msra.mxu0 %v6947
        %7141 = vmatprep.subr.bf16.mxu0 %v6950
        %7142 = vmatpush1.bf16.msra.mxu0 %v6949
        %7143 = vmatprep.subr.bf16.mxu0 %v6952
        %7144 = vmatpush1.bf16.msra.mxu0 %v6951
        %7145 = vmatprep.subr.bf16.mxu0 %v6954
        %7146 = vmatpush1.bf16.msra.mxu0 %v6953
        %7147 = vmatprep.subr.bf16.mxu0 %v6956
        %7148 = vmatpush1.bf16.msra.mxu0 %v6955
        %7149 = vmatprep.subr.bf16.mxu0 %v6958
        %7150 = vmatpush1.bf16.msra.mxu0 %v6957
        %7151 = vmatprep.subr.bf16.mxu0 %v6960
        %7152 = vmatpush1.bf16.msra.mxu0 %v6959
        %7153 = vmatprep.subr.bf16.mxu0 %v6962
        %7154 = vmatpush1.bf16.msra.mxu0 %v6961
        %7155 = vmatprep.subr.bf16.mxu0 %v6964
        %7156 = vmatpush1.bf16.msra.mxu0 %v6963
        %7157 = vmatprep.subr.bf16.mxu0 %v6966
        %7158 = vmatpush1.bf16.msra.mxu0 %v6965
        %7159 = vmatprep.subr.bf16.mxu0 %v6968
        %7160 = vmatpush1.bf16.msra.mxu0 %v6967
        %7161 = vmatprep.subr.bf16.mxu0 %v6970
        %7162 = vmatpush1.bf16.msra.mxu0 %v6969
        %7163 = vmatprep.subr.bf16.mxu0 %v6972
        %7164 = vmatpush1.bf16.msra.mxu0 %v6971
        %7165 = vmatprep.subr.bf16.mxu0 %v6974
        %7166 = vmatpush1.bf16.msra.mxu0 %v6973
        %7167 = vmatprep.subr.bf16.mxu0 %v6976
        %7168 = vmatpush1.bf16.msra.mxu0 %v6975
        %7169 = vmatprep.mubr.bf16.mxu0 %v6514
        %7170 = vmatmul.mubr.bf16.gmra.mrb[0].mxu0 %v6513
        %v7171 = vpop.f32.mrb[0].mxu0
        %v7172 = vadd.f32 0.0, %v7171
        %v7173 = vpop.f32.mrb[0].mxu0
        %v7174 = vadd.f32 0.0, %v7173
        %v7175 = vpop.f32.mrb[0].mxu0
        %v7176 = vadd.f32 0.0, %v7175
        %v7177 = vpop.f32.mrb[0].mxu0
        %v7178 = vadd.f32 0.0, %v7177
        %7179 = vmatprep.mubr.bf16.mxu0 %v6520
        %7180 = vmatmul.mubr.bf16.gmra.mrb[0].mxu0 %v6519
        %v7181 = vpop.f32.mrb[0].mxu0
        %v7182 = vadd.f32 0.0, %v7181
        %v7183 = vpop.f32.mrb[0].mxu0
        %v7184 = vadd.f32 0.0, %v7183
        %v7185 = vpop.f32.mrb[0].mxu0
        %v7186 = vadd.f32 0.0, %v7185
        %v7187 = vpop.f32.mrb[0].mxu0
        %v7188 = vadd.f32 0.0, %v7187
        %7189 = vmatprep.mubr.bf16.mxu0 %v6526
        %7190 = vmatmul.mubr.bf16.gmra.mrb[0].mxu0 %v6525
        %v7191 = vpop.f32.mrb[0].mxu0
        %v7192 = vadd.f32 0.0, %v7191
        %v7193 = vpop.f32.mrb[0].mxu0
        %v7194 = vadd.f32 0.0, %v7193
        %v7195 = vpop.f32.mrb[0].mxu0
        %v7196 = vadd.f32 0.0, %v7195
        %v7197 = vpop.f32.mrb[0].mxu0
        %v7198 = vadd.f32 0.0, %v7197
        %7199 = vmatprep.mubr.bf16.mxu0 %v6532
        %7200 = vmatmul.mubr.bf16.gmra.mrb[0].mxu0 %v6531
        %v7201 = vpop.f32.mrb[0].mxu0
        %v7202 = vadd.f32 0.0, %v7201
        %v7203 = vpop.f32.mrb[0].mxu0
        %v7204 = vadd.f32 0.0, %v7203
        %v7205 = vpop.f32.mrb[0].mxu0
        %v7206 = vadd.f32 0.0, %v7205
        %v7207 = vpop.f32.mrb[0].mxu0
        %v7208 = vadd.f32 0.0, %v7207
        %7209 = vmatprep.mubr.bf16.mxu0 %v6538
        %7210 = vmatmul.mubr.bf16.gmra.mrb[0].mxu0 %v6537
        %v7211 = vpop.f32.mrb[0].mxu0
        %v7212 = vadd.f32 0.0, %v7211
        %v7213 = vpop.f32.mrb[0].mxu0
        %v7214 = vadd.f32 0.0, %v7213
        %v7215 = vpop.f32.mrb[0].mxu0
        %v7216 = vadd.f32 0.0, %v7215
        %v7217 = vpop.f32.mrb[0].mxu0
        %v7218 = vadd.f32 0.0, %v7217
        %7219 = vmatprep.mubr.bf16.mxu0 %v6544
        %7220 = vmatmul.mubr.bf16.gmra.mrb[0].mxu0 %v6543
        %v7221 = vpop.f32.mrb[0].mxu0
        %v7222 = vadd.f32 0.0, %v7221
        %v7223 = vpop.f32.mrb[0].mxu0
        %v7224 = vadd.f32 0.0, %v7223
        %v7225 = vpop.f32.mrb[0].mxu0
        %v7226 = vadd.f32 0.0, %v7225
        %v7227 = vpop.f32.mrb[0].mxu0
        %v7228 = vadd.f32 0.0, %v7227
        %7229 = vmatprep.mubr.bf16.mxu0 %v6550
        %7230 = vmatmul.mubr.bf16.gmra.mrb[0].mxu0 %v6549
        %v7231 = vpop.f32.mrb[0].mxu0
        %v7232 = vadd.f32 0.0, %v7231
        %v7233 = vpop.f32.mrb[0].mxu0
        %v7234 = vadd.f32 0.0, %v7233
        %v7235 = vpop.f32.mrb[0].mxu0
        %v7236 = vadd.f32 0.0, %v7235
        %v7237 = vpop.f32.mrb[0].mxu0
        %v7238 = vadd.f32 0.0, %v7237
        %7239 = vmatprep.mubr.bf16.mxu0 %v6556
        %7240 = vmatmul.mubr.bf16.gmra.mrb[0].mxu0 %v6555
        %v7241 = vpop.f32.mrb[0].mxu0
        %v7242 = vadd.f32 0.0, %v7241
        %v7243 = vpop.f32.mrb[0].mxu0
        %v7244 = vadd.f32 0.0, %v7243
        %v7245 = vpop.f32.mrb[0].mxu0
        %v7246 = vadd.f32 0.0, %v7245
        %v7247 = vpop.f32.mrb[0].mxu0
        %v7248 = vadd.f32 0.0, %v7247
        %7249 = vdwg.mxu0
        %7250 = vmatprep.subr.bf16.mxu0 %v6978
        %7251 = vmatpush1.bf16.msra.mxu0 %v6977
        %7252 = vmatprep.subr.bf16.mxu0 %v6980
        %7253 = vmatpush1.bf16.msra.mxu0 %v6979
        %7254 = vmatprep.subr.bf16.mxu0 %v6982
        %7255 = vmatpush1.bf16.msra.mxu0 %v6981
        %7256 = vmatprep.subr.bf16.mxu0 %v6984
        %7257 = vmatpush1.bf16.msra.mxu0 %v6983
        %7258 = vmatprep.subr.bf16.mxu0 %v6986
        %7259 = vmatpush1.bf16.msra.mxu0 %v6985
        %7260 = vmatprep.subr.bf16.mxu0 %v6988
        %7261 = vmatpush1.bf16.msra.mxu0 %v6987
        %7262 = vmatprep.subr.bf16.mxu0 %v6990
        %7263 = vmatpush1.bf16.msra.mxu0 %v6989
        %7264 = vmatprep.subr.bf16.mxu0 %v6992
        %7265 = vmatpush1.bf16.msra.mxu0 %v6991
        %7266 = vmatprep.subr.bf16.mxu0 %v6994
        %7267 = vmatpush1.bf16.msra.mxu0 %v6993
        %7268 = vmatprep.subr.bf16.mxu0 %v6996
        %7269 = vmatpush1.bf16.msra.mxu0 %v6995
        %7270 = vmatprep.subr.bf16.mxu0 %v6998
        %7271 = vmatpush1.bf16.msra.mxu0 %v6997
        %7272 = vmatprep.subr.bf16.mxu0 %v7000
        %7273 = vmatpush1.bf16.msra.mxu0 %v6999
        %7274 = vmatprep.subr.bf16.mxu0 %v7002
        %7275 = vmatpush1.bf16.msra.mxu0 %v7001
        %7276 = vmatprep.subr.bf16.mxu0 %v7004
        %7277 = vmatpush1.bf16.msra.mxu0 %v7003
        %7278 = vmatprep.subr.bf16.mxu0 %v7006
        %7279 = vmatpush1.bf16.msra.mxu0 %v7005
        %7280 = vmatprep.subr.bf16.mxu0 %v7008
        %7281 = vmatpush1.bf16.msra.mxu0 %v7007
        %7282 = vmatprep.mubr.bf16.mxu0 %v6516
        %7283 = vmatmul.mubr.bf16.gmra.mrb[0].mxu0 %v6515
        %v7284 = vpop.f32.mrb[0].mxu0
        %v7285 = vadd.f32 %v7172, %v7284
        %v7286 = vpop.f32.mrb[0].mxu0
        %v7287 = vadd.f32 %v7174, %v7286
        %v7288 = vpop.f32.mrb[0].mxu0
        %v7289 = vadd.f32 %v7176, %v7288
        %v7290 = vpop.f32.mrb[0].mxu0
        %v7291 = vadd.f32 %v7178, %v7290
        %7292 = vmatprep.mubr.bf16.mxu0 %v6522
        %7293 = vmatmul.mubr.bf16.gmra.mrb[0].mxu0 %v6521
        %v7294 = vpop.f32.mrb[0].mxu0
        %v7295 = vadd.f32 %v7182, %v7294
        %v7296 = vpop.f32.mrb[0].mxu0
        %v7297 = vadd.f32 %v7184, %v7296
        %v7298 = vpop.f32.mrb[0].mxu0
        %v7299 = vadd.f32 %v7186, %v7298
        %v7300 = vpop.f32.mrb[0].mxu0
        %v7301 = vadd.f32 %v7188, %v7300
        %7302 = vmatprep.mubr.bf16.mxu0 %v6528
        %7303 = vmatmul.mubr.bf16.gmra.mrb[0].mxu0 %v6527
        %v7304 = vpop.f32.mrb[0].mxu0
        %v7305 = vadd.f32 %v7192, %v7304
        %v7306 = vpop.f32.mrb[0].mxu0
        %v7307 = vadd.f32 %v7194, %v7306
        %v7308 = vpop.f32.mrb[0].mxu0
        %v7309 = vadd.f32 %v7196, %v7308
        %v7310 = vpop.f32.mrb[0].mxu0
        %v7311 = vadd.f32 %v7198, %v7310
        %7312 = vmatprep.mubr.bf16.mxu0 %v6534
        %7313 = vmatmul.mubr.bf16.gmra.mrb[0].mxu0 %v6533
        %v7314 = vpop.f32.mrb[0].mxu0
        %v7315 = vadd.f32 %v7202, %v7314
        %v7316 = vpop.f32.mrb[0].mxu0
        %v7317 = vadd.f32 %v7204, %v7316
        %v7318 = vpop.f32.mrb[0].mxu0
        %v7319 = vadd.f32 %v7206, %v7318
        %v7320 = vpop.f32.mrb[0].mxu0
        %v7321 = vadd.f32 %v7208, %v7320
        %7322 = vmatprep.mubr.bf16.mxu0 %v6540
        %7323 = vmatmul.mubr.bf16.gmra.mrb[0].mxu0 %v6539
        %v7324 = vpop.f32.mrb[0].mxu0
        %v7325 = vadd.f32 %v7212, %v7324
        %v7326 = vpop.f32.mrb[0].mxu0
        %v7327 = vadd.f32 %v7214, %v7326
        %v7328 = vpop.f32.mrb[0].mxu0
        %v7329 = vadd.f32 %v7216, %v7328
        %v7330 = vpop.f32.mrb[0].mxu0
        %v7331 = vadd.f32 %v7218, %v7330
        %7332 = vmatprep.mubr.bf16.mxu0 %v6546
        %7333 = vmatmul.mubr.bf16.gmra.mrb[0].mxu0 %v6545
        %v7334 = vpop.f32.mrb[0].mxu0
        %v7335 = vadd.f32 %v7222, %v7334
        %v7336 = vpop.f32.mrb[0].mxu0
        %v7337 = vadd.f32 %v7224, %v7336
        %v7338 = vpop.f32.mrb[0].mxu0
        %v7339 = vadd.f32 %v7226, %v7338
        %v7340 = vpop.f32.mrb[0].mxu0
        %v7341 = vadd.f32 %v7228, %v7340
        %7342 = vmatprep.mubr.bf16.mxu0 %v6552
        %7343 = vmatmul.mubr.bf16.gmra.mrb[0].mxu0 %v6551
        %v7344 = vpop.f32.mrb[0].mxu0
        %v7345 = vadd.f32 %v7232, %v7344
        %v7346 = vpop.f32.mrb[0].mxu0
        %v7347 = vadd.f32 %v7234, %v7346
        %v7348 = vpop.f32.mrb[0].mxu0
        %v7349 = vadd.f32 %v7236, %v7348
        %v7350 = vpop.f32.mrb[0].mxu0
        %v7351 = vadd.f32 %v7238, %v7350
        %7352 = vmatprep.mubr.bf16.mxu0 %v6558
        %7353 = vmatmul.mubr.bf16.gmra.mrb[0].mxu0 %v6557
        %v7354 = vpop.f32.mrb[0].mxu0
        %v7355 = vadd.f32 %v7242, %v7354
        %v7356 = vpop.f32.mrb[0].mxu0
        %v7357 = vadd.f32 %v7244, %v7356
        %v7358 = vpop.f32.mrb[0].mxu0
        %v7359 = vadd.f32 %v7246, %v7358
        %v7360 = vpop.f32.mrb[0].mxu0
        %v7361 = vadd.f32 %v7248, %v7360
        %7362 = vdwg.mxu0
        %7363 = vmatprep.subr.bf16.mxu0 %v7010
        %7364 = vmatpush1.bf16.msra.mxu0 %v7009
        %7365 = vmatprep.subr.bf16.mxu0 %v7012
        %7366 = vmatpush1.bf16.msra.mxu0 %v7011
        %7367 = vmatprep.subr.bf16.mxu0 %v7014
        %7368 = vmatpush1.bf16.msra.mxu0 %v7013
        %7369 = vmatprep.subr.bf16.mxu0 %v7016
        %7370 = vmatpush1.bf16.msra.mxu0 %v7015
        %7371 = vmatprep.subr.bf16.mxu0 %v7018
        %7372 = vmatpush1.bf16.msra.mxu0 %v7017
        %7373 = vmatprep.subr.bf16.mxu0 %v7020
        %7374 = vmatpush1.bf16.msra.mxu0 %v7019
        %7375 = vmatprep.subr.bf16.mxu0 %v7022
        %7376 = vmatpush1.bf16.msra.mxu0 %v7021
        %7377 = vmatprep.subr.bf16.mxu0 %v7024
        %7378 = vmatpush1.bf16.msra.mxu0 %v7023
        %7379 = vmatprep.subr.bf16.mxu0 %v7026
        %7380 = vmatpush1.bf16.msra.mxu0 %v7025
        %7381 = vmatprep.subr.bf16.mxu0 %v7028
        %7382 = vmatpush1.bf16.msra.mxu0 %v7027
        %7383 = vmatprep.subr.bf16.mxu0 %v7030
        %7384 = vmatpush1.bf16.msra.mxu0 %v7029
        %7385 = vmatprep.subr.bf16.mxu0 %v7032
        %7386 = vmatpush1.bf16.msra.mxu0 %v7031
        %7387 = vmatprep.subr.bf16.mxu0 %v7034
        %7388 = vmatpush1.bf16.msra.mxu0 %v7033
        %7389 = vmatprep.subr.bf16.mxu0 %v7036
        %7390 = vmatpush1.bf16.msra.mxu0 %v7035
        %7391 = vmatprep.subr.bf16.mxu0 %v7038
        %7392 = vmatpush1.bf16.msra.mxu0 %v7037
        %7393 = vmatprep.subr.bf16.mxu0 %v7040
        %7394 = vmatpush1.bf16.msra.mxu0 %v7039
        %7395 = vmatprep.mubr.bf16.mxu0 %v6518
        %7396 = vmatmul.mubr.bf16.gmra.mrb[0].mxu0 %v6517
        %v7397 = vpop.f32.mrb[0].mxu0
        %v7398 = vadd.f32 %v7285, %v7397
        %v7399 = vpop.f32.mrb[0].mxu0
        %v7400 = vadd.f32 %v7287, %v7399
        %v7401 = vpop.f32.mrb[0].mxu0
        %v7402 = vadd.f32 %v7289, %v7401
        %v7403 = vpop.f32.mrb[0].mxu0
        %v7404 = vadd.f32 %v7291, %v7403
        %7405 = vmatprep.mubr.bf16.mxu0 %v6524
        %7406 = vmatmul.mubr.bf16.gmra.mrb[0].mxu0 %v6523
        %v7407 = vpop.f32.mrb[0].mxu0
        %v7408 = vadd.f32 %v7295, %v7407
        %v7409 = vpop.f32.mrb[0].mxu0
        %v7410 = vadd.f32 %v7297, %v7409
        %v7411 = vpop.f32.mrb[0].mxu0
        %v7412 = vadd.f32 %v7299, %v7411
        %v7413 = vpop.f32.mrb[0].mxu0
        %v7414 = vadd.f32 %v7301, %v7413
        %7415 = vmatprep.mubr.bf16.mxu0 %v6530
        %7416 = vmatmul.mubr.bf16.gmra.mrb[0].mxu0 %v6529
        %v7417 = vpop.f32.mrb[0].mxu0
        %v7418 = vadd.f32 %v7305, %v7417
        %v7419 = vpop.f32.mrb[0].mxu0
        %v7420 = vadd.f32 %v7307, %v7419
        %v7421 = vpop.f32.mrb[0].mxu0
        %v7422 = vadd.f32 %v7309, %v7421
        %v7423 = vpop.f32.mrb[0].mxu0
        %v7424 = vadd.f32 %v7311, %v7423
        %7425 = vmatprep.mubr.bf16.mxu0 %v6536
        %7426 = vmatmul.mubr.bf16.gmra.mrb[0].mxu0 %v6535
        %v7427 = vpop.f32.mrb[0].mxu0
        %v7428 = vadd.f32 %v7315, %v7427
        %v7429 = vpop.f32.mrb[0].mxu0
        %v7430 = vadd.f32 %v7317, %v7429
        %v7431 = vpop.f32.mrb[0].mxu0
        %v7432 = vadd.f32 %v7319, %v7431
        %v7433 = vpop.f32.mrb[0].mxu0
        %v7434 = vadd.f32 %v7321, %v7433
        %7435 = vmatprep.mubr.bf16.mxu0 %v6542
        %7436 = vmatmul.mubr.bf16.gmra.mrb[0].mxu0 %v6541
        %v7437 = vpop.f32.mrb[0].mxu0
        %v7438 = vadd.f32 %v7325, %v7437
        %v7439 = vpop.f32.mrb[0].mxu0
        %v7440 = vadd.f32 %v7327, %v7439
        %v7441 = vpop.f32.mrb[0].mxu0
        %v7442 = vadd.f32 %v7329, %v7441
        %v7443 = vpop.f32.mrb[0].mxu0
        %v7444 = vadd.f32 %v7331, %v7443
        %7445 = vmatprep.mubr.bf16.mxu0 %v6548
        %7446 = vmatmul.mubr.bf16.gmra.mrb[0].mxu0 %v6547
        %v7447 = vpop.f32.mrb[0].mxu0
        %v7448 = vadd.f32 %v7335, %v7447
        %v7449 = vpop.f32.mrb[0].mxu0
        %v7450 = vadd.f32 %v7337, %v7449
        %v7451 = vpop.f32.mrb[0].mxu0
        %v7452 = vadd.f32 %v7339, %v7451
        %v7453 = vpop.f32.mrb[0].mxu0
        %v7454 = vadd.f32 %v7341, %v7453
        %7455 = vmatprep.mubr.bf16.mxu0 %v6554
        %7456 = vmatmul.mubr.bf16.gmra.mrb[0].mxu0 %v6553
        %v7457 = vpop.f32.mrb[0].mxu0
        %v7458 = vadd.f32 %v7345, %v7457
        %v7459 = vpop.f32.mrb[0].mxu0
        %v7460 = vadd.f32 %v7347, %v7459
        %v7461 = vpop.f32.mrb[0].mxu0
        %v7462 = vadd.f32 %v7349, %v7461
        %v7463 = vpop.f32.mrb[0].mxu0
        %v7464 = vadd.f32 %v7351, %v7463
        %7465 = vmatprep.mubr.bf16.mxu0 %v6560
        %7466 = vmatmul.mubr.bf16.gmra.mrb[0].mxu0 %v6559
        %v7467 = vpop.f32.mrb[0].mxu0
        %v7468 = vadd.f32 %v7355, %v7467
        %v7469 = vpop.f32.mrb[0].mxu0
        %v7470 = vadd.f32 %v7357, %v7469
        %v7471 = vpop.f32.mrb[0].mxu0
        %v7472 = vadd.f32 %v7359, %v7471
        %v7473 = vpop.f32.mrb[0].mxu0
        %v7474 = vadd.f32 %v7361, %v7473
        %7475 = vdwg.mxu0
        %v7476 = vadd.f32 %v4398, %v7398
        %v7477 = vadd.f32 %v4399, %v7400
        %v7478 = vadd.f32 %v4400, %v7402
        %v7479 = vadd.f32 %v4401, %v7404
        %v7480 = vadd.f32 %v4402, %v7408
        %v7481 = vadd.f32 %v4403, %v7410
        %v7482 = vadd.f32 %v4404, %v7412
        %v7483 = vadd.f32 %v4405, %v7414
        %v7484 = vadd.f32 %v4406, %v7418
        %v7485 = vadd.f32 %v4407, %v7420
        %v7486 = vadd.f32 %v4408, %v7422
        %v7487 = vadd.f32 %v4409, %v7424
        %v7488 = vadd.f32 %v4410, %v7428
        %v7489 = vadd.f32 %v4411, %v7430
        %v7490 = vadd.f32 %v4412, %v7432
        %v7491 = vadd.f32 %v4413, %v7434
        %v7492 = vadd.f32 %v4414, %v7438
        %v7493 = vadd.f32 %v4415, %v7440
        %v7494 = vadd.f32 %v4416, %v7442
        %v7495 = vadd.f32 %v4417, %v7444
        %v7496 = vadd.f32 %v4418, %v7448
        %v7497 = vadd.f32 %v4419, %v7450
        %v7498 = vadd.f32 %v4420, %v7452
        %v7499 = vadd.f32 %v4421, %v7454
        %v7500 = vadd.f32 %v4422, %v7458
        %v7501 = vadd.f32 %v4423, %v7460
        %v7502 = vadd.f32 %v4424, %v7462
        %v7503 = vadd.f32 %v4425, %v7464
        %v7504 = vadd.f32 %v4426, %v7468
        %v7505 = vadd.f32 %v4427, %v7470
        %v7506 = vadd.f32 %v4428, %v7472
        %v7507 = vadd.f32 %v4429, %v7474
        %v7508 = vld [vmem:[%s908] sm:$0x3]
        %v7510 = vlaneseq
        %v7511 = vshrl.u32 %v7510, 7
        %v7512 = vsub.s32 0, %v7511
        %v7513 = vrot.slane %v7508, %v7512
        %v7514 = vlaneseq
        %v7515 = vshrl.u32 %v7514, 7
        %v7516 = vsub.s32 1, %v7515
        %v7517 = vrot.slane %v7508, %v7516
        %v7520 = vadd.f32 %v7476, %v7513
        %v7521 = vadd.f32 %v7477, %v7517
        %v7522 = vadd.f32 %v7478, %v7513
        %v7523 = vadd.f32 %v7479, %v7517
        %v7524 = vadd.f32 %v7480, %v7513
        %v7525 = vadd.f32 %v7481, %v7517
        %v7526 = vadd.f32 %v7482, %v7513
        %v7527 = vadd.f32 %v7483, %v7517
        %v7528 = vadd.f32 %v7484, %v7513
        %v7529 = vadd.f32 %v7485, %v7517
        %v7530 = vadd.f32 %v7486, %v7513
        %v7531 = vadd.f32 %v7487, %v7517
        %v7532 = vadd.f32 %v7488, %v7513
        %v7533 = vadd.f32 %v7489, %v7517
        %v7534 = vadd.f32 %v7490, %v7513
        %v7535 = vadd.f32 %v7491, %v7517
        %v7536 = vadd.f32 %v7492, %v7513
        %v7537 = vadd.f32 %v7493, %v7517
        %v7538 = vadd.f32 %v7494, %v7513
        %v7539 = vadd.f32 %v7495, %v7517
        %v7540 = vadd.f32 %v7496, %v7513
        %v7541 = vadd.f32 %v7497, %v7517
        %v7542 = vadd.f32 %v7498, %v7513
        %v7543 = vadd.f32 %v7499, %v7517
        %v7544 = vadd.f32 %v7500, %v7513
        %v7545 = vadd.f32 %v7501, %v7517
        %v7546 = vadd.f32 %v7502, %v7513
        %v7547 = vadd.f32 %v7503, %v7517
        %v7548 = vadd.f32 %v7504, %v7513
        %v7549 = vadd.f32 %v7505, %v7517
        %v7550 = vadd.f32 %v7506, %v7513
        %v7551 = vadd.f32 %v7507, %v7517
        %7552 = vst [vmem:[#allocation2] sm:$0xff] %v7520
        %7553 = vst.msk [vmem:[#allocation2 + $0x8] sm:$0xff] %vm1414, %v7521
        %7554 = vst [vmem:[#allocation2 + $0x10] sm:$0xff] %v7522
        %7555 = vst.msk [vmem:[#allocation2 + $0x18] sm:$0xff] %vm1414, %v7523
        %7556 = vst [vmem:[#allocation2 + $0x20] sm:$0xff] %v7524
        %7557 = vst.msk [vmem:[#allocation2 + $0x28] sm:$0xff] %vm1414, %v7525
        %7558 = vst [vmem:[#allocation2 + $0x30] sm:$0xff] %v7526
        %7559 = vst.msk [vmem:[#allocation2 + $0x38] sm:$0xff] %vm1414, %v7527
        %7560 = vst [vmem:[#allocation2 + $0x40] sm:$0xff] %v7528
        %7561 = vst.msk [vmem:[#allocation2 + $0x48] sm:$0xff] %vm1414, %v7529
        %7562 = vst [vmem:[#allocation2 + $0x50] sm:$0xff] %v7530
        %7563 = vst.msk [vmem:[#allocation2 + $0x58] sm:$0xff] %vm1414, %v7531
        %7564 = vst [vmem:[#allocation2 + $0x60] sm:$0xff] %v7532
        %7565 = vst.msk [vmem:[#allocation2 + $0x68] sm:$0xff] %vm1414, %v7533
        %7566 = vst [vmem:[#allocation2 + $0x70] sm:$0xff] %v7534
        %7567 = vst.msk [vmem:[#allocation2 + $0x78] sm:$0xff] %vm1414, %v7535
        %7568 = vst [vmem:[#allocation2 + $0x80] sm:$0xff] %v7536
        %7569 = vst.msk [vmem:[#allocation2 + $0x88] sm:$0xff] %vm1414, %v7537
        %7570 = vst [vmem:[#allocation2 + $0x90] sm:$0xff] %v7538
        %7571 = vst.msk [vmem:[#allocation2 + $0x98] sm:$0xff] %vm1414, %v7539
        %7572 = vst [vmem:[#allocation2 + $0xa0] sm:$0xff] %v7540
        %7573 = vst.msk [vmem:[#allocation2 + $0xa8] sm:$0xff] %vm1414, %v7541
        %7574 = vst [vmem:[#allocation2 + $0xb0] sm:$0xff] %v7542
        %7575 = vst.msk [vmem:[#allocation2 + $0xb8] sm:$0xff] %vm1414, %v7543
        %7576 = vst [vmem:[#allocation2 + $0xc0] sm:$0xff] %v7544
        %7577 = vst.msk [vmem:[#allocation2 + $0xc8] sm:$0xff] %vm1414, %v7545
        %7578 = vst [vmem:[#allocation2 + $0xd0] sm:$0xff] %v7546
        %7579 = vst.msk [vmem:[#allocation2 + $0xd8] sm:$0xff] %vm1414, %v7547
        %7580 = vst [vmem:[#allocation2 + $0xe0] sm:$0xff] %v7548
        %7581 = vst.msk [vmem:[#allocation2 + $0xe8] sm:$0xff] %vm1414, %v7549
        %7582 = vst [vmem:[#allocation2 + $0xf0] sm:$0xff] %v7550
        %7583 = vst.msk [vmem:[#allocation2 + $0xf8] sm:$0xff] %vm1414, %v7551
        %p7584 = scmp.eq.s32.totalorder %s41, 1
        // Predicated region
        $region113: #{ast_forward.1} parent=107 // pred_check
          %p7585 = pneg %p7584
        $region114: #{ast_forward.1} parent=107 // pred_check_branch
          %7587 = sbr.rel (%p7585) target = $region116
        $region115: #{ast_forward.1} parent=107 // pred_region
          %v7588 = vld [vmem:[%s16] sm:$0x3]
          %v7589 = vld [vmem:[%s17] sm:$0x3]
          %vm7590 = vcmask 1041408
          %v7591 = vsel %vm7590, %v7520, 0.0
          %vm7592 = vcmask 517120
          %v7593 = vsel %vm7592, %v7521, 0.0
          %v7594 = vadd.f32 %v7591, %v7593
          %7595 = vadd.xlane.f32.xlu0 %v7594
          %v7596 = vpop.xlane.xlu0 %7595
          %v7597 = vmul.f32 %v7596, %v1479
          %v7598 = vsub.f32 %v7520, %v7597
          %v7599 = vsub.f32 %v7521, %v7597
          %v7600 = vmul.f32 %v7598, %v7598
          %v7601 = vmul.f32 %v7599, %v7599
          %v7602 = vsel %vm7590, %v7600, 0.0
          %v7603 = vsel %vm7592, %v7601, 0.0
          %v7604 = vadd.f32 %v7602, %v7603
          %7605 = vadd.xlane.f32.xlu0 %v7604
          %v7606 = vpop.xlane.xlu0 %7605
          %v7607 = vmul.f32 %v7606, %v1479
          %v7608 = vadd.f32 %v7607, 1e-06
          %v7609 = vrsqrt.pop %v7608
          %v7610 = vmul.f32 %v7598, %v7609
          %v7611 = vmul.f32 %v7599, %v7609
          %v7613 = vlaneseq
          %v7614 = vshrl.u32 %v7613, 7
          %v7615 = vsub.s32 0, %v7614
          %v7616 = vrot.slane %v7588, %v7615
          %v7617 = vlaneseq
          %v7618 = vshrl.u32 %v7617, 7
          %v7619 = vsub.s32 1, %v7618
          %v7620 = vrot.slane %v7588, %v7619
          %v7623 = vmul.f32 %v7610, %v7616
          %v7624 = vmul.f32 %v7611, %v7620
          %v7626 = vlaneseq
          %v7627 = vshrl.u32 %v7626, 7
          %v7628 = vsub.s32 0, %v7627
          %v7629 = vrot.slane %v7589, %v7628
          %v7630 = vlaneseq
          %v7631 = vshrl.u32 %v7630, 7
          %v7632 = vsub.s32 1, %v7631
          %v7633 = vrot.slane %v7589, %v7632
          %v7636 = vadd.f32 %v7623, %v7629
          %v7637 = vadd.f32 %v7624, %v7633
          %v7640 = vrot.slane %v7636, 1
          %v7641 = vrot.slane %v7637, 1
          %v7644 = vadd.f32 %v7636, %v7640
          %v7645 = vadd.f32 %v7637, %v7641
          %v7646 = vmul.f32 %v7644, 0.5
          %v7647 = vmul.f32 %v7645, 0.5
          %v7648 = vld [vmem:[%s18] sm:$0x3]
          %v7649 = vld [vmem:[%s19] sm:$0x3]
          %vm7650 = vcmask 1040384
          %v7651 = vsel %vm7650, %v7646, 0.0
          %vm7652 = vcmask 516096
          %v7653 = vsel %vm7652, %v7647, 0.0
          %v7654 = vadd.f32 %v7651, %v7653
          %7655 = vadd.xlane.f32.xlu0 %v7654
          %v7656 = vpop.xlane.xlu0 %7655
          %v7657 = vmul.f32 %v7656, %v1479
          %v7658 = vsub.f32 %v7646, %v7657
          %v7659 = vsub.f32 %v7647, %v7657
          %v7660 = vmul.f32 %v7658, %v7658
          %v7661 = vmul.f32 %v7659, %v7659
          %v7662 = vsel %vm7650, %v7660, 0.0
          %v7663 = vsel %vm7652, %v7661, 0.0
          %v7664 = vadd.f32 %v7662, %v7663
          %7665 = vadd.xlane.f32.xlu0 %v7664
          %v7666 = vpop.xlane.xlu0 %7665
          %v7667 = vmul.f32 %v7666, %v1479
          %v7668 = vadd.f32 %v7667, 1e-05
          %v7669 = vrsqrt.pop %v7668
          %v7670 = vmul.f32 %v7658, %v7669
          %v7671 = vmul.f32 %v7659, %v7669
          %v7673 = vlaneseq
          %v7674 = vshrl.u32 %v7673, 7
          %v7675 = vsub.s32 0, %v7674
          %v7676 = vrot.slane %v7648, %v7675
          %v7677 = vlaneseq
          %v7678 = vshrl.u32 %v7677, 7
          %v7679 = vsub.s32 1, %v7678
          %v7680 = vrot.slane %v7648, %v7679
          %v7683 = vmul.f32 %v7670, %v7676
          %v7684 = vmul.f32 %v7671, %v7680
          %v7686 = vlaneseq
          %v7687 = vshrl.u32 %v7686, 7
          %v7688 = vsub.s32 0, %v7687
          %v7689 = vrot.slane %v7649, %v7688
          %v7690 = vlaneseq
          %v7691 = vshrl.u32 %v7690, 7
          %v7692 = vsub.s32 1, %v7691
          %v7693 = vrot.slane %v7649, %v7692
          %v7696 = vadd.f32 %v7683, %v7689
          %v7697 = vadd.f32 %v7684, %v7693
          %v7698 = vld [vmem:[%s20] sm:$0xff]
          %v7699 = vld [vmem:[%s20 + $0x8] sm:$0xff]
          %v7700 = vld [vmem:[%s20 + $0x10] sm:$0xff]
          %v7701 = vld [vmem:[%s20 + $0x18] sm:$0xff]
          %v7702 = vld [vmem:[%s20 + $0x20] sm:$0xff]
          %v7703 = vld [vmem:[%s20 + $0x28] sm:$0xff]
          %v7704 = vld [vmem:[%s20 + $0x30] sm:$0xff]
          %v7705 = vld [vmem:[%s20 + $0x38] sm:$0xff]
          %v7706 = vld [vmem:[%s20 + $0x40] sm:$0xff]
          %v7707 = vld [vmem:[%s20 + $0x48] sm:$0xff]
          %v7708 = vld [vmem:[%s20 + $0x50] sm:$0xff]
          %v7709 = vld [vmem:[%s20 + $0x58] sm:$0xff]
          %v7710 = vld [vmem:[%s20 + $0x60] sm:$0xff]
          %v7711 = vld [vmem:[%s20 + $0x68] sm:$0xff]
          %v7712 = vld [vmem:[%s20 + $0x70] sm:$0xff]
          %v7713 = vld [vmem:[%s20 + $0x78] sm:$0xff]
          %v7714 = vld [vmem:[%s20 + $0x80] sm:$0xff]
          %v7715 = vld [vmem:[%s20 + $0x88] sm:$0xff]
          %v7716 = vld [vmem:[%s20 + $0x90] sm:$0xff]
          %v7717 = vld [vmem:[%s20 + $0x98] sm:$0xff]
          %v7718 = vld [vmem:[%s20 + $0xa0] sm:$0xff]
          %v7719 = vld [vmem:[%s20 + $0xa8] sm:$0xff]
          %v7720 = vld [vmem:[%s20 + $0xb0] sm:$0xff]
          %v7721 = vld [vmem:[%s20 + $0xb8] sm:$0xff]
          %v7722 = vld [vmem:[%s21] sm:$0x1]
          %v7724 = vsel %vm1414, %v7697, 0
          %7726 = vmatprep.subr.mxu0 0.0
          %7727 = vmatpush1.msra.mxu0 %v7698
          %7728 = vmatprep.subr.mxu0 0.0
          %7729 = vmatpush1.msra.mxu0 %v7699
          %7730 = vmatprep.subr.mxu0 0.0
          %7731 = vmatpush1.msra.mxu0 %v7700
          %7732 = vmatprep.subr.mxu0 0.0
          %7733 = vmatpush1.msra.mxu0 %v7701
          %7734 = vmatprep.subr.mxu0 0.0
          %7735 = vmatpush1.msra.mxu0 %v7702
          %7736 = vmatprep.subr.mxu0 0.0
          %7737 = vmatpush1.msra.mxu0 %v7703
          %7738 = vmatprep.subr.mxu0 0.0
          %7739 = vmatpush1.msra.mxu0 %v7704
          %7740 = vmatprep.subr.mxu0 0.0
          %7741 = vmatpush1.msra.mxu0 %v7705
          %7742 = vmatprep.subr.mxu0 0.0
          %7743 = vmatpush1.msra.mxu0 %v7706
          %7744 = vmatprep.subr.mxu0 0.0
          %7745 = vmatpush1.msra.mxu0 %v7707
          %7746 = vmatprep.subr.mxu0 0.0
          %7747 = vmatpush1.msra.mxu0 %v7708
          %7748 = vmatprep.subr.mxu0 0.0
          %7749 = vmatpush1.msra.mxu0 %v7709
          %7750 = vmatprep.subr.mxu0 0.0
          %7751 = vmatpush1.msra.mxu0 %v7710
          %7752 = vmatprep.subr.mxu0 0.0
          %7753 = vmatpush1.msra.mxu0 %v7711
          %7754 = vmatprep.subr.mxu0 0.0
          %7755 = vmatpush1.msra.mxu0 %v7712
          %7756 = vmatprep.subr.mxu0 0.0
          %7757 = vmatpush1.msra.mxu0 %v7713
          %7758 = vmatprep.subr.mxu0 0.0
          %7759 = vmatpush1.msra.mxu0 %v7714
          %7760 = vmatprep.subr.mxu0 0.0
          %7761 = vmatpush1.msra.mxu0 %v7715
          %7762 = vmatprep.subr.mxu0 0.0
          %7763 = vmatpush1.msra.mxu0 %v7716
          %7764 = vmatprep.subr.mxu0 0.0
          %7765 = vmatpush1.msra.mxu0 %v7717
          %7766 = vmatprep.subr.mxu0 0.0
          %7767 = vmatpush1.msra.mxu0 %v7718
          %7768 = vmatprep.subr.mxu0 0.0
          %7769 = vmatpush1.msra.mxu0 %v7719
          %7770 = vmatprep.subr.mxu0 0.0
          %7771 = vmatpush1.msra.mxu0 %v7720
          %7772 = vmatprep.subr.mxu0 0.0
          %7773 = vmatpush1.msra.mxu0 %v7721
          %7774 = vmatprep.subr.mxu0 0.0
          %7775 = vmatpush1.msra.mxu0 0.0
          %7776 = vmatprep.subr.mxu0 0.0
          %7777 = vmatpush1.msra.mxu0 0.0
          %7778 = vmatprep.subr.mxu0 0.0
          %7779 = vmatpush1.msra.mxu0 0.0
          %7780 = vmatprep.subr.mxu0 0.0
          %7781 = vmatpush1.msra.mxu0 0.0
          %7782 = vmatprep.subr.mxu0 0.0
          %7783 = vmatpush1.msra.mxu0 0.0
          %7784 = vmatprep.subr.mxu0 0.0
          %7785 = vmatpush1.msra.mxu0 0.0
          %7786 = vmatprep.subr.mxu0 0.0
          %7787 = vmatpush1.msra.mxu0 0.0
          %7788 = vmatprep.subr.mxu0 0.0
          %7789 = vmatpush1.msra.mxu0 0.0
          %7790 = vmatprep.mubr.f32.mxu0 %v7724
          %7791 = vmatmul.mubr.f32.gmra.mrb[0].mxu0 %v7696
          %v7792 = vpop.f32.mrb[0].mxu0
          %v7793 = vadd.f32 %v7722, %v7792
          %v7794 = vpop.f32.mrb[0].mxu0
          %7795 = vdwg.mxu0
          %vm7796 = vcmask 8192
          %7797 = vst.msk [vmem:[%s851] sm:$0x1] %vm7796, %v7793
        $region116: #{ast_forward.1} parent=107 // pred_fallthru
          _
        %s7798 = sand.u32 %s583, 1
        %s7799 = scalar_lea.sflag [#allocation4], %s7798
        %s7800 = sand.u32 %s583, 1
        %s7801 = scalar_lea.vmem [#allocation3], %s7800
        // Predicated region
        $region117: #{ast_forward.1} parent=107 // pred_check
          %p7802 = pneg %p593
        $region118: #{ast_forward.1} parent=107 // pred_check_branch
          %7804 = sbr.rel (%p7802) target = $region120
        $region119: #{ast_forward.1} parent=107 // pred_region
          %s7806 = ssub.s32 16, 16
          %7807 = vsyncadd %s7799, %s7806
          %s7808 = smul.addr %s40, 16
          %s7809 = scalar_lea.hbm %s22, %s7808
          %s7811 = sshll.u32 %s7801, 4
          %s7812 = int_to_ptr.vmem [resolvable:$true] %s7811
          %7814 = dma.vmem_to_hbm [thread:$0]  %s7812, 16, %s7809, %s7799
        $region120: #{ast_forward.1} parent=107 // pred_fallthru
          _
      $region108: #{ast_forward.1} parent=5 // pred_fallthru
        _
      %p7815 = scmp.le.s32.totalorder 2, %s31
      // Predicated region
      $region121: #{ast_forward.1} parent=5 // pred_check
        %p7816 = pneg %p7815
      $region122: #{ast_forward.1} parent=5 // pred_check_branch
        %7818 = sbr.rel (%p7816) target = $region124
      $region123: #{ast_forward.1} parent=5 // pred_region
        %s7819 = ssub.s32 %s31, 2
        // Predicated region
        $region125: #{ast_forward.1} parent=123 // pred_check
          %p7820 = pneg %p599
        $region126: #{ast_forward.1} parent=123 // pred_check_branch
          %7822 = sbr.rel (%p7820) target = $region128
        $region127: #{ast_forward.1} parent=123 // pred_region
          %s7823 = sand.u32 %s584, 1
          %s7824 = scalar_lea.sflag [#allocation4], %s7823
          %s7825 = sand.u32 %s584, 1
          %s7826 = scalar_lea.vmem [#allocation3], %s7825
          %7827 = dma.done %s7824, 16
        $region128: #{ast_forward.1} parent=123 // pred_fallthru
          _
      $region124: #{ast_forward.1} parent=5 // pred_fallthru
        _
    $region6: #{ast_forward.1} parent=1 // loop_footer
      %s35 = sadd.s32 1, %s31
    $region7: #{ast_forward.1} parent=1 // loop_footer_branch
      %30 = sbr.rel target = $region3
    $region8: #{ast_forward.1} parent=1 // loop_exit
      _
    %7828 = vsyncpa [#allocation4], 1
    %s7829 = scalar_lea.sflag [#allocation4], 1
    %7830 = vsyncpa %s7829, 1

</llo_original>
